<compile_context>
chip_gen: v7x
topology: tpu7x:2x2x1
jax: 0.10.0
libtpu: 0.0.40
codegen_flags: <defaults>
</compile_context>

<pallas_src>
import jax
import jax.numpy as jnp
from jax import lax
from jax.experimental import pallas as pl
from jax.experimental.pallas import tpu as pltpu


# ------------------------------ in-kernel math ------------------------------

def _lstm_step(xh_lo, c_f32, w_ref, b_ref):
    """One LSTM update with the fused [x, h] @ [Wih; Whh] (K=256) matmul.
    xh_lo is already in the matmul dtype (bf16); everything else is f32."""
    H = w_ref.shape[-1] // 4
    gates = (jnp.dot(xh_lo, w_ref[...], preferred_element_type=jnp.float32)
             + b_ref[...])
    i = jax.nn.sigmoid(gates[:, 0 * H:1 * H])
    f = jax.nn.sigmoid(gates[:, 1 * H:2 * H])
    g = jnp.tanh(gates[:, 2 * H:3 * H])
    o = jax.nn.sigmoid(gates[:, 3 * H:4 * H])
    c_new = f * c_f32 + i * g
    h_new = o * jnp.tanh(c_new)
    return h_new, c_new


# ------------------------------ fused kernel --------------------------------

def seq2seq_kernel(tf_ref,                                    # SMEM prefetch
                   src_emb_ref, lbl_emb_ref,
                   enc_w_ref, enc_b_ref,
                   dec_w_ref, dec_b_ref,
                   wfc_ref, bfc_ref, demb_ref,
                   logits_ref,
                   x_scr):
    S, B, _ = src_emb_ref.shape
    L1 = logits_ref.shape[0]                # label_len - 1 decode steps
    H = enc_w_ref.shape[-1] // 4
    V = bfc_ref.shape[-1]
    cdt = enc_w_ref.dtype                   # matmul (bf16) dtype

    # ------------------------------ encoder ---------------------------------
    h = jnp.zeros((B, H), jnp.float32)
    c = jnp.zeros((B, H), jnp.float32)
    for t in range(S):                      # static trip count, fully unrolled
        xh = jnp.concatenate([src_emb_ref[t], h.astype(cdt)], axis=-1)
        h, c = _lstm_step(xh, c, enc_w_ref, enc_b_ref)

    # ------------------------------ decoder ---------------------------------
    # x_scr carries this step's input embedding: label embedding when teacher
    # forced, otherwise the greedy embedding written at the previous step.
    for step in range(L1):
        if step == 0:
            x_scr[...] = lbl_emb_ref[0].astype(jnp.float32)   # label[0]
        else:
            @pl.when(tf_ref[step] != 0)                       # teacher forcing
            def _(step=step):
                x_scr[...] = lbl_emb_ref[step].astype(jnp.float32)

        xh = jnp.concatenate([x_scr[...].astype(cdt), h.astype(cdt)], axis=-1)
        h, c = _lstm_step(xh, c, dec_w_ref, dec_b_ref)

        # FC projection to vocab (lane-dense V_pad=128); padded lanes = -1e30.
        logits = (jnp.dot(h.astype(cdt), wfc_ref[...],
                          preferred_element_type=jnp.float32)
                  + bfc_ref[...])
        logits_ref[step] = logits

        # Greedy next-token embedding — only if the next step exists AND is
        # not teacher-forced (otherwise the label overwrite makes it dead).
        if step + 1 < L1:
            @pl.when(tf_ref[step + 1] == 0)
            def _(logits=logits):
                m = jnp.max(logits, axis=-1, keepdims=True)
                iota_v = lax.broadcasted_iota(jnp.int32, logits.shape, 1)
                top1 = jnp.min(jnp.where(logits == m, iota_v, V),
                               axis=-1, keepdims=True)        # first argmax
                onehot = (iota_v == top1).astype(demb_ref.dtype)
                x_scr[...] = jnp.dot(onehot, demb_ref[...],
                                     preferred_element_type=jnp.float32)


def run_seq2seq(pp, src_emb, lbl_emb, tf):
    S, B_pad, E_pad = src_emb.shape
    L = lbl_emb.shape[0]
    K_pad, H4 = pp["dec_w"].shape
    H_pad = H4 // 4
    V_pad = pp["dec_bfc"].shape[-1]
    return pl.pallas_call(
        seq2seq_kernel,
        grid_spec=pltpu.PrefetchScalarGridSpec(
            num_scalar_prefetch=1,
            grid=(1,),
            in_specs=[
                pl.BlockSpec((S, B_pad, E_pad), lambda i, tf: (0, 0, 0)),
                pl.BlockSpec((L, B_pad, E_pad), lambda i, tf: (0, 0, 0)),
                pl.BlockSpec((K_pad, H4), lambda i, tf: (0, 0)),
                pl.BlockSpec((1, H4), lambda i, tf: (0, 0)),
                pl.BlockSpec((K_pad, H4), lambda i, tf: (0, 0)),
                pl.BlockSpec((1, H4), lambda i, tf: (0, 0)),
                pl.BlockSpec((H_pad, V_pad), lambda i, tf: (0, 0)),
                pl.BlockSpec((1, V_pad), lambda i, tf: (0, 0)),
                pl.BlockSpec((V_pad, E_pad), lambda i, tf: (0, 0)),
            ],
            out_specs=pl.BlockSpec((L - 1, B_pad, V_pad),
                                   lambda i, tf: (0, 0, 0)),
            scratch_shapes=[pltpu.VMEM((B_pad, E_pad), jnp.float32)],
        ),
        out_shape=jax.ShapeDtypeStruct((L - 1, B_pad, V_pad), jnp.float32),
        compiler_params=pltpu.CompilerParams(
            dimension_semantics=("arbitrary",)),
    )(tf, src_emb, lbl_emb,
      pp["enc_w"], pp["enc_b"], pp["dec_w"], pp["dec_b"],
      pp["dec_wfc"], pp["dec_bfc"], pp["dec_emb"])


# --------------------------- parameter construction -------------------------

def init_params(key, vocab, emb_dim, hidden_dim):
    ks = jax.random.split(key, 10)
    s = 0.1
    n = lambda k, shp: jax.random.normal(k, shp, jnp.float32) * s
    return dict(
        enc_emb=n(ks[0], (vocab, emb_dim)),
        enc_wih=n(ks[1], (emb_dim, 4 * hidden_dim)),
        enc_whh=n(ks[2], (hidden_dim, 4 * hidden_dim)),
        enc_b=n(ks[3], (1, 4 * hidden_dim)),          # b_ih + b_hh combined
        dec_emb=n(ks[4], (vocab, emb_dim)),
        dec_wih=n(ks[5], (emb_dim, 4 * hidden_dim)),
        dec_whh=n(ks[6], (hidden_dim, 4 * hidden_dim)),
        dec_b=n(ks[7], (1, 4 * hidden_dim)),
        dec_wfc=n(ks[8], (hidden_dim, vocab)),
        dec_bfc=n(ks[9], (1, vocab)),
    )


def _pad_to(x, shape):
    return jnp.pad(x, [(0, t - s) for s, t in zip(x.shape, shape)])


def _pad_gate_weight(w, in_pad, hid, hid_pad):
    """Pad an [in, 4*H] (i,f,g,o)-stacked weight to [in_pad, 4*H_pad],
    padding each gate block independently with zeros."""
    in_dim = w.shape[0]
    w4 = w.reshape(in_dim, 4, hid)
    w4 = jnp.pad(w4, ((0, in_pad - in_dim), (0, 0), (0, hid_pad - hid)))
    return w4.reshape(in_pad, 4 * hid_pad)


def prepare_params(p, emb_pad=128, hid_pad=128, voc_pad=128,
                   compute_dtype=jnp.bfloat16):
    """Pad to lane/sublane-friendly shapes, fuse [Wih; Whh] into one matmul
    weight, and cast matmul operands to bf16.  Zero padding keeps the padded
    recurrence identical to the un-padded one (padded h/c lanes stay 0);
    padded FC-bias lanes are -1e30 so in-kernel argmax never picks padding."""
    vocab, _ = p["enc_emb"].shape
    hid = p["enc_whh"].shape[0]

    def fuse(wih, whh):
        return jnp.concatenate(
            [_pad_gate_weight(wih, emb_pad, hid, hid_pad),
             _pad_gate_weight(whh, hid_pad, hid, hid_pad)], axis=0)

    out = {
        "enc_emb": _pad_to(p["enc_emb"], (vocab, emb_pad)).astype(compute_dtype),
        "dec_emb": _pad_to(p["dec_emb"], (voc_pad, emb_pad)).astype(compute_dtype),
        "enc_w": fuse(p["enc_wih"], p["enc_whh"]).astype(compute_dtype),
        "dec_w": fuse(p["dec_wih"], p["dec_whh"]).astype(compute_dtype),
        "enc_b": _pad_gate_weight(p["enc_b"], 1, hid, hid_pad).astype(jnp.float32),
        "dec_b": _pad_gate_weight(p["dec_b"], 1, hid, hid_pad).astype(jnp.float32),
        "dec_wfc": _pad_to(p["dec_wfc"], (hid_pad, voc_pad)).astype(compute_dtype),
    }
    bfc = jnp.full((1, voc_pad), -1e30, jnp.float32)
    out["dec_bfc"] = bfc.at[:, :vocab].set(p["dec_bfc"].astype(jnp.float32))
    return out


# ------------------------------ Seq2Seq forward ------------------------------

def seq2seq_forward(pp, src, label, tf, vocab):
    """pp: padded params; src [S,B] int32; label [L,B] int32;
    tf: [L] int32 teacher-forcing flags (flag t picks label[t] as the input of
    decode step t+1, matching the reference loop).
    Returns [L, B, vocab] float32 (matches torch.cat(outputs, dim=0))."""
    S, B = src.shape
    L = label.shape[0]
    B_pad = ((B + 7) // 8) * 8

    src_p = jnp.pad(src, ((0, 0), (0, B_pad - B)))
    lbl_p = jnp.pad(label, ((0, 0), (0, B_pad - B)))

    # one-time embedding gathers (XLA glue, outside the recurrent hot path)
    src_emb = jnp.take(pp["enc_emb"], src_p, axis=0)   # [S, B_pad, E_pad]
    lbl_emb = jnp.take(pp["dec_emb"], lbl_p, axis=0)   # [L, B_pad, E_pad]

    dec_logits = run_seq2seq(pp, src_emb, lbl_emb, tf)  # [L-1, B_pad, V_pad]

    # first "output" = token id repeated across vocab (as in the reference)
    first = jnp.broadcast_to(label[0, :, None].astype(jnp.float32),
                             (B, vocab))[None]
    rest = dec_logits[:, :B, :vocab]
    return jnp.concatenate([first, rest], axis=0)       # [L, B, vocab]


# ----------------------------------- main ------------------------------------

if __name__ == "__main__":
    VOCAB, EMB, HIDDEN = 32, 16, 32
    SRC_LEN, LABEL_LEN, BATCH = 6, 8, 4
    TEACHER_FORCING_RATIO = 0.5

    root = jax.random.PRNGKey(0)
    k_params, k_src, k_label, k_tf = jax.random.split(root, 4)

    params = init_params(k_params, VOCAB, EMB, HIDDEN)
    pp = prepare_params(params)

    src = jax.random.randint(k_src, (SRC_LEN, BATCH), 0, VOCAB, dtype=jnp.int32)
    label = jax.random.randint(k_label, (LABEL_LEN, BATCH), 0, VOCAB,
                               dtype=jnp.int32)
    # TODO(synk): reference draws torch.rand(1) per decode step; coin flips are
    # drawn up-front from a JAX key (statistically equivalent, not bit-matching).
    tf = (jax.random.uniform(k_tf, (LABEL_LEN,))
          < TEACHER_FORCING_RATIO).astype(jnp.int32)

    fwd = jax.jit(seq2seq_forward, static_argnums=(4,))
    out = jax.block_until_ready(fwd(pp, src, label, tf, VOCAB))

    assert out.shape == (LABEL_LEN, BATCH, VOCAB), out.shape
    assert out.dtype == jnp.float32
    assert bool(jnp.all(jnp.isfinite(out)))
    print("KERNEL_OK")
</pallas_src>

<mosaic_0001>
module attributes {stable_mosaic.version = 11 : i64} {
  func.func @seq2seq_kernel(%arg0: i32, %arg1: memref<8xi32, #tpu.memory_space<smem>>, %arg2: memref<6x8x128xbf16, #tpu.memory_space<vmem>>, %arg3: memref<8x8x128xbf16, #tpu.memory_space<vmem>>, %arg4: memref<256x512xbf16, #tpu.memory_space<vmem>>, %arg5: memref<1x512xf32, #tpu.memory_space<vmem>>, %arg6: memref<256x512xbf16, #tpu.memory_space<vmem>>, %arg7: memref<1x512xf32, #tpu.memory_space<vmem>>, %arg8: memref<128x128xbf16, #tpu.memory_space<vmem>>, %arg9: memref<1x128xf32, #tpu.memory_space<vmem>>, %arg10: memref<128x128xbf16, #tpu.memory_space<vmem>>, %arg11: memref<7x8x128xf32, #tpu.memory_space<vmem>>, %arg12: memref<8x128xf32, #tpu.memory_space<vmem>>) attributes {dimension_semantics = [#tpu.dimension_semantics<arbitrary>], iteration_bounds = array<i64: 1>, scalar_prefetch = 1 : i64, scratch_operands = 1 : i64, tpu.core_type = #tpu.core_type<tc>, window_params = [{pipeline_mode = #tpu.pipeline_mode<synchronous>, transform_indices = @transform_0, window_bounds = array<i64: 6, 8, 128>}, {pipeline_mode = #tpu.pipeline_mode<synchronous>, transform_indices = @transform_1, window_bounds = array<i64: 8, 8, 128>}, {pipeline_mode = #tpu.pipeline_mode<synchronous>, transform_indices = @transform_2, window_bounds = array<i64: 256, 512>}, {pipeline_mode = #tpu.pipeline_mode<synchronous>, transform_indices = @transform_3, window_bounds = array<i64: 1, 512>}, {pipeline_mode = #tpu.pipeline_mode<synchronous>, transform_indices = @transform_4, window_bounds = array<i64: 256, 512>}, {pipeline_mode = #tpu.pipeline_mode<synchronous>, transform_indices = @transform_5, window_bounds = array<i64: 1, 512>}, {pipeline_mode = #tpu.pipeline_mode<synchronous>, transform_indices = @transform_6, window_bounds = array<i64: 128, 128>}, {pipeline_mode = #tpu.pipeline_mode<synchronous>, transform_indices = @transform_7, window_bounds = array<i64: 1, 128>}, {pipeline_mode = #tpu.pipeline_mode<synchronous>, transform_indices = @transform_8, window_bounds = array<i64: 128, 128>}, {pipeline_mode = #tpu.pipeline_mode<synchronous>, transform_indices = @transform_9, window_bounds = array<i64: 7, 8, 128>}]} {
    %cst = arith.constant 0.000000e+00 : f32
    %0 = vector.broadcast %cst : f32 to vector<8x128xf32>
    %cst_0 = arith.constant 0.000000e+00 : f32
    %1 = vector.broadcast %cst_0 : f32 to vector<8x128xf32>
    %c0 = arith.constant 0 : index
    %c0_1 = arith.constant 0 : index
    %c0_2 = arith.constant 0 : index
    %2 = vector.load %arg2[%c0, %c0_1, %c0_2] : memref<6x8x128xbf16, #tpu.memory_space<vmem>>, vector<1x8x128xbf16>
    %3 = vector.shape_cast %2 : vector<1x8x128xbf16> to vector<8x128xbf16>
    %4 = arith.truncf %0 : vector<8x128xf32> to vector<8x128xbf16>
    %5 = tpu.concatenate %3, %4 in 1 : vector<8x128xbf16>, vector<8x128xbf16> -> vector<8x256xbf16>
    %c0_3 = arith.constant 0 : index
    %c0_4 = arith.constant 0 : index
    %6 = vector.load %arg4[%c0_3, %c0_4] : memref<256x512xbf16, #tpu.memory_space<vmem>>, vector<256x512xbf16>
    %cst_5 = arith.constant dense<0.000000e+00> : vector<8x512xf32>
    %7 = tpu.matmul %5, %6, %cst_5 {dimension_numbers = #tpu.dot_dimension_numbers<[1], [0], [0], [1], [0, 0, 1, 1], [], []>} : vector<8x256xbf16>, vector<256x512xbf16>, vector<8x512xf32> -> vector<8x512xf32>
    %c0_6 = arith.constant 0 : index
    %c0_7 = arith.constant 0 : index
    %8 = vector.load %arg5[%c0_6, %c0_7] : memref<1x512xf32, #tpu.memory_space<vmem>>, vector<1x512xf32>
    %9 = vector.broadcast %8 : vector<1x512xf32> to vector<8x512xf32>
    %10 = arith.addf %7, %9 : vector<8x512xf32>
    %11 = vector.extract_strided_slice %10 {offsets = [0, 0], sizes = [8, 128], strides = [1, 1]} : vector<8x512xf32> to vector<8x128xf32>
    %12 = arith.negf %11 : vector<8x128xf32>
    %13 = math.exp %12 : vector<8x128xf32>
    %cst_8 = arith.constant 1.000000e+00 : f32
    %14 = vector.broadcast %cst_8 : f32 to vector<8x128xf32>
    %15 = arith.addf %14, %13 : vector<8x128xf32>
    %16 = arith.divf %14, %15 : vector<8x128xf32>
    %17 = vector.extract_strided_slice %10 {offsets = [0, 128], sizes = [8, 128], strides = [1, 1]} : vector<8x512xf32> to vector<8x128xf32>
    %18 = arith.negf %17 : vector<8x128xf32>
    %19 = math.exp %18 : vector<8x128xf32>
    %cst_9 = arith.constant 1.000000e+00 : f32
    %20 = vector.broadcast %cst_9 : f32 to vector<8x128xf32>
    %21 = arith.addf %20, %19 : vector<8x128xf32>
    %22 = arith.divf %20, %21 : vector<8x128xf32>
    %23 = vector.extract_strided_slice %10 {offsets = [0, 256], sizes = [8, 128], strides = [1, 1]} : vector<8x512xf32> to vector<8x128xf32>
    %24 = math.tanh %23 : vector<8x128xf32>
    %25 = vector.extract_strided_slice %10 {offsets = [0, 384], sizes = [8, 128], strides = [1, 1]} : vector<8x512xf32> to vector<8x128xf32>
    %26 = arith.negf %25 : vector<8x128xf32>
    %27 = math.exp %26 : vector<8x128xf32>
    %cst_10 = arith.constant 1.000000e+00 : f32
    %28 = vector.broadcast %cst_10 : f32 to vector<8x128xf32>
    %29 = arith.addf %28, %27 : vector<8x128xf32>
    %30 = arith.divf %28, %29 : vector<8x128xf32>
    %31 = arith.mulf %22, %1 : vector<8x128xf32>
    %32 = arith.mulf %16, %24 : vector<8x128xf32>
    %33 = arith.addf %31, %32 : vector<8x128xf32>
    %34 = math.tanh %33 : vector<8x128xf32>
    %35 = arith.mulf %30, %34 : vector<8x128xf32>
    %c1 = arith.constant 1 : index
    %c0_11 = arith.constant 0 : index
    %c0_12 = arith.constant 0 : index
    %36 = vector.load %arg2[%c1, %c0_11, %c0_12] : memref<6x8x128xbf16, #tpu.memory_space<vmem>>, vector<1x8x128xbf16>
    %37 = vector.shape_cast %36 : vector<1x8x128xbf16> to vector<8x128xbf16>
    %38 = arith.truncf %35 : vector<8x128xf32> to vector<8x128xbf16>
    %39 = tpu.concatenate %37, %38 in 1 : vector<8x128xbf16>, vector<8x128xbf16> -> vector<8x256xbf16>
    %c0_13 = arith.constant 0 : index
    %c0_14 = arith.constant 0 : index
    %40 = vector.load %arg4[%c0_13, %c0_14] : memref<256x512xbf16, #tpu.memory_space<vmem>>, vector<256x512xbf16>
    %cst_15 = arith.constant dense<0.000000e+00> : vector<8x512xf32>
    %41 = tpu.matmul %39, %40, %cst_15 {dimension_numbers = #tpu.dot_dimension_numbers<[1], [0], [0], [1], [0, 0, 1, 1], [], []>} : vector<8x256xbf16>, vector<256x512xbf16>, vector<8x512xf32> -> vector<8x512xf32>
    %c0_16 = arith.constant 0 : index
    %c0_17 = arith.constant 0 : index
    %42 = vector.load %arg5[%c0_16, %c0_17] : memref<1x512xf32, #tpu.memory_space<vmem>>, vector<1x512xf32>
    %43 = vector.broadcast %42 : vector<1x512xf32> to vector<8x512xf32>
    %44 = arith.addf %41, %43 : vector<8x512xf32>
    %45 = vector.extract_strided_slice %44 {offsets = [0, 0], sizes = [8, 128], strides = [1, 1]} : vector<8x512xf32> to vector<8x128xf32>
    %46 = arith.negf %45 : vector<8x128xf32>
    %47 = math.exp %46 : vector<8x128xf32>
    %cst_18 = arith.constant 1.000000e+00 : f32
    %48 = vector.broadcast %cst_18 : f32 to vector<8x128xf32>
    %49 = arith.addf %48, %47 : vector<8x128xf32>
    %50 = arith.divf %48, %49 : vector<8x128xf32>
    %51 = vector.extract_strided_slice %44 {offsets = [0, 128], sizes = [8, 128], strides = [1, 1]} : vector<8x512xf32> to vector<8x128xf32>
    %52 = arith.negf %51 : vector<8x128xf32>
    %53 = math.exp %52 : vector<8x128xf32>
    %cst_19 = arith.constant 1.000000e+00 : f32
    %54 = vector.broadcast %cst_19 : f32 to vector<8x128xf32>
    %55 = arith.addf %54, %53 : vector<8x128xf32>
    %56 = arith.divf %54, %55 : vector<8x128xf32>
    %57 = vector.extract_strided_slice %44 {offsets = [0, 256], sizes = [8, 128], strides = [1, 1]} : vector<8x512xf32> to vector<8x128xf32>
    %58 = math.tanh %57 : vector<8x128xf32>
    %59 = vector.extract_strided_slice %44 {offsets = [0, 384], sizes = [8, 128], strides = [1, 1]} : vector<8x512xf32> to vector<8x128xf32>
    %60 = arith.negf %59 : vector<8x128xf32>
    %61 = math.exp %60 : vector<8x128xf32>
    %cst_20 = arith.constant 1.000000e+00 : f32
    %62 = vector.broadcast %cst_20 : f32 to vector<8x128xf32>
    %63 = arith.addf %62, %61 : vector<8x128xf32>
    %64 = arith.divf %62, %63 : vector<8x128xf32>
    %65 = arith.mulf %56, %33 : vector<8x128xf32>
    %66 = arith.mulf %50, %58 : vector<8x128xf32>
    %67 = arith.addf %65, %66 : vector<8x128xf32>
    %68 = math.tanh %67 : vector<8x128xf32>
    %69 = arith.mulf %64, %68 : vector<8x128xf32>
    %c2 = arith.constant 2 : index
    %c0_21 = arith.constant 0 : index
    %c0_22 = arith.constant 0 : index
    %70 = vector.load %arg2[%c2, %c0_21, %c0_22] : memref<6x8x128xbf16, #tpu.memory_space<vmem>>, vector<1x8x128xbf16>
    %71 = vector.shape_cast %70 : vector<1x8x128xbf16> to vector<8x128xbf16>
    %72 = arith.truncf %69 : vector<8x128xf32> to vector<8x128xbf16>
    %73 = tpu.concatenate %71, %72 in 1 : vector<8x128xbf16>, vector<8x128xbf16> -> vector<8x256xbf16>
    %c0_23 = arith.constant 0 : index
    %c0_24 = arith.constant 0 : index
    %74 = vector.load %arg4[%c0_23, %c0_24] : memref<256x512xbf16, #tpu.memory_space<vmem>>, vector<256x512xbf16>
    %cst_25 = arith.constant dense<0.000000e+00> : vector<8x512xf32>
    %75 = tpu.matmul %73, %74, %cst_25 {dimension_numbers = #tpu.dot_dimension_numbers<[1], [0], [0], [1], [0, 0, 1, 1], [], []>} : vector<8x256xbf16>, vector<256x512xbf16>, vector<8x512xf32> -> vector<8x512xf32>
    %c0_26 = arith.constant 0 : index
    %c0_27 = arith.constant 0 : index
    %76 = vector.load %arg5[%c0_26, %c0_27] : memref<1x512xf32, #tpu.memory_space<vmem>>, vector<1x512xf32>
    %77 = vector.broadcast %76 : vector<1x512xf32> to vector<8x512xf32>
    %78 = arith.addf %75, %77 : vector<8x512xf32>
    %79 = vector.extract_strided_slice %78 {offsets = [0, 0], sizes = [8, 128], strides = [1, 1]} : vector<8x512xf32> to vector<8x128xf32>
    %80 = arith.negf %79 : vector<8x128xf32>
    %81 = math.exp %80 : vector<8x128xf32>
    %cst_28 = arith.constant 1.000000e+00 : f32
    %82 = vector.broadcast %cst_28 : f32 to vector<8x128xf32>
    %83 = arith.addf %82, %81 : vector<8x128xf32>
    %84 = arith.divf %82, %83 : vector<8x128xf32>
    %85 = vector.extract_strided_slice %78 {offsets = [0, 128], sizes = [8, 128], strides = [1, 1]} : vector<8x512xf32> to vector<8x128xf32>
    %86 = arith.negf %85 : vector<8x128xf32>
    %87 = math.exp %86 : vector<8x128xf32>
    %cst_29 = arith.constant 1.000000e+00 : f32
    %88 = vector.broadcast %cst_29 : f32 to vector<8x128xf32>
    %89 = arith.addf %88, %87 : vector<8x128xf32>
    %90 = arith.divf %88, %89 : vector<8x128xf32>
    %91 = vector.extract_strided_slice %78 {offsets = [0, 256], sizes = [8, 128], strides = [1, 1]} : vector<8x512xf32> to vector<8x128xf32>
    %92 = math.tanh %91 : vector<8x128xf32>
    %93 = vector.extract_strided_slice %78 {offsets = [0, 384], sizes = [8, 128], strides = [1, 1]} : vector<8x512xf32> to vector<8x128xf32>
    %94 = arith.negf %93 : vector<8x128xf32>
    %95 = math.exp %94 : vector<8x128xf32>
    %cst_30 = arith.constant 1.000000e+00 : f32
    %96 = vector.broadcast %cst_30 : f32 to vector<8x128xf32>
    %97 = arith.addf %96, %95 : vector<8x128xf32>
    %98 = arith.divf %96, %97 : vector<8x128xf32>
    %99 = arith.mulf %90, %67 : vector<8x128xf32>
    %100 = arith.mulf %84, %92 : vector<8x128xf32>
    %101 = arith.addf %99, %100 : vector<8x128xf32>
    %102 = math.tanh %101 : vector<8x128xf32>
    %103 = arith.mulf %98, %102 : vector<8x128xf32>
    %c3 = arith.constant 3 : index
    %c0_31 = arith.constant 0 : index
    %c0_32 = arith.constant 0 : index
    %104 = vector.load %arg2[%c3, %c0_31, %c0_32] : memref<6x8x128xbf16, #tpu.memory_space<vmem>>, vector<1x8x128xbf16>
    %105 = vector.shape_cast %104 : vector<1x8x128xbf16> to vector<8x128xbf16>
    %106 = arith.truncf %103 : vector<8x128xf32> to vector<8x128xbf16>
    %107 = tpu.concatenate %105, %106 in 1 : vector<8x128xbf16>, vector<8x128xbf16> -> vector<8x256xbf16>
    %c0_33 = arith.constant 0 : index
    %c0_34 = arith.constant 0 : index
    %108 = vector.load %arg4[%c0_33, %c0_34] : memref<256x512xbf16, #tpu.memory_space<vmem>>, vector<256x512xbf16>
    %cst_35 = arith.constant dense<0.000000e+00> : vector<8x512xf32>
    %109 = tpu.matmul %107, %108, %cst_35 {dimension_numbers = #tpu.dot_dimension_numbers<[1], [0], [0], [1], [0, 0, 1, 1], [], []>} : vector<8x256xbf16>, vector<256x512xbf16>, vector<8x512xf32> -> vector<8x512xf32>
    %c0_36 = arith.constant 0 : index
    %c0_37 = arith.constant 0 : index
    %110 = vector.load %arg5[%c0_36, %c0_37] : memref<1x512xf32, #tpu.memory_space<vmem>>, vector<1x512xf32>
    %111 = vector.broadcast %110 : vector<1x512xf32> to vector<8x512xf32>
    %112 = arith.addf %109, %111 : vector<8x512xf32>
    %113 = vector.extract_strided_slice %112 {offsets = [0, 0], sizes = [8, 128], strides = [1, 1]} : vector<8x512xf32> to vector<8x128xf32>
    %114 = arith.negf %113 : vector<8x128xf32>
    %115 = math.exp %114 : vector<8x128xf32>
    %cst_38 = arith.constant 1.000000e+00 : f32
    %116 = vector.broadcast %cst_38 : f32 to vector<8x128xf32>
    %117 = arith.addf %116, %115 : vector<8x128xf32>
    %118 = arith.divf %116, %117 : vector<8x128xf32>
    %119 = vector.extract_strided_slice %112 {offsets = [0, 128], sizes = [8, 128], strides = [1, 1]} : vector<8x512xf32> to vector<8x128xf32>
    %120 = arith.negf %119 : vector<8x128xf32>
    %121 = math.exp %120 : vector<8x128xf32>
    %cst_39 = arith.constant 1.000000e+00 : f32
    %122 = vector.broadcast %cst_39 : f32 to vector<8x128xf32>
    %123 = arith.addf %122, %121 : vector<8x128xf32>
    %124 = arith.divf %122, %123 : vector<8x128xf32>
    %125 = vector.extract_strided_slice %112 {offsets = [0, 256], sizes = [8, 128], strides = [1, 1]} : vector<8x512xf32> to vector<8x128xf32>
    %126 = math.tanh %125 : vector<8x128xf32>
    %127 = vector.extract_strided_slice %112 {offsets = [0, 384], sizes = [8, 128], strides = [1, 1]} : vector<8x512xf32> to vector<8x128xf32>
    %128 = arith.negf %127 : vector<8x128xf32>
    %129 = math.exp %128 : vector<8x128xf32>
    %cst_40 = arith.constant 1.000000e+00 : f32
    %130 = vector.broadcast %cst_40 : f32 to vector<8x128xf32>
    %131 = arith.addf %130, %129 : vector<8x128xf32>
    %132 = arith.divf %130, %131 : vector<8x128xf32>
    %133 = arith.mulf %124, %101 : vector<8x128xf32>
    %134 = arith.mulf %118, %126 : vector<8x128xf32>
    %135 = arith.addf %133, %134 : vector<8x128xf32>
    %136 = math.tanh %135 : vector<8x128xf32>
    %137 = arith.mulf %132, %136 : vector<8x128xf32>
    %c4 = arith.constant 4 : index
    %c0_41 = arith.constant 0 : index
    %c0_42 = arith.constant 0 : index
    %138 = vector.load %arg2[%c4, %c0_41, %c0_42] : memref<6x8x128xbf16, #tpu.memory_space<vmem>>, vector<1x8x128xbf16>
    %139 = vector.shape_cast %138 : vector<1x8x128xbf16> to vector<8x128xbf16>
    %140 = arith.truncf %137 : vector<8x128xf32> to vector<8x128xbf16>
    %141 = tpu.concatenate %139, %140 in 1 : vector<8x128xbf16>, vector<8x128xbf16> -> vector<8x256xbf16>
    %c0_43 = arith.constant 0 : index
    %c0_44 = arith.constant 0 : index
    %142 = vector.load %arg4[%c0_43, %c0_44] : memref<256x512xbf16, #tpu.memory_space<vmem>>, vector<256x512xbf16>
    %cst_45 = arith.constant dense<0.000000e+00> : vector<8x512xf32>
    %143 = tpu.matmul %141, %142, %cst_45 {dimension_numbers = #tpu.dot_dimension_numbers<[1], [0], [0], [1], [0, 0, 1, 1], [], []>} : vector<8x256xbf16>, vector<256x512xbf16>, vector<8x512xf32> -> vector<8x512xf32>
    %c0_46 = arith.constant 0 : index
    %c0_47 = arith.constant 0 : index
    %144 = vector.load %arg5[%c0_46, %c0_47] : memref<1x512xf32, #tpu.memory_space<vmem>>, vector<1x512xf32>
    %145 = vector.broadcast %144 : vector<1x512xf32> to vector<8x512xf32>
    %146 = arith.addf %143, %145 : vector<8x512xf32>
    %147 = vector.extract_strided_slice %146 {offsets = [0, 0], sizes = [8, 128], strides = [1, 1]} : vector<8x512xf32> to vector<8x128xf32>
    %148 = arith.negf %147 : vector<8x128xf32>
    %149 = math.exp %148 : vector<8x128xf32>
    %cst_48 = arith.constant 1.000000e+00 : f32
    %150 = vector.broadcast %cst_48 : f32 to vector<8x128xf32>
    %151 = arith.addf %150, %149 : vector<8x128xf32>
    %152 = arith.divf %150, %151 : vector<8x128xf32>
    %153 = vector.extract_strided_slice %146 {offsets = [0, 128], sizes = [8, 128], strides = [1, 1]} : vector<8x512xf32> to vector<8x128xf32>
    %154 = arith.negf %153 : vector<8x128xf32>
    %155 = math.exp %154 : vector<8x128xf32>
    %cst_49 = arith.constant 1.000000e+00 : f32
    %156 = vector.broadcast %cst_49 : f32 to vector<8x128xf32>
    %157 = arith.addf %156, %155 : vector<8x128xf32>
    %158 = arith.divf %156, %157 : vector<8x128xf32>
    %159 = vector.extract_strided_slice %146 {offsets = [0, 256], sizes = [8, 128], strides = [1, 1]} : vector<8x512xf32> to vector<8x128xf32>
    %160 = math.tanh %159 : vector<8x128xf32>
    %161 = vector.extract_strided_slice %146 {offsets = [0, 384], sizes = [8, 128], strides = [1, 1]} : vector<8x512xf32> to vector<8x128xf32>
    %162 = arith.negf %161 : vector<8x128xf32>
    %163 = math.exp %162 : vector<8x128xf32>
    %cst_50 = arith.constant 1.000000e+00 : f32
    %164 = vector.broadcast %cst_50 : f32 to vector<8x128xf32>
    %165 = arith.addf %164, %163 : vector<8x128xf32>
    %166 = arith.divf %164, %165 : vector<8x128xf32>
    %167 = arith.mulf %158, %135 : vector<8x128xf32>
    %168 = arith.mulf %152, %160 : vector<8x128xf32>
    %169 = arith.addf %167, %168 : vector<8x128xf32>
    %170 = math.tanh %169 : vector<8x128xf32>
    %171 = arith.mulf %166, %170 : vector<8x128xf32>
    %c5 = arith.constant 5 : index
    %c0_51 = arith.constant 0 : index
    %c0_52 = arith.constant 0 : index
    %172 = vector.load %arg2[%c5, %c0_51, %c0_52] : memref<6x8x128xbf16, #tpu.memory_space<vmem>>, vector<1x8x128xbf16>
    %173 = vector.shape_cast %172 : vector<1x8x128xbf16> to vector<8x128xbf16>
    %174 = arith.truncf %171 : vector<8x128xf32> to vector<8x128xbf16>
    %175 = tpu.concatenate %173, %174 in 1 : vector<8x128xbf16>, vector<8x128xbf16> -> vector<8x256xbf16>
    %c0_53 = arith.constant 0 : index
    %c0_54 = arith.constant 0 : index
    %176 = vector.load %arg4[%c0_53, %c0_54] : memref<256x512xbf16, #tpu.memory_space<vmem>>, vector<256x512xbf16>
    %cst_55 = arith.constant dense<0.000000e+00> : vector<8x512xf32>
    %177 = tpu.matmul %175, %176, %cst_55 {dimension_numbers = #tpu.dot_dimension_numbers<[1], [0], [0], [1], [0, 0, 1, 1], [], []>} : vector<8x256xbf16>, vector<256x512xbf16>, vector<8x512xf32> -> vector<8x512xf32>
    %c0_56 = arith.constant 0 : index
    %c0_57 = arith.constant 0 : index
    %178 = vector.load %arg5[%c0_56, %c0_57] : memref<1x512xf32, #tpu.memory_space<vmem>>, vector<1x512xf32>
    %179 = vector.broadcast %178 : vector<1x512xf32> to vector<8x512xf32>
    %180 = arith.addf %177, %179 : vector<8x512xf32>
    %181 = vector.extract_strided_slice %180 {offsets = [0, 0], sizes = [8, 128], strides = [1, 1]} : vector<8x512xf32> to vector<8x128xf32>
    %182 = arith.negf %181 : vector<8x128xf32>
    %183 = math.exp %182 : vector<8x128xf32>
    %cst_58 = arith.constant 1.000000e+00 : f32
    %184 = vector.broadcast %cst_58 : f32 to vector<8x128xf32>
    %185 = arith.addf %184, %183 : vector<8x128xf32>
    %186 = arith.divf %184, %185 : vector<8x128xf32>
    %187 = vector.extract_strided_slice %180 {offsets = [0, 128], sizes = [8, 128], strides = [1, 1]} : vector<8x512xf32> to vector<8x128xf32>
    %188 = arith.negf %187 : vector<8x128xf32>
    %189 = math.exp %188 : vector<8x128xf32>
    %cst_59 = arith.constant 1.000000e+00 : f32
    %190 = vector.broadcast %cst_59 : f32 to vector<8x128xf32>
    %191 = arith.addf %190, %189 : vector<8x128xf32>
    %192 = arith.divf %190, %191 : vector<8x128xf32>
    %193 = vector.extract_strided_slice %180 {offsets = [0, 256], sizes = [8, 128], strides = [1, 1]} : vector<8x512xf32> to vector<8x128xf32>
    %194 = math.tanh %193 : vector<8x128xf32>
    %195 = vector.extract_strided_slice %180 {offsets = [0, 384], sizes = [8, 128], strides = [1, 1]} : vector<8x512xf32> to vector<8x128xf32>
    %196 = arith.negf %195 : vector<8x128xf32>
    %197 = math.exp %196 : vector<8x128xf32>
    %cst_60 = arith.constant 1.000000e+00 : f32
    %198 = vector.broadcast %cst_60 : f32 to vector<8x128xf32>
    %199 = arith.addf %198, %197 : vector<8x128xf32>
    %200 = arith.divf %198, %199 : vector<8x128xf32>
    %201 = arith.mulf %192, %169 : vector<8x128xf32>
    %202 = arith.mulf %186, %194 : vector<8x128xf32>
    %203 = arith.addf %201, %202 : vector<8x128xf32>
    %204 = math.tanh %203 : vector<8x128xf32>
    %205 = arith.mulf %200, %204 : vector<8x128xf32>
    %c0_61 = arith.constant 0 : index
    %c0_62 = arith.constant 0 : index
    %c0_63 = arith.constant 0 : index
    %206 = vector.load %arg3[%c0_61, %c0_62, %c0_63] : memref<8x8x128xbf16, #tpu.memory_space<vmem>>, vector<1x8x128xbf16>
    %207 = vector.shape_cast %206 : vector<1x8x128xbf16> to vector<8x128xbf16>
    %208 = arith.extf %207 : vector<8x128xbf16> to vector<8x128xf32>
    %c0_64 = arith.constant 0 : index
    %c0_65 = arith.constant 0 : index
    %209 = vector.load %arg12[%c0_64, %c0_65] : memref<8x128xf32, #tpu.memory_space<vmem>>, vector<8x128xf32>
    tpu.vector_store %arg12[%c0_64, %c0_65], %208 {strides = array<i32>} : memref<8x128xf32, #tpu.memory_space<vmem>>, vector<8x128xf32>,
    %c0_66 = arith.constant 0 : index
    %c0_67 = arith.constant 0 : index
    %210 = vector.load %arg12[%c0_66, %c0_67] : memref<8x128xf32, #tpu.memory_space<vmem>>, vector<8x128xf32>
    %211 = arith.truncf %210 : vector<8x128xf32> to vector<8x128xbf16>
    %212 = arith.truncf %205 : vector<8x128xf32> to vector<8x128xbf16>
    %213 = tpu.concatenate %211, %212 in 1 : vector<8x128xbf16>, vector<8x128xbf16> -> vector<8x256xbf16>
    %c0_68 = arith.constant 0 : index
    %c0_69 = arith.constant 0 : index
    %214 = vector.load %arg6[%c0_68, %c0_69] : memref<256x512xbf16, #tpu.memory_space<vmem>>, vector<256x512xbf16>
    %cst_70 = arith.constant dense<0.000000e+00> : vector<8x512xf32>
    %215 = tpu.matmul %213, %214, %cst_70 {dimension_numbers = #tpu.dot_dimension_numbers<[1], [0], [0], [1], [0, 0, 1, 1], [], []>} : vector<8x256xbf16>, vector<256x512xbf16>, vector<8x512xf32> -> vector<8x512xf32>
    %c0_71 = arith.constant 0 : index
    %c0_72 = arith.constant 0 : index
    %216 = vector.load %arg7[%c0_71, %c0_72] : memref<1x512xf32, #tpu.memory_space<vmem>>, vector<1x512xf32>
    %217 = vector.broadcast %216 : vector<1x512xf32> to vector<8x512xf32>
    %218 = arith.addf %215, %217 : vector<8x512xf32>
    %219 = vector.extract_strided_slice %218 {offsets = [0, 0], sizes = [8, 128], strides = [1, 1]} : vector<8x512xf32> to vector<8x128xf32>
    %220 = arith.negf %219 : vector<8x128xf32>
    %221 = math.exp %220 : vector<8x128xf32>
    %cst_73 = arith.constant 1.000000e+00 : f32
    %222 = vector.broadcast %cst_73 : f32 to vector<8x128xf32>
    %223 = arith.addf %222, %221 : vector<8x128xf32>
    %224 = arith.divf %222, %223 : vector<8x128xf32>
    %225 = vector.extract_strided_slice %218 {offsets = [0, 128], sizes = [8, 128], strides = [1, 1]} : vector<8x512xf32> to vector<8x128xf32>
    %226 = arith.negf %225 : vector<8x128xf32>
    %227 = math.exp %226 : vector<8x128xf32>
    %cst_74 = arith.constant 1.000000e+00 : f32
    %228 = vector.broadcast %cst_74 : f32 to vector<8x128xf32>
    %229 = arith.addf %228, %227 : vector<8x128xf32>
    %230 = arith.divf %228, %229 : vector<8x128xf32>
    %231 = vector.extract_strided_slice %218 {offsets = [0, 256], sizes = [8, 128], strides = [1, 1]} : vector<8x512xf32> to vector<8x128xf32>
    %232 = math.tanh %231 : vector<8x128xf32>
    %233 = vector.extract_strided_slice %218 {offsets = [0, 384], sizes = [8, 128], strides = [1, 1]} : vector<8x512xf32> to vector<8x128xf32>
    %234 = arith.negf %233 : vector<8x128xf32>
    %235 = math.exp %234 : vector<8x128xf32>
    %cst_75 = arith.constant 1.000000e+00 : f32
    %236 = vector.broadcast %cst_75 : f32 to vector<8x128xf32>
    %237 = arith.addf %236, %235 : vector<8x128xf32>
    %238 = arith.divf %236, %237 : vector<8x128xf32>
    %239 = arith.mulf %230, %203 : vector<8x128xf32>
    %240 = arith.mulf %224, %232 : vector<8x128xf32>
    %241 = arith.addf %239, %240 : vector<8x128xf32>
    %242 = math.tanh %241 : vector<8x128xf32>
    %243 = arith.mulf %238, %242 : vector<8x128xf32>
    %244 = arith.truncf %243 : vector<8x128xf32> to vector<8x128xbf16>
    %c0_76 = arith.constant 0 : index
    %c0_77 = arith.constant 0 : index
    %245 = vector.load %arg8[%c0_76, %c0_77] : memref<128x128xbf16, #tpu.memory_space<vmem>>, vector<128x128xbf16>
    %cst_78 = arith.constant dense<0.000000e+00> : vector<8x128xf32>
    %246 = tpu.matmul %244, %245, %cst_78 {dimension_numbers = #tpu.dot_dimension_numbers<[1], [0], [0], [1], [0, 0, 1, 1], [], []>} : vector<8x128xbf16>, vector<128x128xbf16>, vector<8x128xf32> -> vector<8x128xf32>
    %c0_79 = arith.constant 0 : index
    %c0_80 = arith.constant 0 : index
    %247 = vector.load %arg9[%c0_79, %c0_80] : memref<1x128xf32, #tpu.memory_space<vmem>>, vector<1x128xf32>
    %248 = vector.broadcast %247 : vector<1x128xf32> to vector<8x128xf32>
    %249 = arith.addf %246, %248 : vector<8x128xf32>
    %c0_81 = arith.constant 0 : index
    %c0_82 = arith.constant 0 : index
    %c0_83 = arith.constant 0 : index
    %250 = vector.load %arg11[%c0_81, %c0_82, %c0_83] : memref<7x8x128xf32, #tpu.memory_space<vmem>>, vector<1x8x128xf32>
    %251 = vector.shape_cast %250 : vector<1x8x128xf32> to vector<8x128xf32>
    %252 = vector.shape_cast %249 : vector<8x128xf32> to vector<1x8x128xf32>
    tpu.vector_store %arg11[%c0_81, %c0_82, %c0_83], %252 {strides = array<i32>} : memref<7x8x128xf32, #tpu.memory_space<vmem>>, vector<1x8x128xf32>,
    %c1_84 = arith.constant 1 : index
    %253 = memref.load %arg1[%c1_84] : memref<8xi32, #tpu.memory_space<smem>>
    %c0_i32 = arith.constant 0 : i32
    %254 = arith.cmpi eq, %253, %c0_i32 : i32
    %255 = arith.extui %254 : i1 to i32
    %c0_i32_85 = arith.constant 0 : i32
    %256 = arith.cmpi ne, %255, %c0_i32_85 : i32
    scf.if %256 {
      %cst_226 = arith.constant dense<0xFF800000> : vector<8xf32>
      %559 = vector.multi_reduction <maximumf>, %249, %cst_226 [1] : vector<8x128xf32> to vector<8xf32>
      %560 = vector.shape_cast %559 : vector<8xf32> to vector<8x1xf32>
      %561 = tpu.iota {dimensions = array<i32: 1>} : vector<8x128xi32>
      %562 = vector.broadcast %560 : vector<8x1xf32> to vector<8x128xf32>
      %563 = arith.cmpf oeq, %249, %562 : vector<8x128xf32>
      %c128_i32 = arith.constant 128 : i32
      %564 = vector.broadcast %c128_i32 : i32 to vector<8x128xi32>
      %565 = arith.select %563, %561, %564 : vector<8x128xi1>, vector<8x128xi32>
      %cst_227 = arith.constant dense<2147483647> : vector<8xi32>
      %566 = vector.multi_reduction <minsi>, %565, %cst_227 [1] : vector<8x128xi32> to vector<8xi32>
      %567 = vector.shape_cast %566 : vector<8xi32> to vector<8x1xi32>
      %568 = vector.broadcast %567 : vector<8x1xi32> to vector<8x128xi32>
      %569 = arith.cmpi eq, %561, %568 : vector<8x128xi32>
      %570 = arith.extui %569 : vector<8x128xi1> to vector<8x128xi32>
      %571 = arith.sitofp %570 : vector<8x128xi32> to vector<8x128xf32>
      %572 = arith.truncf %571 : vector<8x128xf32> to vector<8x128xbf16>
      %c0_228 = arith.constant 0 : index
      %c0_229 = arith.constant 0 : index
      %573 = vector.load %arg10[%c0_228, %c0_229] : memref<128x128xbf16, #tpu.memory_space<vmem>>, vector<128x128xbf16>
      %cst_230 = arith.constant dense<0.000000e+00> : vector<8x128xf32>
      %574 = tpu.matmul %572, %573, %cst_230 {dimension_numbers = #tpu.dot_dimension_numbers<[1], [0], [0], [1], [0, 0, 1, 1], [], []>} : vector<8x128xbf16>, vector<128x128xbf16>, vector<8x128xf32> -> vector<8x128xf32>
      %c0_231 = arith.constant 0 : index
      %c0_232 = arith.constant 0 : index
      %575 = vector.load %arg12[%c0_231, %c0_232] : memref<8x128xf32, #tpu.memory_space<vmem>>, vector<8x128xf32>
      tpu.vector_store %arg12[%c0_231, %c0_232], %574 {strides = array<i32>} : memref<8x128xf32, #tpu.memory_space<vmem>>, vector<8x128xf32>,
    } else {
    }
    %c1_86 = arith.constant 1 : index
    %257 = memref.load %arg1[%c1_86] : memref<8xi32, #tpu.memory_space<smem>>
    %c0_i32_87 = arith.constant 0 : i32
    %258 = arith.cmpi ne, %257, %c0_i32_87 : i32
    %259 = arith.extui %258 : i1 to i32
    %c0_i32_88 = arith.constant 0 : i32
    %260 = arith.cmpi ne, %259, %c0_i32_88 : i32
    scf.if %260 {
      %c1_226 = arith.constant 1 : index
      %c0_227 = arith.constant 0 : index
      %c0_228 = arith.constant 0 : index
      %559 = vector.load %arg3[%c1_226, %c0_227, %c0_228] : memref<8x8x128xbf16, #tpu.memory_space<vmem>>, vector<1x8x128xbf16>
      %560 = vector.shape_cast %559 : vector<1x8x128xbf16> to vector<8x128xbf16>
      %561 = arith.extf %560 : vector<8x128xbf16> to vector<8x128xf32>
      %c0_229 = arith.constant 0 : index
      %c0_230 = arith.constant 0 : index
      %562 = vector.load %arg12[%c0_229, %c0_230] : memref<8x128xf32, #tpu.memory_space<vmem>>, vector<8x128xf32>
      tpu.vector_store %arg12[%c0_229, %c0_230], %561 {strides = array<i32>} : memref<8x128xf32, #tpu.memory_space<vmem>>, vector<8x128xf32>,
    } else {
    }
    %c0_89 = arith.constant 0 : index
    %c0_90 = arith.constant 0 : index
    %261 = vector.load %arg12[%c0_89, %c0_90] : memref<8x128xf32, #tpu.memory_space<vmem>>, vector<8x128xf32>
    %262 = arith.truncf %261 : vector<8x128xf32> to vector<8x128xbf16>
    %263 = arith.truncf %243 : vector<8x128xf32> to vector<8x128xbf16>
    %264 = tpu.concatenate %262, %263 in 1 : vector<8x128xbf16>, vector<8x128xbf16> -> vector<8x256xbf16>
    %c0_91 = arith.constant 0 : index
    %c0_92 = arith.constant 0 : index
    %265 = vector.load %arg6[%c0_91, %c0_92] : memref<256x512xbf16, #tpu.memory_space<vmem>>, vector<256x512xbf16>
    %cst_93 = arith.constant dense<0.000000e+00> : vector<8x512xf32>
    %266 = tpu.matmul %264, %265, %cst_93 {dimension_numbers = #tpu.dot_dimension_numbers<[1], [0], [0], [1], [0, 0, 1, 1], [], []>} : vector<8x256xbf16>, vector<256x512xbf16>, vector<8x512xf32> -> vector<8x512xf32>
    %c0_94 = arith.constant 0 : index
    %c0_95 = arith.constant 0 : index
    %267 = vector.load %arg7[%c0_94, %c0_95] : memref<1x512xf32, #tpu.memory_space<vmem>>, vector<1x512xf32>
    %268 = vector.broadcast %267 : vector<1x512xf32> to vector<8x512xf32>
    %269 = arith.addf %266, %268 : vector<8x512xf32>
    %270 = vector.extract_strided_slice %269 {offsets = [0, 0], sizes = [8, 128], strides = [1, 1]} : vector<8x512xf32> to vector<8x128xf32>
    %271 = arith.negf %270 : vector<8x128xf32>
    %272 = math.exp %271 : vector<8x128xf32>
    %cst_96 = arith.constant 1.000000e+00 : f32
    %273 = vector.broadcast %cst_96 : f32 to vector<8x128xf32>
    %274 = arith.addf %273, %272 : vector<8x128xf32>
    %275 = arith.divf %273, %274 : vector<8x128xf32>
    %276 = vector.extract_strided_slice %269 {offsets = [0, 128], sizes = [8, 128], strides = [1, 1]} : vector<8x512xf32> to vector<8x128xf32>
    %277 = arith.negf %276 : vector<8x128xf32>
    %278 = math.exp %277 : vector<8x128xf32>
    %cst_97 = arith.constant 1.000000e+00 : f32
    %279 = vector.broadcast %cst_97 : f32 to vector<8x128xf32>
    %280 = arith.addf %279, %278 : vector<8x128xf32>
    %281 = arith.divf %279, %280 : vector<8x128xf32>
    %282 = vector.extract_strided_slice %269 {offsets = [0, 256], sizes = [8, 128], strides = [1, 1]} : vector<8x512xf32> to vector<8x128xf32>
    %283 = math.tanh %282 : vector<8x128xf32>
    %284 = vector.extract_strided_slice %269 {offsets = [0, 384], sizes = [8, 128], strides = [1, 1]} : vector<8x512xf32> to vector<8x128xf32>
    %285 = arith.negf %284 : vector<8x128xf32>
    %286 = math.exp %285 : vector<8x128xf32>
    %cst_98 = arith.constant 1.000000e+00 : f32
    %287 = vector.broadcast %cst_98 : f32 to vector<8x128xf32>
    %288 = arith.addf %287, %286 : vector<8x128xf32>
    %289 = arith.divf %287, %288 : vector<8x128xf32>
    %290 = arith.mulf %281, %241 : vector<8x128xf32>
    %291 = arith.mulf %275, %283 : vector<8x128xf32>
    %292 = arith.addf %290, %291 : vector<8x128xf32>
    %293 = math.tanh %292 : vector<8x128xf32>
    %294 = arith.mulf %289, %293 : vector<8x128xf32>
    %295 = arith.truncf %294 : vector<8x128xf32> to vector<8x128xbf16>
    %c0_99 = arith.constant 0 : index
    %c0_100 = arith.constant 0 : index
    %296 = vector.load %arg8[%c0_99, %c0_100] : memref<128x128xbf16, #tpu.memory_space<vmem>>, vector<128x128xbf16>
    %cst_101 = arith.constant dense<0.000000e+00> : vector<8x128xf32>
    %297 = tpu.matmul %295, %296, %cst_101 {dimension_numbers = #tpu.dot_dimension_numbers<[1], [0], [0], [1], [0, 0, 1, 1], [], []>} : vector<8x128xbf16>, vector<128x128xbf16>, vector<8x128xf32> -> vector<8x128xf32>
    %c0_102 = arith.constant 0 : index
    %c0_103 = arith.constant 0 : index
    %298 = vector.load %arg9[%c0_102, %c0_103] : memref<1x128xf32, #tpu.memory_space<vmem>>, vector<1x128xf32>
    %299 = vector.broadcast %298 : vector<1x128xf32> to vector<8x128xf32>
    %300 = arith.addf %297, %299 : vector<8x128xf32>
    %c1_104 = arith.constant 1 : index
    %c0_105 = arith.constant 0 : index
    %c0_106 = arith.constant 0 : index
    %301 = vector.load %arg11[%c1_104, %c0_105, %c0_106] : memref<7x8x128xf32, #tpu.memory_space<vmem>>, vector<1x8x128xf32>
    %302 = vector.shape_cast %301 : vector<1x8x128xf32> to vector<8x128xf32>
    %303 = vector.shape_cast %300 : vector<8x128xf32> to vector<1x8x128xf32>
    tpu.vector_store %arg11[%c1_104, %c0_105, %c0_106], %303 {strides = array<i32>} : memref<7x8x128xf32, #tpu.memory_space<vmem>>, vector<1x8x128xf32>,
    %c2_107 = arith.constant 2 : index
    %304 = memref.load %arg1[%c2_107] : memref<8xi32, #tpu.memory_space<smem>>
    %c0_i32_108 = arith.constant 0 : i32
    %305 = arith.cmpi eq, %304, %c0_i32_108 : i32
    %306 = arith.extui %305 : i1 to i32
    %c0_i32_109 = arith.constant 0 : i32
    %307 = arith.cmpi ne, %306, %c0_i32_109 : i32
    scf.if %307 {
      %cst_226 = arith.constant dense<0xFF800000> : vector<8xf32>
      %559 = vector.multi_reduction <maximumf>, %300, %cst_226 [1] : vector<8x128xf32> to vector<8xf32>
      %560 = vector.shape_cast %559 : vector<8xf32> to vector<8x1xf32>
      %561 = tpu.iota {dimensions = array<i32: 1>} : vector<8x128xi32>
      %562 = vector.broadcast %560 : vector<8x1xf32> to vector<8x128xf32>
      %563 = arith.cmpf oeq, %300, %562 : vector<8x128xf32>
      %c128_i32 = arith.constant 128 : i32
      %564 = vector.broadcast %c128_i32 : i32 to vector<8x128xi32>
      %565 = arith.select %563, %561, %564 : vector<8x128xi1>, vector<8x128xi32>
      %cst_227 = arith.constant dense<2147483647> : vector<8xi32>
      %566 = vector.multi_reduction <minsi>, %565, %cst_227 [1] : vector<8x128xi32> to vector<8xi32>
      %567 = vector.shape_cast %566 : vector<8xi32> to vector<8x1xi32>
      %568 = vector.broadcast %567 : vector<8x1xi32> to vector<8x128xi32>
      %569 = arith.cmpi eq, %561, %568 : vector<8x128xi32>
      %570 = arith.extui %569 : vector<8x128xi1> to vector<8x128xi32>
      %571 = arith.sitofp %570 : vector<8x128xi32> to vector<8x128xf32>
      %572 = arith.truncf %571 : vector<8x128xf32> to vector<8x128xbf16>
      %c0_228 = arith.constant 0 : index
      %c0_229 = arith.constant 0 : index
      %573 = vector.load %arg10[%c0_228, %c0_229] : memref<128x128xbf16, #tpu.memory_space<vmem>>, vector<128x128xbf16>
      %cst_230 = arith.constant dense<0.000000e+00> : vector<8x128xf32>
      %574 = tpu.matmul %572, %573, %cst_230 {dimension_numbers = #tpu.dot_dimension_numbers<[1], [0], [0], [1], [0, 0, 1, 1], [], []>} : vector<8x128xbf16>, vector<128x128xbf16>, vector<8x128xf32> -> vector<8x128xf32>
      %c0_231 = arith.constant 0 : index
      %c0_232 = arith.constant 0 : index
      %575 = vector.load %arg12[%c0_231, %c0_232] : memref<8x128xf32, #tpu.memory_space<vmem>>, vector<8x128xf32>
      tpu.vector_store %arg12[%c0_231, %c0_232], %574 {strides = array<i32>} : memref<8x128xf32, #tpu.memory_space<vmem>>, vector<8x128xf32>,
    } else {
    }
    %c2_110 = arith.constant 2 : index
    %308 = memref.load %arg1[%c2_110] : memref<8xi32, #tpu.memory_space<smem>>
    %c0_i32_111 = arith.constant 0 : i32
    %309 = arith.cmpi ne, %308, %c0_i32_111 : i32
    %310 = arith.extui %309 : i1 to i32
    %c0_i32_112 = arith.constant 0 : i32
    %311 = arith.cmpi ne, %310, %c0_i32_112 : i32
    scf.if %311 {
      %c2_226 = arith.constant 2 : index
      %c0_227 = arith.constant 0 : index
      %c0_228 = arith.constant 0 : index
      %559 = vector.load %arg3[%c2_226, %c0_227, %c0_228] : memref<8x8x128xbf16, #tpu.memory_space<vmem>>, vector<1x8x128xbf16>
      %560 = vector.shape_cast %559 : vector<1x8x128xbf16> to vector<8x128xbf16>
      %561 = arith.extf %560 : vector<8x128xbf16> to vector<8x128xf32>
      %c0_229 = arith.constant 0 : index
      %c0_230 = arith.constant 0 : index
      %562 = vector.load %arg12[%c0_229, %c0_230] : memref<8x128xf32, #tpu.memory_space<vmem>>, vector<8x128xf32>
      tpu.vector_store %arg12[%c0_229, %c0_230], %561 {strides = array<i32>} : memref<8x128xf32, #tpu.memory_space<vmem>>, vector<8x128xf32>,
    } else {
    }
    %c0_113 = arith.constant 0 : index
    %c0_114 = arith.constant 0 : index
    %312 = vector.load %arg12[%c0_113, %c0_114] : memref<8x128xf32, #tpu.memory_space<vmem>>, vector<8x128xf32>
    %313 = arith.truncf %312 : vector<8x128xf32> to vector<8x128xbf16>
    %314 = arith.truncf %294 : vector<8x128xf32> to vector<8x128xbf16>
    %315 = tpu.concatenate %313, %314 in 1 : vector<8x128xbf16>, vector<8x128xbf16> -> vector<8x256xbf16>
    %c0_115 = arith.constant 0 : index
    %c0_116 = arith.constant 0 : index
    %316 = vector.load %arg6[%c0_115, %c0_116] : memref<256x512xbf16, #tpu.memory_space<vmem>>, vector<256x512xbf16>
    %cst_117 = arith.constant dense<0.000000e+00> : vector<8x512xf32>
    %317 = tpu.matmul %315, %316, %cst_117 {dimension_numbers = #tpu.dot_dimension_numbers<[1], [0], [0], [1], [0, 0, 1, 1], [], []>} : vector<8x256xbf16>, vector<256x512xbf16>, vector<8x512xf32> -> vector<8x512xf32>
    %c0_118 = arith.constant 0 : index
    %c0_119 = arith.constant 0 : index
    %318 = vector.load %arg7[%c0_118, %c0_119] : memref<1x512xf32, #tpu.memory_space<vmem>>, vector<1x512xf32>
    %319 = vector.broadcast %318 : vector<1x512xf32> to vector<8x512xf32>
    %320 = arith.addf %317, %319 : vector<8x512xf32>
    %321 = vector.extract_strided_slice %320 {offsets = [0, 0], sizes = [8, 128], strides = [1, 1]} : vector<8x512xf32> to vector<8x128xf32>
    %322 = arith.negf %321 : vector<8x128xf32>
    %323 = math.exp %322 : vector<8x128xf32>
    %cst_120 = arith.constant 1.000000e+00 : f32
    %324 = vector.broadcast %cst_120 : f32 to vector<8x128xf32>
    %325 = arith.addf %324, %323 : vector<8x128xf32>
    %326 = arith.divf %324, %325 : vector<8x128xf32>
    %327 = vector.extract_strided_slice %320 {offsets = [0, 128], sizes = [8, 128], strides = [1, 1]} : vector<8x512xf32> to vector<8x128xf32>
    %328 = arith.negf %327 : vector<8x128xf32>
    %329 = math.exp %328 : vector<8x128xf32>
    %cst_121 = arith.constant 1.000000e+00 : f32
    %330 = vector.broadcast %cst_121 : f32 to vector<8x128xf32>
    %331 = arith.addf %330, %329 : vector<8x128xf32>
    %332 = arith.divf %330, %331 : vector<8x128xf32>
    %333 = vector.extract_strided_slice %320 {offsets = [0, 256], sizes = [8, 128], strides = [1, 1]} : vector<8x512xf32> to vector<8x128xf32>
    %334 = math.tanh %333 : vector<8x128xf32>
    %335 = vector.extract_strided_slice %320 {offsets = [0, 384], sizes = [8, 128], strides = [1, 1]} : vector<8x512xf32> to vector<8x128xf32>
    %336 = arith.negf %335 : vector<8x128xf32>
    %337 = math.exp %336 : vector<8x128xf32>
    %cst_122 = arith.constant 1.000000e+00 : f32
    %338 = vector.broadcast %cst_122 : f32 to vector<8x128xf32>
    %339 = arith.addf %338, %337 : vector<8x128xf32>
    %340 = arith.divf %338, %339 : vector<8x128xf32>
    %341 = arith.mulf %332, %292 : vector<8x128xf32>
    %342 = arith.mulf %326, %334 : vector<8x128xf32>
    %343 = arith.addf %341, %342 : vector<8x128xf32>
    %344 = math.tanh %343 : vector<8x128xf32>
    %345 = arith.mulf %340, %344 : vector<8x128xf32>
    %346 = arith.truncf %345 : vector<8x128xf32> to vector<8x128xbf16>
    %c0_123 = arith.constant 0 : index
    %c0_124 = arith.constant 0 : index
    %347 = vector.load %arg8[%c0_123, %c0_124] : memref<128x128xbf16, #tpu.memory_space<vmem>>, vector<128x128xbf16>
    %cst_125 = arith.constant dense<0.000000e+00> : vector<8x128xf32>
    %348 = tpu.matmul %346, %347, %cst_125 {dimension_numbers = #tpu.dot_dimension_numbers<[1], [0], [0], [1], [0, 0, 1, 1], [], []>} : vector<8x128xbf16>, vector<128x128xbf16>, vector<8x128xf32> -> vector<8x128xf32>
    %c0_126 = arith.constant 0 : index
    %c0_127 = arith.constant 0 : index
    %349 = vector.load %arg9[%c0_126, %c0_127] : memref<1x128xf32, #tpu.memory_space<vmem>>, vector<1x128xf32>
    %350 = vector.broadcast %349 : vector<1x128xf32> to vector<8x128xf32>
    %351 = arith.addf %348, %350 : vector<8x128xf32>
    %c2_128 = arith.constant 2 : index
    %c0_129 = arith.constant 0 : index
    %c0_130 = arith.constant 0 : index
    %352 = vector.load %arg11[%c2_128, %c0_129, %c0_130] : memref<7x8x128xf32, #tpu.memory_space<vmem>>, vector<1x8x128xf32>
    %353 = vector.shape_cast %352 : vector<1x8x128xf32> to vector<8x128xf32>
    %354 = vector.shape_cast %351 : vector<8x128xf32> to vector<1x8x128xf32>
    tpu.vector_store %arg11[%c2_128, %c0_129, %c0_130], %354 {strides = array<i32>} : memref<7x8x128xf32, #tpu.memory_space<vmem>>, vector<1x8x128xf32>,
    %c3_131 = arith.constant 3 : index
    %355 = memref.load %arg1[%c3_131] : memref<8xi32, #tpu.memory_space<smem>>
    %c0_i32_132 = arith.constant 0 : i32
    %356 = arith.cmpi eq, %355, %c0_i32_132 : i32
    %357 = arith.extui %356 : i1 to i32
    %c0_i32_133 = arith.constant 0 : i32
    %358 = arith.cmpi ne, %357, %c0_i32_133 : i32
    scf.if %358 {
      %cst_226 = arith.constant dense<0xFF800000> : vector<8xf32>
      %559 = vector.multi_reduction <maximumf>, %351, %cst_226 [1] : vector<8x128xf32> to vector<8xf32>
      %560 = vector.shape_cast %559 : vector<8xf32> to vector<8x1xf32>
      %561 = tpu.iota {dimensions = array<i32: 1>} : vector<8x128xi32>
      %562 = vector.broadcast %560 : vector<8x1xf32> to vector<8x128xf32>
      %563 = arith.cmpf oeq, %351, %562 : vector<8x128xf32>
      %c128_i32 = arith.constant 128 : i32
      %564 = vector.broadcast %c128_i32 : i32 to vector<8x128xi32>
      %565 = arith.select %563, %561, %564 : vector<8x128xi1>, vector<8x128xi32>
      %cst_227 = arith.constant dense<2147483647> : vector<8xi32>
      %566 = vector.multi_reduction <minsi>, %565, %cst_227 [1] : vector<8x128xi32> to vector<8xi32>
      %567 = vector.shape_cast %566 : vector<8xi32> to vector<8x1xi32>
      %568 = vector.broadcast %567 : vector<8x1xi32> to vector<8x128xi32>
      %569 = arith.cmpi eq, %561, %568 : vector<8x128xi32>
      %570 = arith.extui %569 : vector<8x128xi1> to vector<8x128xi32>
      %571 = arith.sitofp %570 : vector<8x128xi32> to vector<8x128xf32>
      %572 = arith.truncf %571 : vector<8x128xf32> to vector<8x128xbf16>
      %c0_228 = arith.constant 0 : index
      %c0_229 = arith.constant 0 : index
      %573 = vector.load %arg10[%c0_228, %c0_229] : memref<128x128xbf16, #tpu.memory_space<vmem>>, vector<128x128xbf16>
      %cst_230 = arith.constant dense<0.000000e+00> : vector<8x128xf32>
      %574 = tpu.matmul %572, %573, %cst_230 {dimension_numbers = #tpu.dot_dimension_numbers<[1], [0], [0], [1], [0, 0, 1, 1], [], []>} : vector<8x128xbf16>, vector<128x128xbf16>, vector<8x128xf32> -> vector<8x128xf32>
      %c0_231 = arith.constant 0 : index
      %c0_232 = arith.constant 0 : index
      %575 = vector.load %arg12[%c0_231, %c0_232] : memref<8x128xf32, #tpu.memory_space<vmem>>, vector<8x128xf32>
      tpu.vector_store %arg12[%c0_231, %c0_232], %574 {strides = array<i32>} : memref<8x128xf32, #tpu.memory_space<vmem>>, vector<8x128xf32>,
    } else {
    }
    %c3_134 = arith.constant 3 : index
    %359 = memref.load %arg1[%c3_134] : memref<8xi32, #tpu.memory_space<smem>>
    %c0_i32_135 = arith.constant 0 : i32
    %360 = arith.cmpi ne, %359, %c0_i32_135 : i32
    %361 = arith.extui %360 : i1 to i32
    %c0_i32_136 = arith.constant 0 : i32
    %362 = arith.cmpi ne, %361, %c0_i32_136 : i32
    scf.if %362 {
      %c3_226 = arith.constant 3 : index
      %c0_227 = arith.constant 0 : index
      %c0_228 = arith.constant 0 : index
      %559 = vector.load %arg3[%c3_226, %c0_227, %c0_228] : memref<8x8x128xbf16, #tpu.memory_space<vmem>>, vector<1x8x128xbf16>
      %560 = vector.shape_cast %559 : vector<1x8x128xbf16> to vector<8x128xbf16>
      %561 = arith.extf %560 : vector<8x128xbf16> to vector<8x128xf32>
      %c0_229 = arith.constant 0 : index
      %c0_230 = arith.constant 0 : index
      %562 = vector.load %arg12[%c0_229, %c0_230] : memref<8x128xf32, #tpu.memory_space<vmem>>, vector<8x128xf32>
      tpu.vector_store %arg12[%c0_229, %c0_230], %561 {strides = array<i32>} : memref<8x128xf32, #tpu.memory_space<vmem>>, vector<8x128xf32>,
    } else {
    }
    %c0_137 = arith.constant 0 : index
    %c0_138 = arith.constant 0 : index
    %363 = vector.load %arg12[%c0_137, %c0_138] : memref<8x128xf32, #tpu.memory_space<vmem>>, vector<8x128xf32>
    %364 = arith.truncf %363 : vector<8x128xf32> to vector<8x128xbf16>
    %365 = arith.truncf %345 : vector<8x128xf32> to vector<8x128xbf16>
    %366 = tpu.concatenate %364, %365 in 1 : vector<8x128xbf16>, vector<8x128xbf16> -> vector<8x256xbf16>
    %c0_139 = arith.constant 0 : index
    %c0_140 = arith.constant 0 : index
    %367 = vector.load %arg6[%c0_139, %c0_140] : memref<256x512xbf16, #tpu.memory_space<vmem>>, vector<256x512xbf16>
    %cst_141 = arith.constant dense<0.000000e+00> : vector<8x512xf32>
    %368 = tpu.matmul %366, %367, %cst_141 {dimension_numbers = #tpu.dot_dimension_numbers<[1], [0], [0], [1], [0, 0, 1, 1], [], []>} : vector<8x256xbf16>, vector<256x512xbf16>, vector<8x512xf32> -> vector<8x512xf32>
    %c0_142 = arith.constant 0 : index
    %c0_143 = arith.constant 0 : index
    %369 = vector.load %arg7[%c0_142, %c0_143] : memref<1x512xf32, #tpu.memory_space<vmem>>, vector<1x512xf32>
    %370 = vector.broadcast %369 : vector<1x512xf32> to vector<8x512xf32>
    %371 = arith.addf %368, %370 : vector<8x512xf32>
    %372 = vector.extract_strided_slice %371 {offsets = [0, 0], sizes = [8, 128], strides = [1, 1]} : vector<8x512xf32> to vector<8x128xf32>
    %373 = arith.negf %372 : vector<8x128xf32>
    %374 = math.exp %373 : vector<8x128xf32>
    %cst_144 = arith.constant 1.000000e+00 : f32
    %375 = vector.broadcast %cst_144 : f32 to vector<8x128xf32>
    %376 = arith.addf %375, %374 : vector<8x128xf32>
    %377 = arith.divf %375, %376 : vector<8x128xf32>
    %378 = vector.extract_strided_slice %371 {offsets = [0, 128], sizes = [8, 128], strides = [1, 1]} : vector<8x512xf32> to vector<8x128xf32>
    %379 = arith.negf %378 : vector<8x128xf32>
    %380 = math.exp %379 : vector<8x128xf32>
    %cst_145 = arith.constant 1.000000e+00 : f32
    %381 = vector.broadcast %cst_145 : f32 to vector<8x128xf32>
    %382 = arith.addf %381, %380 : vector<8x128xf32>
    %383 = arith.divf %381, %382 : vector<8x128xf32>
    %384 = vector.extract_strided_slice %371 {offsets = [0, 256], sizes = [8, 128], strides = [1, 1]} : vector<8x512xf32> to vector<8x128xf32>
    %385 = math.tanh %384 : vector<8x128xf32>
    %386 = vector.extract_strided_slice %371 {offsets = [0, 384], sizes = [8, 128], strides = [1, 1]} : vector<8x512xf32> to vector<8x128xf32>
    %387 = arith.negf %386 : vector<8x128xf32>
    %388 = math.exp %387 : vector<8x128xf32>
    %cst_146 = arith.constant 1.000000e+00 : f32
    %389 = vector.broadcast %cst_146 : f32 to vector<8x128xf32>
    %390 = arith.addf %389, %388 : vector<8x128xf32>
    %391 = arith.divf %389, %390 : vector<8x128xf32>
    %392 = arith.mulf %383, %343 : vector<8x128xf32>
    %393 = arith.mulf %377, %385 : vector<8x128xf32>
    %394 = arith.addf %392, %393 : vector<8x128xf32>
    %395 = math.tanh %394 : vector<8x128xf32>
    %396 = arith.mulf %391, %395 : vector<8x128xf32>
    %397 = arith.truncf %396 : vector<8x128xf32> to vector<8x128xbf16>
    %c0_147 = arith.constant 0 : index
    %c0_148 = arith.constant 0 : index
    %398 = vector.load %arg8[%c0_147, %c0_148] : memref<128x128xbf16, #tpu.memory_space<vmem>>, vector<128x128xbf16>
    %cst_149 = arith.constant dense<0.000000e+00> : vector<8x128xf32>
    %399 = tpu.matmul %397, %398, %cst_149 {dimension_numbers = #tpu.dot_dimension_numbers<[1], [0], [0], [1], [0, 0, 1, 1], [], []>} : vector<8x128xbf16>, vector<128x128xbf16>, vector<8x128xf32> -> vector<8x128xf32>
    %c0_150 = arith.constant 0 : index
    %c0_151 = arith.constant 0 : index
    %400 = vector.load %arg9[%c0_150, %c0_151] : memref<1x128xf32, #tpu.memory_space<vmem>>, vector<1x128xf32>
    %401 = vector.broadcast %400 : vector<1x128xf32> to vector<8x128xf32>
    %402 = arith.addf %399, %401 : vector<8x128xf32>
    %c3_152 = arith.constant 3 : index
    %c0_153 = arith.constant 0 : index
    %c0_154 = arith.constant 0 : index
    %403 = vector.load %arg11[%c3_152, %c0_153, %c0_154] : memref<7x8x128xf32, #tpu.memory_space<vmem>>, vector<1x8x128xf32>
    %404 = vector.shape_cast %403 : vector<1x8x128xf32> to vector<8x128xf32>
    %405 = vector.shape_cast %402 : vector<8x128xf32> to vector<1x8x128xf32>
    tpu.vector_store %arg11[%c3_152, %c0_153, %c0_154], %405 {strides = array<i32>} : memref<7x8x128xf32, #tpu.memory_space<vmem>>, vector<1x8x128xf32>,
    %c4_155 = arith.constant 4 : index
    %406 = memref.load %arg1[%c4_155] : memref<8xi32, #tpu.memory_space<smem>>
    %c0_i32_156 = arith.constant 0 : i32
    %407 = arith.cmpi eq, %406, %c0_i32_156 : i32
    %408 = arith.extui %407 : i1 to i32
    %c0_i32_157 = arith.constant 0 : i32
    %409 = arith.cmpi ne, %408, %c0_i32_157 : i32
    scf.if %409 {
      %cst_226 = arith.constant dense<0xFF800000> : vector<8xf32>
      %559 = vector.multi_reduction <maximumf>, %402, %cst_226 [1] : vector<8x128xf32> to vector<8xf32>
      %560 = vector.shape_cast %559 : vector<8xf32> to vector<8x1xf32>
      %561 = tpu.iota {dimensions = array<i32: 1>} : vector<8x128xi32>
      %562 = vector.broadcast %560 : vector<8x1xf32> to vector<8x128xf32>
      %563 = arith.cmpf oeq, %402, %562 : vector<8x128xf32>
      %c128_i32 = arith.constant 128 : i32
      %564 = vector.broadcast %c128_i32 : i32 to vector<8x128xi32>
      %565 = arith.select %563, %561, %564 : vector<8x128xi1>, vector<8x128xi32>
      %cst_227 = arith.constant dense<2147483647> : vector<8xi32>
      %566 = vector.multi_reduction <minsi>, %565, %cst_227 [1] : vector<8x128xi32> to vector<8xi32>
      %567 = vector.shape_cast %566 : vector<8xi32> to vector<8x1xi32>
      %568 = vector.broadcast %567 : vector<8x1xi32> to vector<8x128xi32>
      %569 = arith.cmpi eq, %561, %568 : vector<8x128xi32>
      %570 = arith.extui %569 : vector<8x128xi1> to vector<8x128xi32>
      %571 = arith.sitofp %570 : vector<8x128xi32> to vector<8x128xf32>
      %572 = arith.truncf %571 : vector<8x128xf32> to vector<8x128xbf16>
      %c0_228 = arith.constant 0 : index
      %c0_229 = arith.constant 0 : index
      %573 = vector.load %arg10[%c0_228, %c0_229] : memref<128x128xbf16, #tpu.memory_space<vmem>>, vector<128x128xbf16>
      %cst_230 = arith.constant dense<0.000000e+00> : vector<8x128xf32>
      %574 = tpu.matmul %572, %573, %cst_230 {dimension_numbers = #tpu.dot_dimension_numbers<[1], [0], [0], [1], [0, 0, 1, 1], [], []>} : vector<8x128xbf16>, vector<128x128xbf16>, vector<8x128xf32> -> vector<8x128xf32>
      %c0_231 = arith.constant 0 : index
      %c0_232 = arith.constant 0 : index
      %575 = vector.load %arg12[%c0_231, %c0_232] : memref<8x128xf32, #tpu.memory_space<vmem>>, vector<8x128xf32>
      tpu.vector_store %arg12[%c0_231, %c0_232], %574 {strides = array<i32>} : memref<8x128xf32, #tpu.memory_space<vmem>>, vector<8x128xf32>,
    } else {
    }
    %c4_158 = arith.constant 4 : index
    %410 = memref.load %arg1[%c4_158] : memref<8xi32, #tpu.memory_space<smem>>
    %c0_i32_159 = arith.constant 0 : i32
    %411 = arith.cmpi ne, %410, %c0_i32_159 : i32
    %412 = arith.extui %411 : i1 to i32
    %c0_i32_160 = arith.constant 0 : i32
    %413 = arith.cmpi ne, %412, %c0_i32_160 : i32
    scf.if %413 {
      %c4_226 = arith.constant 4 : index
      %c0_227 = arith.constant 0 : index
      %c0_228 = arith.constant 0 : index
      %559 = vector.load %arg3[%c4_226, %c0_227, %c0_228] : memref<8x8x128xbf16, #tpu.memory_space<vmem>>, vector<1x8x128xbf16>
      %560 = vector.shape_cast %559 : vector<1x8x128xbf16> to vector<8x128xbf16>
      %561 = arith.extf %560 : vector<8x128xbf16> to vector<8x128xf32>
      %c0_229 = arith.constant 0 : index
      %c0_230 = arith.constant 0 : index
      %562 = vector.load %arg12[%c0_229, %c0_230] : memref<8x128xf32, #tpu.memory_space<vmem>>, vector<8x128xf32>
      tpu.vector_store %arg12[%c0_229, %c0_230], %561 {strides = array<i32>} : memref<8x128xf32, #tpu.memory_space<vmem>>, vector<8x128xf32>,
    } else {
    }
    %c0_161 = arith.constant 0 : index
    %c0_162 = arith.constant 0 : index
    %414 = vector.load %arg12[%c0_161, %c0_162] : memref<8x128xf32, #tpu.memory_space<vmem>>, vector<8x128xf32>
    %415 = arith.truncf %414 : vector<8x128xf32> to vector<8x128xbf16>
    %416 = arith.truncf %396 : vector<8x128xf32> to vector<8x128xbf16>
    %417 = tpu.concatenate %415, %416 in 1 : vector<8x128xbf16>, vector<8x128xbf16> -> vector<8x256xbf16>
    %c0_163 = arith.constant 0 : index
    %c0_164 = arith.constant 0 : index
    %418 = vector.load %arg6[%c0_163, %c0_164] : memref<256x512xbf16, #tpu.memory_space<vmem>>, vector<256x512xbf16>
    %cst_165 = arith.constant dense<0.000000e+00> : vector<8x512xf32>
    %419 = tpu.matmul %417, %418, %cst_165 {dimension_numbers = #tpu.dot_dimension_numbers<[1], [0], [0], [1], [0, 0, 1, 1], [], []>} : vector<8x256xbf16>, vector<256x512xbf16>, vector<8x512xf32> -> vector<8x512xf32>
    %c0_166 = arith.constant 0 : index
    %c0_167 = arith.constant 0 : index
    %420 = vector.load %arg7[%c0_166, %c0_167] : memref<1x512xf32, #tpu.memory_space<vmem>>, vector<1x512xf32>
    %421 = vector.broadcast %420 : vector<1x512xf32> to vector<8x512xf32>
    %422 = arith.addf %419, %421 : vector<8x512xf32>
    %423 = vector.extract_strided_slice %422 {offsets = [0, 0], sizes = [8, 128], strides = [1, 1]} : vector<8x512xf32> to vector<8x128xf32>
    %424 = arith.negf %423 : vector<8x128xf32>
    %425 = math.exp %424 : vector<8x128xf32>
    %cst_168 = arith.constant 1.000000e+00 : f32
    %426 = vector.broadcast %cst_168 : f32 to vector<8x128xf32>
    %427 = arith.addf %426, %425 : vector<8x128xf32>
    %428 = arith.divf %426, %427 : vector<8x128xf32>
    %429 = vector.extract_strided_slice %422 {offsets = [0, 128], sizes = [8, 128], strides = [1, 1]} : vector<8x512xf32> to vector<8x128xf32>
    %430 = arith.negf %429 : vector<8x128xf32>
    %431 = math.exp %430 : vector<8x128xf32>
    %cst_169 = arith.constant 1.000000e+00 : f32
    %432 = vector.broadcast %cst_169 : f32 to vector<8x128xf32>
    %433 = arith.addf %432, %431 : vector<8x128xf32>
    %434 = arith.divf %432, %433 : vector<8x128xf32>
    %435 = vector.extract_strided_slice %422 {offsets = [0, 256], sizes = [8, 128], strides = [1, 1]} : vector<8x512xf32> to vector<8x128xf32>
    %436 = math.tanh %435 : vector<8x128xf32>
    %437 = vector.extract_strided_slice %422 {offsets = [0, 384], sizes = [8, 128], strides = [1, 1]} : vector<8x512xf32> to vector<8x128xf32>
    %438 = arith.negf %437 : vector<8x128xf32>
    %439 = math.exp %438 : vector<8x128xf32>
    %cst_170 = arith.constant 1.000000e+00 : f32
    %440 = vector.broadcast %cst_170 : f32 to vector<8x128xf32>
    %441 = arith.addf %440, %439 : vector<8x128xf32>
    %442 = arith.divf %440, %441 : vector<8x128xf32>
    %443 = arith.mulf %434, %394 : vector<8x128xf32>
    %444 = arith.mulf %428, %436 : vector<8x128xf32>
    %445 = arith.addf %443, %444 : vector<8x128xf32>
    %446 = math.tanh %445 : vector<8x128xf32>
    %447 = arith.mulf %442, %446 : vector<8x128xf32>
    %448 = arith.truncf %447 : vector<8x128xf32> to vector<8x128xbf16>
    %c0_171 = arith.constant 0 : index
    %c0_172 = arith.constant 0 : index
    %449 = vector.load %arg8[%c0_171, %c0_172] : memref<128x128xbf16, #tpu.memory_space<vmem>>, vector<128x128xbf16>
    %cst_173 = arith.constant dense<0.000000e+00> : vector<8x128xf32>
    %450 = tpu.matmul %448, %449, %cst_173 {dimension_numbers = #tpu.dot_dimension_numbers<[1], [0], [0], [1], [0, 0, 1, 1], [], []>} : vector<8x128xbf16>, vector<128x128xbf16>, vector<8x128xf32> -> vector<8x128xf32>
    %c0_174 = arith.constant 0 : index
    %c0_175 = arith.constant 0 : index
    %451 = vector.load %arg9[%c0_174, %c0_175] : memref<1x128xf32, #tpu.memory_space<vmem>>, vector<1x128xf32>
    %452 = vector.broadcast %451 : vector<1x128xf32> to vector<8x128xf32>
    %453 = arith.addf %450, %452 : vector<8x128xf32>
    %c4_176 = arith.constant 4 : index
    %c0_177 = arith.constant 0 : index
    %c0_178 = arith.constant 0 : index
    %454 = vector.load %arg11[%c4_176, %c0_177, %c0_178] : memref<7x8x128xf32, #tpu.memory_space<vmem>>, vector<1x8x128xf32>
    %455 = vector.shape_cast %454 : vector<1x8x128xf32> to vector<8x128xf32>
    %456 = vector.shape_cast %453 : vector<8x128xf32> to vector<1x8x128xf32>
    tpu.vector_store %arg11[%c4_176, %c0_177, %c0_178], %456 {strides = array<i32>} : memref<7x8x128xf32, #tpu.memory_space<vmem>>, vector<1x8x128xf32>,
    %c5_179 = arith.constant 5 : index
    %457 = memref.load %arg1[%c5_179] : memref<8xi32, #tpu.memory_space<smem>>
    %c0_i32_180 = arith.constant 0 : i32
    %458 = arith.cmpi eq, %457, %c0_i32_180 : i32
    %459 = arith.extui %458 : i1 to i32
    %c0_i32_181 = arith.constant 0 : i32
    %460 = arith.cmpi ne, %459, %c0_i32_181 : i32
    scf.if %460 {
      %cst_226 = arith.constant dense<0xFF800000> : vector<8xf32>
      %559 = vector.multi_reduction <maximumf>, %453, %cst_226 [1] : vector<8x128xf32> to vector<8xf32>
      %560 = vector.shape_cast %559 : vector<8xf32> to vector<8x1xf32>
      %561 = tpu.iota {dimensions = array<i32: 1>} : vector<8x128xi32>
      %562 = vector.broadcast %560 : vector<8x1xf32> to vector<8x128xf32>
      %563 = arith.cmpf oeq, %453, %562 : vector<8x128xf32>
      %c128_i32 = arith.constant 128 : i32
      %564 = vector.broadcast %c128_i32 : i32 to vector<8x128xi32>
      %565 = arith.select %563, %561, %564 : vector<8x128xi1>, vector<8x128xi32>
      %cst_227 = arith.constant dense<2147483647> : vector<8xi32>
      %566 = vector.multi_reduction <minsi>, %565, %cst_227 [1] : vector<8x128xi32> to vector<8xi32>
      %567 = vector.shape_cast %566 : vector<8xi32> to vector<8x1xi32>
      %568 = vector.broadcast %567 : vector<8x1xi32> to vector<8x128xi32>
      %569 = arith.cmpi eq, %561, %568 : vector<8x128xi32>
      %570 = arith.extui %569 : vector<8x128xi1> to vector<8x128xi32>
      %571 = arith.sitofp %570 : vector<8x128xi32> to vector<8x128xf32>
      %572 = arith.truncf %571 : vector<8x128xf32> to vector<8x128xbf16>
      %c0_228 = arith.constant 0 : index
      %c0_229 = arith.constant 0 : index
      %573 = vector.load %arg10[%c0_228, %c0_229] : memref<128x128xbf16, #tpu.memory_space<vmem>>, vector<128x128xbf16>
      %cst_230 = arith.constant dense<0.000000e+00> : vector<8x128xf32>
      %574 = tpu.matmul %572, %573, %cst_230 {dimension_numbers = #tpu.dot_dimension_numbers<[1], [0], [0], [1], [0, 0, 1, 1], [], []>} : vector<8x128xbf16>, vector<128x128xbf16>, vector<8x128xf32> -> vector<8x128xf32>
      %c0_231 = arith.constant 0 : index
      %c0_232 = arith.constant 0 : index
      %575 = vector.load %arg12[%c0_231, %c0_232] : memref<8x128xf32, #tpu.memory_space<vmem>>, vector<8x128xf32>
      tpu.vector_store %arg12[%c0_231, %c0_232], %574 {strides = array<i32>} : memref<8x128xf32, #tpu.memory_space<vmem>>, vector<8x128xf32>,
    } else {
    }
    %c5_182 = arith.constant 5 : index
    %461 = memref.load %arg1[%c5_182] : memref<8xi32, #tpu.memory_space<smem>>
    %c0_i32_183 = arith.constant 0 : i32
    %462 = arith.cmpi ne, %461, %c0_i32_183 : i32
    %463 = arith.extui %462 : i1 to i32
    %c0_i32_184 = arith.constant 0 : i32
    %464 = arith.cmpi ne, %463, %c0_i32_184 : i32
    scf.if %464 {
      %c5_226 = arith.constant 5 : index
      %c0_227 = arith.constant 0 : index
      %c0_228 = arith.constant 0 : index
      %559 = vector.load %arg3[%c5_226, %c0_227, %c0_228] : memref<8x8x128xbf16, #tpu.memory_space<vmem>>, vector<1x8x128xbf16>
      %560 = vector.shape_cast %559 : vector<1x8x128xbf16> to vector<8x128xbf16>
      %561 = arith.extf %560 : vector<8x128xbf16> to vector<8x128xf32>
      %c0_229 = arith.constant 0 : index
      %c0_230 = arith.constant 0 : index
      %562 = vector.load %arg12[%c0_229, %c0_230] : memref<8x128xf32, #tpu.memory_space<vmem>>, vector<8x128xf32>
      tpu.vector_store %arg12[%c0_229, %c0_230], %561 {strides = array<i32>} : memref<8x128xf32, #tpu.memory_space<vmem>>, vector<8x128xf32>,
    } else {
    }
    %c0_185 = arith.constant 0 : index
    %c0_186 = arith.constant 0 : index
    %465 = vector.load %arg12[%c0_185, %c0_186] : memref<8x128xf32, #tpu.memory_space<vmem>>, vector<8x128xf32>
    %466 = arith.truncf %465 : vector<8x128xf32> to vector<8x128xbf16>
    %467 = arith.truncf %447 : vector<8x128xf32> to vector<8x128xbf16>
    %468 = tpu.concatenate %466, %467 in 1 : vector<8x128xbf16>, vector<8x128xbf16> -> vector<8x256xbf16>
    %c0_187 = arith.constant 0 : index
    %c0_188 = arith.constant 0 : index
    %469 = vector.load %arg6[%c0_187, %c0_188] : memref<256x512xbf16, #tpu.memory_space<vmem>>, vector<256x512xbf16>
    %cst_189 = arith.constant dense<0.000000e+00> : vector<8x512xf32>
    %470 = tpu.matmul %468, %469, %cst_189 {dimension_numbers = #tpu.dot_dimension_numbers<[1], [0], [0], [1], [0, 0, 1, 1], [], []>} : vector<8x256xbf16>, vector<256x512xbf16>, vector<8x512xf32> -> vector<8x512xf32>
    %c0_190 = arith.constant 0 : index
    %c0_191 = arith.constant 0 : index
    %471 = vector.load %arg7[%c0_190, %c0_191] : memref<1x512xf32, #tpu.memory_space<vmem>>, vector<1x512xf32>
    %472 = vector.broadcast %471 : vector<1x512xf32> to vector<8x512xf32>
    %473 = arith.addf %470, %472 : vector<8x512xf32>
    %474 = vector.extract_strided_slice %473 {offsets = [0, 0], sizes = [8, 128], strides = [1, 1]} : vector<8x512xf32> to vector<8x128xf32>
    %475 = arith.negf %474 : vector<8x128xf32>
    %476 = math.exp %475 : vector<8x128xf32>
    %cst_192 = arith.constant 1.000000e+00 : f32
    %477 = vector.broadcast %cst_192 : f32 to vector<8x128xf32>
    %478 = arith.addf %477, %476 : vector<8x128xf32>
    %479 = arith.divf %477, %478 : vector<8x128xf32>
    %480 = vector.extract_strided_slice %473 {offsets = [0, 128], sizes = [8, 128], strides = [1, 1]} : vector<8x512xf32> to vector<8x128xf32>
    %481 = arith.negf %480 : vector<8x128xf32>
    %482 = math.exp %481 : vector<8x128xf32>
    %cst_193 = arith.constant 1.000000e+00 : f32
    %483 = vector.broadcast %cst_193 : f32 to vector<8x128xf32>
    %484 = arith.addf %483, %482 : vector<8x128xf32>
    %485 = arith.divf %483, %484 : vector<8x128xf32>
    %486 = vector.extract_strided_slice %473 {offsets = [0, 256], sizes = [8, 128], strides = [1, 1]} : vector<8x512xf32> to vector<8x128xf32>
    %487 = math.tanh %486 : vector<8x128xf32>
    %488 = vector.extract_strided_slice %473 {offsets = [0, 384], sizes = [8, 128], strides = [1, 1]} : vector<8x512xf32> to vector<8x128xf32>
    %489 = arith.negf %488 : vector<8x128xf32>
    %490 = math.exp %489 : vector<8x128xf32>
    %cst_194 = arith.constant 1.000000e+00 : f32
    %491 = vector.broadcast %cst_194 : f32 to vector<8x128xf32>
    %492 = arith.addf %491, %490 : vector<8x128xf32>
    %493 = arith.divf %491, %492 : vector<8x128xf32>
    %494 = arith.mulf %485, %445 : vector<8x128xf32>
    %495 = arith.mulf %479, %487 : vector<8x128xf32>
    %496 = arith.addf %494, %495 : vector<8x128xf32>
    %497 = math.tanh %496 : vector<8x128xf32>
    %498 = arith.mulf %493, %497 : vector<8x128xf32>
    %499 = arith.truncf %498 : vector<8x128xf32> to vector<8x128xbf16>
    %c0_195 = arith.constant 0 : index
    %c0_196 = arith.constant 0 : index
    %500 = vector.load %arg8[%c0_195, %c0_196] : memref<128x128xbf16, #tpu.memory_space<vmem>>, vector<128x128xbf16>
    %cst_197 = arith.constant dense<0.000000e+00> : vector<8x128xf32>
    %501 = tpu.matmul %499, %500, %cst_197 {dimension_numbers = #tpu.dot_dimension_numbers<[1], [0], [0], [1], [0, 0, 1, 1], [], []>} : vector<8x128xbf16>, vector<128x128xbf16>, vector<8x128xf32> -> vector<8x128xf32>
    %c0_198 = arith.constant 0 : index
    %c0_199 = arith.constant 0 : index
    %502 = vector.load %arg9[%c0_198, %c0_199] : memref<1x128xf32, #tpu.memory_space<vmem>>, vector<1x128xf32>
    %503 = vector.broadcast %502 : vector<1x128xf32> to vector<8x128xf32>
    %504 = arith.addf %501, %503 : vector<8x128xf32>
    %c5_200 = arith.constant 5 : index
    %c0_201 = arith.constant 0 : index
    %c0_202 = arith.constant 0 : index
    %505 = vector.load %arg11[%c5_200, %c0_201, %c0_202] : memref<7x8x128xf32, #tpu.memory_space<vmem>>, vector<1x8x128xf32>
    %506 = vector.shape_cast %505 : vector<1x8x128xf32> to vector<8x128xf32>
    %507 = vector.shape_cast %504 : vector<8x128xf32> to vector<1x8x128xf32>
    tpu.vector_store %arg11[%c5_200, %c0_201, %c0_202], %507 {strides = array<i32>} : memref<7x8x128xf32, #tpu.memory_space<vmem>>, vector<1x8x128xf32>,
    %c6 = arith.constant 6 : index
    %508 = memref.load %arg1[%c6] : memref<8xi32, #tpu.memory_space<smem>>
    %c0_i32_203 = arith.constant 0 : i32
    %509 = arith.cmpi eq, %508, %c0_i32_203 : i32
    %510 = arith.extui %509 : i1 to i32
    %c0_i32_204 = arith.constant 0 : i32
    %511 = arith.cmpi ne, %510, %c0_i32_204 : i32
    scf.if %511 {
      %cst_226 = arith.constant dense<0xFF800000> : vector<8xf32>
      %559 = vector.multi_reduction <maximumf>, %504, %cst_226 [1] : vector<8x128xf32> to vector<8xf32>
      %560 = vector.shape_cast %559 : vector<8xf32> to vector<8x1xf32>
      %561 = tpu.iota {dimensions = array<i32: 1>} : vector<8x128xi32>
      %562 = vector.broadcast %560 : vector<8x1xf32> to vector<8x128xf32>
      %563 = arith.cmpf oeq, %504, %562 : vector<8x128xf32>
      %c128_i32 = arith.constant 128 : i32
      %564 = vector.broadcast %c128_i32 : i32 to vector<8x128xi32>
      %565 = arith.select %563, %561, %564 : vector<8x128xi1>, vector<8x128xi32>
      %cst_227 = arith.constant dense<2147483647> : vector<8xi32>
      %566 = vector.multi_reduction <minsi>, %565, %cst_227 [1] : vector<8x128xi32> to vector<8xi32>
      %567 = vector.shape_cast %566 : vector<8xi32> to vector<8x1xi32>
      %568 = vector.broadcast %567 : vector<8x1xi32> to vector<8x128xi32>
      %569 = arith.cmpi eq, %561, %568 : vector<8x128xi32>
      %570 = arith.extui %569 : vector<8x128xi1> to vector<8x128xi32>
      %571 = arith.sitofp %570 : vector<8x128xi32> to vector<8x128xf32>
      %572 = arith.truncf %571 : vector<8x128xf32> to vector<8x128xbf16>
      %c0_228 = arith.constant 0 : index
      %c0_229 = arith.constant 0 : index
      %573 = vector.load %arg10[%c0_228, %c0_229] : memref<128x128xbf16, #tpu.memory_space<vmem>>, vector<128x128xbf16>
      %cst_230 = arith.constant dense<0.000000e+00> : vector<8x128xf32>
      %574 = tpu.matmul %572, %573, %cst_230 {dimension_numbers = #tpu.dot_dimension_numbers<[1], [0], [0], [1], [0, 0, 1, 1], [], []>} : vector<8x128xbf16>, vector<128x128xbf16>, vector<8x128xf32> -> vector<8x128xf32>
      %c0_231 = arith.constant 0 : index
      %c0_232 = arith.constant 0 : index
      %575 = vector.load %arg12[%c0_231, %c0_232] : memref<8x128xf32, #tpu.memory_space<vmem>>, vector<8x128xf32>
      tpu.vector_store %arg12[%c0_231, %c0_232], %574 {strides = array<i32>} : memref<8x128xf32, #tpu.memory_space<vmem>>, vector<8x128xf32>,
    } else {
    }
    %c6_205 = arith.constant 6 : index
    %512 = memref.load %arg1[%c6_205] : memref<8xi32, #tpu.memory_space<smem>>
    %c0_i32_206 = arith.constant 0 : i32
    %513 = arith.cmpi ne, %512, %c0_i32_206 : i32
    %514 = arith.extui %513 : i1 to i32
    %c0_i32_207 = arith.constant 0 : i32
    %515 = arith.cmpi ne, %514, %c0_i32_207 : i32
    scf.if %515 {
      %c6_226 = arith.constant 6 : index
      %c0_227 = arith.constant 0 : index
      %c0_228 = arith.constant 0 : index
      %559 = vector.load %arg3[%c6_226, %c0_227, %c0_228] : memref<8x8x128xbf16, #tpu.memory_space<vmem>>, vector<1x8x128xbf16>
      %560 = vector.shape_cast %559 : vector<1x8x128xbf16> to vector<8x128xbf16>
      %561 = arith.extf %560 : vector<8x128xbf16> to vector<8x128xf32>
      %c0_229 = arith.constant 0 : index
      %c0_230 = arith.constant 0 : index
      %562 = vector.load %arg12[%c0_229, %c0_230] : memref<8x128xf32, #tpu.memory_space<vmem>>, vector<8x128xf32>
      tpu.vector_store %arg12[%c0_229, %c0_230], %561 {strides = array<i32>} : memref<8x128xf32, #tpu.memory_space<vmem>>, vector<8x128xf32>,
    } else {
    }
    %c0_208 = arith.constant 0 : index
    %c0_209 = arith.constant 0 : index
    %516 = vector.load %arg12[%c0_208, %c0_209] : memref<8x128xf32, #tpu.memory_space<vmem>>, vector<8x128xf32>
    %517 = arith.truncf %516 : vector<8x128xf32> to vector<8x128xbf16>
    %518 = arith.truncf %498 : vector<8x128xf32> to vector<8x128xbf16>
    %519 = tpu.concatenate %517, %518 in 1 : vector<8x128xbf16>, vector<8x128xbf16> -> vector<8x256xbf16>
    %c0_210 = arith.constant 0 : index
    %c0_211 = arith.constant 0 : index
    %520 = vector.load %arg6[%c0_210, %c0_211] : memref<256x512xbf16, #tpu.memory_space<vmem>>, vector<256x512xbf16>
    %cst_212 = arith.constant dense<0.000000e+00> : vector<8x512xf32>
    %521 = tpu.matmul %519, %520, %cst_212 {dimension_numbers = #tpu.dot_dimension_numbers<[1], [0], [0], [1], [0, 0, 1, 1], [], []>} : vector<8x256xbf16>, vector<256x512xbf16>, vector<8x512xf32> -> vector<8x512xf32>
    %c0_213 = arith.constant 0 : index
    %c0_214 = arith.constant 0 : index
    %522 = vector.load %arg7[%c0_213, %c0_214] : memref<1x512xf32, #tpu.memory_space<vmem>>, vector<1x512xf32>
    %523 = vector.broadcast %522 : vector<1x512xf32> to vector<8x512xf32>
    %524 = arith.addf %521, %523 : vector<8x512xf32>
    %525 = vector.extract_strided_slice %524 {offsets = [0, 0], sizes = [8, 128], strides = [1, 1]} : vector<8x512xf32> to vector<8x128xf32>
    %526 = arith.negf %525 : vector<8x128xf32>
    %527 = math.exp %526 : vector<8x128xf32>
    %cst_215 = arith.constant 1.000000e+00 : f32
    %528 = vector.broadcast %cst_215 : f32 to vector<8x128xf32>
    %529 = arith.addf %528, %527 : vector<8x128xf32>
    %530 = arith.divf %528, %529 : vector<8x128xf32>
    %531 = vector.extract_strided_slice %524 {offsets = [0, 128], sizes = [8, 128], strides = [1, 1]} : vector<8x512xf32> to vector<8x128xf32>
    %532 = arith.negf %531 : vector<8x128xf32>
    %533 = math.exp %532 : vector<8x128xf32>
    %cst_216 = arith.constant 1.000000e+00 : f32
    %534 = vector.broadcast %cst_216 : f32 to vector<8x128xf32>
    %535 = arith.addf %534, %533 : vector<8x128xf32>
    %536 = arith.divf %534, %535 : vector<8x128xf32>
    %537 = vector.extract_strided_slice %524 {offsets = [0, 256], sizes = [8, 128], strides = [1, 1]} : vector<8x512xf32> to vector<8x128xf32>
    %538 = math.tanh %537 : vector<8x128xf32>
    %539 = vector.extract_strided_slice %524 {offsets = [0, 384], sizes = [8, 128], strides = [1, 1]} : vector<8x512xf32> to vector<8x128xf32>
    %540 = arith.negf %539 : vector<8x128xf32>
    %541 = math.exp %540 : vector<8x128xf32>
    %cst_217 = arith.constant 1.000000e+00 : f32
    %542 = vector.broadcast %cst_217 : f32 to vector<8x128xf32>
    %543 = arith.addf %542, %541 : vector<8x128xf32>
    %544 = arith.divf %542, %543 : vector<8x128xf32>
    %545 = arith.mulf %536, %496 : vector<8x128xf32>
    %546 = arith.mulf %530, %538 : vector<8x128xf32>
    %547 = arith.addf %545, %546 : vector<8x128xf32>
    %548 = math.tanh %547 : vector<8x128xf32>
    %549 = arith.mulf %544, %548 : vector<8x128xf32>
    %550 = arith.truncf %549 : vector<8x128xf32> to vector<8x128xbf16>
    %c0_218 = arith.constant 0 : index
    %c0_219 = arith.constant 0 : index
    %551 = vector.load %arg8[%c0_218, %c0_219] : memref<128x128xbf16, #tpu.memory_space<vmem>>, vector<128x128xbf16>
    %cst_220 = arith.constant dense<0.000000e+00> : vector<8x128xf32>
    %552 = tpu.matmul %550, %551, %cst_220 {dimension_numbers = #tpu.dot_dimension_numbers<[1], [0], [0], [1], [0, 0, 1, 1], [], []>} : vector<8x128xbf16>, vector<128x128xbf16>, vector<8x128xf32> -> vector<8x128xf32>
    %c0_221 = arith.constant 0 : index
    %c0_222 = arith.constant 0 : index
    %553 = vector.load %arg9[%c0_221, %c0_222] : memref<1x128xf32, #tpu.memory_space<vmem>>, vector<1x128xf32>
    %554 = vector.broadcast %553 : vector<1x128xf32> to vector<8x128xf32>
    %555 = arith.addf %552, %554 : vector<8x128xf32>
    %c6_223 = arith.constant 6 : index
    %c0_224 = arith.constant 0 : index
    %c0_225 = arith.constant 0 : index
    %556 = vector.load %arg11[%c6_223, %c0_224, %c0_225] : memref<7x8x128xf32, #tpu.memory_space<vmem>>, vector<1x8x128xf32>
    %557 = vector.shape_cast %556 : vector<1x8x128xf32> to vector<8x128xf32>
    %558 = vector.shape_cast %555 : vector<8x128xf32> to vector<1x8x128xf32>
    tpu.vector_store %arg11[%c6_223, %c0_224, %c0_225], %558 {strides = array<i32>} : memref<7x8x128xf32, #tpu.memory_space<vmem>>, vector<1x8x128xf32>,
    return
  }
  func.func @transform_0(%arg0: i32, %arg1: memref<8xi32, #tpu.memory_space<smem>>) -> (i32, i32, i32) {
    %c0_i32 = arith.constant 0 : i32
    %c0_i32_0 = arith.constant 0 : i32
    %c0_i32_1 = arith.constant 0 : i32
    %c0_i32_2 = arith.constant 0 : i32
    return %c0_i32, %c0_i32_0, %c0_i32_1 : i32, i32, i32
  }
  func.func @transform_1(%arg0: i32, %arg1: memref<8xi32, #tpu.memory_space<smem>>) -> (i32, i32, i32) {
    %c0_i32 = arith.constant 0 : i32
    %c0_i32_0 = arith.constant 0 : i32
    %c0_i32_1 = arith.constant 0 : i32
    %c0_i32_2 = arith.constant 0 : i32
    return %c0_i32, %c0_i32_0, %c0_i32_1 : i32, i32, i32
  }
  func.func @transform_2(%arg0: i32, %arg1: memref<8xi32, #tpu.memory_space<smem>>) -> (i32, i32) {
    %c0_i32 = arith.constant 0 : i32
    %c0_i32_0 = arith.constant 0 : i32
    %c0_i32_1 = arith.constant 0 : i32
    return %c0_i32, %c0_i32_0 : i32, i32
  }
  func.func @transform_3(%arg0: i32, %arg1: memref<8xi32, #tpu.memory_space<smem>>) -> (i32, i32) {
    %c0_i32 = arith.constant 0 : i32
    %c0_i32_0 = arith.constant 0 : i32
    %c0_i32_1 = arith.constant 0 : i32
    return %c0_i32, %c0_i32_0 : i32, i32
  }
  func.func @transform_4(%arg0: i32, %arg1: memref<8xi32, #tpu.memory_space<smem>>) -> (i32, i32) {
    %c0_i32 = arith.constant 0 : i32
    %c0_i32_0 = arith.constant 0 : i32
    %c0_i32_1 = arith.constant 0 : i32
    return %c0_i32, %c0_i32_0 : i32, i32
  }
  func.func @transform_5(%arg0: i32, %arg1: memref<8xi32, #tpu.memory_space<smem>>) -> (i32, i32) {
    %c0_i32 = arith.constant 0 : i32
    %c0_i32_0 = arith.constant 0 : i32
    %c0_i32_1 = arith.constant 0 : i32
    return %c0_i32, %c0_i32_0 : i32, i32
  }
  func.func @transform_6(%arg0: i32, %arg1: memref<8xi32, #tpu.memory_space<smem>>) -> (i32, i32) {
    %c0_i32 = arith.constant 0 : i32
    %c0_i32_0 = arith.constant 0 : i32
    %c0_i32_1 = arith.constant 0 : i32
    return %c0_i32, %c0_i32_0 : i32, i32
  }
  func.func @transform_7(%arg0: i32, %arg1: memref<8xi32, #tpu.memory_space<smem>>) -> (i32, i32) {
    %c0_i32 = arith.constant 0 : i32
    %c0_i32_0 = arith.constant 0 : i32
    %c0_i32_1 = arith.constant 0 : i32
    return %c0_i32, %c0_i32_0 : i32, i32
  }
  func.func @transform_8(%arg0: i32, %arg1: memref<8xi32, #tpu.memory_space<smem>>) -> (i32, i32) {
    %c0_i32 = arith.constant 0 : i32
    %c0_i32_0 = arith.constant 0 : i32
    %c0_i32_1 = arith.constant 0 : i32
    return %c0_i32, %c0_i32_0 : i32, i32
  }
  func.func @transform_9(%arg0: i32, %arg1: memref<8xi32, #tpu.memory_space<smem>>) -> (i32, i32, i32) {
    %c0_i32 = arith.constant 0 : i32
    %c0_i32_0 = arith.constant 0 : i32
    %c0_i32_1 = arith.constant 0 : i32
    %c0_i32_2 = arith.constant 0 : i32
    return %c0_i32, %c0_i32_0, %c0_i32_1 : i32, i32, i32
  }
}

</mosaic_0001>

<llo_original>
// kernel: seq2seq_forward.1
$region0: #{seq2seq_forward.1}
  #allocation0 [shape = 'u32[]', space=smem, size = 0x4, offset = 0x4, fixed_abs, tag = 'smem constant byte address 0x4 - core index']
  #allocation1 [shape = 'u32[144,128]{1,0:T(1,128)}', space=vmem, size = 0x12000, scoped, tag = 'internal scratch']
  #allocation2 [shape = 'f32[8,128]{1,0:T(8,128)}', space=vmem, size = 0x1000, scoped, tag = 'scratch operand']
  #allocation3 [shape = 's32[1]{0}', space=sflag, size = 0x4, scoped, tag = 'scoped memory for seq2seq_forward.1']
  #allocation4 [shape = 'u8[512]{0}', space=smem, size = 0x200, scoped, tag = 'prefetched SMEM operand 0']
  %s0 = inlined_call_operand.vmem [shape: s32[8], index: 0, kind: input, shape index: {}]
  %s1 = inlined_call_operand.vmem [shape: bf16[6,8,128], index: 1, kind: input, shape index: {}]
  %s2 = inlined_call_operand.vmem [shape: bf16[8,8,128], index: 2, kind: input, shape index: {}]
  %s3 = inlined_call_operand.vmem [shape: bf16[256,512], index: 3, kind: input, shape index: {}]
  %s4 = inlined_call_operand.vmem [shape: f32[1,512], index: 4, kind: input, shape index: {}]
  %s5 = inlined_call_operand.hbm [shape: bf16[256,512], index: 5, kind: input, shape index: {}]
  %s6 = inlined_call_operand.vmem [shape: f32[1,512], index: 6, kind: input, shape index: {}]
  %s7 = inlined_call_operand.vmem [shape: bf16[128,128], index: 7, kind: input, shape index: {}]
  %s8 = inlined_call_operand.vmem [shape: f32[1,128], index: 8, kind: input, shape index: {}]
  %s9 = inlined_call_operand.vmem [shape: bf16[128,128], index: 9, kind: input, shape index: {}]
  %s10 = inlined_call_operand.vmem [shape: f32[7,8,128], index: 10, kind: output, shape index: {}]
  %s11 = sld [smem:[#allocation0]]
  $region98: #{seq2seq_forward.1} parent=0
    _
  %s13 = ssub.s32 1, %s11
  %s14 = scalar_select 0, %s13, %s11
  %s15 = sshll.u32 %s0, 4
  %s16 = int_to_ptr.vmem [resolvable:$true] %s15
  %18 = dma.vmem_to_smem %s16, 16, [#allocation4], [#allocation3]
  %19 = dma.done [#allocation3], 16
  %20 = sfence
  $region1: #{seq2seq_forward.1} parent=0
    #allocation5 [shape = 'u8[262144]{0}', space=vmem, size = 0x40000, scoped, tag = 'input window, operand 5, single buffered']
    #allocation6 [shape = 's32[1]{0}', space=sflag, size = 0x4, scoped, tag = 'scoped memory for seq2seq_forward.1']
    %21 = vsyncpa [#allocation6], 0
    // Predicated region
    $region2: #{seq2seq_forward.1} parent=1 // pred_check
      _
    $region3: #{seq2seq_forward.1} parent=1 // pred_check_branch
      %23 = sbr.rel (0) target = $region5
    $region4: #{seq2seq_forward.1} parent=1 // pred_region
      _
    $region5: #{seq2seq_forward.1} parent=1 // pred_fallthru
      _
    // Predicated region
    $region6: #{seq2seq_forward.1} parent=1 // pred_check
      _
    $region7: #{seq2seq_forward.1} parent=1 // pred_check_branch
      %25 = sbr.rel (0) target = $region9
    $region8: #{seq2seq_forward.1} parent=1 // pred_region
      _
    $region9: #{seq2seq_forward.1} parent=1 // pred_fallthru
      _
    // Predicated region
    $region10: #{seq2seq_forward.1} parent=1 // pred_check
      _
    $region11: #{seq2seq_forward.1} parent=1 // pred_check_branch
      %27 = sbr.rel (0) target = $region13
    $region12: #{seq2seq_forward.1} parent=1 // pred_region
      _
    $region13: #{seq2seq_forward.1} parent=1 // pred_fallthru
      _
    // Predicated region
    $region14: #{seq2seq_forward.1} parent=1 // pred_check
      _
    $region15: #{seq2seq_forward.1} parent=1 // pred_check_branch
      %29 = sbr.rel (0) target = $region17
    $region16: #{seq2seq_forward.1} parent=1 // pred_region
      _
    $region17: #{seq2seq_forward.1} parent=1 // pred_fallthru
      _
    // Predicated region
    $region18: #{seq2seq_forward.1} parent=1 // pred_check
      _
    $region19: #{seq2seq_forward.1} parent=1 // pred_check_branch
      %31 = sbr.rel (0) target = $region21
    $region20: #{seq2seq_forward.1} parent=1 // pred_region
      %s33 = ssub.s32 8192, 8192
      %34 = vsyncadd [#allocation6], %s33
      %s35 = sshll.u32 [#allocation5], 4
      %s36 = int_to_ptr.vmem [resolvable:$true] %s35
      %41 = dma.hbm_to_vmem [thread:$0]  %s5, 8192, %s36, [#allocation6], 256, 256, 16
    $region21: #{seq2seq_forward.1} parent=1 // pred_fallthru
      _
    // Predicated region
    $region22: #{seq2seq_forward.1} parent=1 // pred_check
      _
    $region23: #{seq2seq_forward.1} parent=1 // pred_check_branch
      %43 = sbr.rel (0) target = $region25
    $region24: #{seq2seq_forward.1} parent=1 // pred_region
      _
    $region25: #{seq2seq_forward.1} parent=1 // pred_fallthru
      _
    // Predicated region
    $region26: #{seq2seq_forward.1} parent=1 // pred_check
      _
    $region27: #{seq2seq_forward.1} parent=1 // pred_check_branch
      %45 = sbr.rel (0) target = $region29
    $region28: #{seq2seq_forward.1} parent=1 // pred_region
      _
    $region29: #{seq2seq_forward.1} parent=1 // pred_fallthru
      _
    // Predicated region
    $region30: #{seq2seq_forward.1} parent=1 // pred_check
      _
    $region31: #{seq2seq_forward.1} parent=1 // pred_check_branch
      %47 = sbr.rel (0) target = $region33
    $region32: #{seq2seq_forward.1} parent=1 // pred_region
      _
    $region33: #{seq2seq_forward.1} parent=1 // pred_fallthru
      _
    // Predicated region
    $region34: #{seq2seq_forward.1} parent=1 // pred_check
      _
    $region35: #{seq2seq_forward.1} parent=1 // pred_check_branch
      %49 = sbr.rel (0) target = $region37
    $region36: #{seq2seq_forward.1} parent=1 // pred_region
      _
    $region37: #{seq2seq_forward.1} parent=1 // pred_fallthru
      _
    // Predicated region
    $region38: #{seq2seq_forward.1} parent=1 // pred_check
      _
    $region39: #{seq2seq_forward.1} parent=1 // pred_check_branch
      %51 = sbr.rel (0) target = $region41
    $region40: #{seq2seq_forward.1} parent=1 // pred_region
      %52 = dma.done [#allocation6], 8192
    $region41: #{seq2seq_forward.1} parent=1 // pred_fallthru
      _
    %v54 = vld [vmem:[%s1] sm:$0xf]
    %v55 = vld [vmem:[%s3] sm:$0xff]
    %v56 = vld [vmem:[%s3 + $0x8] sm:$0xff]
    %v57 = vld [vmem:[%s3 + $0x10] sm:$0xff]
    %v58 = vld [vmem:[%s3 + $0x18] sm:$0xff]
    %v59 = vld [vmem:[%s3 + $0x20] sm:$0xff]
    %v60 = vld [vmem:[%s3 + $0x28] sm:$0xff]
    %v61 = vld [vmem:[%s3 + $0x30] sm:$0xff]
    %v62 = vld [vmem:[%s3 + $0x38] sm:$0xff]
    %v63 = vld [vmem:[%s3 + $0x40] sm:$0xff]
    %v64 = vld [vmem:[%s3 + $0x48] sm:$0xff]
    %v65 = vld [vmem:[%s3 + $0x50] sm:$0xff]
    %v66 = vld [vmem:[%s3 + $0x58] sm:$0xff]
    %v67 = vld [vmem:[%s3 + $0x60] sm:$0xff]
    %v68 = vld [vmem:[%s3 + $0x68] sm:$0xff]
    %v69 = vld [vmem:[%s3 + $0x70] sm:$0xff]
    %v70 = vld [vmem:[%s3 + $0x78] sm:$0xff]
    %v71 = vld [vmem:[%s3 + $0x80] sm:$0xff]
    %v72 = vld [vmem:[%s3 + $0x88] sm:$0xff]
    %v73 = vld [vmem:[%s3 + $0x90] sm:$0xff]
    %v74 = vld [vmem:[%s3 + $0x98] sm:$0xff]
    %v75 = vld [vmem:[%s3 + $0xa0] sm:$0xff]
    %v76 = vld [vmem:[%s3 + $0xa8] sm:$0xff]
    %v77 = vld [vmem:[%s3 + $0xb0] sm:$0xff]
    %v78 = vld [vmem:[%s3 + $0xb8] sm:$0xff]
    %v79 = vld [vmem:[%s3 + $0xc0] sm:$0xff]
    %v80 = vld [vmem:[%s3 + $0xc8] sm:$0xff]
    %v81 = vld [vmem:[%s3 + $0xd0] sm:$0xff]
    %v82 = vld [vmem:[%s3 + $0xd8] sm:$0xff]
    %v83 = vld [vmem:[%s3 + $0xe0] sm:$0xff]
    %v84 = vld [vmem:[%s3 + $0xe8] sm:$0xff]
    %v85 = vld [vmem:[%s3 + $0xf0] sm:$0xff]
    %v86 = vld [vmem:[%s3 + $0xf8] sm:$0xff]
    %v87 = vld [vmem:[%s3 + $0x100] sm:$0xff]
    %v88 = vld [vmem:[%s3 + $0x108] sm:$0xff]
    %v89 = vld [vmem:[%s3 + $0x110] sm:$0xff]
    %v90 = vld [vmem:[%s3 + $0x118] sm:$0xff]
    %v91 = vld [vmem:[%s3 + $0x120] sm:$0xff]
    %v92 = vld [vmem:[%s3 + $0x128] sm:$0xff]
    %v93 = vld [vmem:[%s3 + $0x130] sm:$0xff]
    %v94 = vld [vmem:[%s3 + $0x138] sm:$0xff]
    %v95 = vld [vmem:[%s3 + $0x140] sm:$0xff]
    %v96 = vld [vmem:[%s3 + $0x148] sm:$0xff]
    %v97 = vld [vmem:[%s3 + $0x150] sm:$0xff]
    %v98 = vld [vmem:[%s3 + $0x158] sm:$0xff]
    %v99 = vld [vmem:[%s3 + $0x160] sm:$0xff]
    %v100 = vld [vmem:[%s3 + $0x168] sm:$0xff]
    %v101 = vld [vmem:[%s3 + $0x170] sm:$0xff]
    %v102 = vld [vmem:[%s3 + $0x178] sm:$0xff]
    %v103 = vld [vmem:[%s3 + $0x180] sm:$0xff]
    %v104 = vld [vmem:[%s3 + $0x188] sm:$0xff]
    %v105 = vld [vmem:[%s3 + $0x190] sm:$0xff]
    %v106 = vld [vmem:[%s3 + $0x198] sm:$0xff]
    %v107 = vld [vmem:[%s3 + $0x1a0] sm:$0xff]
    %v108 = vld [vmem:[%s3 + $0x1a8] sm:$0xff]
    %v109 = vld [vmem:[%s3 + $0x1b0] sm:$0xff]
    %v110 = vld [vmem:[%s3 + $0x1b8] sm:$0xff]
    %v111 = vld [vmem:[%s3 + $0x1c0] sm:$0xff]
    %v112 = vld [vmem:[%s3 + $0x1c8] sm:$0xff]
    %v113 = vld [vmem:[%s3 + $0x1d0] sm:$0xff]
    %v114 = vld [vmem:[%s3 + $0x1d8] sm:$0xff]
    %v115 = vld [vmem:[%s3 + $0x1e0] sm:$0xff]
    %v116 = vld [vmem:[%s3 + $0x1e8] sm:$0xff]
    %v117 = vld [vmem:[%s3 + $0x1f0] sm:$0xff]
    %v118 = vld [vmem:[%s3 + $0x1f8] sm:$0xff]
    %v119 = vld [vmem:[%s4] sm:$0xf]
    %v121 = vlaneseq
    %v122 = vshrl.u32 %v121, 7
    %v123 = vsub.s32 0, %v122
    %v124 = vrot.slane %v119, %v123
    %v125 = vlaneseq
    %v126 = vshrl.u32 %v125, 7
    %v127 = vsub.s32 1, %v126
    %v128 = vrot.slane %v119, %v127
    %v129 = vlaneseq
    %v130 = vshrl.u32 %v129, 7
    %v131 = vsub.s32 2, %v130
    %v132 = vrot.slane %v119, %v131
    %v133 = vlaneseq
    %v134 = vshrl.u32 %v133, 7
    %v135 = vsub.s32 3, %v134
    %v136 = vrot.slane %v119, %v135
    %v205 = vunpack.c.l.b16 %v55
    %v206 = vunpack.c.h.b16 %v55
    %v207 = vunpack.c.l.b16 %v56
    %v208 = vunpack.c.h.b16 %v56
    %v209 = vunpack.c.l.b16 %v57
    %v210 = vunpack.c.h.b16 %v57
    %v211 = vunpack.c.l.b16 %v58
    %v212 = vunpack.c.h.b16 %v58
    %v213 = vunpack.c.l.b16 %v59
    %v214 = vunpack.c.h.b16 %v59
    %v215 = vunpack.c.l.b16 %v60
    %v216 = vunpack.c.h.b16 %v60
    %v217 = vunpack.c.l.b16 %v61
    %v218 = vunpack.c.h.b16 %v61
    %v219 = vunpack.c.l.b16 %v62
    %v220 = vunpack.c.h.b16 %v62
    %v221 = vunpack.c.l.b16 %v63
    %v222 = vunpack.c.h.b16 %v63
    %v223 = vunpack.c.l.b16 %v64
    %v224 = vunpack.c.h.b16 %v64
    %v225 = vunpack.c.l.b16 %v65
    %v226 = vunpack.c.h.b16 %v65
    %v227 = vunpack.c.l.b16 %v66
    %v228 = vunpack.c.h.b16 %v66
    %v229 = vunpack.c.l.b16 %v67
    %v230 = vunpack.c.h.b16 %v67
    %v231 = vunpack.c.l.b16 %v68
    %v232 = vunpack.c.h.b16 %v68
    %v233 = vunpack.c.l.b16 %v69
    %v234 = vunpack.c.h.b16 %v69
    %v235 = vunpack.c.l.b16 %v70
    %v236 = vunpack.c.h.b16 %v70
    %v237 = vunpack.c.l.b16 %v71
    %v238 = vunpack.c.h.b16 %v71
    %v239 = vunpack.c.l.b16 %v72
    %v240 = vunpack.c.h.b16 %v72
    %v241 = vunpack.c.l.b16 %v73
    %v242 = vunpack.c.h.b16 %v73
    %v243 = vunpack.c.l.b16 %v74
    %v244 = vunpack.c.h.b16 %v74
    %v245 = vunpack.c.l.b16 %v75
    %v246 = vunpack.c.h.b16 %v75
    %v247 = vunpack.c.l.b16 %v76
    %v248 = vunpack.c.h.b16 %v76
    %v249 = vunpack.c.l.b16 %v77
    %v250 = vunpack.c.h.b16 %v77
    %v251 = vunpack.c.l.b16 %v78
    %v252 = vunpack.c.h.b16 %v78
    %v253 = vunpack.c.l.b16 %v79
    %v254 = vunpack.c.h.b16 %v79
    %v255 = vunpack.c.l.b16 %v80
    %v256 = vunpack.c.h.b16 %v80
    %v257 = vunpack.c.l.b16 %v81
    %v258 = vunpack.c.h.b16 %v81
    %v259 = vunpack.c.l.b16 %v82
    %v260 = vunpack.c.h.b16 %v82
    %v261 = vunpack.c.l.b16 %v83
    %v262 = vunpack.c.h.b16 %v83
    %v263 = vunpack.c.l.b16 %v84
    %v264 = vunpack.c.h.b16 %v84
    %v265 = vunpack.c.l.b16 %v85
    %v266 = vunpack.c.h.b16 %v85
    %v267 = vunpack.c.l.b16 %v86
    %v268 = vunpack.c.h.b16 %v86
    %v269 = vunpack.c.l.b16 %v87
    %v270 = vunpack.c.h.b16 %v87
    %v271 = vunpack.c.l.b16 %v88
    %v272 = vunpack.c.h.b16 %v88
    %v273 = vunpack.c.l.b16 %v89
    %v274 = vunpack.c.h.b16 %v89
    %v275 = vunpack.c.l.b16 %v90
    %v276 = vunpack.c.h.b16 %v90
    %v277 = vunpack.c.l.b16 %v91
    %v278 = vunpack.c.h.b16 %v91
    %v279 = vunpack.c.l.b16 %v92
    %v280 = vunpack.c.h.b16 %v92
    %v281 = vunpack.c.l.b16 %v93
    %v282 = vunpack.c.h.b16 %v93
    %v283 = vunpack.c.l.b16 %v94
    %v284 = vunpack.c.h.b16 %v94
    %v285 = vunpack.c.l.b16 %v95
    %v286 = vunpack.c.h.b16 %v95
    %v287 = vunpack.c.l.b16 %v96
    %v288 = vunpack.c.h.b16 %v96
    %v289 = vunpack.c.l.b16 %v97
    %v290 = vunpack.c.h.b16 %v97
    %v291 = vunpack.c.l.b16 %v98
    %v292 = vunpack.c.h.b16 %v98
    %v293 = vunpack.c.l.b16 %v99
    %v294 = vunpack.c.h.b16 %v99
    %v295 = vunpack.c.l.b16 %v100
    %v296 = vunpack.c.h.b16 %v100
    %v297 = vunpack.c.l.b16 %v101
    %v298 = vunpack.c.h.b16 %v101
    %v299 = vunpack.c.l.b16 %v102
    %v300 = vunpack.c.h.b16 %v102
    %v301 = vunpack.c.l.b16 %v103
    %v302 = vunpack.c.h.b16 %v103
    %v303 = vunpack.c.l.b16 %v104
    %v304 = vunpack.c.h.b16 %v104
    %v305 = vunpack.c.l.b16 %v105
    %v306 = vunpack.c.h.b16 %v105
    %v307 = vunpack.c.l.b16 %v106
    %v308 = vunpack.c.h.b16 %v106
    %v309 = vunpack.c.l.b16 %v107
    %v310 = vunpack.c.h.b16 %v107
    %v311 = vunpack.c.l.b16 %v108
    %v312 = vunpack.c.h.b16 %v108
    %v313 = vunpack.c.l.b16 %v109
    %v314 = vunpack.c.h.b16 %v109
    %v315 = vunpack.c.l.b16 %v110
    %v316 = vunpack.c.h.b16 %v110
    %v317 = vunpack.c.l.b16 %v111
    %v318 = vunpack.c.h.b16 %v111
    %v319 = vunpack.c.l.b16 %v112
    %v320 = vunpack.c.h.b16 %v112
    %v321 = vunpack.c.l.b16 %v113
    %v322 = vunpack.c.h.b16 %v113
    %v323 = vunpack.c.l.b16 %v114
    %v324 = vunpack.c.h.b16 %v114
    %v325 = vunpack.c.l.b16 %v115
    %v326 = vunpack.c.h.b16 %v115
    %v327 = vunpack.c.l.b16 %v116
    %v328 = vunpack.c.h.b16 %v116
    %v329 = vunpack.c.l.b16 %v117
    %v330 = vunpack.c.h.b16 %v117
    %v331 = vunpack.c.l.b16 %v118
    %v332 = vunpack.c.h.b16 %v118
    %v333 = vpack.c.b16 %v209, %v205
    %v334 = vpack.c.b16 %v210, %v206
    %v335 = vpack.c.b16 %v211, %v207
    %v336 = vpack.c.b16 %v212, %v208
    %v337 = vpack.c.b16 %v217, %v213
    %v338 = vpack.c.b16 %v218, %v214
    %v339 = vpack.c.b16 %v219, %v215
    %v340 = vpack.c.b16 %v220, %v216
    %v341 = vpack.c.b16 %v225, %v221
    %v342 = vpack.c.b16 %v226, %v222
    %v343 = vpack.c.b16 %v227, %v223
    %v344 = vpack.c.b16 %v228, %v224
    %v345 = vpack.c.b16 %v233, %v229
    %v346 = vpack.c.b16 %v234, %v230
    %v347 = vpack.c.b16 %v235, %v231
    %v348 = vpack.c.b16 %v236, %v232
    %v349 = vpack.c.b16 %v241, %v237
    %v350 = vpack.c.b16 %v242, %v238
    %v351 = vpack.c.b16 %v243, %v239
    %v352 = vpack.c.b16 %v244, %v240
    %v353 = vpack.c.b16 %v249, %v245
    %v354 = vpack.c.b16 %v250, %v246
    %v355 = vpack.c.b16 %v251, %v247
    %v356 = vpack.c.b16 %v252, %v248
    %v357 = vpack.c.b16 %v257, %v253
    %v358 = vpack.c.b16 %v258, %v254
    %v359 = vpack.c.b16 %v259, %v255
    %v360 = vpack.c.b16 %v260, %v256
    %v361 = vpack.c.b16 %v265, %v261
    %v362 = vpack.c.b16 %v266, %v262
    %v363 = vpack.c.b16 %v267, %v263
    %v364 = vpack.c.b16 %v268, %v264
    %v365 = vpack.c.b16 %v273, %v269
    %v366 = vpack.c.b16 %v274, %v270
    %v367 = vpack.c.b16 %v275, %v271
    %v368 = vpack.c.b16 %v276, %v272
    %v369 = vpack.c.b16 %v281, %v277
    %v370 = vpack.c.b16 %v282, %v278
    %v371 = vpack.c.b16 %v283, %v279
    %v372 = vpack.c.b16 %v284, %v280
    %v373 = vpack.c.b16 %v289, %v285
    %v374 = vpack.c.b16 %v290, %v286
    %v375 = vpack.c.b16 %v291, %v287
    %v376 = vpack.c.b16 %v292, %v288
    %v377 = vpack.c.b16 %v297, %v293
    %v378 = vpack.c.b16 %v298, %v294
    %v379 = vpack.c.b16 %v299, %v295
    %v380 = vpack.c.b16 %v300, %v296
    %v381 = vpack.c.b16 %v305, %v301
    %v382 = vpack.c.b16 %v306, %v302
    %v383 = vpack.c.b16 %v307, %v303
    %v384 = vpack.c.b16 %v308, %v304
    %v385 = vpack.c.b16 %v313, %v309
    %v386 = vpack.c.b16 %v314, %v310
    %v387 = vpack.c.b16 %v315, %v311
    %v388 = vpack.c.b16 %v316, %v312
    %v389 = vpack.c.b16 %v321, %v317
    %v390 = vpack.c.b16 %v322, %v318
    %v391 = vpack.c.b16 %v323, %v319
    %v392 = vpack.c.b16 %v324, %v320
    %v393 = vpack.c.b16 %v329, %v325
    %v394 = vpack.c.b16 %v330, %v326
    %v395 = vpack.c.b16 %v331, %v327
    %v396 = vpack.c.b16 %v332, %v328
    %461 = vmatprep.subr.bf16.mxu0 %v334
    %462 = vmatpush1.bf16.msra.mxu0 %v333
    %463 = vmatprep.subr.bf16.mxu0 %v338
    %464 = vmatpush1.bf16.msra.mxu0 %v337
    %465 = vmatprep.subr.bf16.mxu0 %v342
    %466 = vmatpush1.bf16.msra.mxu0 %v341
    %467 = vmatprep.subr.bf16.mxu0 %v346
    %468 = vmatpush1.bf16.msra.mxu0 %v345
    %469 = vmatprep.subr.bf16.mxu0 %v350
    %470 = vmatpush1.bf16.msra.mxu0 %v349
    %471 = vmatprep.subr.bf16.mxu0 %v354
    %472 = vmatpush1.bf16.msra.mxu0 %v353
    %473 = vmatprep.subr.bf16.mxu0 %v358
    %474 = vmatpush1.bf16.msra.mxu0 %v357
    %475 = vmatprep.subr.bf16.mxu0 %v362
    %476 = vmatpush1.bf16.msra.mxu0 %v361
    %477 = vmatprep.subr.bf16.mxu0 %v366
    %478 = vmatpush1.bf16.msra.mxu0 %v365
    %479 = vmatprep.subr.bf16.mxu0 %v370
    %480 = vmatpush1.bf16.msra.mxu0 %v369
    %481 = vmatprep.subr.bf16.mxu0 %v374
    %482 = vmatpush1.bf16.msra.mxu0 %v373
    %483 = vmatprep.subr.bf16.mxu0 %v378
    %484 = vmatpush1.bf16.msra.mxu0 %v377
    %485 = vmatprep.subr.bf16.mxu0 %v382
    %486 = vmatpush1.bf16.msra.mxu0 %v381
    %487 = vmatprep.subr.bf16.mxu0 %v386
    %488 = vmatpush1.bf16.msra.mxu0 %v385
    %489 = vmatprep.subr.bf16.mxu0 %v390
    %490 = vmatpush1.bf16.msra.mxu0 %v389
    %491 = vmatprep.subr.bf16.mxu0 %v394
    %492 = vmatpush1.bf16.msra.mxu0 %v393
    %493 = vmatprep.mubr.bf16.mxu0 0
    %494 = vmatmul.mubr.bf16.gmra.mrb[0].mxu0 %v54
    %v495 = vpop.f32.mrb[0].mxu0
    %v496 = vadd.f32 %v124, %v495
    %v497 = vpop.f32.mrb[0].mxu0
    %v498 = vadd.f32 %v128, %v497
    %v499 = vpop.f32.mrb[0].mxu0
    %v500 = vpop.f32.mrb[0].mxu0
    %501 = vdwg.mxu0
    %502 = vmatprep.subr.bf16.mxu0 %v336
    %503 = vmatpush1.bf16.msra.mxu0 %v335
    %504 = vmatprep.subr.bf16.mxu0 %v340
    %505 = vmatpush1.bf16.msra.mxu0 %v339
    %506 = vmatprep.subr.bf16.mxu0 %v344
    %507 = vmatpush1.bf16.msra.mxu0 %v343
    %508 = vmatprep.subr.bf16.mxu0 %v348
    %509 = vmatpush1.bf16.msra.mxu0 %v347
    %510 = vmatprep.subr.bf16.mxu0 %v352
    %511 = vmatpush1.bf16.msra.mxu0 %v351
    %512 = vmatprep.subr.bf16.mxu0 %v356
    %513 = vmatpush1.bf16.msra.mxu0 %v355
    %514 = vmatprep.subr.bf16.mxu0 %v360
    %515 = vmatpush1.bf16.msra.mxu0 %v359
    %516 = vmatprep.subr.bf16.mxu0 %v364
    %517 = vmatpush1.bf16.msra.mxu0 %v363
    %518 = vmatprep.subr.bf16.mxu0 %v368
    %519 = vmatpush1.bf16.msra.mxu0 %v367
    %520 = vmatprep.subr.bf16.mxu0 %v372
    %521 = vmatpush1.bf16.msra.mxu0 %v371
    %522 = vmatprep.subr.bf16.mxu0 %v376
    %523 = vmatpush1.bf16.msra.mxu0 %v375
    %524 = vmatprep.subr.bf16.mxu0 %v380
    %525 = vmatpush1.bf16.msra.mxu0 %v379
    %526 = vmatprep.subr.bf16.mxu0 %v384
    %527 = vmatpush1.bf16.msra.mxu0 %v383
    %528 = vmatprep.subr.bf16.mxu0 %v388
    %529 = vmatpush1.bf16.msra.mxu0 %v387
    %530 = vmatprep.subr.bf16.mxu0 %v392
    %531 = vmatpush1.bf16.msra.mxu0 %v391
    %532 = vmatprep.subr.bf16.mxu0 %v396
    %533 = vmatpush1.bf16.msra.mxu0 %v395
    %534 = vmatprep.mubr.bf16.mxu0 0
    %535 = vmatmul.mubr.bf16.gmra.mrb[0].mxu0 %v54
    %v536 = vpop.f32.mrb[0].mxu0
    %v537 = vadd.f32 %v132, %v536
    %v538 = vpop.f32.mrb[0].mxu0
    %v539 = vadd.f32 %v136, %v538
    %v540 = vpop.f32.mrb[0].mxu0
    %v541 = vpop.f32.mrb[0].mxu0
    %542 = vdwg.mxu0
    %v543 = vxor.u32 %v496, 2147483648
    %v544 = vmul.f32 %v543, 1.442695
    %v545 = vpow.pop %v544
    %v546 = vadd.f32 %v545, 1.0
    %v547 = vrcp.pop %v546
    %v548 = vmul.f32 1.0, %v547
    %v549 = vxor.u32 %v498, 2147483648
    %v550 = vmul.f32 %v549, 1.442695
    %v551 = vpow.pop %v550
    %v552 = vadd.f32 %v551, 1.0
    %v553 = vrcp.pop %v552
    %v554 = vmul.f32 1.0, %v553
    %v555 = vtanh.pop %v537
    %v556 = vxor.u32 %v539, 2147483648
    %v557 = vmul.f32 %v556, 1.442695
    %v558 = vpow.pop %v557
    %v559 = vadd.f32 %v558, 1.0
    %v560 = vrcp.pop %v559
    %v561 = vmul.f32 1.0, %v560
    %v562 = vmul.f32 %v554, 0.0
    %v563 = vmul.f32 %v548, %v555
    %v564 = vadd.f32 %v562, %v563
    %v565 = vtanh.pop %v564
    %v566 = vmul.f32 %v561, %v565
    %s567 = scalar_lea.vmem %s1, 4
    %v568 = vld [vmem:[%s567] sm:$0xf]
    %v569 = vpack.c.bf16 %v566, %v566
    %570 = vmatprep.subr.bf16.mxu0 %v334
    %571 = vmatpush1.bf16.msra.mxu0 %v333
    %572 = vmatprep.subr.bf16.mxu0 %v338
    %573 = vmatpush1.bf16.msra.mxu0 %v337
    %574 = vmatprep.subr.bf16.mxu0 %v342
    %575 = vmatpush1.bf16.msra.mxu0 %v341
    %576 = vmatprep.subr.bf16.mxu0 %v346
    %577 = vmatpush1.bf16.msra.mxu0 %v345
    %578 = vmatprep.subr.bf16.mxu0 %v350
    %579 = vmatpush1.bf16.msra.mxu0 %v349
    %580 = vmatprep.subr.bf16.mxu0 %v354
    %581 = vmatpush1.bf16.msra.mxu0 %v353
    %582 = vmatprep.subr.bf16.mxu0 %v358
    %583 = vmatpush1.bf16.msra.mxu0 %v357
    %584 = vmatprep.subr.bf16.mxu0 %v362
    %585 = vmatpush1.bf16.msra.mxu0 %v361
    %586 = vmatprep.subr.bf16.mxu0 %v366
    %587 = vmatpush1.bf16.msra.mxu0 %v365
    %588 = vmatprep.subr.bf16.mxu0 %v370
    %589 = vmatpush1.bf16.msra.mxu0 %v369
    %590 = vmatprep.subr.bf16.mxu0 %v374
    %591 = vmatpush1.bf16.msra.mxu0 %v373
    %592 = vmatprep.subr.bf16.mxu0 %v378
    %593 = vmatpush1.bf16.msra.mxu0 %v377
    %594 = vmatprep.subr.bf16.mxu0 %v382
    %595 = vmatpush1.bf16.msra.mxu0 %v381
    %596 = vmatprep.subr.bf16.mxu0 %v386
    %597 = vmatpush1.bf16.msra.mxu0 %v385
    %598 = vmatprep.subr.bf16.mxu0 %v390
    %599 = vmatpush1.bf16.msra.mxu0 %v389
    %600 = vmatprep.subr.bf16.mxu0 %v394
    %601 = vmatpush1.bf16.msra.mxu0 %v393
    %602 = vmatprep.mubr.bf16.mxu0 %v569
    %603 = vmatmul.mubr.bf16.gmra.mrb[0].mxu0 %v568
    %v604 = vpop.f32.mrb[0].mxu0
    %v605 = vadd.f32 %v124, %v604
    %v606 = vpop.f32.mrb[0].mxu0
    %v607 = vadd.f32 %v128, %v606
    %v608 = vpop.f32.mrb[0].mxu0
    %v609 = vpop.f32.mrb[0].mxu0
    %610 = vdwg.mxu0
    %611 = vmatprep.subr.bf16.mxu0 %v336
    %612 = vmatpush1.bf16.msra.mxu0 %v335
    %613 = vmatprep.subr.bf16.mxu0 %v340
    %614 = vmatpush1.bf16.msra.mxu0 %v339
    %615 = vmatprep.subr.bf16.mxu0 %v344
    %616 = vmatpush1.bf16.msra.mxu0 %v343
    %617 = vmatprep.subr.bf16.mxu0 %v348
    %618 = vmatpush1.bf16.msra.mxu0 %v347
    %619 = vmatprep.subr.bf16.mxu0 %v352
    %620 = vmatpush1.bf16.msra.mxu0 %v351
    %621 = vmatprep.subr.bf16.mxu0 %v356
    %622 = vmatpush1.bf16.msra.mxu0 %v355
    %623 = vmatprep.subr.bf16.mxu0 %v360
    %624 = vmatpush1.bf16.msra.mxu0 %v359
    %625 = vmatprep.subr.bf16.mxu0 %v364
    %626 = vmatpush1.bf16.msra.mxu0 %v363
    %627 = vmatprep.subr.bf16.mxu0 %v368
    %628 = vmatpush1.bf16.msra.mxu0 %v367
    %629 = vmatprep.subr.bf16.mxu0 %v372
    %630 = vmatpush1.bf16.msra.mxu0 %v371
    %631 = vmatprep.subr.bf16.mxu0 %v376
    %632 = vmatpush1.bf16.msra.mxu0 %v375
    %633 = vmatprep.subr.bf16.mxu0 %v380
    %634 = vmatpush1.bf16.msra.mxu0 %v379
    %635 = vmatprep.subr.bf16.mxu0 %v384
    %636 = vmatpush1.bf16.msra.mxu0 %v383
    %637 = vmatprep.subr.bf16.mxu0 %v388
    %638 = vmatpush1.bf16.msra.mxu0 %v387
    %639 = vmatprep.subr.bf16.mxu0 %v392
    %640 = vmatpush1.bf16.msra.mxu0 %v391
    %641 = vmatprep.subr.bf16.mxu0 %v396
    %642 = vmatpush1.bf16.msra.mxu0 %v395
    %643 = vmatprep.mubr.bf16.mxu0 %v569
    %644 = vmatmul.mubr.bf16.gmra.mrb[0].mxu0 %v568
    %v645 = vpop.f32.mrb[0].mxu0
    %v646 = vadd.f32 %v132, %v645
    %v647 = vpop.f32.mrb[0].mxu0
    %v648 = vadd.f32 %v136, %v647
    %v649 = vpop.f32.mrb[0].mxu0
    %v650 = vpop.f32.mrb[0].mxu0
    %651 = vdwg.mxu0
    %v652 = vxor.u32 %v605, 2147483648
    %v653 = vmul.f32 %v652, 1.442695
    %v654 = vpow.pop %v653
    %v655 = vadd.f32 %v654, 1.0
    %v656 = vrcp.pop %v655
    %v657 = vmul.f32 1.0, %v656
    %v658 = vxor.u32 %v607, 2147483648
    %v659 = vmul.f32 %v658, 1.442695
    %v660 = vpow.pop %v659
    %v661 = vadd.f32 %v660, 1.0
    %v662 = vrcp.pop %v661
    %v663 = vmul.f32 1.0, %v662
    %v664 = vtanh.pop %v646
    %v665 = vxor.u32 %v648, 2147483648
    %v666 = vmul.f32 %v665, 1.442695
    %v667 = vpow.pop %v666
    %v668 = vadd.f32 %v667, 1.0
    %v669 = vrcp.pop %v668
    %v670 = vmul.f32 1.0, %v669
    %v671 = vmul.f32 %v663, %v564
    %v672 = vmul.f32 %v657, %v664
    %v673 = vadd.f32 %v671, %v672
    %v674 = vtanh.pop %v673
    %v675 = vmul.f32 %v670, %v674
    %s676 = scalar_lea.vmem %s1, 8
    %v677 = vld [vmem:[%s676] sm:$0xf]
    %v678 = vpack.c.bf16 %v675, %v675
    %679 = vmatprep.subr.bf16.mxu0 %v334
    %680 = vmatpush1.bf16.msra.mxu0 %v333
    %681 = vmatprep.subr.bf16.mxu0 %v338
    %682 = vmatpush1.bf16.msra.mxu0 %v337
    %683 = vmatprep.subr.bf16.mxu0 %v342
    %684 = vmatpush1.bf16.msra.mxu0 %v341
    %685 = vmatprep.subr.bf16.mxu0 %v346
    %686 = vmatpush1.bf16.msra.mxu0 %v345
    %687 = vmatprep.subr.bf16.mxu0 %v350
    %688 = vmatpush1.bf16.msra.mxu0 %v349
    %689 = vmatprep.subr.bf16.mxu0 %v354
    %690 = vmatpush1.bf16.msra.mxu0 %v353
    %691 = vmatprep.subr.bf16.mxu0 %v358
    %692 = vmatpush1.bf16.msra.mxu0 %v357
    %693 = vmatprep.subr.bf16.mxu0 %v362
    %694 = vmatpush1.bf16.msra.mxu0 %v361
    %695 = vmatprep.subr.bf16.mxu0 %v366
    %696 = vmatpush1.bf16.msra.mxu0 %v365
    %697 = vmatprep.subr.bf16.mxu0 %v370
    %698 = vmatpush1.bf16.msra.mxu0 %v369
    %699 = vmatprep.subr.bf16.mxu0 %v374
    %700 = vmatpush1.bf16.msra.mxu0 %v373
    %701 = vmatprep.subr.bf16.mxu0 %v378
    %702 = vmatpush1.bf16.msra.mxu0 %v377
    %703 = vmatprep.subr.bf16.mxu0 %v382
    %704 = vmatpush1.bf16.msra.mxu0 %v381
    %705 = vmatprep.subr.bf16.mxu0 %v386
    %706 = vmatpush1.bf16.msra.mxu0 %v385
    %707 = vmatprep.subr.bf16.mxu0 %v390
    %708 = vmatpush1.bf16.msra.mxu0 %v389
    %709 = vmatprep.subr.bf16.mxu0 %v394
    %710 = vmatpush1.bf16.msra.mxu0 %v393
    %711 = vmatprep.mubr.bf16.mxu0 %v678
    %712 = vmatmul.mubr.bf16.gmra.mrb[0].mxu0 %v677
    %v713 = vpop.f32.mrb[0].mxu0
    %v714 = vadd.f32 %v124, %v713
    %v715 = vpop.f32.mrb[0].mxu0
    %v716 = vadd.f32 %v128, %v715
    %v717 = vpop.f32.mrb[0].mxu0
    %v718 = vpop.f32.mrb[0].mxu0
    %719 = vdwg.mxu0
    %720 = vmatprep.subr.bf16.mxu0 %v336
    %721 = vmatpush1.bf16.msra.mxu0 %v335
    %722 = vmatprep.subr.bf16.mxu0 %v340
    %723 = vmatpush1.bf16.msra.mxu0 %v339
    %724 = vmatprep.subr.bf16.mxu0 %v344
    %725 = vmatpush1.bf16.msra.mxu0 %v343
    %726 = vmatprep.subr.bf16.mxu0 %v348
    %727 = vmatpush1.bf16.msra.mxu0 %v347
    %728 = vmatprep.subr.bf16.mxu0 %v352
    %729 = vmatpush1.bf16.msra.mxu0 %v351
    %730 = vmatprep.subr.bf16.mxu0 %v356
    %731 = vmatpush1.bf16.msra.mxu0 %v355
    %732 = vmatprep.subr.bf16.mxu0 %v360
    %733 = vmatpush1.bf16.msra.mxu0 %v359
    %734 = vmatprep.subr.bf16.mxu0 %v364
    %735 = vmatpush1.bf16.msra.mxu0 %v363
    %736 = vmatprep.subr.bf16.mxu0 %v368
    %737 = vmatpush1.bf16.msra.mxu0 %v367
    %738 = vmatprep.subr.bf16.mxu0 %v372
    %739 = vmatpush1.bf16.msra.mxu0 %v371
    %740 = vmatprep.subr.bf16.mxu0 %v376
    %741 = vmatpush1.bf16.msra.mxu0 %v375
    %742 = vmatprep.subr.bf16.mxu0 %v380
    %743 = vmatpush1.bf16.msra.mxu0 %v379
    %744 = vmatprep.subr.bf16.mxu0 %v384
    %745 = vmatpush1.bf16.msra.mxu0 %v383
    %746 = vmatprep.subr.bf16.mxu0 %v388
    %747 = vmatpush1.bf16.msra.mxu0 %v387
    %748 = vmatprep.subr.bf16.mxu0 %v392
    %749 = vmatpush1.bf16.msra.mxu0 %v391
    %750 = vmatprep.subr.bf16.mxu0 %v396
    %751 = vmatpush1.bf16.msra.mxu0 %v395
    %752 = vmatprep.mubr.bf16.mxu0 %v678
    %753 = vmatmul.mubr.bf16.gmra.mrb[0].mxu0 %v677
    %v754 = vpop.f32.mrb[0].mxu0
    %v755 = vadd.f32 %v132, %v754
    %v756 = vpop.f32.mrb[0].mxu0
    %v757 = vadd.f32 %v136, %v756
    %v758 = vpop.f32.mrb[0].mxu0
    %v759 = vpop.f32.mrb[0].mxu0
    %760 = vdwg.mxu0
    %v761 = vxor.u32 %v714, 2147483648
    %v762 = vmul.f32 %v761, 1.442695
    %v763 = vpow.pop %v762
    %v764 = vadd.f32 %v763, 1.0
    %v765 = vrcp.pop %v764
    %v766 = vmul.f32 1.0, %v765
    %v767 = vxor.u32 %v716, 2147483648
    %v768 = vmul.f32 %v767, 1.442695
    %v769 = vpow.pop %v768
    %v770 = vadd.f32 %v769, 1.0
    %v771 = vrcp.pop %v770
    %v772 = vmul.f32 1.0, %v771
    %v773 = vtanh.pop %v755
    %v774 = vxor.u32 %v757, 2147483648
    %v775 = vmul.f32 %v774, 1.442695
    %v776 = vpow.pop %v775
    %v777 = vadd.f32 %v776, 1.0
    %v778 = vrcp.pop %v777
    %v779 = vmul.f32 1.0, %v778
    %v780 = vmul.f32 %v772, %v673
    %v781 = vmul.f32 %v766, %v773
    %v782 = vadd.f32 %v780, %v781
    %v783 = vtanh.pop %v782
    %v784 = vmul.f32 %v779, %v783
    %s785 = scalar_lea.vmem %s1, 12
    %v786 = vld [vmem:[%s785] sm:$0xf]
    %v787 = vpack.c.bf16 %v784, %v784
    %788 = vmatprep.subr.bf16.mxu0 %v334
    %789 = vmatpush1.bf16.msra.mxu0 %v333
    %790 = vmatprep.subr.bf16.mxu0 %v338
    %791 = vmatpush1.bf16.msra.mxu0 %v337
    %792 = vmatprep.subr.bf16.mxu0 %v342
    %793 = vmatpush1.bf16.msra.mxu0 %v341
    %794 = vmatprep.subr.bf16.mxu0 %v346
    %795 = vmatpush1.bf16.msra.mxu0 %v345
    %796 = vmatprep.subr.bf16.mxu0 %v350
    %797 = vmatpush1.bf16.msra.mxu0 %v349
    %798 = vmatprep.subr.bf16.mxu0 %v354
    %799 = vmatpush1.bf16.msra.mxu0 %v353
    %800 = vmatprep.subr.bf16.mxu0 %v358
    %801 = vmatpush1.bf16.msra.mxu0 %v357
    %802 = vmatprep.subr.bf16.mxu0 %v362
    %803 = vmatpush1.bf16.msra.mxu0 %v361
    %804 = vmatprep.subr.bf16.mxu0 %v366
    %805 = vmatpush1.bf16.msra.mxu0 %v365
    %806 = vmatprep.subr.bf16.mxu0 %v370
    %807 = vmatpush1.bf16.msra.mxu0 %v369
    %808 = vmatprep.subr.bf16.mxu0 %v374
    %809 = vmatpush1.bf16.msra.mxu0 %v373
    %810 = vmatprep.subr.bf16.mxu0 %v378
    %811 = vmatpush1.bf16.msra.mxu0 %v377
    %812 = vmatprep.subr.bf16.mxu0 %v382
    %813 = vmatpush1.bf16.msra.mxu0 %v381
    %814 = vmatprep.subr.bf16.mxu0 %v386
    %815 = vmatpush1.bf16.msra.mxu0 %v385
    %816 = vmatprep.subr.bf16.mxu0 %v390
    %817 = vmatpush1.bf16.msra.mxu0 %v389
    %818 = vmatprep.subr.bf16.mxu0 %v394
    %819 = vmatpush1.bf16.msra.mxu0 %v393
    %820 = vmatprep.mubr.bf16.mxu0 %v787
    %821 = vmatmul.mubr.bf16.gmra.mrb[0].mxu0 %v786
    %v822 = vpop.f32.mrb[0].mxu0
    %v823 = vadd.f32 %v124, %v822
    %v824 = vpop.f32.mrb[0].mxu0
    %v825 = vadd.f32 %v128, %v824
    %v826 = vpop.f32.mrb[0].mxu0
    %v827 = vpop.f32.mrb[0].mxu0
    %828 = vdwg.mxu0
    %829 = vmatprep.subr.bf16.mxu0 %v336
    %830 = vmatpush1.bf16.msra.mxu0 %v335
    %831 = vmatprep.subr.bf16.mxu0 %v340
    %832 = vmatpush1.bf16.msra.mxu0 %v339
    %833 = vmatprep.subr.bf16.mxu0 %v344
    %834 = vmatpush1.bf16.msra.mxu0 %v343
    %835 = vmatprep.subr.bf16.mxu0 %v348
    %836 = vmatpush1.bf16.msra.mxu0 %v347
    %837 = vmatprep.subr.bf16.mxu0 %v352
    %838 = vmatpush1.bf16.msra.mxu0 %v351
    %839 = vmatprep.subr.bf16.mxu0 %v356
    %840 = vmatpush1.bf16.msra.mxu0 %v355
    %841 = vmatprep.subr.bf16.mxu0 %v360
    %842 = vmatpush1.bf16.msra.mxu0 %v359
    %843 = vmatprep.subr.bf16.mxu0 %v364
    %844 = vmatpush1.bf16.msra.mxu0 %v363
    %845 = vmatprep.subr.bf16.mxu0 %v368
    %846 = vmatpush1.bf16.msra.mxu0 %v367
    %847 = vmatprep.subr.bf16.mxu0 %v372
    %848 = vmatpush1.bf16.msra.mxu0 %v371
    %849 = vmatprep.subr.bf16.mxu0 %v376
    %850 = vmatpush1.bf16.msra.mxu0 %v375
    %851 = vmatprep.subr.bf16.mxu0 %v380
    %852 = vmatpush1.bf16.msra.mxu0 %v379
    %853 = vmatprep.subr.bf16.mxu0 %v384
    %854 = vmatpush1.bf16.msra.mxu0 %v383
    %855 = vmatprep.subr.bf16.mxu0 %v388
    %856 = vmatpush1.bf16.msra.mxu0 %v387
    %857 = vmatprep.subr.bf16.mxu0 %v392
    %858 = vmatpush1.bf16.msra.mxu0 %v391
    %859 = vmatprep.subr.bf16.mxu0 %v396
    %860 = vmatpush1.bf16.msra.mxu0 %v395
    %861 = vmatprep.mubr.bf16.mxu0 %v787
    %862 = vmatmul.mubr.bf16.gmra.mrb[0].mxu0 %v786
    %v863 = vpop.f32.mrb[0].mxu0
    %v864 = vadd.f32 %v132, %v863
    %v865 = vpop.f32.mrb[0].mxu0
    %v866 = vadd.f32 %v136, %v865
    %v867 = vpop.f32.mrb[0].mxu0
    %v868 = vpop.f32.mrb[0].mxu0
    %869 = vdwg.mxu0
    %v870 = vxor.u32 %v823, 2147483648
    %v871 = vmul.f32 %v870, 1.442695
    %v872 = vpow.pop %v871
    %v873 = vadd.f32 %v872, 1.0
    %v874 = vrcp.pop %v873
    %v875 = vmul.f32 1.0, %v874
    %v876 = vxor.u32 %v825, 2147483648
    %v877 = vmul.f32 %v876, 1.442695
    %v878 = vpow.pop %v877
    %v879 = vadd.f32 %v878, 1.0
    %v880 = vrcp.pop %v879
    %v881 = vmul.f32 1.0, %v880
    %v882 = vtanh.pop %v864
    %v883 = vxor.u32 %v866, 2147483648
    %v884 = vmul.f32 %v883, 1.442695
    %v885 = vpow.pop %v884
    %v886 = vadd.f32 %v885, 1.0
    %v887 = vrcp.pop %v886
    %v888 = vmul.f32 1.0, %v887
    %v889 = vmul.f32 %v881, %v782
    %v890 = vmul.f32 %v875, %v882
    %v891 = vadd.f32 %v889, %v890
    %v892 = vtanh.pop %v891
    %v893 = vmul.f32 %v888, %v892
    %s894 = scalar_lea.vmem %s1, 16
    %v895 = vld [vmem:[%s894] sm:$0xf]
    %v896 = vpack.c.bf16 %v893, %v893
    %897 = vmatprep.subr.bf16.mxu0 %v334
    %898 = vmatpush1.bf16.msra.mxu0 %v333
    %899 = vmatprep.subr.bf16.mxu0 %v338
    %900 = vmatpush1.bf16.msra.mxu0 %v337
    %901 = vmatprep.subr.bf16.mxu0 %v342
    %902 = vmatpush1.bf16.msra.mxu0 %v341
    %903 = vmatprep.subr.bf16.mxu0 %v346
    %904 = vmatpush1.bf16.msra.mxu0 %v345
    %905 = vmatprep.subr.bf16.mxu0 %v350
    %906 = vmatpush1.bf16.msra.mxu0 %v349
    %907 = vmatprep.subr.bf16.mxu0 %v354
    %908 = vmatpush1.bf16.msra.mxu0 %v353
    %909 = vmatprep.subr.bf16.mxu0 %v358
    %910 = vmatpush1.bf16.msra.mxu0 %v357
    %911 = vmatprep.subr.bf16.mxu0 %v362
    %912 = vmatpush1.bf16.msra.mxu0 %v361
    %913 = vmatprep.subr.bf16.mxu0 %v366
    %914 = vmatpush1.bf16.msra.mxu0 %v365
    %915 = vmatprep.subr.bf16.mxu0 %v370
    %916 = vmatpush1.bf16.msra.mxu0 %v369
    %917 = vmatprep.subr.bf16.mxu0 %v374
    %918 = vmatpush1.bf16.msra.mxu0 %v373
    %919 = vmatprep.subr.bf16.mxu0 %v378
    %920 = vmatpush1.bf16.msra.mxu0 %v377
    %921 = vmatprep.subr.bf16.mxu0 %v382
    %922 = vmatpush1.bf16.msra.mxu0 %v381
    %923 = vmatprep.subr.bf16.mxu0 %v386
    %924 = vmatpush1.bf16.msra.mxu0 %v385
    %925 = vmatprep.subr.bf16.mxu0 %v390
    %926 = vmatpush1.bf16.msra.mxu0 %v389
    %927 = vmatprep.subr.bf16.mxu0 %v394
    %928 = vmatpush1.bf16.msra.mxu0 %v393
    %929 = vmatprep.mubr.bf16.mxu0 %v896
    %930 = vmatmul.mubr.bf16.gmra.mrb[0].mxu0 %v895
    %v931 = vpop.f32.mrb[0].mxu0
    %v932 = vadd.f32 %v124, %v931
    %v933 = vpop.f32.mrb[0].mxu0
    %v934 = vadd.f32 %v128, %v933
    %v935 = vpop.f32.mrb[0].mxu0
    %v936 = vpop.f32.mrb[0].mxu0
    %937 = vdwg.mxu0
    %938 = vmatprep.subr.bf16.mxu0 %v336
    %939 = vmatpush1.bf16.msra.mxu0 %v335
    %940 = vmatprep.subr.bf16.mxu0 %v340
    %941 = vmatpush1.bf16.msra.mxu0 %v339
    %942 = vmatprep.subr.bf16.mxu0 %v344
    %943 = vmatpush1.bf16.msra.mxu0 %v343
    %944 = vmatprep.subr.bf16.mxu0 %v348
    %945 = vmatpush1.bf16.msra.mxu0 %v347
    %946 = vmatprep.subr.bf16.mxu0 %v352
    %947 = vmatpush1.bf16.msra.mxu0 %v351
    %948 = vmatprep.subr.bf16.mxu0 %v356
    %949 = vmatpush1.bf16.msra.mxu0 %v355
    %950 = vmatprep.subr.bf16.mxu0 %v360
    %951 = vmatpush1.bf16.msra.mxu0 %v359
    %952 = vmatprep.subr.bf16.mxu0 %v364
    %953 = vmatpush1.bf16.msra.mxu0 %v363
    %954 = vmatprep.subr.bf16.mxu0 %v368
    %955 = vmatpush1.bf16.msra.mxu0 %v367
    %956 = vmatprep.subr.bf16.mxu0 %v372
    %957 = vmatpush1.bf16.msra.mxu0 %v371
    %958 = vmatprep.subr.bf16.mxu0 %v376
    %959 = vmatpush1.bf16.msra.mxu0 %v375
    %960 = vmatprep.subr.bf16.mxu0 %v380
    %961 = vmatpush1.bf16.msra.mxu0 %v379
    %962 = vmatprep.subr.bf16.mxu0 %v384
    %963 = vmatpush1.bf16.msra.mxu0 %v383
    %964 = vmatprep.subr.bf16.mxu0 %v388
    %965 = vmatpush1.bf16.msra.mxu0 %v387
    %966 = vmatprep.subr.bf16.mxu0 %v392
    %967 = vmatpush1.bf16.msra.mxu0 %v391
    %968 = vmatprep.subr.bf16.mxu0 %v396
    %969 = vmatpush1.bf16.msra.mxu0 %v395
    %970 = vmatprep.mubr.bf16.mxu0 %v896
    %971 = vmatmul.mubr.bf16.gmra.mrb[0].mxu0 %v895
    %v972 = vpop.f32.mrb[0].mxu0
    %v973 = vadd.f32 %v132, %v972
    %v974 = vpop.f32.mrb[0].mxu0
    %v975 = vadd.f32 %v136, %v974
    %v976 = vpop.f32.mrb[0].mxu0
    %v977 = vpop.f32.mrb[0].mxu0
    %978 = vdwg.mxu0
    %v979 = vxor.u32 %v932, 2147483648
    %v980 = vmul.f32 %v979, 1.442695
    %v981 = vpow.pop %v980
    %v982 = vadd.f32 %v981, 1.0
    %v983 = vrcp.pop %v982
    %v984 = vmul.f32 1.0, %v983
    %v985 = vxor.u32 %v934, 2147483648
    %v986 = vmul.f32 %v985, 1.442695
    %v987 = vpow.pop %v986
    %v988 = vadd.f32 %v987, 1.0
    %v989 = vrcp.pop %v988
    %v990 = vmul.f32 1.0, %v989
    %v991 = vtanh.pop %v973
    %v992 = vxor.u32 %v975, 2147483648
    %v993 = vmul.f32 %v992, 1.442695
    %v994 = vpow.pop %v993
    %v995 = vadd.f32 %v994, 1.0
    %v996 = vrcp.pop %v995
    %v997 = vmul.f32 1.0, %v996
    %v998 = vmul.f32 %v990, %v891
    %v999 = vmul.f32 %v984, %v991
    %v1000 = vadd.f32 %v998, %v999
    %v1001 = vtanh.pop %v1000
    %v1002 = vmul.f32 %v997, %v1001
    %s1003 = scalar_lea.vmem %s1, 20
    %v1004 = vld [vmem:[%s1003] sm:$0xf]
    %v1005 = vpack.c.bf16 %v1002, %v1002
    %1006 = vmatprep.subr.bf16.mxu0 %v334
    %1007 = vmatpush1.bf16.msra.mxu0 %v333
    %1008 = vmatprep.subr.bf16.mxu0 %v338
    %1009 = vmatpush1.bf16.msra.mxu0 %v337
    %1010 = vmatprep.subr.bf16.mxu0 %v342
    %1011 = vmatpush1.bf16.msra.mxu0 %v341
    %1012 = vmatprep.subr.bf16.mxu0 %v346
    %1013 = vmatpush1.bf16.msra.mxu0 %v345
    %1014 = vmatprep.subr.bf16.mxu0 %v350
    %1015 = vmatpush1.bf16.msra.mxu0 %v349
    %1016 = vmatprep.subr.bf16.mxu0 %v354
    %1017 = vmatpush1.bf16.msra.mxu0 %v353
    %1018 = vmatprep.subr.bf16.mxu0 %v358
    %1019 = vmatpush1.bf16.msra.mxu0 %v357
    %1020 = vmatprep.subr.bf16.mxu0 %v362
    %1021 = vmatpush1.bf16.msra.mxu0 %v361
    %1022 = vmatprep.subr.bf16.mxu0 %v366
    %1023 = vmatpush1.bf16.msra.mxu0 %v365
    %1024 = vmatprep.subr.bf16.mxu0 %v370
    %1025 = vmatpush1.bf16.msra.mxu0 %v369
    %1026 = vmatprep.subr.bf16.mxu0 %v374
    %1027 = vmatpush1.bf16.msra.mxu0 %v373
    %1028 = vmatprep.subr.bf16.mxu0 %v378
    %1029 = vmatpush1.bf16.msra.mxu0 %v377
    %1030 = vmatprep.subr.bf16.mxu0 %v382
    %1031 = vmatpush1.bf16.msra.mxu0 %v381
    %1032 = vmatprep.subr.bf16.mxu0 %v386
    %1033 = vmatpush1.bf16.msra.mxu0 %v385
    %1034 = vmatprep.subr.bf16.mxu0 %v390
    %1035 = vmatpush1.bf16.msra.mxu0 %v389
    %1036 = vmatprep.subr.bf16.mxu0 %v394
    %1037 = vmatpush1.bf16.msra.mxu0 %v393
    %1038 = vmatprep.mubr.bf16.mxu0 %v1005
    %1039 = vmatmul.mubr.bf16.gmra.mrb[0].mxu0 %v1004
    %v1040 = vpop.f32.mrb[0].mxu0
    %v1041 = vadd.f32 %v124, %v1040
    %v1042 = vpop.f32.mrb[0].mxu0
    %v1043 = vadd.f32 %v128, %v1042
    %v1044 = vpop.f32.mrb[0].mxu0
    %v1045 = vpop.f32.mrb[0].mxu0
    %1046 = vdwg.mxu0
    %1047 = vmatprep.subr.bf16.mxu0 %v336
    %1048 = vmatpush1.bf16.msra.mxu0 %v335
    %1049 = vmatprep.subr.bf16.mxu0 %v340
    %1050 = vmatpush1.bf16.msra.mxu0 %v339
    %1051 = vmatprep.subr.bf16.mxu0 %v344
    %1052 = vmatpush1.bf16.msra.mxu0 %v343
    %1053 = vmatprep.subr.bf16.mxu0 %v348
    %1054 = vmatpush1.bf16.msra.mxu0 %v347
    %1055 = vmatprep.subr.bf16.mxu0 %v352
    %1056 = vmatpush1.bf16.msra.mxu0 %v351
    %1057 = vmatprep.subr.bf16.mxu0 %v356
    %1058 = vmatpush1.bf16.msra.mxu0 %v355
    %1059 = vmatprep.subr.bf16.mxu0 %v360
    %1060 = vmatpush1.bf16.msra.mxu0 %v359
    %1061 = vmatprep.subr.bf16.mxu0 %v364
    %1062 = vmatpush1.bf16.msra.mxu0 %v363
    %1063 = vmatprep.subr.bf16.mxu0 %v368
    %1064 = vmatpush1.bf16.msra.mxu0 %v367
    %1065 = vmatprep.subr.bf16.mxu0 %v372
    %1066 = vmatpush1.bf16.msra.mxu0 %v371
    %1067 = vmatprep.subr.bf16.mxu0 %v376
    %1068 = vmatpush1.bf16.msra.mxu0 %v375
    %1069 = vmatprep.subr.bf16.mxu0 %v380
    %1070 = vmatpush1.bf16.msra.mxu0 %v379
    %1071 = vmatprep.subr.bf16.mxu0 %v384
    %1072 = vmatpush1.bf16.msra.mxu0 %v383
    %1073 = vmatprep.subr.bf16.mxu0 %v388
    %1074 = vmatpush1.bf16.msra.mxu0 %v387
    %1075 = vmatprep.subr.bf16.mxu0 %v392
    %1076 = vmatpush1.bf16.msra.mxu0 %v391
    %1077 = vmatprep.subr.bf16.mxu0 %v396
    %1078 = vmatpush1.bf16.msra.mxu0 %v395
    %1079 = vmatprep.mubr.bf16.mxu0 %v1005
    %1080 = vmatmul.mubr.bf16.gmra.mrb[0].mxu0 %v1004
    %v1081 = vpop.f32.mrb[0].mxu0
    %v1082 = vadd.f32 %v132, %v1081
    %v1083 = vpop.f32.mrb[0].mxu0
    %v1084 = vadd.f32 %v136, %v1083
    %v1085 = vpop.f32.mrb[0].mxu0
    %v1086 = vpop.f32.mrb[0].mxu0
    %1087 = vdwg.mxu0
    %v1088 = vxor.u32 %v1041, 2147483648
    %v1089 = vmul.f32 %v1088, 1.442695
    %v1090 = vpow.pop %v1089
    %v1091 = vadd.f32 %v1090, 1.0
    %v1092 = vrcp.pop %v1091
    %v1093 = vmul.f32 1.0, %v1092
    %v1094 = vxor.u32 %v1043, 2147483648
    %v1095 = vmul.f32 %v1094, 1.442695
    %v1096 = vpow.pop %v1095
    %v1097 = vadd.f32 %v1096, 1.0
    %v1098 = vrcp.pop %v1097
    %v1099 = vmul.f32 1.0, %v1098
    %v1100 = vtanh.pop %v1082
    %v1101 = vxor.u32 %v1084, 2147483648
    %v1102 = vmul.f32 %v1101, 1.442695
    %v1103 = vpow.pop %v1102
    %v1104 = vadd.f32 %v1103, 1.0
    %v1105 = vrcp.pop %v1104
    %v1106 = vmul.f32 1.0, %v1105
    %v1107 = vmul.f32 %v1099, %v1000
    %v1108 = vmul.f32 %v1093, %v1100
    %v1109 = vadd.f32 %v1107, %v1108
    %v1110 = vtanh.pop %v1109
    %v1111 = vmul.f32 %v1106, %v1110
    %v1112 = vld [vmem:[%s2] sm:$0xf]
    %v1113 = vunpack.c.l.bf16 %v1112
    %1114 = vst [vmem:[#allocation2] sm:$0xff] %v1113
    %v1115 = vld [vmem:[#allocation2] sm:$0xff]
    %v1116 = vpack.c.bf16 %v1115, %v1115
    %v1117 = vpack.c.bf16 %v1111, %v1111
    %v1118 = vld [vmem:[#allocation5] sm:$0xff]
    %v1119 = vld [vmem:[#allocation5 + $0x8] sm:$0xff]
    %v1120 = vld [vmem:[#allocation5 + $0x10] sm:$0xff]
    %v1121 = vld [vmem:[#allocation5 + $0x18] sm:$0xff]
    %v1122 = vld [vmem:[#allocation5 + $0x20] sm:$0xff]
    %v1123 = vld [vmem:[#allocation5 + $0x28] sm:$0xff]
    %v1124 = vld [vmem:[#allocation5 + $0x30] sm:$0xff]
    %v1125 = vld [vmem:[#allocation5 + $0x38] sm:$0xff]
    %v1126 = vld [vmem:[#allocation5 + $0x40] sm:$0xff]
    %v1127 = vld [vmem:[#allocation5 + $0x48] sm:$0xff]
    %v1128 = vld [vmem:[#allocation5 + $0x50] sm:$0xff]
    %v1129 = vld [vmem:[#allocation5 + $0x58] sm:$0xff]
    %v1130 = vld [vmem:[#allocation5 + $0x60] sm:$0xff]
    %v1131 = vld [vmem:[#allocation5 + $0x68] sm:$0xff]
    %v1132 = vld [vmem:[#allocation5 + $0x70] sm:$0xff]
    %v1133 = vld [vmem:[#allocation5 + $0x78] sm:$0xff]
    %v1134 = vld [vmem:[#allocation5 + $0x80] sm:$0xff]
    %v1135 = vld [vmem:[#allocation5 + $0x88] sm:$0xff]
    %v1136 = vld [vmem:[#allocation5 + $0x90] sm:$0xff]
    %v1137 = vld [vmem:[#allocation5 + $0x98] sm:$0xff]
    %v1138 = vld [vmem:[#allocation5 + $0xa0] sm:$0xff]
    %v1139 = vld [vmem:[#allocation5 + $0xa8] sm:$0xff]
    %v1140 = vld [vmem:[#allocation5 + $0xb0] sm:$0xff]
    %v1141 = vld [vmem:[#allocation5 + $0xb8] sm:$0xff]
    %v1142 = vld [vmem:[#allocation5 + $0xc0] sm:$0xff]
    %v1143 = vld [vmem:[#allocation5 + $0xc8] sm:$0xff]
    %v1144 = vld [vmem:[#allocation5 + $0xd0] sm:$0xff]
    %v1145 = vld [vmem:[#allocation5 + $0xd8] sm:$0xff]
    %v1146 = vld [vmem:[#allocation5 + $0xe0] sm:$0xff]
    %v1147 = vld [vmem:[#allocation5 + $0xe8] sm:$0xff]
    %v1148 = vld [vmem:[#allocation5 + $0xf0] sm:$0xff]
    %v1149 = vld [vmem:[#allocation5 + $0xf8] sm:$0xff]
    %v1150 = vld [vmem:[#allocation5 + $0x100] sm:$0xff]
    %v1151 = vld [vmem:[#allocation5 + $0x108] sm:$0xff]
    %v1152 = vld [vmem:[#allocation5 + $0x110] sm:$0xff]
    %v1153 = vld [vmem:[#allocation5 + $0x118] sm:$0xff]
    %v1154 = vld [vmem:[#allocation5 + $0x120] sm:$0xff]
    %v1155 = vld [vmem:[#allocation5 + $0x128] sm:$0xff]
    %v1156 = vld [vmem:[#allocation5 + $0x130] sm:$0xff]
    %v1157 = vld [vmem:[#allocation5 + $0x138] sm:$0xff]
    %v1158 = vld [vmem:[#allocation5 + $0x140] sm:$0xff]
    %v1159 = vld [vmem:[#allocation5 + $0x148] sm:$0xff]
    %v1160 = vld [vmem:[#allocation5 + $0x150] sm:$0xff]
    %v1161 = vld [vmem:[#allocation5 + $0x158] sm:$0xff]
    %v1162 = vld [vmem:[#allocation5 + $0x160] sm:$0xff]
    %v1163 = vld [vmem:[#allocation5 + $0x168] sm:$0xff]
    %v1164 = vld [vmem:[#allocation5 + $0x170] sm:$0xff]
    %v1165 = vld [vmem:[#allocation5 + $0x178] sm:$0xff]
    %v1166 = vld [vmem:[#allocation5 + $0x180] sm:$0xff]
    %v1167 = vld [vmem:[#allocation5 + $0x188] sm:$0xff]
    %v1168 = vld [vmem:[#allocation5 + $0x190] sm:$0xff]
    %v1169 = vld [vmem:[#allocation5 + $0x198] sm:$0xff]
    %v1170 = vld [vmem:[#allocation5 + $0x1a0] sm:$0xff]
    %v1171 = vld [vmem:[#allocation5 + $0x1a8] sm:$0xff]
    %v1172 = vld [vmem:[#allocation5 + $0x1b0] sm:$0xff]
    %v1173 = vld [vmem:[#allocation5 + $0x1b8] sm:$0xff]
    %v1174 = vld [vmem:[#allocation5 + $0x1c0] sm:$0xff]
    %v1175 = vld [vmem:[#allocation5 + $0x1c8] sm:$0xff]
    %v1176 = vld [vmem:[#allocation5 + $0x1d0] sm:$0xff]
    %v1177 = vld [vmem:[#allocation5 + $0x1d8] sm:$0xff]
    %v1178 = vld [vmem:[#allocation5 + $0x1e0] sm:$0xff]
    %v1179 = vld [vmem:[#allocation5 + $0x1e8] sm:$0xff]
    %v1180 = vld [vmem:[#allocation5 + $0x1f0] sm:$0xff]
    %v1181 = vld [vmem:[#allocation5 + $0x1f8] sm:$0xff]
    %v1182 = vld [vmem:[%s6] sm:$0xf]
    %v1184 = vlaneseq
    %v1185 = vshrl.u32 %v1184, 7
    %v1186 = vsub.s32 0, %v1185
    %v1187 = vrot.slane %v1182, %v1186
    %v1188 = vlaneseq
    %v1189 = vshrl.u32 %v1188, 7
    %v1190 = vsub.s32 1, %v1189
    %v1191 = vrot.slane %v1182, %v1190
    %v1192 = vlaneseq
    %v1193 = vshrl.u32 %v1192, 7
    %v1194 = vsub.s32 2, %v1193
    %v1195 = vrot.slane %v1182, %v1194
    %v1196 = vlaneseq
    %v1197 = vshrl.u32 %v1196, 7
    %v1198 = vsub.s32 3, %v1197
    %v1199 = vrot.slane %v1182, %v1198
    %v1268 = vunpack.c.l.b16 %v1118
    %v1269 = vunpack.c.h.b16 %v1118
    %v1270 = vunpack.c.l.b16 %v1119
    %v1271 = vunpack.c.h.b16 %v1119
    %v1272 = vunpack.c.l.b16 %v1120
    %v1273 = vunpack.c.h.b16 %v1120
    %v1274 = vunpack.c.l.b16 %v1121
    %v1275 = vunpack.c.h.b16 %v1121
    %v1276 = vunpack.c.l.b16 %v1122
    %v1277 = vunpack.c.h.b16 %v1122
    %v1278 = vunpack.c.l.b16 %v1123
    %v1279 = vunpack.c.h.b16 %v1123
    %v1280 = vunpack.c.l.b16 %v1124
    %v1281 = vunpack.c.h.b16 %v1124
    %v1282 = vunpack.c.l.b16 %v1125
    %v1283 = vunpack.c.h.b16 %v1125
    %v1284 = vunpack.c.l.b16 %v1126
    %v1285 = vunpack.c.h.b16 %v1126
    %v1286 = vunpack.c.l.b16 %v1127
    %v1287 = vunpack.c.h.b16 %v1127
    %v1288 = vunpack.c.l.b16 %v1128
    %v1289 = vunpack.c.h.b16 %v1128
    %v1290 = vunpack.c.l.b16 %v1129
    %v1291 = vunpack.c.h.b16 %v1129
    %v1292 = vunpack.c.l.b16 %v1130
    %v1293 = vunpack.c.h.b16 %v1130
    %v1294 = vunpack.c.l.b16 %v1131
    %v1295 = vunpack.c.h.b16 %v1131
    %v1296 = vunpack.c.l.b16 %v1132
    %v1297 = vunpack.c.h.b16 %v1132
    %v1298 = vunpack.c.l.b16 %v1133
    %v1299 = vunpack.c.h.b16 %v1133
    %v1300 = vunpack.c.l.b16 %v1134
    %v1301 = vunpack.c.h.b16 %v1134
    %v1302 = vunpack.c.l.b16 %v1135
    %v1303 = vunpack.c.h.b16 %v1135
    %v1304 = vunpack.c.l.b16 %v1136
    %v1305 = vunpack.c.h.b16 %v1136
    %v1306 = vunpack.c.l.b16 %v1137
    %v1307 = vunpack.c.h.b16 %v1137
    %v1308 = vunpack.c.l.b16 %v1138
    %v1309 = vunpack.c.h.b16 %v1138
    %v1310 = vunpack.c.l.b16 %v1139
    %v1311 = vunpack.c.h.b16 %v1139
    %v1312 = vunpack.c.l.b16 %v1140
    %v1313 = vunpack.c.h.b16 %v1140
    %v1314 = vunpack.c.l.b16 %v1141
    %v1315 = vunpack.c.h.b16 %v1141
    %v1316 = vunpack.c.l.b16 %v1142
    %v1317 = vunpack.c.h.b16 %v1142
    %v1318 = vunpack.c.l.b16 %v1143
    %v1319 = vunpack.c.h.b16 %v1143
    %v1320 = vunpack.c.l.b16 %v1144
    %v1321 = vunpack.c.h.b16 %v1144
    %v1322 = vunpack.c.l.b16 %v1145
    %v1323 = vunpack.c.h.b16 %v1145
    %v1324 = vunpack.c.l.b16 %v1146
    %v1325 = vunpack.c.h.b16 %v1146
    %v1326 = vunpack.c.l.b16 %v1147
    %v1327 = vunpack.c.h.b16 %v1147
    %v1328 = vunpack.c.l.b16 %v1148
    %v1329 = vunpack.c.h.b16 %v1148
    %v1330 = vunpack.c.l.b16 %v1149
    %v1331 = vunpack.c.h.b16 %v1149
    %v1332 = vunpack.c.l.b16 %v1150
    %v1333 = vunpack.c.h.b16 %v1150
    %v1334 = vunpack.c.l.b16 %v1151
    %v1335 = vunpack.c.h.b16 %v1151
    %v1336 = vunpack.c.l.b16 %v1152
    %v1337 = vunpack.c.h.b16 %v1152
    %v1338 = vunpack.c.l.b16 %v1153
    %v1339 = vunpack.c.h.b16 %v1153
    %v1340 = vunpack.c.l.b16 %v1154
    %v1341 = vunpack.c.h.b16 %v1154
    %v1342 = vunpack.c.l.b16 %v1155
    %v1343 = vunpack.c.h.b16 %v1155
    %v1344 = vunpack.c.l.b16 %v1156
    %v1345 = vunpack.c.h.b16 %v1156
    %v1346 = vunpack.c.l.b16 %v1157
    %v1347 = vunpack.c.h.b16 %v1157
    %v1348 = vunpack.c.l.b16 %v1158
    %v1349 = vunpack.c.h.b16 %v1158
    %v1350 = vunpack.c.l.b16 %v1159
    %v1351 = vunpack.c.h.b16 %v1159
    %v1352 = vunpack.c.l.b16 %v1160
    %v1353 = vunpack.c.h.b16 %v1160
    %v1354 = vunpack.c.l.b16 %v1161
    %v1355 = vunpack.c.h.b16 %v1161
    %v1356 = vunpack.c.l.b16 %v1162
    %v1357 = vunpack.c.h.b16 %v1162
    %v1358 = vunpack.c.l.b16 %v1163
    %v1359 = vunpack.c.h.b16 %v1163
    %v1360 = vunpack.c.l.b16 %v1164
    %v1361 = vunpack.c.h.b16 %v1164
    %v1362 = vunpack.c.l.b16 %v1165
    %v1363 = vunpack.c.h.b16 %v1165
    %v1364 = vunpack.c.l.b16 %v1166
    %v1365 = vunpack.c.h.b16 %v1166
    %v1366 = vunpack.c.l.b16 %v1167
    %v1367 = vunpack.c.h.b16 %v1167
    %v1368 = vunpack.c.l.b16 %v1168
    %v1369 = vunpack.c.h.b16 %v1168
    %v1370 = vunpack.c.l.b16 %v1169
    %v1371 = vunpack.c.h.b16 %v1169
    %v1372 = vunpack.c.l.b16 %v1170
    %v1373 = vunpack.c.h.b16 %v1170
    %v1374 = vunpack.c.l.b16 %v1171
    %v1375 = vunpack.c.h.b16 %v1171
    %v1376 = vunpack.c.l.b16 %v1172
    %v1377 = vunpack.c.h.b16 %v1172
    %v1378 = vunpack.c.l.b16 %v1173
    %v1379 = vunpack.c.h.b16 %v1173
    %v1380 = vunpack.c.l.b16 %v1174
    %v1381 = vunpack.c.h.b16 %v1174
    %v1382 = vunpack.c.l.b16 %v1175
    %v1383 = vunpack.c.h.b16 %v1175
    %v1384 = vunpack.c.l.b16 %v1176
    %v1385 = vunpack.c.h.b16 %v1176
    %v1386 = vunpack.c.l.b16 %v1177
    %v1387 = vunpack.c.h.b16 %v1177
    %v1388 = vunpack.c.l.b16 %v1178
    %v1389 = vunpack.c.h.b16 %v1178
    %v1390 = vunpack.c.l.b16 %v1179
    %v1391 = vunpack.c.h.b16 %v1179
    %v1392 = vunpack.c.l.b16 %v1180
    %v1393 = vunpack.c.h.b16 %v1180
    %v1394 = vunpack.c.l.b16 %v1181
    %v1395 = vunpack.c.h.b16 %v1181
    %v1396 = vpack.c.b16 %v1272, %v1268
    %v1397 = vpack.c.b16 %v1273, %v1269
    %v1398 = vpack.c.b16 %v1274, %v1270
    %v1399 = vpack.c.b16 %v1275, %v1271
    %v1400 = vpack.c.b16 %v1280, %v1276
    %v1401 = vpack.c.b16 %v1281, %v1277
    %v1402 = vpack.c.b16 %v1282, %v1278
    %v1403 = vpack.c.b16 %v1283, %v1279
    %v1404 = vpack.c.b16 %v1288, %v1284
    %v1405 = vpack.c.b16 %v1289, %v1285
    %v1406 = vpack.c.b16 %v1290, %v1286
    %v1407 = vpack.c.b16 %v1291, %v1287
    %v1408 = vpack.c.b16 %v1296, %v1292
    %v1409 = vpack.c.b16 %v1297, %v1293
    %v1410 = vpack.c.b16 %v1298, %v1294
    %v1411 = vpack.c.b16 %v1299, %v1295
    %v1412 = vpack.c.b16 %v1304, %v1300
    %v1413 = vpack.c.b16 %v1305, %v1301
    %v1414 = vpack.c.b16 %v1306, %v1302
    %v1415 = vpack.c.b16 %v1307, %v1303
    %v1416 = vpack.c.b16 %v1312, %v1308
    %v1417 = vpack.c.b16 %v1313, %v1309
    %v1418 = vpack.c.b16 %v1314, %v1310
    %v1419 = vpack.c.b16 %v1315, %v1311
    %v1420 = vpack.c.b16 %v1320, %v1316
    %v1421 = vpack.c.b16 %v1321, %v1317
    %v1422 = vpack.c.b16 %v1322, %v1318
    %v1423 = vpack.c.b16 %v1323, %v1319
    %v1424 = vpack.c.b16 %v1328, %v1324
    %v1425 = vpack.c.b16 %v1329, %v1325
    %v1426 = vpack.c.b16 %v1330, %v1326
    %v1427 = vpack.c.b16 %v1331, %v1327
    %v1428 = vpack.c.b16 %v1336, %v1332
    %v1429 = vpack.c.b16 %v1337, %v1333
    %v1430 = vpack.c.b16 %v1338, %v1334
    %v1431 = vpack.c.b16 %v1339, %v1335
    %v1432 = vpack.c.b16 %v1344, %v1340
    %v1433 = vpack.c.b16 %v1345, %v1341
    %v1434 = vpack.c.b16 %v1346, %v1342
    %v1435 = vpack.c.b16 %v1347, %v1343
    %v1436 = vpack.c.b16 %v1352, %v1348
    %v1437 = vpack.c.b16 %v1353, %v1349
    %v1438 = vpack.c.b16 %v1354, %v1350
    %v1439 = vpack.c.b16 %v1355, %v1351
    %v1440 = vpack.c.b16 %v1360, %v1356
    %v1441 = vpack.c.b16 %v1361, %v1357
    %v1442 = vpack.c.b16 %v1362, %v1358
    %v1443 = vpack.c.b16 %v1363, %v1359
    %v1444 = vpack.c.b16 %v1368, %v1364
    %v1445 = vpack.c.b16 %v1369, %v1365
    %v1446 = vpack.c.b16 %v1370, %v1366
    %v1447 = vpack.c.b16 %v1371, %v1367
    %v1448 = vpack.c.b16 %v1376, %v1372
    %v1449 = vpack.c.b16 %v1377, %v1373
    %v1450 = vpack.c.b16 %v1378, %v1374
    %v1451 = vpack.c.b16 %v1379, %v1375
    %v1452 = vpack.c.b16 %v1384, %v1380
    %v1453 = vpack.c.b16 %v1385, %v1381
    %v1454 = vpack.c.b16 %v1386, %v1382
    %v1455 = vpack.c.b16 %v1387, %v1383
    %v1456 = vpack.c.b16 %v1392, %v1388
    %v1457 = vpack.c.b16 %v1393, %v1389
    %v1458 = vpack.c.b16 %v1394, %v1390
    %v1459 = vpack.c.b16 %v1395, %v1391
    %1524 = vmatprep.subr.bf16.mxu0 %v1397
    %1525 = vmatpush1.bf16.msra.mxu0 %v1396
    %1526 = vmatprep.subr.bf16.mxu0 %v1401
    %1527 = vmatpush1.bf16.msra.mxu0 %v1400
    %1528 = vmatprep.subr.bf16.mxu0 %v1405
    %1529 = vmatpush1.bf16.msra.mxu0 %v1404
    %1530 = vmatprep.subr.bf16.mxu0 %v1409
    %1531 = vmatpush1.bf16.msra.mxu0 %v1408
    %1532 = vmatprep.subr.bf16.mxu0 %v1413
    %1533 = vmatpush1.bf16.msra.mxu0 %v1412
    %1534 = vmatprep.subr.bf16.mxu0 %v1417
    %1535 = vmatpush1.bf16.msra.mxu0 %v1416
    %1536 = vmatprep.subr.bf16.mxu0 %v1421
    %1537 = vmatpush1.bf16.msra.mxu0 %v1420
    %1538 = vmatprep.subr.bf16.mxu0 %v1425
    %1539 = vmatpush1.bf16.msra.mxu0 %v1424
    %1540 = vmatprep.subr.bf16.mxu0 %v1429
    %1541 = vmatpush1.bf16.msra.mxu0 %v1428
    %1542 = vmatprep.subr.bf16.mxu0 %v1433
    %1543 = vmatpush1.bf16.msra.mxu0 %v1432
    %1544 = vmatprep.subr.bf16.mxu0 %v1437
    %1545 = vmatpush1.bf16.msra.mxu0 %v1436
    %1546 = vmatprep.subr.bf16.mxu0 %v1441
    %1547 = vmatpush1.bf16.msra.mxu0 %v1440
    %1548 = vmatprep.subr.bf16.mxu0 %v1445
    %1549 = vmatpush1.bf16.msra.mxu0 %v1444
    %1550 = vmatprep.subr.bf16.mxu0 %v1449
    %1551 = vmatpush1.bf16.msra.mxu0 %v1448
    %1552 = vmatprep.subr.bf16.mxu0 %v1453
    %1553 = vmatpush1.bf16.msra.mxu0 %v1452
    %1554 = vmatprep.subr.bf16.mxu0 %v1457
    %1555 = vmatpush1.bf16.msra.mxu0 %v1456
    %1556 = vmatprep.mubr.bf16.mxu0 %v1117
    %1557 = vmatmul.mubr.bf16.gmra.mrb[0].mxu0 %v1116
    %v1558 = vpop.f32.mrb[0].mxu0
    %v1559 = vadd.f32 %v1187, %v1558
    %v1560 = vpop.f32.mrb[0].mxu0
    %v1561 = vadd.f32 %v1191, %v1560
    %v1562 = vpop.f32.mrb[0].mxu0
    %v1563 = vpop.f32.mrb[0].mxu0
    %1564 = vdwg.mxu0
    %1565 = vmatprep.subr.bf16.mxu0 %v1399
    %1566 = vmatpush1.bf16.msra.mxu0 %v1398
    %1567 = vmatprep.subr.bf16.mxu0 %v1403
    %1568 = vmatpush1.bf16.msra.mxu0 %v1402
    %1569 = vmatprep.subr.bf16.mxu0 %v1407
    %1570 = vmatpush1.bf16.msra.mxu0 %v1406
    %1571 = vmatprep.subr.bf16.mxu0 %v1411
    %1572 = vmatpush1.bf16.msra.mxu0 %v1410
    %1573 = vmatprep.subr.bf16.mxu0 %v1415
    %1574 = vmatpush1.bf16.msra.mxu0 %v1414
    %1575 = vmatprep.subr.bf16.mxu0 %v1419
    %1576 = vmatpush1.bf16.msra.mxu0 %v1418
    %1577 = vmatprep.subr.bf16.mxu0 %v1423
    %1578 = vmatpush1.bf16.msra.mxu0 %v1422
    %1579 = vmatprep.subr.bf16.mxu0 %v1427
    %1580 = vmatpush1.bf16.msra.mxu0 %v1426
    %1581 = vmatprep.subr.bf16.mxu0 %v1431
    %1582 = vmatpush1.bf16.msra.mxu0 %v1430
    %1583 = vmatprep.subr.bf16.mxu0 %v1435
    %1584 = vmatpush1.bf16.msra.mxu0 %v1434
    %1585 = vmatprep.subr.bf16.mxu0 %v1439
    %1586 = vmatpush1.bf16.msra.mxu0 %v1438
    %1587 = vmatprep.subr.bf16.mxu0 %v1443
    %1588 = vmatpush1.bf16.msra.mxu0 %v1442
    %1589 = vmatprep.subr.bf16.mxu0 %v1447
    %1590 = vmatpush1.bf16.msra.mxu0 %v1446
    %1591 = vmatprep.subr.bf16.mxu0 %v1451
    %1592 = vmatpush1.bf16.msra.mxu0 %v1450
    %1593 = vmatprep.subr.bf16.mxu0 %v1455
    %1594 = vmatpush1.bf16.msra.mxu0 %v1454
    %1595 = vmatprep.subr.bf16.mxu0 %v1459
    %1596 = vmatpush1.bf16.msra.mxu0 %v1458
    %1597 = vmatprep.mubr.bf16.mxu0 %v1117
    %1598 = vmatmul.mubr.bf16.gmra.mrb[0].mxu0 %v1116
    %v1599 = vpop.f32.mrb[0].mxu0
    %v1600 = vadd.f32 %v1195, %v1599
    %v1601 = vpop.f32.mrb[0].mxu0
    %v1602 = vadd.f32 %v1199, %v1601
    %v1603 = vpop.f32.mrb[0].mxu0
    %v1604 = vpop.f32.mrb[0].mxu0
    %1605 = vdwg.mxu0
    %v1606 = vxor.u32 %v1559, 2147483648
    %v1607 = vmul.f32 %v1606, 1.442695
    %v1608 = vpow.pop %v1607
    %v1609 = vadd.f32 %v1608, 1.0
    %v1610 = vrcp.pop %v1609
    %v1611 = vmul.f32 1.0, %v1610
    %v1612 = vxor.u32 %v1561, 2147483648
    %v1613 = vmul.f32 %v1612, 1.442695
    %v1614 = vpow.pop %v1613
    %v1615 = vadd.f32 %v1614, 1.0
    %v1616 = vrcp.pop %v1615
    %v1617 = vmul.f32 1.0, %v1616
    %v1618 = vtanh.pop %v1600
    %v1619 = vxor.u32 %v1602, 2147483648
    %v1620 = vmul.f32 %v1619, 1.442695
    %v1621 = vpow.pop %v1620
    %v1622 = vadd.f32 %v1621, 1.0
    %v1623 = vrcp.pop %v1622
    %v1624 = vmul.f32 1.0, %v1623
    %v1625 = vmul.f32 %v1617, %v1109
    %v1626 = vmul.f32 %v1611, %v1618
    %v1627 = vadd.f32 %v1625, %v1626
    %v1628 = vtanh.pop %v1627
    %v1629 = vmul.f32 %v1624, %v1628
    %v1630 = vpack.c.bf16 %v1629, %v1629
    %v1631 = vld [vmem:[%s7] sm:$0xf]
    %v1632 = vld [vmem:[%s7 + $0x4] sm:$0xf]
    %v1633 = vld [vmem:[%s7 + $0x8] sm:$0xf]
    %v1634 = vld [vmem:[%s7 + $0xc] sm:$0xf]
    %v1635 = vld [vmem:[%s7 + $0x10] sm:$0xf]
    %v1636 = vld [vmem:[%s7 + $0x14] sm:$0xf]
    %v1637 = vld [vmem:[%s7 + $0x18] sm:$0xf]
    %v1638 = vld [vmem:[%s7 + $0x1c] sm:$0xf]
    %v1639 = vld [vmem:[%s7 + $0x20] sm:$0xf]
    %v1640 = vld [vmem:[%s7 + $0x24] sm:$0xf]
    %v1641 = vld [vmem:[%s7 + $0x28] sm:$0xf]
    %v1642 = vld [vmem:[%s7 + $0x2c] sm:$0xf]
    %v1643 = vld [vmem:[%s7 + $0x30] sm:$0xf]
    %v1644 = vld [vmem:[%s7 + $0x34] sm:$0xf]
    %v1645 = vld [vmem:[%s7 + $0x38] sm:$0xf]
    %v1646 = vld [vmem:[%s7 + $0x3c] sm:$0xf]
    %v1647 = vld [vmem:[%s8] sm:$0x1]
    %v1649 = vlaneseq
    %v1650 = vshrl.u32 %v1649, 7
    %v1651 = vsub.s32 0, %v1650
    %v1652 = vrot.slane %v1647, %v1651
    %v1670 = vunpack.c.l.b16 %v1631
    %v1671 = vunpack.c.l.b16 %v1632
    %v1672 = vunpack.c.l.b16 %v1633
    %v1673 = vunpack.c.l.b16 %v1634
    %v1674 = vunpack.c.l.b16 %v1635
    %v1675 = vunpack.c.l.b16 %v1636
    %v1676 = vunpack.c.l.b16 %v1637
    %v1677 = vunpack.c.l.b16 %v1638
    %v1678 = vunpack.c.l.b16 %v1639
    %v1679 = vunpack.c.l.b16 %v1640
    %v1680 = vunpack.c.l.b16 %v1641
    %v1681 = vunpack.c.l.b16 %v1642
    %v1682 = vunpack.c.l.b16 %v1643
    %v1683 = vunpack.c.l.b16 %v1644
    %v1684 = vunpack.c.l.b16 %v1645
    %v1685 = vunpack.c.l.b16 %v1646
    %v1686 = vpack.c.b16 %v1671, %v1670
    %v1687 = vpack.c.b16 %v1673, %v1672
    %v1688 = vpack.c.b16 %v1675, %v1674
    %v1689 = vpack.c.b16 %v1677, %v1676
    %v1690 = vpack.c.b16 %v1679, %v1678
    %v1691 = vpack.c.b16 %v1681, %v1680
    %v1692 = vpack.c.b16 %v1683, %v1682
    %v1693 = vpack.c.b16 %v1685, %v1684
    %1702 = vmatprep.subr.bf16.mxu0 0
    %1703 = vmatpush1.bf16.msra.mxu0 %v1686
    %1704 = vmatprep.subr.bf16.mxu0 0
    %1705 = vmatpush1.bf16.msra.mxu0 %v1687
    %1706 = vmatprep.subr.bf16.mxu0 0
    %1707 = vmatpush1.bf16.msra.mxu0 %v1688
    %1708 = vmatprep.subr.bf16.mxu0 0
    %1709 = vmatpush1.bf16.msra.mxu0 %v1689
    %1710 = vmatprep.subr.bf16.mxu0 0
    %1711 = vmatpush1.bf16.msra.mxu0 %v1690
    %1712 = vmatprep.subr.bf16.mxu0 0
    %1713 = vmatpush1.bf16.msra.mxu0 %v1691
    %1714 = vmatprep.subr.bf16.mxu0 0
    %1715 = vmatpush1.bf16.msra.mxu0 %v1692
    %1716 = vmatprep.subr.bf16.mxu0 0
    %1717 = vmatpush1.bf16.msra.mxu0 %v1693
    %1718 = vmatprep.subr.bf16.mxu0 0
    %1719 = vmatpush1.bf16.msra.mxu0 0
    %1720 = vmatprep.subr.bf16.mxu0 0
    %1721 = vmatpush1.bf16.msra.mxu0 0
    %1722 = vmatprep.subr.bf16.mxu0 0
    %1723 = vmatpush1.bf16.msra.mxu0 0
    %1724 = vmatprep.subr.bf16.mxu0 0
    %1725 = vmatpush1.bf16.msra.mxu0 0
    %1726 = vmatprep.subr.bf16.mxu0 0
    %1727 = vmatpush1.bf16.msra.mxu0 0
    %1728 = vmatprep.subr.bf16.mxu0 0
    %1729 = vmatpush1.bf16.msra.mxu0 0
    %1730 = vmatprep.subr.bf16.mxu0 0
    %1731 = vmatpush1.bf16.msra.mxu0 0
    %1732 = vmatprep.subr.bf16.mxu0 0
    %1733 = vmatpush1.bf16.msra.mxu0 0
    %1734 = vmatprep.mubr.bf16.mxu0 0
    %1735 = vmatmul.mubr.bf16.gmra.mrb[0].mxu0 %v1630
    %v1736 = vpop.f32.mrb[0].mxu0
    %v1737 = vadd.f32 %v1652, %v1736
    %v1738 = vpop.f32.mrb[0].mxu0
    %v1739 = vpop.f32.mrb[0].mxu0
    %v1740 = vpop.f32.mrb[0].mxu0
    %1741 = vdwg.mxu0
    %1742 = vst [vmem:[%s10] sm:$0xff] %v1737
    %s1743 = sld [smem:[#allocation4 + $0x1]]
    %p1744 = scmp.eq.s32.totalorder %s1743, 0
    // Predicated region
    $region42: #{seq2seq_forward.1} parent=1 // pred_check
      %p1745 = pneg %p1744
    $region43: #{seq2seq_forward.1} parent=1 // pred_check_branch
      %1747 = sbr.rel (%p1745) target = $region45
    $region44: #{seq2seq_forward.1} parent=1 // pred_region
      %1748 = vmax.xlane.f32.xlu0 %v1737
      %v1749 = vpop.xlane.xlu0 %1748
      %v1750 = vlaneseq
      %v1751 = vand.u32 %v1750, 127
      %vm1752 = vcmp.eq.f32.partialorder %v1737, %v1749
      %v1753 = vsel %vm1752, %v1751, 128
      %v1754 = vand.u32 %v1753, 65535
      %v1755 = vshra.s32 %v1753, 16
      %v1756 = vcvt.s32.f32 %v1754
      %v1757 = vcvt.s32.f32 %v1755
      %1758 = vmin.xlane.f32.xlu0 %v1757
      %v1759 = vpop.xlane.xlu0 %1758
      %vm1760 = vcmp.eq.f32.partialorder %v1757, %v1759
      %v1761 = vsel %vm1760, %v1756, inf
      %1762 = vmin.xlane.f32.xlu0 %v1761
      %v1763 = vpop.xlane.xlu0 %1762
      %v1764 = vcvt.f32.s32 %v1763
      %v1765 = vcvt.f32.s32 %v1759
      %v1766 = vshll.u32 %v1765, 16
      %v1767 = vadd.s32 %v1766, %v1764
      %vm1768 = vcmp.eq.s32.totalorder %v1751, %v1767
      %v1769 = vsel %vm1768, 1, 0
      %v1770 = vcvt.s32.f32 %v1769
      %v1771 = vpack.c.bf16 %v1770, %v1770
      %v1772 = vld [vmem:[%s9] sm:$0xf]
      %v1773 = vld [vmem:[%s9 + $0x4] sm:$0xf]
      %v1774 = vld [vmem:[%s9 + $0x8] sm:$0xf]
      %v1775 = vld [vmem:[%s9 + $0xc] sm:$0xf]
      %v1776 = vld [vmem:[%s9 + $0x10] sm:$0xf]
      %v1777 = vld [vmem:[%s9 + $0x14] sm:$0xf]
      %v1778 = vld [vmem:[%s9 + $0x18] sm:$0xf]
      %v1779 = vld [vmem:[%s9 + $0x1c] sm:$0xf]
      %v1780 = vld [vmem:[%s9 + $0x20] sm:$0xf]
      %v1781 = vld [vmem:[%s9 + $0x24] sm:$0xf]
      %v1782 = vld [vmem:[%s9 + $0x28] sm:$0xf]
      %v1783 = vld [vmem:[%s9 + $0x2c] sm:$0xf]
      %v1784 = vld [vmem:[%s9 + $0x30] sm:$0xf]
      %v1785 = vld [vmem:[%s9 + $0x34] sm:$0xf]
      %v1786 = vld [vmem:[%s9 + $0x38] sm:$0xf]
      %v1787 = vld [vmem:[%s9 + $0x3c] sm:$0xf]
      %v1804 = vunpack.c.l.b16 %v1772
      %v1805 = vunpack.c.l.b16 %v1773
      %v1806 = vunpack.c.l.b16 %v1774
      %v1807 = vunpack.c.l.b16 %v1775
      %v1808 = vunpack.c.l.b16 %v1776
      %v1809 = vunpack.c.l.b16 %v1777
      %v1810 = vunpack.c.l.b16 %v1778
      %v1811 = vunpack.c.l.b16 %v1779
      %v1812 = vunpack.c.l.b16 %v1780
      %v1813 = vunpack.c.l.b16 %v1781
      %v1814 = vunpack.c.l.b16 %v1782
      %v1815 = vunpack.c.l.b16 %v1783
      %v1816 = vunpack.c.l.b16 %v1784
      %v1817 = vunpack.c.l.b16 %v1785
      %v1818 = vunpack.c.l.b16 %v1786
      %v1819 = vunpack.c.l.b16 %v1787
      %v1820 = vpack.c.b16 %v1805, %v1804
      %v1821 = vpack.c.b16 %v1807, %v1806
      %v1822 = vpack.c.b16 %v1809, %v1808
      %v1823 = vpack.c.b16 %v1811, %v1810
      %v1824 = vpack.c.b16 %v1813, %v1812
      %v1825 = vpack.c.b16 %v1815, %v1814
      %v1826 = vpack.c.b16 %v1817, %v1816
      %v1827 = vpack.c.b16 %v1819, %v1818
      %1836 = vmatprep.subr.bf16.mxu0 0
      %1837 = vmatpush1.bf16.msra.mxu0 %v1820
      %1838 = vmatprep.subr.bf16.mxu0 0
      %1839 = vmatpush1.bf16.msra.mxu0 %v1821
      %1840 = vmatprep.subr.bf16.mxu0 0
      %1841 = vmatpush1.bf16.msra.mxu0 %v1822
      %1842 = vmatprep.subr.bf16.mxu0 0
      %1843 = vmatpush1.bf16.msra.mxu0 %v1823
      %1844 = vmatprep.subr.bf16.mxu0 0
      %1845 = vmatpush1.bf16.msra.mxu0 %v1824
      %1846 = vmatprep.subr.bf16.mxu0 0
      %1847 = vmatpush1.bf16.msra.mxu0 %v1825
      %1848 = vmatprep.subr.bf16.mxu0 0
      %1849 = vmatpush1.bf16.msra.mxu0 %v1826
      %1850 = vmatprep.subr.bf16.mxu0 0
      %1851 = vmatpush1.bf16.msra.mxu0 %v1827
      %1852 = vmatprep.subr.bf16.mxu0 0
      %1853 = vmatpush1.bf16.msra.mxu0 0
      %1854 = vmatprep.subr.bf16.mxu0 0
      %1855 = vmatpush1.bf16.msra.mxu0 0
      %1856 = vmatprep.subr.bf16.mxu0 0
      %1857 = vmatpush1.bf16.msra.mxu0 0
      %1858 = vmatprep.subr.bf16.mxu0 0
      %1859 = vmatpush1.bf16.msra.mxu0 0
      %1860 = vmatprep.subr.bf16.mxu0 0
      %1861 = vmatpush1.bf16.msra.mxu0 0
      %1862 = vmatprep.subr.bf16.mxu0 0
      %1863 = vmatpush1.bf16.msra.mxu0 0
      %1864 = vmatprep.subr.bf16.mxu0 0
      %1865 = vmatpush1.bf16.msra.mxu0 0
      %1866 = vmatprep.subr.bf16.mxu0 0
      %1867 = vmatpush1.bf16.msra.mxu0 0
      %1868 = vmatprep.mubr.bf16.mxu0 0
      %1869 = vmatmul.mubr.bf16.gmra.mrb[0].mxu0 %v1771
      %v1870 = vpop.f32.mrb[0].mxu0
      %v1871 = vadd.f32 0.0, %v1870
      %v1872 = vpop.f32.mrb[0].mxu0
      %v1873 = vpop.f32.mrb[0].mxu0
      %v1874 = vpop.f32.mrb[0].mxu0
      %1875 = vdwg.mxu0
      %1876 = vst [vmem:[#allocation2] sm:$0xff] %v1871
    $region45: #{seq2seq_forward.1} parent=1 // pred_fallthru
      _
    %s1877 = sld [smem:[#allocation4 + $0x1]]
    %p1878 = scmp.ne.s32.totalorder %s1877, 0
    // Predicated region
    $region46: #{seq2seq_forward.1} parent=1 // pred_check
      %p1879 = pneg %p1878
    $region47: #{seq2seq_forward.1} parent=1 // pred_check_branch
      %1881 = sbr.rel (%p1879) target = $region49
    $region48: #{seq2seq_forward.1} parent=1 // pred_region
      %s1882 = scalar_lea.vmem %s2, 4
      %v1883 = vld [vmem:[%s1882] sm:$0xf]
      %v1884 = vunpack.c.l.bf16 %v1883
      %1885 = vst [vmem:[#allocation2] sm:$0xff] %v1884
    $region49: #{seq2seq_forward.1} parent=1 // pred_fallthru
      _
    %v1886 = vld [vmem:[#allocation2] sm:$0xff]
    %v1887 = vpack.c.bf16 %v1886, %v1886
    %v1888 = vld [vmem:[#allocation5] sm:$0xff]
    %v1889 = vld [vmem:[#allocation5 + $0x8] sm:$0xff]
    %v1890 = vld [vmem:[#allocation5 + $0x10] sm:$0xff]
    %v1891 = vld [vmem:[#allocation5 + $0x18] sm:$0xff]
    %v1892 = vld [vmem:[#allocation5 + $0x20] sm:$0xff]
    %v1893 = vld [vmem:[#allocation5 + $0x28] sm:$0xff]
    %v1894 = vld [vmem:[#allocation5 + $0x30] sm:$0xff]
    %v1895 = vld [vmem:[#allocation5 + $0x38] sm:$0xff]
    %v1896 = vld [vmem:[#allocation5 + $0x40] sm:$0xff]
    %v1897 = vld [vmem:[#allocation5 + $0x48] sm:$0xff]
    %v1898 = vld [vmem:[#allocation5 + $0x50] sm:$0xff]
    %v1899 = vld [vmem:[#allocation5 + $0x58] sm:$0xff]
    %v1900 = vld [vmem:[#allocation5 + $0x60] sm:$0xff]
    %v1901 = vld [vmem:[#allocation5 + $0x68] sm:$0xff]
    %v1902 = vld [vmem:[#allocation5 + $0x70] sm:$0xff]
    %v1903 = vld [vmem:[#allocation5 + $0x78] sm:$0xff]
    %v1904 = vld [vmem:[#allocation5 + $0x80] sm:$0xff]
    %v1905 = vld [vmem:[#allocation5 + $0x88] sm:$0xff]
    %v1906 = vld [vmem:[#allocation5 + $0x90] sm:$0xff]
    %v1907 = vld [vmem:[#allocation5 + $0x98] sm:$0xff]
    %v1908 = vld [vmem:[#allocation5 + $0xa0] sm:$0xff]
    %v1909 = vld [vmem:[#allocation5 + $0xa8] sm:$0xff]
    %v1910 = vld [vmem:[#allocation5 + $0xb0] sm:$0xff]
    %v1911 = vld [vmem:[#allocation5 + $0xb8] sm:$0xff]
    %v1912 = vld [vmem:[#allocation5 + $0xc0] sm:$0xff]
    %v1913 = vld [vmem:[#allocation5 + $0xc8] sm:$0xff]
    %v1914 = vld [vmem:[#allocation5 + $0xd0] sm:$0xff]
    %v1915 = vld [vmem:[#allocation5 + $0xd8] sm:$0xff]
    %v1916 = vld [vmem:[#allocation5 + $0xe0] sm:$0xff]
    %v1917 = vld [vmem:[#allocation5 + $0xe8] sm:$0xff]
    %v1918 = vld [vmem:[#allocation5 + $0xf0] sm:$0xff]
    %v1919 = vld [vmem:[#allocation5 + $0xf8] sm:$0xff]
    %v1920 = vld [vmem:[#allocation5 + $0x100] sm:$0xff]
    %v1921 = vld [vmem:[#allocation5 + $0x108] sm:$0xff]
    %v1922 = vld [vmem:[#allocation5 + $0x110] sm:$0xff]
    %v1923 = vld [vmem:[#allocation5 + $0x118] sm:$0xff]
    %v1924 = vld [vmem:[#allocation5 + $0x120] sm:$0xff]
    %v1925 = vld [vmem:[#allocation5 + $0x128] sm:$0xff]
    %v1926 = vld [vmem:[#allocation5 + $0x130] sm:$0xff]
    %v1927 = vld [vmem:[#allocation5 + $0x138] sm:$0xff]
    %v1928 = vld [vmem:[#allocation5 + $0x140] sm:$0xff]
    %v1929 = vld [vmem:[#allocation5 + $0x148] sm:$0xff]
    %v1930 = vld [vmem:[#allocation5 + $0x150] sm:$0xff]
    %v1931 = vld [vmem:[#allocation5 + $0x158] sm:$0xff]
    %v1932 = vld [vmem:[#allocation5 + $0x160] sm:$0xff]
    %v1933 = vld [vmem:[#allocation5 + $0x168] sm:$0xff]
    %v1934 = vld [vmem:[#allocation5 + $0x170] sm:$0xff]
    %v1935 = vld [vmem:[#allocation5 + $0x178] sm:$0xff]
    %v1936 = vld [vmem:[#allocation5 + $0x180] sm:$0xff]
    %v1937 = vld [vmem:[#allocation5 + $0x188] sm:$0xff]
    %v1938 = vld [vmem:[#allocation5 + $0x190] sm:$0xff]
    %v1939 = vld [vmem:[#allocation5 + $0x198] sm:$0xff]
    %v1940 = vld [vmem:[#allocation5 + $0x1a0] sm:$0xff]
    %v1941 = vld [vmem:[#allocation5 + $0x1a8] sm:$0xff]
    %v1942 = vld [vmem:[#allocation5 + $0x1b0] sm:$0xff]
    %v1943 = vld [vmem:[#allocation5 + $0x1b8] sm:$0xff]
    %v1944 = vld [vmem:[#allocation5 + $0x1c0] sm:$0xff]
    %v1945 = vld [vmem:[#allocation5 + $0x1c8] sm:$0xff]
    %v1946 = vld [vmem:[#allocation5 + $0x1d0] sm:$0xff]
    %v1947 = vld [vmem:[#allocation5 + $0x1d8] sm:$0xff]
    %v1948 = vld [vmem:[#allocation5 + $0x1e0] sm:$0xff]
    %v1949 = vld [vmem:[#allocation5 + $0x1e8] sm:$0xff]
    %v1950 = vld [vmem:[#allocation5 + $0x1f0] sm:$0xff]
    %v1951 = vld [vmem:[#allocation5 + $0x1f8] sm:$0xff]
    %v1952 = vld [vmem:[%s6] sm:$0xf]
    %v1954 = vlaneseq
    %v1955 = vshrl.u32 %v1954, 7
    %v1956 = vsub.s32 0, %v1955
    %v1957 = vrot.slane %v1952, %v1956
    %v1958 = vlaneseq
    %v1959 = vshrl.u32 %v1958, 7
    %v1960 = vsub.s32 1, %v1959
    %v1961 = vrot.slane %v1952, %v1960
    %v1962 = vlaneseq
    %v1963 = vshrl.u32 %v1962, 7
    %v1964 = vsub.s32 2, %v1963
    %v1965 = vrot.slane %v1952, %v1964
    %v1966 = vlaneseq
    %v1967 = vshrl.u32 %v1966, 7
    %v1968 = vsub.s32 3, %v1967
    %v1969 = vrot.slane %v1952, %v1968
    %v2038 = vunpack.c.l.b16 %v1888
    %v2039 = vunpack.c.h.b16 %v1888
    %v2040 = vunpack.c.l.b16 %v1889
    %v2041 = vunpack.c.h.b16 %v1889
    %v2042 = vunpack.c.l.b16 %v1890
    %v2043 = vunpack.c.h.b16 %v1890
    %v2044 = vunpack.c.l.b16 %v1891
    %v2045 = vunpack.c.h.b16 %v1891
    %v2046 = vunpack.c.l.b16 %v1892
    %v2047 = vunpack.c.h.b16 %v1892
    %v2048 = vunpack.c.l.b16 %v1893
    %v2049 = vunpack.c.h.b16 %v1893
    %v2050 = vunpack.c.l.b16 %v1894
    %v2051 = vunpack.c.h.b16 %v1894
    %v2052 = vunpack.c.l.b16 %v1895
    %v2053 = vunpack.c.h.b16 %v1895
    %v2054 = vunpack.c.l.b16 %v1896
    %v2055 = vunpack.c.h.b16 %v1896
    %v2056 = vunpack.c.l.b16 %v1897
    %v2057 = vunpack.c.h.b16 %v1897
    %v2058 = vunpack.c.l.b16 %v1898
    %v2059 = vunpack.c.h.b16 %v1898
    %v2060 = vunpack.c.l.b16 %v1899
    %v2061 = vunpack.c.h.b16 %v1899
    %v2062 = vunpack.c.l.b16 %v1900
    %v2063 = vunpack.c.h.b16 %v1900
    %v2064 = vunpack.c.l.b16 %v1901
    %v2065 = vunpack.c.h.b16 %v1901
    %v2066 = vunpack.c.l.b16 %v1902
    %v2067 = vunpack.c.h.b16 %v1902
    %v2068 = vunpack.c.l.b16 %v1903
    %v2069 = vunpack.c.h.b16 %v1903
    %v2070 = vunpack.c.l.b16 %v1904
    %v2071 = vunpack.c.h.b16 %v1904
    %v2072 = vunpack.c.l.b16 %v1905
    %v2073 = vunpack.c.h.b16 %v1905
    %v2074 = vunpack.c.l.b16 %v1906
    %v2075 = vunpack.c.h.b16 %v1906
    %v2076 = vunpack.c.l.b16 %v1907
    %v2077 = vunpack.c.h.b16 %v1907
    %v2078 = vunpack.c.l.b16 %v1908
    %v2079 = vunpack.c.h.b16 %v1908
    %v2080 = vunpack.c.l.b16 %v1909
    %v2081 = vunpack.c.h.b16 %v1909
    %v2082 = vunpack.c.l.b16 %v1910
    %v2083 = vunpack.c.h.b16 %v1910
    %v2084 = vunpack.c.l.b16 %v1911
    %v2085 = vunpack.c.h.b16 %v1911
    %v2086 = vunpack.c.l.b16 %v1912
    %v2087 = vunpack.c.h.b16 %v1912
    %v2088 = vunpack.c.l.b16 %v1913
    %v2089 = vunpack.c.h.b16 %v1913
    %v2090 = vunpack.c.l.b16 %v1914
    %v2091 = vunpack.c.h.b16 %v1914
    %v2092 = vunpack.c.l.b16 %v1915
    %v2093 = vunpack.c.h.b16 %v1915
    %v2094 = vunpack.c.l.b16 %v1916
    %v2095 = vunpack.c.h.b16 %v1916
    %v2096 = vunpack.c.l.b16 %v1917
    %v2097 = vunpack.c.h.b16 %v1917
    %v2098 = vunpack.c.l.b16 %v1918
    %v2099 = vunpack.c.h.b16 %v1918
    %v2100 = vunpack.c.l.b16 %v1919
    %v2101 = vunpack.c.h.b16 %v1919
    %v2102 = vunpack.c.l.b16 %v1920
    %v2103 = vunpack.c.h.b16 %v1920
    %v2104 = vunpack.c.l.b16 %v1921
    %v2105 = vunpack.c.h.b16 %v1921
    %v2106 = vunpack.c.l.b16 %v1922
    %v2107 = vunpack.c.h.b16 %v1922
    %v2108 = vunpack.c.l.b16 %v1923
    %v2109 = vunpack.c.h.b16 %v1923
    %v2110 = vunpack.c.l.b16 %v1924
    %v2111 = vunpack.c.h.b16 %v1924
    %v2112 = vunpack.c.l.b16 %v1925
    %v2113 = vunpack.c.h.b16 %v1925
    %v2114 = vunpack.c.l.b16 %v1926
    %v2115 = vunpack.c.h.b16 %v1926
    %v2116 = vunpack.c.l.b16 %v1927
    %v2117 = vunpack.c.h.b16 %v1927
    %v2118 = vunpack.c.l.b16 %v1928
    %v2119 = vunpack.c.h.b16 %v1928
    %v2120 = vunpack.c.l.b16 %v1929
    %v2121 = vunpack.c.h.b16 %v1929
    %v2122 = vunpack.c.l.b16 %v1930
    %v2123 = vunpack.c.h.b16 %v1930
    %v2124 = vunpack.c.l.b16 %v1931
    %v2125 = vunpack.c.h.b16 %v1931
    %v2126 = vunpack.c.l.b16 %v1932
    %v2127 = vunpack.c.h.b16 %v1932
    %v2128 = vunpack.c.l.b16 %v1933
    %v2129 = vunpack.c.h.b16 %v1933
    %v2130 = vunpack.c.l.b16 %v1934
    %v2131 = vunpack.c.h.b16 %v1934
    %v2132 = vunpack.c.l.b16 %v1935
    %v2133 = vunpack.c.h.b16 %v1935
    %v2134 = vunpack.c.l.b16 %v1936
    %v2135 = vunpack.c.h.b16 %v1936
    %v2136 = vunpack.c.l.b16 %v1937
    %v2137 = vunpack.c.h.b16 %v1937
    %v2138 = vunpack.c.l.b16 %v1938
    %v2139 = vunpack.c.h.b16 %v1938
    %v2140 = vunpack.c.l.b16 %v1939
    %v2141 = vunpack.c.h.b16 %v1939
    %v2142 = vunpack.c.l.b16 %v1940
    %v2143 = vunpack.c.h.b16 %v1940
    %v2144 = vunpack.c.l.b16 %v1941
    %v2145 = vunpack.c.h.b16 %v1941
    %v2146 = vunpack.c.l.b16 %v1942
    %v2147 = vunpack.c.h.b16 %v1942
    %v2148 = vunpack.c.l.b16 %v1943
    %v2149 = vunpack.c.h.b16 %v1943
    %v2150 = vunpack.c.l.b16 %v1944
    %v2151 = vunpack.c.h.b16 %v1944
    %v2152 = vunpack.c.l.b16 %v1945
    %v2153 = vunpack.c.h.b16 %v1945
    %v2154 = vunpack.c.l.b16 %v1946
    %v2155 = vunpack.c.h.b16 %v1946
    %v2156 = vunpack.c.l.b16 %v1947
    %v2157 = vunpack.c.h.b16 %v1947
    %v2158 = vunpack.c.l.b16 %v1948
    %v2159 = vunpack.c.h.b16 %v1948
    %v2160 = vunpack.c.l.b16 %v1949
    %v2161 = vunpack.c.h.b16 %v1949
    %v2162 = vunpack.c.l.b16 %v1950
    %v2163 = vunpack.c.h.b16 %v1950
    %v2164 = vunpack.c.l.b16 %v1951
    %v2165 = vunpack.c.h.b16 %v1951
    %v2166 = vpack.c.b16 %v2042, %v2038
    %v2167 = vpack.c.b16 %v2043, %v2039
    %v2168 = vpack.c.b16 %v2044, %v2040
    %v2169 = vpack.c.b16 %v2045, %v2041
    %v2170 = vpack.c.b16 %v2050, %v2046
    %v2171 = vpack.c.b16 %v2051, %v2047
    %v2172 = vpack.c.b16 %v2052, %v2048
    %v2173 = vpack.c.b16 %v2053, %v2049
    %v2174 = vpack.c.b16 %v2058, %v2054
    %v2175 = vpack.c.b16 %v2059, %v2055
    %v2176 = vpack.c.b16 %v2060, %v2056
    %v2177 = vpack.c.b16 %v2061, %v2057
    %v2178 = vpack.c.b16 %v2066, %v2062
    %v2179 = vpack.c.b16 %v2067, %v2063
    %v2180 = vpack.c.b16 %v2068, %v2064
    %v2181 = vpack.c.b16 %v2069, %v2065
    %v2182 = vpack.c.b16 %v2074, %v2070
    %v2183 = vpack.c.b16 %v2075, %v2071
    %v2184 = vpack.c.b16 %v2076, %v2072
    %v2185 = vpack.c.b16 %v2077, %v2073
    %v2186 = vpack.c.b16 %v2082, %v2078
    %v2187 = vpack.c.b16 %v2083, %v2079
    %v2188 = vpack.c.b16 %v2084, %v2080
    %v2189 = vpack.c.b16 %v2085, %v2081
    %v2190 = vpack.c.b16 %v2090, %v2086
    %v2191 = vpack.c.b16 %v2091, %v2087
    %v2192 = vpack.c.b16 %v2092, %v2088
    %v2193 = vpack.c.b16 %v2093, %v2089
    %v2194 = vpack.c.b16 %v2098, %v2094
    %v2195 = vpack.c.b16 %v2099, %v2095
    %v2196 = vpack.c.b16 %v2100, %v2096
    %v2197 = vpack.c.b16 %v2101, %v2097
    %v2198 = vpack.c.b16 %v2106, %v2102
    %v2199 = vpack.c.b16 %v2107, %v2103
    %v2200 = vpack.c.b16 %v2108, %v2104
    %v2201 = vpack.c.b16 %v2109, %v2105
    %v2202 = vpack.c.b16 %v2114, %v2110
    %v2203 = vpack.c.b16 %v2115, %v2111
    %v2204 = vpack.c.b16 %v2116, %v2112
    %v2205 = vpack.c.b16 %v2117, %v2113
    %v2206 = vpack.c.b16 %v2122, %v2118
    %v2207 = vpack.c.b16 %v2123, %v2119
    %v2208 = vpack.c.b16 %v2124, %v2120
    %v2209 = vpack.c.b16 %v2125, %v2121
    %v2210 = vpack.c.b16 %v2130, %v2126
    %v2211 = vpack.c.b16 %v2131, %v2127
    %v2212 = vpack.c.b16 %v2132, %v2128
    %v2213 = vpack.c.b16 %v2133, %v2129
    %v2214 = vpack.c.b16 %v2138, %v2134
    %v2215 = vpack.c.b16 %v2139, %v2135
    %v2216 = vpack.c.b16 %v2140, %v2136
    %v2217 = vpack.c.b16 %v2141, %v2137
    %v2218 = vpack.c.b16 %v2146, %v2142
    %v2219 = vpack.c.b16 %v2147, %v2143
    %v2220 = vpack.c.b16 %v2148, %v2144
    %v2221 = vpack.c.b16 %v2149, %v2145
    %v2222 = vpack.c.b16 %v2154, %v2150
    %v2223 = vpack.c.b16 %v2155, %v2151
    %v2224 = vpack.c.b16 %v2156, %v2152
    %v2225 = vpack.c.b16 %v2157, %v2153
    %v2226 = vpack.c.b16 %v2162, %v2158
    %v2227 = vpack.c.b16 %v2163, %v2159
    %v2228 = vpack.c.b16 %v2164, %v2160
    %v2229 = vpack.c.b16 %v2165, %v2161
    %2294 = vmatprep.subr.bf16.mxu0 %v2167
    %2295 = vmatpush1.bf16.msra.mxu0 %v2166
    %2296 = vmatprep.subr.bf16.mxu0 %v2171
    %2297 = vmatpush1.bf16.msra.mxu0 %v2170
    %2298 = vmatprep.subr.bf16.mxu0 %v2175
    %2299 = vmatpush1.bf16.msra.mxu0 %v2174
    %2300 = vmatprep.subr.bf16.mxu0 %v2179
    %2301 = vmatpush1.bf16.msra.mxu0 %v2178
    %2302 = vmatprep.subr.bf16.mxu0 %v2183
    %2303 = vmatpush1.bf16.msra.mxu0 %v2182
    %2304 = vmatprep.subr.bf16.mxu0 %v2187
    %2305 = vmatpush1.bf16.msra.mxu0 %v2186
    %2306 = vmatprep.subr.bf16.mxu0 %v2191
    %2307 = vmatpush1.bf16.msra.mxu0 %v2190
    %2308 = vmatprep.subr.bf16.mxu0 %v2195
    %2309 = vmatpush1.bf16.msra.mxu0 %v2194
    %2310 = vmatprep.subr.bf16.mxu0 %v2199
    %2311 = vmatpush1.bf16.msra.mxu0 %v2198
    %2312 = vmatprep.subr.bf16.mxu0 %v2203
    %2313 = vmatpush1.bf16.msra.mxu0 %v2202
    %2314 = vmatprep.subr.bf16.mxu0 %v2207
    %2315 = vmatpush1.bf16.msra.mxu0 %v2206
    %2316 = vmatprep.subr.bf16.mxu0 %v2211
    %2317 = vmatpush1.bf16.msra.mxu0 %v2210
    %2318 = vmatprep.subr.bf16.mxu0 %v2215
    %2319 = vmatpush1.bf16.msra.mxu0 %v2214
    %2320 = vmatprep.subr.bf16.mxu0 %v2219
    %2321 = vmatpush1.bf16.msra.mxu0 %v2218
    %2322 = vmatprep.subr.bf16.mxu0 %v2223
    %2323 = vmatpush1.bf16.msra.mxu0 %v2222
    %2324 = vmatprep.subr.bf16.mxu0 %v2227
    %2325 = vmatpush1.bf16.msra.mxu0 %v2226
    %2326 = vmatprep.mubr.bf16.mxu0 %v1630
    %2327 = vmatmul.mubr.bf16.gmra.mrb[0].mxu0 %v1887
    %v2328 = vpop.f32.mrb[0].mxu0
    %v2329 = vadd.f32 %v1957, %v2328
    %v2330 = vpop.f32.mrb[0].mxu0
    %v2331 = vadd.f32 %v1961, %v2330
    %v2332 = vpop.f32.mrb[0].mxu0
    %v2333 = vpop.f32.mrb[0].mxu0
    %2334 = vdwg.mxu0
    %2335 = vmatprep.subr.bf16.mxu0 %v2169
    %2336 = vmatpush1.bf16.msra.mxu0 %v2168
    %2337 = vmatprep.subr.bf16.mxu0 %v2173
    %2338 = vmatpush1.bf16.msra.mxu0 %v2172
    %2339 = vmatprep.subr.bf16.mxu0 %v2177
    %2340 = vmatpush1.bf16.msra.mxu0 %v2176
    %2341 = vmatprep.subr.bf16.mxu0 %v2181
    %2342 = vmatpush1.bf16.msra.mxu0 %v2180
    %2343 = vmatprep.subr.bf16.mxu0 %v2185
    %2344 = vmatpush1.bf16.msra.mxu0 %v2184
    %2345 = vmatprep.subr.bf16.mxu0 %v2189
    %2346 = vmatpush1.bf16.msra.mxu0 %v2188
    %2347 = vmatprep.subr.bf16.mxu0 %v2193
    %2348 = vmatpush1.bf16.msra.mxu0 %v2192
    %2349 = vmatprep.subr.bf16.mxu0 %v2197
    %2350 = vmatpush1.bf16.msra.mxu0 %v2196
    %2351 = vmatprep.subr.bf16.mxu0 %v2201
    %2352 = vmatpush1.bf16.msra.mxu0 %v2200
    %2353 = vmatprep.subr.bf16.mxu0 %v2205
    %2354 = vmatpush1.bf16.msra.mxu0 %v2204
    %2355 = vmatprep.subr.bf16.mxu0 %v2209
    %2356 = vmatpush1.bf16.msra.mxu0 %v2208
    %2357 = vmatprep.subr.bf16.mxu0 %v2213
    %2358 = vmatpush1.bf16.msra.mxu0 %v2212
    %2359 = vmatprep.subr.bf16.mxu0 %v2217
    %2360 = vmatpush1.bf16.msra.mxu0 %v2216
    %2361 = vmatprep.subr.bf16.mxu0 %v2221
    %2362 = vmatpush1.bf16.msra.mxu0 %v2220
    %2363 = vmatprep.subr.bf16.mxu0 %v2225
    %2364 = vmatpush1.bf16.msra.mxu0 %v2224
    %2365 = vmatprep.subr.bf16.mxu0 %v2229
    %2366 = vmatpush1.bf16.msra.mxu0 %v2228
    %2367 = vmatprep.mubr.bf16.mxu0 %v1630
    %2368 = vmatmul.mubr.bf16.gmra.mrb[0].mxu0 %v1887
    %v2369 = vpop.f32.mrb[0].mxu0
    %v2370 = vadd.f32 %v1965, %v2369
    %v2371 = vpop.f32.mrb[0].mxu0
    %v2372 = vadd.f32 %v1969, %v2371
    %v2373 = vpop.f32.mrb[0].mxu0
    %v2374 = vpop.f32.mrb[0].mxu0
    %2375 = vdwg.mxu0
    %v2376 = vxor.u32 %v2329, 2147483648
    %v2377 = vmul.f32 %v2376, 1.442695
    %v2378 = vpow.pop %v2377
    %v2379 = vadd.f32 %v2378, 1.0
    %v2380 = vrcp.pop %v2379
    %v2381 = vmul.f32 1.0, %v2380
    %v2382 = vxor.u32 %v2331, 2147483648
    %v2383 = vmul.f32 %v2382, 1.442695
    %v2384 = vpow.pop %v2383
    %v2385 = vadd.f32 %v2384, 1.0
    %v2386 = vrcp.pop %v2385
    %v2387 = vmul.f32 1.0, %v2386
    %v2388 = vtanh.pop %v2370
    %v2389 = vxor.u32 %v2372, 2147483648
    %v2390 = vmul.f32 %v2389, 1.442695
    %v2391 = vpow.pop %v2390
    %v2392 = vadd.f32 %v2391, 1.0
    %v2393 = vrcp.pop %v2392
    %v2394 = vmul.f32 1.0, %v2393
    %v2395 = vmul.f32 %v2387, %v1627
    %v2396 = vmul.f32 %v2381, %v2388
    %v2397 = vadd.f32 %v2395, %v2396
    %v2398 = vtanh.pop %v2397
    %v2399 = vmul.f32 %v2394, %v2398
    %v2400 = vpack.c.bf16 %v2399, %v2399
    %v2401 = vld [vmem:[%s7] sm:$0xf]
    %v2402 = vld [vmem:[%s7 + $0x4] sm:$0xf]
    %v2403 = vld [vmem:[%s7 + $0x8] sm:$0xf]
    %v2404 = vld [vmem:[%s7 + $0xc] sm:$0xf]
    %v2405 = vld [vmem:[%s7 + $0x10] sm:$0xf]
    %v2406 = vld [vmem:[%s7 + $0x14] sm:$0xf]
    %v2407 = vld [vmem:[%s7 + $0x18] sm:$0xf]
    %v2408 = vld [vmem:[%s7 + $0x1c] sm:$0xf]
    %v2409 = vld [vmem:[%s7 + $0x20] sm:$0xf]
    %v2410 = vld [vmem:[%s7 + $0x24] sm:$0xf]
    %v2411 = vld [vmem:[%s7 + $0x28] sm:$0xf]
    %v2412 = vld [vmem:[%s7 + $0x2c] sm:$0xf]
    %v2413 = vld [vmem:[%s7 + $0x30] sm:$0xf]
    %v2414 = vld [vmem:[%s7 + $0x34] sm:$0xf]
    %v2415 = vld [vmem:[%s7 + $0x38] sm:$0xf]
    %v2416 = vld [vmem:[%s7 + $0x3c] sm:$0xf]
    %v2417 = vld [vmem:[%s8] sm:$0x1]
    %v2419 = vlaneseq
    %v2420 = vshrl.u32 %v2419, 7
    %v2421 = vsub.s32 0, %v2420
    %v2422 = vrot.slane %v2417, %v2421
    %v2440 = vunpack.c.l.b16 %v2401
    %v2441 = vunpack.c.l.b16 %v2402
    %v2442 = vunpack.c.l.b16 %v2403
    %v2443 = vunpack.c.l.b16 %v2404
    %v2444 = vunpack.c.l.b16 %v2405
    %v2445 = vunpack.c.l.b16 %v2406
    %v2446 = vunpack.c.l.b16 %v2407
    %v2447 = vunpack.c.l.b16 %v2408
    %v2448 = vunpack.c.l.b16 %v2409
    %v2449 = vunpack.c.l.b16 %v2410
    %v2450 = vunpack.c.l.b16 %v2411
    %v2451 = vunpack.c.l.b16 %v2412
    %v2452 = vunpack.c.l.b16 %v2413
    %v2453 = vunpack.c.l.b16 %v2414
    %v2454 = vunpack.c.l.b16 %v2415
    %v2455 = vunpack.c.l.b16 %v2416
    %v2456 = vpack.c.b16 %v2441, %v2440
    %v2457 = vpack.c.b16 %v2443, %v2442
    %v2458 = vpack.c.b16 %v2445, %v2444
    %v2459 = vpack.c.b16 %v2447, %v2446
    %v2460 = vpack.c.b16 %v2449, %v2448
    %v2461 = vpack.c.b16 %v2451, %v2450
    %v2462 = vpack.c.b16 %v2453, %v2452
    %v2463 = vpack.c.b16 %v2455, %v2454
    %2472 = vmatprep.subr.bf16.mxu0 0
    %2473 = vmatpush1.bf16.msra.mxu0 %v2456
    %2474 = vmatprep.subr.bf16.mxu0 0
    %2475 = vmatpush1.bf16.msra.mxu0 %v2457
    %2476 = vmatprep.subr.bf16.mxu0 0
    %2477 = vmatpush1.bf16.msra.mxu0 %v2458
    %2478 = vmatprep.subr.bf16.mxu0 0
    %2479 = vmatpush1.bf16.msra.mxu0 %v2459
    %2480 = vmatprep.subr.bf16.mxu0 0
    %2481 = vmatpush1.bf16.msra.mxu0 %v2460
    %2482 = vmatprep.subr.bf16.mxu0 0
    %2483 = vmatpush1.bf16.msra.mxu0 %v2461
    %2484 = vmatprep.subr.bf16.mxu0 0
    %2485 = vmatpush1.bf16.msra.mxu0 %v2462
    %2486 = vmatprep.subr.bf16.mxu0 0
    %2487 = vmatpush1.bf16.msra.mxu0 %v2463
    %2488 = vmatprep.subr.bf16.mxu0 0
    %2489 = vmatpush1.bf16.msra.mxu0 0
    %2490 = vmatprep.subr.bf16.mxu0 0
    %2491 = vmatpush1.bf16.msra.mxu0 0
    %2492 = vmatprep.subr.bf16.mxu0 0
    %2493 = vmatpush1.bf16.msra.mxu0 0
    %2494 = vmatprep.subr.bf16.mxu0 0
    %2495 = vmatpush1.bf16.msra.mxu0 0
    %2496 = vmatprep.subr.bf16.mxu0 0
    %2497 = vmatpush1.bf16.msra.mxu0 0
    %2498 = vmatprep.subr.bf16.mxu0 0
    %2499 = vmatpush1.bf16.msra.mxu0 0
    %2500 = vmatprep.subr.bf16.mxu0 0
    %2501 = vmatpush1.bf16.msra.mxu0 0
    %2502 = vmatprep.subr.bf16.mxu0 0
    %2503 = vmatpush1.bf16.msra.mxu0 0
    %2504 = vmatprep.mubr.bf16.mxu0 0
    %2505 = vmatmul.mubr.bf16.gmra.mrb[0].mxu0 %v2400
    %v2506 = vpop.f32.mrb[0].mxu0
    %v2507 = vadd.f32 %v2422, %v2506
    %v2508 = vpop.f32.mrb[0].mxu0
    %v2509 = vpop.f32.mrb[0].mxu0
    %v2510 = vpop.f32.mrb[0].mxu0
    %2511 = vdwg.mxu0
    %s2512 = scalar_lea.vmem %s10, 8
    %2513 = vst [vmem:[%s2512] sm:$0xff] %v2507
    %s2514 = sld [smem:[#allocation4 + $0x2]]
    %p2515 = scmp.eq.s32.totalorder %s2514, 0
    // Predicated region
    $region50: #{seq2seq_forward.1} parent=1 // pred_check
      %p2516 = pneg %p2515
    $region51: #{seq2seq_forward.1} parent=1 // pred_check_branch
      %2518 = sbr.rel (%p2516) target = $region53
    $region52: #{seq2seq_forward.1} parent=1 // pred_region
      %2519 = vmax.xlane.f32.xlu0 %v2507
      %v2520 = vpop.xlane.xlu0 %2519
      %v2521 = vlaneseq
      %v2522 = vand.u32 %v2521, 127
      %vm2523 = vcmp.eq.f32.partialorder %v2507, %v2520
      %v2524 = vsel %vm2523, %v2522, 128
      %v2525 = vand.u32 %v2524, 65535
      %v2526 = vshra.s32 %v2524, 16
      %v2527 = vcvt.s32.f32 %v2525
      %v2528 = vcvt.s32.f32 %v2526
      %2529 = vmin.xlane.f32.xlu0 %v2528
      %v2530 = vpop.xlane.xlu0 %2529
      %vm2531 = vcmp.eq.f32.partialorder %v2528, %v2530
      %v2532 = vsel %vm2531, %v2527, inf
      %2533 = vmin.xlane.f32.xlu0 %v2532
      %v2534 = vpop.xlane.xlu0 %2533
      %v2535 = vcvt.f32.s32 %v2534
      %v2536 = vcvt.f32.s32 %v2530
      %v2537 = vshll.u32 %v2536, 16
      %v2538 = vadd.s32 %v2537, %v2535
      %vm2539 = vcmp.eq.s32.totalorder %v2522, %v2538
      %v2540 = vsel %vm2539, 1, 0
      %v2541 = vcvt.s32.f32 %v2540
      %v2542 = vpack.c.bf16 %v2541, %v2541
      %v2543 = vld [vmem:[%s9] sm:$0xf]
      %v2544 = vld [vmem:[%s9 + $0x4] sm:$0xf]
      %v2545 = vld [vmem:[%s9 + $0x8] sm:$0xf]
      %v2546 = vld [vmem:[%s9 + $0xc] sm:$0xf]
      %v2547 = vld [vmem:[%s9 + $0x10] sm:$0xf]
      %v2548 = vld [vmem:[%s9 + $0x14] sm:$0xf]
      %v2549 = vld [vmem:[%s9 + $0x18] sm:$0xf]
      %v2550 = vld [vmem:[%s9 + $0x1c] sm:$0xf]
      %v2551 = vld [vmem:[%s9 + $0x20] sm:$0xf]
      %v2552 = vld [vmem:[%s9 + $0x24] sm:$0xf]
      %v2553 = vld [vmem:[%s9 + $0x28] sm:$0xf]
      %v2554 = vld [vmem:[%s9 + $0x2c] sm:$0xf]
      %v2555 = vld [vmem:[%s9 + $0x30] sm:$0xf]
      %v2556 = vld [vmem:[%s9 + $0x34] sm:$0xf]
      %v2557 = vld [vmem:[%s9 + $0x38] sm:$0xf]
      %v2558 = vld [vmem:[%s9 + $0x3c] sm:$0xf]
      %v2575 = vunpack.c.l.b16 %v2543
      %v2576 = vunpack.c.l.b16 %v2544
      %v2577 = vunpack.c.l.b16 %v2545
      %v2578 = vunpack.c.l.b16 %v2546
      %v2579 = vunpack.c.l.b16 %v2547
      %v2580 = vunpack.c.l.b16 %v2548
      %v2581 = vunpack.c.l.b16 %v2549
      %v2582 = vunpack.c.l.b16 %v2550
      %v2583 = vunpack.c.l.b16 %v2551
      %v2584 = vunpack.c.l.b16 %v2552
      %v2585 = vunpack.c.l.b16 %v2553
      %v2586 = vunpack.c.l.b16 %v2554
      %v2587 = vunpack.c.l.b16 %v2555
      %v2588 = vunpack.c.l.b16 %v2556
      %v2589 = vunpack.c.l.b16 %v2557
      %v2590 = vunpack.c.l.b16 %v2558
      %v2591 = vpack.c.b16 %v2576, %v2575
      %v2592 = vpack.c.b16 %v2578, %v2577
      %v2593 = vpack.c.b16 %v2580, %v2579
      %v2594 = vpack.c.b16 %v2582, %v2581
      %v2595 = vpack.c.b16 %v2584, %v2583
      %v2596 = vpack.c.b16 %v2586, %v2585
      %v2597 = vpack.c.b16 %v2588, %v2587
      %v2598 = vpack.c.b16 %v2590, %v2589
      %2607 = vmatprep.subr.bf16.mxu0 0
      %2608 = vmatpush1.bf16.msra.mxu0 %v2591
      %2609 = vmatprep.subr.bf16.mxu0 0
      %2610 = vmatpush1.bf16.msra.mxu0 %v2592
      %2611 = vmatprep.subr.bf16.mxu0 0
      %2612 = vmatpush1.bf16.msra.mxu0 %v2593
      %2613 = vmatprep.subr.bf16.mxu0 0
      %2614 = vmatpush1.bf16.msra.mxu0 %v2594
      %2615 = vmatprep.subr.bf16.mxu0 0
      %2616 = vmatpush1.bf16.msra.mxu0 %v2595
      %2617 = vmatprep.subr.bf16.mxu0 0
      %2618 = vmatpush1.bf16.msra.mxu0 %v2596
      %2619 = vmatprep.subr.bf16.mxu0 0
      %2620 = vmatpush1.bf16.msra.mxu0 %v2597
      %2621 = vmatprep.subr.bf16.mxu0 0
      %2622 = vmatpush1.bf16.msra.mxu0 %v2598
      %2623 = vmatprep.subr.bf16.mxu0 0
      %2624 = vmatpush1.bf16.msra.mxu0 0
      %2625 = vmatprep.subr.bf16.mxu0 0
      %2626 = vmatpush1.bf16.msra.mxu0 0
      %2627 = vmatprep.subr.bf16.mxu0 0
      %2628 = vmatpush1.bf16.msra.mxu0 0
      %2629 = vmatprep.subr.bf16.mxu0 0
      %2630 = vmatpush1.bf16.msra.mxu0 0
      %2631 = vmatprep.subr.bf16.mxu0 0
      %2632 = vmatpush1.bf16.msra.mxu0 0
      %2633 = vmatprep.subr.bf16.mxu0 0
      %2634 = vmatpush1.bf16.msra.mxu0 0
      %2635 = vmatprep.subr.bf16.mxu0 0
      %2636 = vmatpush1.bf16.msra.mxu0 0
      %2637 = vmatprep.subr.bf16.mxu0 0
      %2638 = vmatpush1.bf16.msra.mxu0 0
      %2639 = vmatprep.mubr.bf16.mxu0 0
      %2640 = vmatmul.mubr.bf16.gmra.mrb[0].mxu0 %v2542
      %v2641 = vpop.f32.mrb[0].mxu0
      %v2642 = vadd.f32 0.0, %v2641
      %v2643 = vpop.f32.mrb[0].mxu0
      %v2644 = vpop.f32.mrb[0].mxu0
      %v2645 = vpop.f32.mrb[0].mxu0
      %2646 = vdwg.mxu0
      %2647 = vst [vmem:[#allocation2] sm:$0xff] %v2642
    $region53: #{seq2seq_forward.1} parent=1 // pred_fallthru
      _
    %s2648 = sld [smem:[#allocation4 + $0x2]]
    %p2649 = scmp.ne.s32.totalorder %s2648, 0
    // Predicated region
    $region54: #{seq2seq_forward.1} parent=1 // pred_check
      %p2650 = pneg %p2649
    $region55: #{seq2seq_forward.1} parent=1 // pred_check_branch
      %2652 = sbr.rel (%p2650) target = $region57
    $region56: #{seq2seq_forward.1} parent=1 // pred_region
      %s2653 = scalar_lea.vmem %s2, 8
      %v2654 = vld [vmem:[%s2653] sm:$0xf]
      %v2655 = vunpack.c.l.bf16 %v2654
      %2656 = vst [vmem:[#allocation2] sm:$0xff] %v2655
    $region57: #{seq2seq_forward.1} parent=1 // pred_fallthru
      _
    %v2657 = vld [vmem:[#allocation2] sm:$0xff]
    %v2658 = vpack.c.bf16 %v2657, %v2657
    %v2659 = vld [vmem:[#allocation5] sm:$0xff]
    %v2660 = vld [vmem:[#allocation5 + $0x8] sm:$0xff]
    %v2661 = vld [vmem:[#allocation5 + $0x10] sm:$0xff]
    %v2662 = vld [vmem:[#allocation5 + $0x18] sm:$0xff]
    %v2663 = vld [vmem:[#allocation5 + $0x20] sm:$0xff]
    %v2664 = vld [vmem:[#allocation5 + $0x28] sm:$0xff]
    %v2665 = vld [vmem:[#allocation5 + $0x30] sm:$0xff]
    %v2666 = vld [vmem:[#allocation5 + $0x38] sm:$0xff]
    %v2667 = vld [vmem:[#allocation5 + $0x40] sm:$0xff]
    %v2668 = vld [vmem:[#allocation5 + $0x48] sm:$0xff]
    %v2669 = vld [vmem:[#allocation5 + $0x50] sm:$0xff]
    %v2670 = vld [vmem:[#allocation5 + $0x58] sm:$0xff]
    %v2671 = vld [vmem:[#allocation5 + $0x60] sm:$0xff]
    %v2672 = vld [vmem:[#allocation5 + $0x68] sm:$0xff]
    %v2673 = vld [vmem:[#allocation5 + $0x70] sm:$0xff]
    %v2674 = vld [vmem:[#allocation5 + $0x78] sm:$0xff]
    %v2675 = vld [vmem:[#allocation5 + $0x80] sm:$0xff]
    %v2676 = vld [vmem:[#allocation5 + $0x88] sm:$0xff]
    %v2677 = vld [vmem:[#allocation5 + $0x90] sm:$0xff]
    %v2678 = vld [vmem:[#allocation5 + $0x98] sm:$0xff]
    %v2679 = vld [vmem:[#allocation5 + $0xa0] sm:$0xff]
    %v2680 = vld [vmem:[#allocation5 + $0xa8] sm:$0xff]
    %v2681 = vld [vmem:[#allocation5 + $0xb0] sm:$0xff]
    %v2682 = vld [vmem:[#allocation5 + $0xb8] sm:$0xff]
    %v2683 = vld [vmem:[#allocation5 + $0xc0] sm:$0xff]
    %v2684 = vld [vmem:[#allocation5 + $0xc8] sm:$0xff]
    %v2685 = vld [vmem:[#allocation5 + $0xd0] sm:$0xff]
    %v2686 = vld [vmem:[#allocation5 + $0xd8] sm:$0xff]
    %v2687 = vld [vmem:[#allocation5 + $0xe0] sm:$0xff]
    %v2688 = vld [vmem:[#allocation5 + $0xe8] sm:$0xff]
    %v2689 = vld [vmem:[#allocation5 + $0xf0] sm:$0xff]
    %v2690 = vld [vmem:[#allocation5 + $0xf8] sm:$0xff]
    %v2691 = vld [vmem:[#allocation5 + $0x100] sm:$0xff]
    %v2692 = vld [vmem:[#allocation5 + $0x108] sm:$0xff]
    %v2693 = vld [vmem:[#allocation5 + $0x110] sm:$0xff]
    %v2694 = vld [vmem:[#allocation5 + $0x118] sm:$0xff]
    %v2695 = vld [vmem:[#allocation5 + $0x120] sm:$0xff]
    %v2696 = vld [vmem:[#allocation5 + $0x128] sm:$0xff]
    %v2697 = vld [vmem:[#allocation5 + $0x130] sm:$0xff]
    %v2698 = vld [vmem:[#allocation5 + $0x138] sm:$0xff]
    %v2699 = vld [vmem:[#allocation5 + $0x140] sm:$0xff]
    %v2700 = vld [vmem:[#allocation5 + $0x148] sm:$0xff]
    %v2701 = vld [vmem:[#allocation5 + $0x150] sm:$0xff]
    %v2702 = vld [vmem:[#allocation5 + $0x158] sm:$0xff]
    %v2703 = vld [vmem:[#allocation5 + $0x160] sm:$0xff]
    %v2704 = vld [vmem:[#allocation5 + $0x168] sm:$0xff]
    %v2705 = vld [vmem:[#allocation5 + $0x170] sm:$0xff]
    %v2706 = vld [vmem:[#allocation5 + $0x178] sm:$0xff]
    %v2707 = vld [vmem:[#allocation5 + $0x180] sm:$0xff]
    %v2708 = vld [vmem:[#allocation5 + $0x188] sm:$0xff]
    %v2709 = vld [vmem:[#allocation5 + $0x190] sm:$0xff]
    %v2710 = vld [vmem:[#allocation5 + $0x198] sm:$0xff]
    %v2711 = vld [vmem:[#allocation5 + $0x1a0] sm:$0xff]
    %v2712 = vld [vmem:[#allocation5 + $0x1a8] sm:$0xff]
    %v2713 = vld [vmem:[#allocation5 + $0x1b0] sm:$0xff]
    %v2714 = vld [vmem:[#allocation5 + $0x1b8] sm:$0xff]
    %v2715 = vld [vmem:[#allocation5 + $0x1c0] sm:$0xff]
    %v2716 = vld [vmem:[#allocation5 + $0x1c8] sm:$0xff]
    %v2717 = vld [vmem:[#allocation5 + $0x1d0] sm:$0xff]
    %v2718 = vld [vmem:[#allocation5 + $0x1d8] sm:$0xff]
    %v2719 = vld [vmem:[#allocation5 + $0x1e0] sm:$0xff]
    %v2720 = vld [vmem:[#allocation5 + $0x1e8] sm:$0xff]
    %v2721 = vld [vmem:[#allocation5 + $0x1f0] sm:$0xff]
    %v2722 = vld [vmem:[#allocation5 + $0x1f8] sm:$0xff]
    %v2723 = vld [vmem:[%s6] sm:$0xf]
    %v2725 = vlaneseq
    %v2726 = vshrl.u32 %v2725, 7
    %v2727 = vsub.s32 0, %v2726
    %v2728 = vrot.slane %v2723, %v2727
    %v2729 = vlaneseq
    %v2730 = vshrl.u32 %v2729, 7
    %v2731 = vsub.s32 1, %v2730
    %v2732 = vrot.slane %v2723, %v2731
    %v2733 = vlaneseq
    %v2734 = vshrl.u32 %v2733, 7
    %v2735 = vsub.s32 2, %v2734
    %v2736 = vrot.slane %v2723, %v2735
    %v2737 = vlaneseq
    %v2738 = vshrl.u32 %v2737, 7
    %v2739 = vsub.s32 3, %v2738
    %v2740 = vrot.slane %v2723, %v2739
    %v2809 = vunpack.c.l.b16 %v2659
    %v2810 = vunpack.c.h.b16 %v2659
    %v2811 = vunpack.c.l.b16 %v2660
    %v2812 = vunpack.c.h.b16 %v2660
    %v2813 = vunpack.c.l.b16 %v2661
    %v2814 = vunpack.c.h.b16 %v2661
    %v2815 = vunpack.c.l.b16 %v2662
    %v2816 = vunpack.c.h.b16 %v2662
    %v2817 = vunpack.c.l.b16 %v2663
    %v2818 = vunpack.c.h.b16 %v2663
    %v2819 = vunpack.c.l.b16 %v2664
    %v2820 = vunpack.c.h.b16 %v2664
    %v2821 = vunpack.c.l.b16 %v2665
    %v2822 = vunpack.c.h.b16 %v2665
    %v2823 = vunpack.c.l.b16 %v2666
    %v2824 = vunpack.c.h.b16 %v2666
    %v2825 = vunpack.c.l.b16 %v2667
    %v2826 = vunpack.c.h.b16 %v2667
    %v2827 = vunpack.c.l.b16 %v2668
    %v2828 = vunpack.c.h.b16 %v2668
    %v2829 = vunpack.c.l.b16 %v2669
    %v2830 = vunpack.c.h.b16 %v2669
    %v2831 = vunpack.c.l.b16 %v2670
    %v2832 = vunpack.c.h.b16 %v2670
    %v2833 = vunpack.c.l.b16 %v2671
    %v2834 = vunpack.c.h.b16 %v2671
    %v2835 = vunpack.c.l.b16 %v2672
    %v2836 = vunpack.c.h.b16 %v2672
    %v2837 = vunpack.c.l.b16 %v2673
    %v2838 = vunpack.c.h.b16 %v2673
    %v2839 = vunpack.c.l.b16 %v2674
    %v2840 = vunpack.c.h.b16 %v2674
    %v2841 = vunpack.c.l.b16 %v2675
    %v2842 = vunpack.c.h.b16 %v2675
    %v2843 = vunpack.c.l.b16 %v2676
    %v2844 = vunpack.c.h.b16 %v2676
    %v2845 = vunpack.c.l.b16 %v2677
    %v2846 = vunpack.c.h.b16 %v2677
    %v2847 = vunpack.c.l.b16 %v2678
    %v2848 = vunpack.c.h.b16 %v2678
    %v2849 = vunpack.c.l.b16 %v2679
    %v2850 = vunpack.c.h.b16 %v2679
    %v2851 = vunpack.c.l.b16 %v2680
    %v2852 = vunpack.c.h.b16 %v2680
    %v2853 = vunpack.c.l.b16 %v2681
    %v2854 = vunpack.c.h.b16 %v2681
    %v2855 = vunpack.c.l.b16 %v2682
    %v2856 = vunpack.c.h.b16 %v2682
    %v2857 = vunpack.c.l.b16 %v2683
    %v2858 = vunpack.c.h.b16 %v2683
    %v2859 = vunpack.c.l.b16 %v2684
    %v2860 = vunpack.c.h.b16 %v2684
    %v2861 = vunpack.c.l.b16 %v2685
    %v2862 = vunpack.c.h.b16 %v2685
    %v2863 = vunpack.c.l.b16 %v2686
    %v2864 = vunpack.c.h.b16 %v2686
    %v2865 = vunpack.c.l.b16 %v2687
    %v2866 = vunpack.c.h.b16 %v2687
    %v2867 = vunpack.c.l.b16 %v2688
    %v2868 = vunpack.c.h.b16 %v2688
    %v2869 = vunpack.c.l.b16 %v2689
    %v2870 = vunpack.c.h.b16 %v2689
    %v2871 = vunpack.c.l.b16 %v2690
    %v2872 = vunpack.c.h.b16 %v2690
    %v2873 = vunpack.c.l.b16 %v2691
    %v2874 = vunpack.c.h.b16 %v2691
    %v2875 = vunpack.c.l.b16 %v2692
    %v2876 = vunpack.c.h.b16 %v2692
    %v2877 = vunpack.c.l.b16 %v2693
    %v2878 = vunpack.c.h.b16 %v2693
    %v2879 = vunpack.c.l.b16 %v2694
    %v2880 = vunpack.c.h.b16 %v2694
    %v2881 = vunpack.c.l.b16 %v2695
    %v2882 = vunpack.c.h.b16 %v2695
    %v2883 = vunpack.c.l.b16 %v2696
    %v2884 = vunpack.c.h.b16 %v2696
    %v2885 = vunpack.c.l.b16 %v2697
    %v2886 = vunpack.c.h.b16 %v2697
    %v2887 = vunpack.c.l.b16 %v2698
    %v2888 = vunpack.c.h.b16 %v2698
    %v2889 = vunpack.c.l.b16 %v2699
    %v2890 = vunpack.c.h.b16 %v2699
    %v2891 = vunpack.c.l.b16 %v2700
    %v2892 = vunpack.c.h.b16 %v2700
    %v2893 = vunpack.c.l.b16 %v2701
    %v2894 = vunpack.c.h.b16 %v2701
    %v2895 = vunpack.c.l.b16 %v2702
    %v2896 = vunpack.c.h.b16 %v2702
    %v2897 = vunpack.c.l.b16 %v2703
    %v2898 = vunpack.c.h.b16 %v2703
    %v2899 = vunpack.c.l.b16 %v2704
    %v2900 = vunpack.c.h.b16 %v2704
    %v2901 = vunpack.c.l.b16 %v2705
    %v2902 = vunpack.c.h.b16 %v2705
    %v2903 = vunpack.c.l.b16 %v2706
    %v2904 = vunpack.c.h.b16 %v2706
    %v2905 = vunpack.c.l.b16 %v2707
    %v2906 = vunpack.c.h.b16 %v2707
    %v2907 = vunpack.c.l.b16 %v2708
    %v2908 = vunpack.c.h.b16 %v2708
    %v2909 = vunpack.c.l.b16 %v2709
    %v2910 = vunpack.c.h.b16 %v2709
    %v2911 = vunpack.c.l.b16 %v2710
    %v2912 = vunpack.c.h.b16 %v2710
    %v2913 = vunpack.c.l.b16 %v2711
    %v2914 = vunpack.c.h.b16 %v2711
    %v2915 = vunpack.c.l.b16 %v2712
    %v2916 = vunpack.c.h.b16 %v2712
    %v2917 = vunpack.c.l.b16 %v2713
    %v2918 = vunpack.c.h.b16 %v2713
    %v2919 = vunpack.c.l.b16 %v2714
    %v2920 = vunpack.c.h.b16 %v2714
    %v2921 = vunpack.c.l.b16 %v2715
    %v2922 = vunpack.c.h.b16 %v2715
    %v2923 = vunpack.c.l.b16 %v2716
    %v2924 = vunpack.c.h.b16 %v2716
    %v2925 = vunpack.c.l.b16 %v2717
    %v2926 = vunpack.c.h.b16 %v2717
    %v2927 = vunpack.c.l.b16 %v2718
    %v2928 = vunpack.c.h.b16 %v2718
    %v2929 = vunpack.c.l.b16 %v2719
    %v2930 = vunpack.c.h.b16 %v2719
    %v2931 = vunpack.c.l.b16 %v2720
    %v2932 = vunpack.c.h.b16 %v2720
    %v2933 = vunpack.c.l.b16 %v2721
    %v2934 = vunpack.c.h.b16 %v2721
    %v2935 = vunpack.c.l.b16 %v2722
    %v2936 = vunpack.c.h.b16 %v2722
    %v2937 = vpack.c.b16 %v2813, %v2809
    %v2938 = vpack.c.b16 %v2814, %v2810
    %v2939 = vpack.c.b16 %v2815, %v2811
    %v2940 = vpack.c.b16 %v2816, %v2812
    %v2941 = vpack.c.b16 %v2821, %v2817
    %v2942 = vpack.c.b16 %v2822, %v2818
    %v2943 = vpack.c.b16 %v2823, %v2819
    %v2944 = vpack.c.b16 %v2824, %v2820
    %v2945 = vpack.c.b16 %v2829, %v2825
    %v2946 = vpack.c.b16 %v2830, %v2826
    %v2947 = vpack.c.b16 %v2831, %v2827
    %v2948 = vpack.c.b16 %v2832, %v2828
    %v2949 = vpack.c.b16 %v2837, %v2833
    %v2950 = vpack.c.b16 %v2838, %v2834
    %v2951 = vpack.c.b16 %v2839, %v2835
    %v2952 = vpack.c.b16 %v2840, %v2836
    %v2953 = vpack.c.b16 %v2845, %v2841
    %v2954 = vpack.c.b16 %v2846, %v2842
    %v2955 = vpack.c.b16 %v2847, %v2843
    %v2956 = vpack.c.b16 %v2848, %v2844
    %v2957 = vpack.c.b16 %v2853, %v2849
    %v2958 = vpack.c.b16 %v2854, %v2850
    %v2959 = vpack.c.b16 %v2855, %v2851
    %v2960 = vpack.c.b16 %v2856, %v2852
    %v2961 = vpack.c.b16 %v2861, %v2857
    %v2962 = vpack.c.b16 %v2862, %v2858
    %v2963 = vpack.c.b16 %v2863, %v2859
    %v2964 = vpack.c.b16 %v2864, %v2860
    %v2965 = vpack.c.b16 %v2869, %v2865
    %v2966 = vpack.c.b16 %v2870, %v2866
    %v2967 = vpack.c.b16 %v2871, %v2867
    %v2968 = vpack.c.b16 %v2872, %v2868
    %v2969 = vpack.c.b16 %v2877, %v2873
    %v2970 = vpack.c.b16 %v2878, %v2874
    %v2971 = vpack.c.b16 %v2879, %v2875
    %v2972 = vpack.c.b16 %v2880, %v2876
    %v2973 = vpack.c.b16 %v2885, %v2881
    %v2974 = vpack.c.b16 %v2886, %v2882
    %v2975 = vpack.c.b16 %v2887, %v2883
    %v2976 = vpack.c.b16 %v2888, %v2884
    %v2977 = vpack.c.b16 %v2893, %v2889
    %v2978 = vpack.c.b16 %v2894, %v2890
    %v2979 = vpack.c.b16 %v2895, %v2891
    %v2980 = vpack.c.b16 %v2896, %v2892
    %v2981 = vpack.c.b16 %v2901, %v2897
    %v2982 = vpack.c.b16 %v2902, %v2898
    %v2983 = vpack.c.b16 %v2903, %v2899
    %v2984 = vpack.c.b16 %v2904, %v2900
    %v2985 = vpack.c.b16 %v2909, %v2905
    %v2986 = vpack.c.b16 %v2910, %v2906
    %v2987 = vpack.c.b16 %v2911, %v2907
    %v2988 = vpack.c.b16 %v2912, %v2908
    %v2989 = vpack.c.b16 %v2917, %v2913
    %v2990 = vpack.c.b16 %v2918, %v2914
    %v2991 = vpack.c.b16 %v2919, %v2915
    %v2992 = vpack.c.b16 %v2920, %v2916
    %v2993 = vpack.c.b16 %v2925, %v2921
    %v2994 = vpack.c.b16 %v2926, %v2922
    %v2995 = vpack.c.b16 %v2927, %v2923
    %v2996 = vpack.c.b16 %v2928, %v2924
    %v2997 = vpack.c.b16 %v2933, %v2929
    %v2998 = vpack.c.b16 %v2934, %v2930
    %v2999 = vpack.c.b16 %v2935, %v2931
    %v3000 = vpack.c.b16 %v2936, %v2932
    %3065 = vmatprep.subr.bf16.mxu0 %v2938
    %3066 = vmatpush1.bf16.msra.mxu0 %v2937
    %3067 = vmatprep.subr.bf16.mxu0 %v2942
    %3068 = vmatpush1.bf16.msra.mxu0 %v2941
    %3069 = vmatprep.subr.bf16.mxu0 %v2946
    %3070 = vmatpush1.bf16.msra.mxu0 %v2945
    %3071 = vmatprep.subr.bf16.mxu0 %v2950
    %3072 = vmatpush1.bf16.msra.mxu0 %v2949
    %3073 = vmatprep.subr.bf16.mxu0 %v2954
    %3074 = vmatpush1.bf16.msra.mxu0 %v2953
    %3075 = vmatprep.subr.bf16.mxu0 %v2958
    %3076 = vmatpush1.bf16.msra.mxu0 %v2957
    %3077 = vmatprep.subr.bf16.mxu0 %v2962
    %3078 = vmatpush1.bf16.msra.mxu0 %v2961
    %3079 = vmatprep.subr.bf16.mxu0 %v2966
    %3080 = vmatpush1.bf16.msra.mxu0 %v2965
    %3081 = vmatprep.subr.bf16.mxu0 %v2970
    %3082 = vmatpush1.bf16.msra.mxu0 %v2969
    %3083 = vmatprep.subr.bf16.mxu0 %v2974
    %3084 = vmatpush1.bf16.msra.mxu0 %v2973
    %3085 = vmatprep.subr.bf16.mxu0 %v2978
    %3086 = vmatpush1.bf16.msra.mxu0 %v2977
    %3087 = vmatprep.subr.bf16.mxu0 %v2982
    %3088 = vmatpush1.bf16.msra.mxu0 %v2981
    %3089 = vmatprep.subr.bf16.mxu0 %v2986
    %3090 = vmatpush1.bf16.msra.mxu0 %v2985
    %3091 = vmatprep.subr.bf16.mxu0 %v2990
    %3092 = vmatpush1.bf16.msra.mxu0 %v2989
    %3093 = vmatprep.subr.bf16.mxu0 %v2994
    %3094 = vmatpush1.bf16.msra.mxu0 %v2993
    %3095 = vmatprep.subr.bf16.mxu0 %v2998
    %3096 = vmatpush1.bf16.msra.mxu0 %v2997
    %3097 = vmatprep.mubr.bf16.mxu0 %v2400
    %3098 = vmatmul.mubr.bf16.gmra.mrb[0].mxu0 %v2658
    %v3099 = vpop.f32.mrb[0].mxu0
    %v3100 = vadd.f32 %v2728, %v3099
    %v3101 = vpop.f32.mrb[0].mxu0
    %v3102 = vadd.f32 %v2732, %v3101
    %v3103 = vpop.f32.mrb[0].mxu0
    %v3104 = vpop.f32.mrb[0].mxu0
    %3105 = vdwg.mxu0
    %3106 = vmatprep.subr.bf16.mxu0 %v2940
    %3107 = vmatpush1.bf16.msra.mxu0 %v2939
    %3108 = vmatprep.subr.bf16.mxu0 %v2944
    %3109 = vmatpush1.bf16.msra.mxu0 %v2943
    %3110 = vmatprep.subr.bf16.mxu0 %v2948
    %3111 = vmatpush1.bf16.msra.mxu0 %v2947
    %3112 = vmatprep.subr.bf16.mxu0 %v2952
    %3113 = vmatpush1.bf16.msra.mxu0 %v2951
    %3114 = vmatprep.subr.bf16.mxu0 %v2956
    %3115 = vmatpush1.bf16.msra.mxu0 %v2955
    %3116 = vmatprep.subr.bf16.mxu0 %v2960
    %3117 = vmatpush1.bf16.msra.mxu0 %v2959
    %3118 = vmatprep.subr.bf16.mxu0 %v2964
    %3119 = vmatpush1.bf16.msra.mxu0 %v2963
    %3120 = vmatprep.subr.bf16.mxu0 %v2968
    %3121 = vmatpush1.bf16.msra.mxu0 %v2967
    %3122 = vmatprep.subr.bf16.mxu0 %v2972
    %3123 = vmatpush1.bf16.msra.mxu0 %v2971
    %3124 = vmatprep.subr.bf16.mxu0 %v2976
    %3125 = vmatpush1.bf16.msra.mxu0 %v2975
    %3126 = vmatprep.subr.bf16.mxu0 %v2980
    %3127 = vmatpush1.bf16.msra.mxu0 %v2979
    %3128 = vmatprep.subr.bf16.mxu0 %v2984
    %3129 = vmatpush1.bf16.msra.mxu0 %v2983
    %3130 = vmatprep.subr.bf16.mxu0 %v2988
    %3131 = vmatpush1.bf16.msra.mxu0 %v2987
    %3132 = vmatprep.subr.bf16.mxu0 %v2992
    %3133 = vmatpush1.bf16.msra.mxu0 %v2991
    %3134 = vmatprep.subr.bf16.mxu0 %v2996
    %3135 = vmatpush1.bf16.msra.mxu0 %v2995
    %3136 = vmatprep.subr.bf16.mxu0 %v3000
    %3137 = vmatpush1.bf16.msra.mxu0 %v2999
    %3138 = vmatprep.mubr.bf16.mxu0 %v2400
    %3139 = vmatmul.mubr.bf16.gmra.mrb[0].mxu0 %v2658
    %v3140 = vpop.f32.mrb[0].mxu0
    %v3141 = vadd.f32 %v2736, %v3140
    %v3142 = vpop.f32.mrb[0].mxu0
    %v3143 = vadd.f32 %v2740, %v3142
    %v3144 = vpop.f32.mrb[0].mxu0
    %v3145 = vpop.f32.mrb[0].mxu0
    %3146 = vdwg.mxu0
    %v3147 = vxor.u32 %v3100, 2147483648
    %v3148 = vmul.f32 %v3147, 1.442695
    %v3149 = vpow.pop %v3148
    %v3150 = vadd.f32 %v3149, 1.0
    %v3151 = vrcp.pop %v3150
    %v3152 = vmul.f32 1.0, %v3151
    %v3153 = vxor.u32 %v3102, 2147483648
    %v3154 = vmul.f32 %v3153, 1.442695
    %v3155 = vpow.pop %v3154
    %v3156 = vadd.f32 %v3155, 1.0
    %v3157 = vrcp.pop %v3156
    %v3158 = vmul.f32 1.0, %v3157
    %v3159 = vtanh.pop %v3141
    %v3160 = vxor.u32 %v3143, 2147483648
    %v3161 = vmul.f32 %v3160, 1.442695
    %v3162 = vpow.pop %v3161
    %v3163 = vadd.f32 %v3162, 1.0
    %v3164 = vrcp.pop %v3163
    %v3165 = vmul.f32 1.0, %v3164
    %v3166 = vmul.f32 %v3158, %v2397
    %v3167 = vmul.f32 %v3152, %v3159
    %v3168 = vadd.f32 %v3166, %v3167
    %v3169 = vtanh.pop %v3168
    %v3170 = vmul.f32 %v3165, %v3169
    %v3171 = vpack.c.bf16 %v3170, %v3170
    %v3172 = vld [vmem:[%s7] sm:$0xf]
    %v3173 = vld [vmem:[%s7 + $0x4] sm:$0xf]
    %v3174 = vld [vmem:[%s7 + $0x8] sm:$0xf]
    %v3175 = vld [vmem:[%s7 + $0xc] sm:$0xf]
    %v3176 = vld [vmem:[%s7 + $0x10] sm:$0xf]
    %v3177 = vld [vmem:[%s7 + $0x14] sm:$0xf]
    %v3178 = vld [vmem:[%s7 + $0x18] sm:$0xf]
    %v3179 = vld [vmem:[%s7 + $0x1c] sm:$0xf]
    %v3180 = vld [vmem:[%s7 + $0x20] sm:$0xf]
    %v3181 = vld [vmem:[%s7 + $0x24] sm:$0xf]
    %v3182 = vld [vmem:[%s7 + $0x28] sm:$0xf]
    %v3183 = vld [vmem:[%s7 + $0x2c] sm:$0xf]
    %v3184 = vld [vmem:[%s7 + $0x30] sm:$0xf]
    %v3185 = vld [vmem:[%s7 + $0x34] sm:$0xf]
    %v3186 = vld [vmem:[%s7 + $0x38] sm:$0xf]
    %v3187 = vld [vmem:[%s7 + $0x3c] sm:$0xf]
    %v3188 = vld [vmem:[%s8] sm:$0x1]
    %v3190 = vlaneseq
    %v3191 = vshrl.u32 %v3190, 7
    %v3192 = vsub.s32 0, %v3191
    %v3193 = vrot.slane %v3188, %v3192
    %v3211 = vunpack.c.l.b16 %v3172
    %v3212 = vunpack.c.l.b16 %v3173
    %v3213 = vunpack.c.l.b16 %v3174
    %v3214 = vunpack.c.l.b16 %v3175
    %v3215 = vunpack.c.l.b16 %v3176
    %v3216 = vunpack.c.l.b16 %v3177
    %v3217 = vunpack.c.l.b16 %v3178
    %v3218 = vunpack.c.l.b16 %v3179
    %v3219 = vunpack.c.l.b16 %v3180
    %v3220 = vunpack.c.l.b16 %v3181
    %v3221 = vunpack.c.l.b16 %v3182
    %v3222 = vunpack.c.l.b16 %v3183
    %v3223 = vunpack.c.l.b16 %v3184
    %v3224 = vunpack.c.l.b16 %v3185
    %v3225 = vunpack.c.l.b16 %v3186
    %v3226 = vunpack.c.l.b16 %v3187
    %v3227 = vpack.c.b16 %v3212, %v3211
    %v3228 = vpack.c.b16 %v3214, %v3213
    %v3229 = vpack.c.b16 %v3216, %v3215
    %v3230 = vpack.c.b16 %v3218, %v3217
    %v3231 = vpack.c.b16 %v3220, %v3219
    %v3232 = vpack.c.b16 %v3222, %v3221
    %v3233 = vpack.c.b16 %v3224, %v3223
    %v3234 = vpack.c.b16 %v3226, %v3225
    %3243 = vmatprep.subr.bf16.mxu0 0
    %3244 = vmatpush1.bf16.msra.mxu0 %v3227
    %3245 = vmatprep.subr.bf16.mxu0 0
    %3246 = vmatpush1.bf16.msra.mxu0 %v3228
    %3247 = vmatprep.subr.bf16.mxu0 0
    %3248 = vmatpush1.bf16.msra.mxu0 %v3229
    %3249 = vmatprep.subr.bf16.mxu0 0
    %3250 = vmatpush1.bf16.msra.mxu0 %v3230
    %3251 = vmatprep.subr.bf16.mxu0 0
    %3252 = vmatpush1.bf16.msra.mxu0 %v3231
    %3253 = vmatprep.subr.bf16.mxu0 0
    %3254 = vmatpush1.bf16.msra.mxu0 %v3232
    %3255 = vmatprep.subr.bf16.mxu0 0
    %3256 = vmatpush1.bf16.msra.mxu0 %v3233
    %3257 = vmatprep.subr.bf16.mxu0 0
    %3258 = vmatpush1.bf16.msra.mxu0 %v3234
    %3259 = vmatprep.subr.bf16.mxu0 0
    %3260 = vmatpush1.bf16.msra.mxu0 0
    %3261 = vmatprep.subr.bf16.mxu0 0
    %3262 = vmatpush1.bf16.msra.mxu0 0
    %3263 = vmatprep.subr.bf16.mxu0 0
    %3264 = vmatpush1.bf16.msra.mxu0 0
    %3265 = vmatprep.subr.bf16.mxu0 0
    %3266 = vmatpush1.bf16.msra.mxu0 0
    %3267 = vmatprep.subr.bf16.mxu0 0
    %3268 = vmatpush1.bf16.msra.mxu0 0
    %3269 = vmatprep.subr.bf16.mxu0 0
    %3270 = vmatpush1.bf16.msra.mxu0 0
    %3271 = vmatprep.subr.bf16.mxu0 0
    %3272 = vmatpush1.bf16.msra.mxu0 0
    %3273 = vmatprep.subr.bf16.mxu0 0
    %3274 = vmatpush1.bf16.msra.mxu0 0
    %3275 = vmatprep.mubr.bf16.mxu0 0
    %3276 = vmatmul.mubr.bf16.gmra.mrb[0].mxu0 %v3171
    %v3277 = vpop.f32.mrb[0].mxu0
    %v3278 = vadd.f32 %v3193, %v3277
    %v3279 = vpop.f32.mrb[0].mxu0
    %v3280 = vpop.f32.mrb[0].mxu0
    %v3281 = vpop.f32.mrb[0].mxu0
    %3282 = vdwg.mxu0
    %s3283 = scalar_lea.vmem %s10, 16
    %3284 = vst [vmem:[%s3283] sm:$0xff] %v3278
    %s3285 = sld [smem:[#allocation4 + $0x3]]
    %p3286 = scmp.eq.s32.totalorder %s3285, 0
    // Predicated region
    $region58: #{seq2seq_forward.1} parent=1 // pred_check
      %p3287 = pneg %p3286
    $region59: #{seq2seq_forward.1} parent=1 // pred_check_branch
      %3289 = sbr.rel (%p3287) target = $region61
    $region60: #{seq2seq_forward.1} parent=1 // pred_region
      %3290 = vmax.xlane.f32.xlu0 %v3278
      %v3291 = vpop.xlane.xlu0 %3290
      %v3292 = vlaneseq
      %v3293 = vand.u32 %v3292, 127
      %vm3294 = vcmp.eq.f32.partialorder %v3278, %v3291
      %v3295 = vsel %vm3294, %v3293, 128
      %v3296 = vand.u32 %v3295, 65535
      %v3297 = vshra.s32 %v3295, 16
      %v3298 = vcvt.s32.f32 %v3296
      %v3299 = vcvt.s32.f32 %v3297
      %3300 = vmin.xlane.f32.xlu0 %v3299
      %v3301 = vpop.xlane.xlu0 %3300
      %vm3302 = vcmp.eq.f32.partialorder %v3299, %v3301
      %v3303 = vsel %vm3302, %v3298, inf
      %3304 = vmin.xlane.f32.xlu0 %v3303
      %v3305 = vpop.xlane.xlu0 %3304
      %v3306 = vcvt.f32.s32 %v3305
      %v3307 = vcvt.f32.s32 %v3301
      %v3308 = vshll.u32 %v3307, 16
      %v3309 = vadd.s32 %v3308, %v3306
      %vm3310 = vcmp.eq.s32.totalorder %v3293, %v3309
      %v3311 = vsel %vm3310, 1, 0
      %v3312 = vcvt.s32.f32 %v3311
      %v3313 = vpack.c.bf16 %v3312, %v3312
      %v3314 = vld [vmem:[%s9] sm:$0xf]
      %v3315 = vld [vmem:[%s9 + $0x4] sm:$0xf]
      %v3316 = vld [vmem:[%s9 + $0x8] sm:$0xf]
      %v3317 = vld [vmem:[%s9 + $0xc] sm:$0xf]
      %v3318 = vld [vmem:[%s9 + $0x10] sm:$0xf]
      %v3319 = vld [vmem:[%s9 + $0x14] sm:$0xf]
      %v3320 = vld [vmem:[%s9 + $0x18] sm:$0xf]
      %v3321 = vld [vmem:[%s9 + $0x1c] sm:$0xf]
      %v3322 = vld [vmem:[%s9 + $0x20] sm:$0xf]
      %v3323 = vld [vmem:[%s9 + $0x24] sm:$0xf]
      %v3324 = vld [vmem:[%s9 + $0x28] sm:$0xf]
      %v3325 = vld [vmem:[%s9 + $0x2c] sm:$0xf]
      %v3326 = vld [vmem:[%s9 + $0x30] sm:$0xf]
      %v3327 = vld [vmem:[%s9 + $0x34] sm:$0xf]
      %v3328 = vld [vmem:[%s9 + $0x38] sm:$0xf]
      %v3329 = vld [vmem:[%s9 + $0x3c] sm:$0xf]
      %v3346 = vunpack.c.l.b16 %v3314
      %v3347 = vunpack.c.l.b16 %v3315
      %v3348 = vunpack.c.l.b16 %v3316
      %v3349 = vunpack.c.l.b16 %v3317
      %v3350 = vunpack.c.l.b16 %v3318
      %v3351 = vunpack.c.l.b16 %v3319
      %v3352 = vunpack.c.l.b16 %v3320
      %v3353 = vunpack.c.l.b16 %v3321
      %v3354 = vunpack.c.l.b16 %v3322
      %v3355 = vunpack.c.l.b16 %v3323
      %v3356 = vunpack.c.l.b16 %v3324
      %v3357 = vunpack.c.l.b16 %v3325
      %v3358 = vunpack.c.l.b16 %v3326
      %v3359 = vunpack.c.l.b16 %v3327
      %v3360 = vunpack.c.l.b16 %v3328
      %v3361 = vunpack.c.l.b16 %v3329
      %v3362 = vpack.c.b16 %v3347, %v3346
      %v3363 = vpack.c.b16 %v3349, %v3348
      %v3364 = vpack.c.b16 %v3351, %v3350
      %v3365 = vpack.c.b16 %v3353, %v3352
      %v3366 = vpack.c.b16 %v3355, %v3354
      %v3367 = vpack.c.b16 %v3357, %v3356
      %v3368 = vpack.c.b16 %v3359, %v3358
      %v3369 = vpack.c.b16 %v3361, %v3360
      %3378 = vmatprep.subr.bf16.mxu0 0
      %3379 = vmatpush1.bf16.msra.mxu0 %v3362
      %3380 = vmatprep.subr.bf16.mxu0 0
      %3381 = vmatpush1.bf16.msra.mxu0 %v3363
      %3382 = vmatprep.subr.bf16.mxu0 0
      %3383 = vmatpush1.bf16.msra.mxu0 %v3364
      %3384 = vmatprep.subr.bf16.mxu0 0
      %3385 = vmatpush1.bf16.msra.mxu0 %v3365
      %3386 = vmatprep.subr.bf16.mxu0 0
      %3387 = vmatpush1.bf16.msra.mxu0 %v3366
      %3388 = vmatprep.subr.bf16.mxu0 0
      %3389 = vmatpush1.bf16.msra.mxu0 %v3367
      %3390 = vmatprep.subr.bf16.mxu0 0
      %3391 = vmatpush1.bf16.msra.mxu0 %v3368
      %3392 = vmatprep.subr.bf16.mxu0 0
      %3393 = vmatpush1.bf16.msra.mxu0 %v3369
      %3394 = vmatprep.subr.bf16.mxu0 0
      %3395 = vmatpush1.bf16.msra.mxu0 0
      %3396 = vmatprep.subr.bf16.mxu0 0
      %3397 = vmatpush1.bf16.msra.mxu0 0
      %3398 = vmatprep.subr.bf16.mxu0 0
      %3399 = vmatpush1.bf16.msra.mxu0 0
      %3400 = vmatprep.subr.bf16.mxu0 0
      %3401 = vmatpush1.bf16.msra.mxu0 0
      %3402 = vmatprep.subr.bf16.mxu0 0
      %3403 = vmatpush1.bf16.msra.mxu0 0
      %3404 = vmatprep.subr.bf16.mxu0 0
      %3405 = vmatpush1.bf16.msra.mxu0 0
      %3406 = vmatprep.subr.bf16.mxu0 0
      %3407 = vmatpush1.bf16.msra.mxu0 0
      %3408 = vmatprep.subr.bf16.mxu0 0
      %3409 = vmatpush1.bf16.msra.mxu0 0
      %3410 = vmatprep.mubr.bf16.mxu0 0
      %3411 = vmatmul.mubr.bf16.gmra.mrb[0].mxu0 %v3313
      %v3412 = vpop.f32.mrb[0].mxu0
      %v3413 = vadd.f32 0.0, %v3412
      %v3414 = vpop.f32.mrb[0].mxu0
      %v3415 = vpop.f32.mrb[0].mxu0
      %v3416 = vpop.f32.mrb[0].mxu0
      %3417 = vdwg.mxu0
      %3418 = vst [vmem:[#allocation2] sm:$0xff] %v3413
    $region61: #{seq2seq_forward.1} parent=1 // pred_fallthru
      _
    %s3419 = sld [smem:[#allocation4 + $0x3]]
    %p3420 = scmp.ne.s32.totalorder %s3419, 0
    // Predicated region
    $region62: #{seq2seq_forward.1} parent=1 // pred_check
      %p3421 = pneg %p3420
    $region63: #{seq2seq_forward.1} parent=1 // pred_check_branch
      %3423 = sbr.rel (%p3421) target = $region65
    $region64: #{seq2seq_forward.1} parent=1 // pred_region
      %s3424 = scalar_lea.vmem %s2, 12
      %v3425 = vld [vmem:[%s3424] sm:$0xf]
      %v3426 = vunpack.c.l.bf16 %v3425
      %3427 = vst [vmem:[#allocation2] sm:$0xff] %v3426
    $region65: #{seq2seq_forward.1} parent=1 // pred_fallthru
      _
    %v3428 = vld [vmem:[#allocation2] sm:$0xff]
    %v3429 = vpack.c.bf16 %v3428, %v3428
    %v3430 = vld [vmem:[#allocation5] sm:$0xff]
    %v3431 = vld [vmem:[#allocation5 + $0x8] sm:$0xff]
    %v3432 = vld [vmem:[#allocation5 + $0x10] sm:$0xff]
    %v3433 = vld [vmem:[#allocation5 + $0x18] sm:$0xff]
    %v3434 = vld [vmem:[#allocation5 + $0x20] sm:$0xff]
    %v3435 = vld [vmem:[#allocation5 + $0x28] sm:$0xff]
    %v3436 = vld [vmem:[#allocation5 + $0x30] sm:$0xff]
    %v3437 = vld [vmem:[#allocation5 + $0x38] sm:$0xff]
    %v3438 = vld [vmem:[#allocation5 + $0x40] sm:$0xff]
    %v3439 = vld [vmem:[#allocation5 + $0x48] sm:$0xff]
    %v3440 = vld [vmem:[#allocation5 + $0x50] sm:$0xff]
    %v3441 = vld [vmem:[#allocation5 + $0x58] sm:$0xff]
    %v3442 = vld [vmem:[#allocation5 + $0x60] sm:$0xff]
    %v3443 = vld [vmem:[#allocation5 + $0x68] sm:$0xff]
    %v3444 = vld [vmem:[#allocation5 + $0x70] sm:$0xff]
    %v3445 = vld [vmem:[#allocation5 + $0x78] sm:$0xff]
    %v3446 = vld [vmem:[#allocation5 + $0x80] sm:$0xff]
    %v3447 = vld [vmem:[#allocation5 + $0x88] sm:$0xff]
    %v3448 = vld [vmem:[#allocation5 + $0x90] sm:$0xff]
    %v3449 = vld [vmem:[#allocation5 + $0x98] sm:$0xff]
    %v3450 = vld [vmem:[#allocation5 + $0xa0] sm:$0xff]
    %v3451 = vld [vmem:[#allocation5 + $0xa8] sm:$0xff]
    %v3452 = vld [vmem:[#allocation5 + $0xb0] sm:$0xff]
    %v3453 = vld [vmem:[#allocation5 + $0xb8] sm:$0xff]
    %v3454 = vld [vmem:[#allocation5 + $0xc0] sm:$0xff]
    %v3455 = vld [vmem:[#allocation5 + $0xc8] sm:$0xff]
    %v3456 = vld [vmem:[#allocation5 + $0xd0] sm:$0xff]
    %v3457 = vld [vmem:[#allocation5 + $0xd8] sm:$0xff]
    %v3458 = vld [vmem:[#allocation5 + $0xe0] sm:$0xff]
    %v3459 = vld [vmem:[#allocation5 + $0xe8] sm:$0xff]
    %v3460 = vld [vmem:[#allocation5 + $0xf0] sm:$0xff]
    %v3461 = vld [vmem:[#allocation5 + $0xf8] sm:$0xff]
    %v3462 = vld [vmem:[#allocation5 + $0x100] sm:$0xff]
    %v3463 = vld [vmem:[#allocation5 + $0x108] sm:$0xff]
    %v3464 = vld [vmem:[#allocation5 + $0x110] sm:$0xff]
    %v3465 = vld [vmem:[#allocation5 + $0x118] sm:$0xff]
    %v3466 = vld [vmem:[#allocation5 + $0x120] sm:$0xff]
    %v3467 = vld [vmem:[#allocation5 + $0x128] sm:$0xff]
    %v3468 = vld [vmem:[#allocation5 + $0x130] sm:$0xff]
    %v3469 = vld [vmem:[#allocation5 + $0x138] sm:$0xff]
    %v3470 = vld [vmem:[#allocation5 + $0x140] sm:$0xff]
    %v3471 = vld [vmem:[#allocation5 + $0x148] sm:$0xff]
    %v3472 = vld [vmem:[#allocation5 + $0x150] sm:$0xff]
    %v3473 = vld [vmem:[#allocation5 + $0x158] sm:$0xff]
    %v3474 = vld [vmem:[#allocation5 + $0x160] sm:$0xff]
    %v3475 = vld [vmem:[#allocation5 + $0x168] sm:$0xff]
    %v3476 = vld [vmem:[#allocation5 + $0x170] sm:$0xff]
    %v3477 = vld [vmem:[#allocation5 + $0x178] sm:$0xff]
    %v3478 = vld [vmem:[#allocation5 + $0x180] sm:$0xff]
    %v3479 = vld [vmem:[#allocation5 + $0x188] sm:$0xff]
    %v3480 = vld [vmem:[#allocation5 + $0x190] sm:$0xff]
    %v3481 = vld [vmem:[#allocation5 + $0x198] sm:$0xff]
    %v3482 = vld [vmem:[#allocation5 + $0x1a0] sm:$0xff]
    %v3483 = vld [vmem:[#allocation5 + $0x1a8] sm:$0xff]
    %v3484 = vld [vmem:[#allocation5 + $0x1b0] sm:$0xff]
    %v3485 = vld [vmem:[#allocation5 + $0x1b8] sm:$0xff]
    %v3486 = vld [vmem:[#allocation5 + $0x1c0] sm:$0xff]
    %v3487 = vld [vmem:[#allocation5 + $0x1c8] sm:$0xff]
    %v3488 = vld [vmem:[#allocation5 + $0x1d0] sm:$0xff]
    %v3489 = vld [vmem:[#allocation5 + $0x1d8] sm:$0xff]
    %v3490 = vld [vmem:[#allocation5 + $0x1e0] sm:$0xff]
    %v3491 = vld [vmem:[#allocation5 + $0x1e8] sm:$0xff]
    %v3492 = vld [vmem:[#allocation5 + $0x1f0] sm:$0xff]
    %v3493 = vld [vmem:[#allocation5 + $0x1f8] sm:$0xff]
    %v3494 = vld [vmem:[%s6] sm:$0xf]
    %v3496 = vlaneseq
    %v3497 = vshrl.u32 %v3496, 7
    %v3498 = vsub.s32 0, %v3497
    %v3499 = vrot.slane %v3494, %v3498
    %v3500 = vlaneseq
    %v3501 = vshrl.u32 %v3500, 7
    %v3502 = vsub.s32 1, %v3501
    %v3503 = vrot.slane %v3494, %v3502
    %v3504 = vlaneseq
    %v3505 = vshrl.u32 %v3504, 7
    %v3506 = vsub.s32 2, %v3505
    %v3507 = vrot.slane %v3494, %v3506
    %v3508 = vlaneseq
    %v3509 = vshrl.u32 %v3508, 7
    %v3510 = vsub.s32 3, %v3509
    %v3511 = vrot.slane %v3494, %v3510
    %v3580 = vunpack.c.l.b16 %v3430
    %v3581 = vunpack.c.h.b16 %v3430
    %v3582 = vunpack.c.l.b16 %v3431
    %v3583 = vunpack.c.h.b16 %v3431
    %v3584 = vunpack.c.l.b16 %v3432
    %v3585 = vunpack.c.h.b16 %v3432
    %v3586 = vunpack.c.l.b16 %v3433
    %v3587 = vunpack.c.h.b16 %v3433
    %v3588 = vunpack.c.l.b16 %v3434
    %v3589 = vunpack.c.h.b16 %v3434
    %v3590 = vunpack.c.l.b16 %v3435
    %v3591 = vunpack.c.h.b16 %v3435
    %v3592 = vunpack.c.l.b16 %v3436
    %v3593 = vunpack.c.h.b16 %v3436
    %v3594 = vunpack.c.l.b16 %v3437
    %v3595 = vunpack.c.h.b16 %v3437
    %v3596 = vunpack.c.l.b16 %v3438
    %v3597 = vunpack.c.h.b16 %v3438
    %v3598 = vunpack.c.l.b16 %v3439
    %v3599 = vunpack.c.h.b16 %v3439
    %v3600 = vunpack.c.l.b16 %v3440
    %v3601 = vunpack.c.h.b16 %v3440
    %v3602 = vunpack.c.l.b16 %v3441
    %v3603 = vunpack.c.h.b16 %v3441
    %v3604 = vunpack.c.l.b16 %v3442
    %v3605 = vunpack.c.h.b16 %v3442
    %v3606 = vunpack.c.l.b16 %v3443
    %v3607 = vunpack.c.h.b16 %v3443
    %v3608 = vunpack.c.l.b16 %v3444
    %v3609 = vunpack.c.h.b16 %v3444
    %v3610 = vunpack.c.l.b16 %v3445
    %v3611 = vunpack.c.h.b16 %v3445
    %v3612 = vunpack.c.l.b16 %v3446
    %v3613 = vunpack.c.h.b16 %v3446
    %v3614 = vunpack.c.l.b16 %v3447
    %v3615 = vunpack.c.h.b16 %v3447
    %v3616 = vunpack.c.l.b16 %v3448
    %v3617 = vunpack.c.h.b16 %v3448
    %v3618 = vunpack.c.l.b16 %v3449
    %v3619 = vunpack.c.h.b16 %v3449
    %v3620 = vunpack.c.l.b16 %v3450
    %v3621 = vunpack.c.h.b16 %v3450
    %v3622 = vunpack.c.l.b16 %v3451
    %v3623 = vunpack.c.h.b16 %v3451
    %v3624 = vunpack.c.l.b16 %v3452
    %v3625 = vunpack.c.h.b16 %v3452
    %v3626 = vunpack.c.l.b16 %v3453
    %v3627 = vunpack.c.h.b16 %v3453
    %v3628 = vunpack.c.l.b16 %v3454
    %v3629 = vunpack.c.h.b16 %v3454
    %v3630 = vunpack.c.l.b16 %v3455
    %v3631 = vunpack.c.h.b16 %v3455
    %v3632 = vunpack.c.l.b16 %v3456
    %v3633 = vunpack.c.h.b16 %v3456
    %v3634 = vunpack.c.l.b16 %v3457
    %v3635 = vunpack.c.h.b16 %v3457
    %v3636 = vunpack.c.l.b16 %v3458
    %v3637 = vunpack.c.h.b16 %v3458
    %v3638 = vunpack.c.l.b16 %v3459
    %v3639 = vunpack.c.h.b16 %v3459
    %v3640 = vunpack.c.l.b16 %v3460
    %v3641 = vunpack.c.h.b16 %v3460
    %v3642 = vunpack.c.l.b16 %v3461
    %v3643 = vunpack.c.h.b16 %v3461
    %v3644 = vunpack.c.l.b16 %v3462
    %v3645 = vunpack.c.h.b16 %v3462
    %v3646 = vunpack.c.l.b16 %v3463
    %v3647 = vunpack.c.h.b16 %v3463
    %v3648 = vunpack.c.l.b16 %v3464
    %v3649 = vunpack.c.h.b16 %v3464
    %v3650 = vunpack.c.l.b16 %v3465
    %v3651 = vunpack.c.h.b16 %v3465
    %v3652 = vunpack.c.l.b16 %v3466
    %v3653 = vunpack.c.h.b16 %v3466
    %v3654 = vunpack.c.l.b16 %v3467
    %v3655 = vunpack.c.h.b16 %v3467
    %v3656 = vunpack.c.l.b16 %v3468
    %v3657 = vunpack.c.h.b16 %v3468
    %v3658 = vunpack.c.l.b16 %v3469
    %v3659 = vunpack.c.h.b16 %v3469
    %v3660 = vunpack.c.l.b16 %v3470
    %v3661 = vunpack.c.h.b16 %v3470
    %v3662 = vunpack.c.l.b16 %v3471
    %v3663 = vunpack.c.h.b16 %v3471
    %v3664 = vunpack.c.l.b16 %v3472
    %v3665 = vunpack.c.h.b16 %v3472
    %v3666 = vunpack.c.l.b16 %v3473
    %v3667 = vunpack.c.h.b16 %v3473
    %v3668 = vunpack.c.l.b16 %v3474
    %v3669 = vunpack.c.h.b16 %v3474
    %v3670 = vunpack.c.l.b16 %v3475
    %v3671 = vunpack.c.h.b16 %v3475
    %v3672 = vunpack.c.l.b16 %v3476
    %v3673 = vunpack.c.h.b16 %v3476
    %v3674 = vunpack.c.l.b16 %v3477
    %v3675 = vunpack.c.h.b16 %v3477
    %v3676 = vunpack.c.l.b16 %v3478
    %v3677 = vunpack.c.h.b16 %v3478
    %v3678 = vunpack.c.l.b16 %v3479
    %v3679 = vunpack.c.h.b16 %v3479
    %v3680 = vunpack.c.l.b16 %v3480
    %v3681 = vunpack.c.h.b16 %v3480
    %v3682 = vunpack.c.l.b16 %v3481
    %v3683 = vunpack.c.h.b16 %v3481
    %v3684 = vunpack.c.l.b16 %v3482
    %v3685 = vunpack.c.h.b16 %v3482
    %v3686 = vunpack.c.l.b16 %v3483
    %v3687 = vunpack.c.h.b16 %v3483
    %v3688 = vunpack.c.l.b16 %v3484
    %v3689 = vunpack.c.h.b16 %v3484
    %v3690 = vunpack.c.l.b16 %v3485
    %v3691 = vunpack.c.h.b16 %v3485
    %v3692 = vunpack.c.l.b16 %v3486
    %v3693 = vunpack.c.h.b16 %v3486
    %v3694 = vunpack.c.l.b16 %v3487
    %v3695 = vunpack.c.h.b16 %v3487
    %v3696 = vunpack.c.l.b16 %v3488
    %v3697 = vunpack.c.h.b16 %v3488
    %v3698 = vunpack.c.l.b16 %v3489
    %v3699 = vunpack.c.h.b16 %v3489
    %v3700 = vunpack.c.l.b16 %v3490
    %v3701 = vunpack.c.h.b16 %v3490
    %v3702 = vunpack.c.l.b16 %v3491
    %v3703 = vunpack.c.h.b16 %v3491
    %v3704 = vunpack.c.l.b16 %v3492
    %v3705 = vunpack.c.h.b16 %v3492
    %v3706 = vunpack.c.l.b16 %v3493
    %v3707 = vunpack.c.h.b16 %v3493
    %v3708 = vpack.c.b16 %v3584, %v3580
    %v3709 = vpack.c.b16 %v3585, %v3581
    %v3710 = vpack.c.b16 %v3586, %v3582
    %v3711 = vpack.c.b16 %v3587, %v3583
    %v3712 = vpack.c.b16 %v3592, %v3588
    %v3713 = vpack.c.b16 %v3593, %v3589
    %v3714 = vpack.c.b16 %v3594, %v3590
    %v3715 = vpack.c.b16 %v3595, %v3591
    %v3716 = vpack.c.b16 %v3600, %v3596
    %v3717 = vpack.c.b16 %v3601, %v3597
    %v3718 = vpack.c.b16 %v3602, %v3598
    %v3719 = vpack.c.b16 %v3603, %v3599
    %v3720 = vpack.c.b16 %v3608, %v3604
    %v3721 = vpack.c.b16 %v3609, %v3605
    %v3722 = vpack.c.b16 %v3610, %v3606
    %v3723 = vpack.c.b16 %v3611, %v3607
    %v3724 = vpack.c.b16 %v3616, %v3612
    %v3725 = vpack.c.b16 %v3617, %v3613
    %v3726 = vpack.c.b16 %v3618, %v3614
    %v3727 = vpack.c.b16 %v3619, %v3615
    %v3728 = vpack.c.b16 %v3624, %v3620
    %v3729 = vpack.c.b16 %v3625, %v3621
    %v3730 = vpack.c.b16 %v3626, %v3622
    %v3731 = vpack.c.b16 %v3627, %v3623
    %v3732 = vpack.c.b16 %v3632, %v3628
    %v3733 = vpack.c.b16 %v3633, %v3629
    %v3734 = vpack.c.b16 %v3634, %v3630
    %v3735 = vpack.c.b16 %v3635, %v3631
    %v3736 = vpack.c.b16 %v3640, %v3636
    %v3737 = vpack.c.b16 %v3641, %v3637
    %v3738 = vpack.c.b16 %v3642, %v3638
    %v3739 = vpack.c.b16 %v3643, %v3639
    %v3740 = vpack.c.b16 %v3648, %v3644
    %v3741 = vpack.c.b16 %v3649, %v3645
    %v3742 = vpack.c.b16 %v3650, %v3646
    %v3743 = vpack.c.b16 %v3651, %v3647
    %v3744 = vpack.c.b16 %v3656, %v3652
    %v3745 = vpack.c.b16 %v3657, %v3653
    %v3746 = vpack.c.b16 %v3658, %v3654
    %v3747 = vpack.c.b16 %v3659, %v3655
    %v3748 = vpack.c.b16 %v3664, %v3660
    %v3749 = vpack.c.b16 %v3665, %v3661
    %v3750 = vpack.c.b16 %v3666, %v3662
    %v3751 = vpack.c.b16 %v3667, %v3663
    %v3752 = vpack.c.b16 %v3672, %v3668
    %v3753 = vpack.c.b16 %v3673, %v3669
    %v3754 = vpack.c.b16 %v3674, %v3670
    %v3755 = vpack.c.b16 %v3675, %v3671
    %v3756 = vpack.c.b16 %v3680, %v3676
    %v3757 = vpack.c.b16 %v3681, %v3677
    %v3758 = vpack.c.b16 %v3682, %v3678
    %v3759 = vpack.c.b16 %v3683, %v3679
    %v3760 = vpack.c.b16 %v3688, %v3684
    %v3761 = vpack.c.b16 %v3689, %v3685
    %v3762 = vpack.c.b16 %v3690, %v3686
    %v3763 = vpack.c.b16 %v3691, %v3687
    %v3764 = vpack.c.b16 %v3696, %v3692
    %v3765 = vpack.c.b16 %v3697, %v3693
    %v3766 = vpack.c.b16 %v3698, %v3694
    %v3767 = vpack.c.b16 %v3699, %v3695
    %v3768 = vpack.c.b16 %v3704, %v3700
    %v3769 = vpack.c.b16 %v3705, %v3701
    %v3770 = vpack.c.b16 %v3706, %v3702
    %v3771 = vpack.c.b16 %v3707, %v3703
    %3836 = vmatprep.subr.bf16.mxu0 %v3709
    %3837 = vmatpush1.bf16.msra.mxu0 %v3708
    %3838 = vmatprep.subr.bf16.mxu0 %v3713
    %3839 = vmatpush1.bf16.msra.mxu0 %v3712
    %3840 = vmatprep.subr.bf16.mxu0 %v3717
    %3841 = vmatpush1.bf16.msra.mxu0 %v3716
    %3842 = vmatprep.subr.bf16.mxu0 %v3721
    %3843 = vmatpush1.bf16.msra.mxu0 %v3720
    %3844 = vmatprep.subr.bf16.mxu0 %v3725
    %3845 = vmatpush1.bf16.msra.mxu0 %v3724
    %3846 = vmatprep.subr.bf16.mxu0 %v3729
    %3847 = vmatpush1.bf16.msra.mxu0 %v3728
    %3848 = vmatprep.subr.bf16.mxu0 %v3733
    %3849 = vmatpush1.bf16.msra.mxu0 %v3732
    %3850 = vmatprep.subr.bf16.mxu0 %v3737
    %3851 = vmatpush1.bf16.msra.mxu0 %v3736
    %3852 = vmatprep.subr.bf16.mxu0 %v3741
    %3853 = vmatpush1.bf16.msra.mxu0 %v3740
    %3854 = vmatprep.subr.bf16.mxu0 %v3745
    %3855 = vmatpush1.bf16.msra.mxu0 %v3744
    %3856 = vmatprep.subr.bf16.mxu0 %v3749
    %3857 = vmatpush1.bf16.msra.mxu0 %v3748
    %3858 = vmatprep.subr.bf16.mxu0 %v3753
    %3859 = vmatpush1.bf16.msra.mxu0 %v3752
    %3860 = vmatprep.subr.bf16.mxu0 %v3757
    %3861 = vmatpush1.bf16.msra.mxu0 %v3756
    %3862 = vmatprep.subr.bf16.mxu0 %v3761
    %3863 = vmatpush1.bf16.msra.mxu0 %v3760
    %3864 = vmatprep.subr.bf16.mxu0 %v3765
    %3865 = vmatpush1.bf16.msra.mxu0 %v3764
    %3866 = vmatprep.subr.bf16.mxu0 %v3769
    %3867 = vmatpush1.bf16.msra.mxu0 %v3768
    %3868 = vmatprep.mubr.bf16.mxu0 %v3171
    %3869 = vmatmul.mubr.bf16.gmra.mrb[0].mxu0 %v3429
    %v3870 = vpop.f32.mrb[0].mxu0
    %v3871 = vadd.f32 %v3499, %v3870
    %v3872 = vpop.f32.mrb[0].mxu0
    %v3873 = vadd.f32 %v3503, %v3872
    %v3874 = vpop.f32.mrb[0].mxu0
    %v3875 = vpop.f32.mrb[0].mxu0
    %3876 = vdwg.mxu0
    %3877 = vmatprep.subr.bf16.mxu0 %v3711
    %3878 = vmatpush1.bf16.msra.mxu0 %v3710
    %3879 = vmatprep.subr.bf16.mxu0 %v3715
    %3880 = vmatpush1.bf16.msra.mxu0 %v3714
    %3881 = vmatprep.subr.bf16.mxu0 %v3719
    %3882 = vmatpush1.bf16.msra.mxu0 %v3718
    %3883 = vmatprep.subr.bf16.mxu0 %v3723
    %3884 = vmatpush1.bf16.msra.mxu0 %v3722
    %3885 = vmatprep.subr.bf16.mxu0 %v3727
    %3886 = vmatpush1.bf16.msra.mxu0 %v3726
    %3887 = vmatprep.subr.bf16.mxu0 %v3731
    %3888 = vmatpush1.bf16.msra.mxu0 %v3730
    %3889 = vmatprep.subr.bf16.mxu0 %v3735
    %3890 = vmatpush1.bf16.msra.mxu0 %v3734
    %3891 = vmatprep.subr.bf16.mxu0 %v3739
    %3892 = vmatpush1.bf16.msra.mxu0 %v3738
    %3893 = vmatprep.subr.bf16.mxu0 %v3743
    %3894 = vmatpush1.bf16.msra.mxu0 %v3742
    %3895 = vmatprep.subr.bf16.mxu0 %v3747
    %3896 = vmatpush1.bf16.msra.mxu0 %v3746
    %3897 = vmatprep.subr.bf16.mxu0 %v3751
    %3898 = vmatpush1.bf16.msra.mxu0 %v3750
    %3899 = vmatprep.subr.bf16.mxu0 %v3755
    %3900 = vmatpush1.bf16.msra.mxu0 %v3754
    %3901 = vmatprep.subr.bf16.mxu0 %v3759
    %3902 = vmatpush1.bf16.msra.mxu0 %v3758
    %3903 = vmatprep.subr.bf16.mxu0 %v3763
    %3904 = vmatpush1.bf16.msra.mxu0 %v3762
    %3905 = vmatprep.subr.bf16.mxu0 %v3767
    %3906 = vmatpush1.bf16.msra.mxu0 %v3766
    %3907 = vmatprep.subr.bf16.mxu0 %v3771
    %3908 = vmatpush1.bf16.msra.mxu0 %v3770
    %3909 = vmatprep.mubr.bf16.mxu0 %v3171
    %3910 = vmatmul.mubr.bf16.gmra.mrb[0].mxu0 %v3429
    %v3911 = vpop.f32.mrb[0].mxu0
    %v3912 = vadd.f32 %v3507, %v3911
    %v3913 = vpop.f32.mrb[0].mxu0
    %v3914 = vadd.f32 %v3511, %v3913
    %v3915 = vpop.f32.mrb[0].mxu0
    %v3916 = vpop.f32.mrb[0].mxu0
    %3917 = vdwg.mxu0
    %v3918 = vxor.u32 %v3871, 2147483648
    %v3919 = vmul.f32 %v3918, 1.442695
    %v3920 = vpow.pop %v3919
    %v3921 = vadd.f32 %v3920, 1.0
    %v3922 = vrcp.pop %v3921
    %v3923 = vmul.f32 1.0, %v3922
    %v3924 = vxor.u32 %v3873, 2147483648
    %v3925 = vmul.f32 %v3924, 1.442695
    %v3926 = vpow.pop %v3925
    %v3927 = vadd.f32 %v3926, 1.0
    %v3928 = vrcp.pop %v3927
    %v3929 = vmul.f32 1.0, %v3928
    %v3930 = vtanh.pop %v3912
    %v3931 = vxor.u32 %v3914, 2147483648
    %v3932 = vmul.f32 %v3931, 1.442695
    %v3933 = vpow.pop %v3932
    %v3934 = vadd.f32 %v3933, 1.0
    %v3935 = vrcp.pop %v3934
    %v3936 = vmul.f32 1.0, %v3935
    %v3937 = vmul.f32 %v3929, %v3168
    %v3938 = vmul.f32 %v3923, %v3930
    %v3939 = vadd.f32 %v3937, %v3938
    %v3940 = vtanh.pop %v3939
    %v3941 = vmul.f32 %v3936, %v3940
    %v3942 = vpack.c.bf16 %v3941, %v3941
    %v3943 = vld [vmem:[%s7] sm:$0xf]
    %v3944 = vld [vmem:[%s7 + $0x4] sm:$0xf]
    %v3945 = vld [vmem:[%s7 + $0x8] sm:$0xf]
    %v3946 = vld [vmem:[%s7 + $0xc] sm:$0xf]
    %v3947 = vld [vmem:[%s7 + $0x10] sm:$0xf]
    %v3948 = vld [vmem:[%s7 + $0x14] sm:$0xf]
    %v3949 = vld [vmem:[%s7 + $0x18] sm:$0xf]
    %v3950 = vld [vmem:[%s7 + $0x1c] sm:$0xf]
    %v3951 = vld [vmem:[%s7 + $0x20] sm:$0xf]
    %v3952 = vld [vmem:[%s7 + $0x24] sm:$0xf]
    %v3953 = vld [vmem:[%s7 + $0x28] sm:$0xf]
    %v3954 = vld [vmem:[%s7 + $0x2c] sm:$0xf]
    %v3955 = vld [vmem:[%s7 + $0x30] sm:$0xf]
    %v3956 = vld [vmem:[%s7 + $0x34] sm:$0xf]
    %v3957 = vld [vmem:[%s7 + $0x38] sm:$0xf]
    %v3958 = vld [vmem:[%s7 + $0x3c] sm:$0xf]
    %v3959 = vld [vmem:[%s8] sm:$0x1]
    %v3961 = vlaneseq
    %v3962 = vshrl.u32 %v3961, 7
    %v3963 = vsub.s32 0, %v3962
    %v3964 = vrot.slane %v3959, %v3963
    %v3982 = vunpack.c.l.b16 %v3943
    %v3983 = vunpack.c.l.b16 %v3944
    %v3984 = vunpack.c.l.b16 %v3945
    %v3985 = vunpack.c.l.b16 %v3946
    %v3986 = vunpack.c.l.b16 %v3947
    %v3987 = vunpack.c.l.b16 %v3948
    %v3988 = vunpack.c.l.b16 %v3949
    %v3989 = vunpack.c.l.b16 %v3950
    %v3990 = vunpack.c.l.b16 %v3951
    %v3991 = vunpack.c.l.b16 %v3952
    %v3992 = vunpack.c.l.b16 %v3953
    %v3993 = vunpack.c.l.b16 %v3954
    %v3994 = vunpack.c.l.b16 %v3955
    %v3995 = vunpack.c.l.b16 %v3956
    %v3996 = vunpack.c.l.b16 %v3957
    %v3997 = vunpack.c.l.b16 %v3958
    %v3998 = vpack.c.b16 %v3983, %v3982
    %v3999 = vpack.c.b16 %v3985, %v3984
    %v4000 = vpack.c.b16 %v3987, %v3986
    %v4001 = vpack.c.b16 %v3989, %v3988
    %v4002 = vpack.c.b16 %v3991, %v3990
    %v4003 = vpack.c.b16 %v3993, %v3992
    %v4004 = vpack.c.b16 %v3995, %v3994
    %v4005 = vpack.c.b16 %v3997, %v3996
    %4014 = vmatprep.subr.bf16.mxu0 0
    %4015 = vmatpush1.bf16.msra.mxu0 %v3998
    %4016 = vmatprep.subr.bf16.mxu0 0
    %4017 = vmatpush1.bf16.msra.mxu0 %v3999
    %4018 = vmatprep.subr.bf16.mxu0 0
    %4019 = vmatpush1.bf16.msra.mxu0 %v4000
    %4020 = vmatprep.subr.bf16.mxu0 0
    %4021 = vmatpush1.bf16.msra.mxu0 %v4001
    %4022 = vmatprep.subr.bf16.mxu0 0
    %4023 = vmatpush1.bf16.msra.mxu0 %v4002
    %4024 = vmatprep.subr.bf16.mxu0 0
    %4025 = vmatpush1.bf16.msra.mxu0 %v4003
    %4026 = vmatprep.subr.bf16.mxu0 0
    %4027 = vmatpush1.bf16.msra.mxu0 %v4004
    %4028 = vmatprep.subr.bf16.mxu0 0
    %4029 = vmatpush1.bf16.msra.mxu0 %v4005
    %4030 = vmatprep.subr.bf16.mxu0 0
    %4031 = vmatpush1.bf16.msra.mxu0 0
    %4032 = vmatprep.subr.bf16.mxu0 0
    %4033 = vmatpush1.bf16.msra.mxu0 0
    %4034 = vmatprep.subr.bf16.mxu0 0
    %4035 = vmatpush1.bf16.msra.mxu0 0
    %4036 = vmatprep.subr.bf16.mxu0 0
    %4037 = vmatpush1.bf16.msra.mxu0 0
    %4038 = vmatprep.subr.bf16.mxu0 0
    %4039 = vmatpush1.bf16.msra.mxu0 0
    %4040 = vmatprep.subr.bf16.mxu0 0
    %4041 = vmatpush1.bf16.msra.mxu0 0
    %4042 = vmatprep.subr.bf16.mxu0 0
    %4043 = vmatpush1.bf16.msra.mxu0 0
    %4044 = vmatprep.subr.bf16.mxu0 0
    %4045 = vmatpush1.bf16.msra.mxu0 0
    %4046 = vmatprep.mubr.bf16.mxu0 0
    %4047 = vmatmul.mubr.bf16.gmra.mrb[0].mxu0 %v3942
    %v4048 = vpop.f32.mrb[0].mxu0
    %v4049 = vadd.f32 %v3964, %v4048
    %v4050 = vpop.f32.mrb[0].mxu0
    %v4051 = vpop.f32.mrb[0].mxu0
    %v4052 = vpop.f32.mrb[0].mxu0
    %4053 = vdwg.mxu0
    %s4054 = scalar_lea.vmem %s10, 24
    %4055 = vst [vmem:[%s4054] sm:$0xff] %v4049
    %s4056 = sld [smem:[#allocation4 + $0x4]]
    %p4057 = scmp.eq.s32.totalorder %s4056, 0
    // Predicated region
    $region66: #{seq2seq_forward.1} parent=1 // pred_check
      %p4058 = pneg %p4057
    $region67: #{seq2seq_forward.1} parent=1 // pred_check_branch
      %4060 = sbr.rel (%p4058) target = $region69
    $region68: #{seq2seq_forward.1} parent=1 // pred_region
      %4061 = vmax.xlane.f32.xlu0 %v4049
      %v4062 = vpop.xlane.xlu0 %4061
      %v4063 = vlaneseq
      %v4064 = vand.u32 %v4063, 127
      %vm4065 = vcmp.eq.f32.partialorder %v4049, %v4062
      %v4066 = vsel %vm4065, %v4064, 128
      %v4067 = vand.u32 %v4066, 65535
      %v4068 = vshra.s32 %v4066, 16
      %v4069 = vcvt.s32.f32 %v4067
      %v4070 = vcvt.s32.f32 %v4068
      %4071 = vmin.xlane.f32.xlu0 %v4070
      %v4072 = vpop.xlane.xlu0 %4071
      %vm4073 = vcmp.eq.f32.partialorder %v4070, %v4072
      %v4074 = vsel %vm4073, %v4069, inf
      %4075 = vmin.xlane.f32.xlu0 %v4074
      %v4076 = vpop.xlane.xlu0 %4075
      %v4077 = vcvt.f32.s32 %v4076
      %v4078 = vcvt.f32.s32 %v4072
      %v4079 = vshll.u32 %v4078, 16
      %v4080 = vadd.s32 %v4079, %v4077
      %vm4081 = vcmp.eq.s32.totalorder %v4064, %v4080
      %v4082 = vsel %vm4081, 1, 0
      %v4083 = vcvt.s32.f32 %v4082
      %v4084 = vpack.c.bf16 %v4083, %v4083
      %v4085 = vld [vmem:[%s9] sm:$0xf]
      %v4086 = vld [vmem:[%s9 + $0x4] sm:$0xf]
      %v4087 = vld [vmem:[%s9 + $0x8] sm:$0xf]
      %v4088 = vld [vmem:[%s9 + $0xc] sm:$0xf]
      %v4089 = vld [vmem:[%s9 + $0x10] sm:$0xf]
      %v4090 = vld [vmem:[%s9 + $0x14] sm:$0xf]
      %v4091 = vld [vmem:[%s9 + $0x18] sm:$0xf]
      %v4092 = vld [vmem:[%s9 + $0x1c] sm:$0xf]
      %v4093 = vld [vmem:[%s9 + $0x20] sm:$0xf]
      %v4094 = vld [vmem:[%s9 + $0x24] sm:$0xf]
      %v4095 = vld [vmem:[%s9 + $0x28] sm:$0xf]
      %v4096 = vld [vmem:[%s9 + $0x2c] sm:$0xf]
      %v4097 = vld [vmem:[%s9 + $0x30] sm:$0xf]
      %v4098 = vld [vmem:[%s9 + $0x34] sm:$0xf]
      %v4099 = vld [vmem:[%s9 + $0x38] sm:$0xf]
      %v4100 = vld [vmem:[%s9 + $0x3c] sm:$0xf]
      %v4117 = vunpack.c.l.b16 %v4085
      %v4118 = vunpack.c.l.b16 %v4086
      %v4119 = vunpack.c.l.b16 %v4087
      %v4120 = vunpack.c.l.b16 %v4088
      %v4121 = vunpack.c.l.b16 %v4089
      %v4122 = vunpack.c.l.b16 %v4090
      %v4123 = vunpack.c.l.b16 %v4091
      %v4124 = vunpack.c.l.b16 %v4092
      %v4125 = vunpack.c.l.b16 %v4093
      %v4126 = vunpack.c.l.b16 %v4094
      %v4127 = vunpack.c.l.b16 %v4095
      %v4128 = vunpack.c.l.b16 %v4096
      %v4129 = vunpack.c.l.b16 %v4097
      %v4130 = vunpack.c.l.b16 %v4098
      %v4131 = vunpack.c.l.b16 %v4099
      %v4132 = vunpack.c.l.b16 %v4100
      %v4133 = vpack.c.b16 %v4118, %v4117
      %v4134 = vpack.c.b16 %v4120, %v4119
      %v4135 = vpack.c.b16 %v4122, %v4121
      %v4136 = vpack.c.b16 %v4124, %v4123
      %v4137 = vpack.c.b16 %v4126, %v4125
      %v4138 = vpack.c.b16 %v4128, %v4127
      %v4139 = vpack.c.b16 %v4130, %v4129
      %v4140 = vpack.c.b16 %v4132, %v4131
      %4149 = vmatprep.subr.bf16.mxu0 0
      %4150 = vmatpush1.bf16.msra.mxu0 %v4133
      %4151 = vmatprep.subr.bf16.mxu0 0
      %4152 = vmatpush1.bf16.msra.mxu0 %v4134
      %4153 = vmatprep.subr.bf16.mxu0 0
      %4154 = vmatpush1.bf16.msra.mxu0 %v4135
      %4155 = vmatprep.subr.bf16.mxu0 0
      %4156 = vmatpush1.bf16.msra.mxu0 %v4136
      %4157 = vmatprep.subr.bf16.mxu0 0
      %4158 = vmatpush1.bf16.msra.mxu0 %v4137
      %4159 = vmatprep.subr.bf16.mxu0 0
      %4160 = vmatpush1.bf16.msra.mxu0 %v4138
      %4161 = vmatprep.subr.bf16.mxu0 0
      %4162 = vmatpush1.bf16.msra.mxu0 %v4139
      %4163 = vmatprep.subr.bf16.mxu0 0
      %4164 = vmatpush1.bf16.msra.mxu0 %v4140
      %4165 = vmatprep.subr.bf16.mxu0 0
      %4166 = vmatpush1.bf16.msra.mxu0 0
      %4167 = vmatprep.subr.bf16.mxu0 0
      %4168 = vmatpush1.bf16.msra.mxu0 0
      %4169 = vmatprep.subr.bf16.mxu0 0
      %4170 = vmatpush1.bf16.msra.mxu0 0
      %4171 = vmatprep.subr.bf16.mxu0 0
      %4172 = vmatpush1.bf16.msra.mxu0 0
      %4173 = vmatprep.subr.bf16.mxu0 0
      %4174 = vmatpush1.bf16.msra.mxu0 0
      %4175 = vmatprep.subr.bf16.mxu0 0
      %4176 = vmatpush1.bf16.msra.mxu0 0
      %4177 = vmatprep.subr.bf16.mxu0 0
      %4178 = vmatpush1.bf16.msra.mxu0 0
      %4179 = vmatprep.subr.bf16.mxu0 0
      %4180 = vmatpush1.bf16.msra.mxu0 0
      %4181 = vmatprep.mubr.bf16.mxu0 0
      %4182 = vmatmul.mubr.bf16.gmra.mrb[0].mxu0 %v4084
      %v4183 = vpop.f32.mrb[0].mxu0
      %v4184 = vadd.f32 0.0, %v4183
      %v4185 = vpop.f32.mrb[0].mxu0
      %v4186 = vpop.f32.mrb[0].mxu0
      %v4187 = vpop.f32.mrb[0].mxu0
      %4188 = vdwg.mxu0
      %4189 = vst [vmem:[#allocation2] sm:$0xff] %v4184
    $region69: #{seq2seq_forward.1} parent=1 // pred_fallthru
      _
    %s4190 = sld [smem:[#allocation4 + $0x4]]
    %p4191 = scmp.ne.s32.totalorder %s4190, 0
    // Predicated region
    $region70: #{seq2seq_forward.1} parent=1 // pred_check
      %p4192 = pneg %p4191
    $region71: #{seq2seq_forward.1} parent=1 // pred_check_branch
      %4194 = sbr.rel (%p4192) target = $region73
    $region72: #{seq2seq_forward.1} parent=1 // pred_region
      %s4195 = scalar_lea.vmem %s2, 16
      %v4196 = vld [vmem:[%s4195] sm:$0xf]
      %v4197 = vunpack.c.l.bf16 %v4196
      %4198 = vst [vmem:[#allocation2] sm:$0xff] %v4197
    $region73: #{seq2seq_forward.1} parent=1 // pred_fallthru
      _
    %v4199 = vld [vmem:[#allocation2] sm:$0xff]
    %v4200 = vpack.c.bf16 %v4199, %v4199
    %v4201 = vld [vmem:[#allocation5] sm:$0xff]
    %v4202 = vld [vmem:[#allocation5 + $0x8] sm:$0xff]
    %v4203 = vld [vmem:[#allocation5 + $0x10] sm:$0xff]
    %v4204 = vld [vmem:[#allocation5 + $0x18] sm:$0xff]
    %v4205 = vld [vmem:[#allocation5 + $0x20] sm:$0xff]
    %v4206 = vld [vmem:[#allocation5 + $0x28] sm:$0xff]
    %v4207 = vld [vmem:[#allocation5 + $0x30] sm:$0xff]
    %v4208 = vld [vmem:[#allocation5 + $0x38] sm:$0xff]
    %v4209 = vld [vmem:[#allocation5 + $0x40] sm:$0xff]
    %v4210 = vld [vmem:[#allocation5 + $0x48] sm:$0xff]
    %v4211 = vld [vmem:[#allocation5 + $0x50] sm:$0xff]
    %v4212 = vld [vmem:[#allocation5 + $0x58] sm:$0xff]
    %v4213 = vld [vmem:[#allocation5 + $0x60] sm:$0xff]
    %v4214 = vld [vmem:[#allocation5 + $0x68] sm:$0xff]
    %v4215 = vld [vmem:[#allocation5 + $0x70] sm:$0xff]
    %v4216 = vld [vmem:[#allocation5 + $0x78] sm:$0xff]
    %v4217 = vld [vmem:[#allocation5 + $0x80] sm:$0xff]
    %v4218 = vld [vmem:[#allocation5 + $0x88] sm:$0xff]
    %v4219 = vld [vmem:[#allocation5 + $0x90] sm:$0xff]
    %v4220 = vld [vmem:[#allocation5 + $0x98] sm:$0xff]
    %v4221 = vld [vmem:[#allocation5 + $0xa0] sm:$0xff]
    %v4222 = vld [vmem:[#allocation5 + $0xa8] sm:$0xff]
    %v4223 = vld [vmem:[#allocation5 + $0xb0] sm:$0xff]
    %v4224 = vld [vmem:[#allocation5 + $0xb8] sm:$0xff]
    %v4225 = vld [vmem:[#allocation5 + $0xc0] sm:$0xff]
    %v4226 = vld [vmem:[#allocation5 + $0xc8] sm:$0xff]
    %v4227 = vld [vmem:[#allocation5 + $0xd0] sm:$0xff]
    %v4228 = vld [vmem:[#allocation5 + $0xd8] sm:$0xff]
    %v4229 = vld [vmem:[#allocation5 + $0xe0] sm:$0xff]
    %v4230 = vld [vmem:[#allocation5 + $0xe8] sm:$0xff]
    %v4231 = vld [vmem:[#allocation5 + $0xf0] sm:$0xff]
    %v4232 = vld [vmem:[#allocation5 + $0xf8] sm:$0xff]
    %v4233 = vld [vmem:[#allocation5 + $0x100] sm:$0xff]
    %v4234 = vld [vmem:[#allocation5 + $0x108] sm:$0xff]
    %v4235 = vld [vmem:[#allocation5 + $0x110] sm:$0xff]
    %v4236 = vld [vmem:[#allocation5 + $0x118] sm:$0xff]
    %v4237 = vld [vmem:[#allocation5 + $0x120] sm:$0xff]
    %v4238 = vld [vmem:[#allocation5 + $0x128] sm:$0xff]
    %v4239 = vld [vmem:[#allocation5 + $0x130] sm:$0xff]
    %v4240 = vld [vmem:[#allocation5 + $0x138] sm:$0xff]
    %v4241 = vld [vmem:[#allocation5 + $0x140] sm:$0xff]
    %v4242 = vld [vmem:[#allocation5 + $0x148] sm:$0xff]
    %v4243 = vld [vmem:[#allocation5 + $0x150] sm:$0xff]
    %v4244 = vld [vmem:[#allocation5 + $0x158] sm:$0xff]
    %v4245 = vld [vmem:[#allocation5 + $0x160] sm:$0xff]
    %v4246 = vld [vmem:[#allocation5 + $0x168] sm:$0xff]
    %v4247 = vld [vmem:[#allocation5 + $0x170] sm:$0xff]
    %v4248 = vld [vmem:[#allocation5 + $0x178] sm:$0xff]
    %v4249 = vld [vmem:[#allocation5 + $0x180] sm:$0xff]
    %v4250 = vld [vmem:[#allocation5 + $0x188] sm:$0xff]
    %v4251 = vld [vmem:[#allocation5 + $0x190] sm:$0xff]
    %v4252 = vld [vmem:[#allocation5 + $0x198] sm:$0xff]
    %v4253 = vld [vmem:[#allocation5 + $0x1a0] sm:$0xff]
    %v4254 = vld [vmem:[#allocation5 + $0x1a8] sm:$0xff]
    %v4255 = vld [vmem:[#allocation5 + $0x1b0] sm:$0xff]
    %v4256 = vld [vmem:[#allocation5 + $0x1b8] sm:$0xff]
    %v4257 = vld [vmem:[#allocation5 + $0x1c0] sm:$0xff]
    %v4258 = vld [vmem:[#allocation5 + $0x1c8] sm:$0xff]
    %v4259 = vld [vmem:[#allocation5 + $0x1d0] sm:$0xff]
    %v4260 = vld [vmem:[#allocation5 + $0x1d8] sm:$0xff]
    %v4261 = vld [vmem:[#allocation5 + $0x1e0] sm:$0xff]
    %v4262 = vld [vmem:[#allocation5 + $0x1e8] sm:$0xff]
    %v4263 = vld [vmem:[#allocation5 + $0x1f0] sm:$0xff]
    %v4264 = vld [vmem:[#allocation5 + $0x1f8] sm:$0xff]
    %v4265 = vld [vmem:[%s6] sm:$0xf]
    %v4267 = vlaneseq
    %v4268 = vshrl.u32 %v4267, 7
    %v4269 = vsub.s32 0, %v4268
    %v4270 = vrot.slane %v4265, %v4269
    %v4271 = vlaneseq
    %v4272 = vshrl.u32 %v4271, 7
    %v4273 = vsub.s32 1, %v4272
    %v4274 = vrot.slane %v4265, %v4273
    %v4275 = vlaneseq
    %v4276 = vshrl.u32 %v4275, 7
    %v4277 = vsub.s32 2, %v4276
    %v4278 = vrot.slane %v4265, %v4277
    %v4279 = vlaneseq
    %v4280 = vshrl.u32 %v4279, 7
    %v4281 = vsub.s32 3, %v4280
    %v4282 = vrot.slane %v4265, %v4281
    %v4351 = vunpack.c.l.b16 %v4201
    %v4352 = vunpack.c.h.b16 %v4201
    %v4353 = vunpack.c.l.b16 %v4202
    %v4354 = vunpack.c.h.b16 %v4202
    %v4355 = vunpack.c.l.b16 %v4203
    %v4356 = vunpack.c.h.b16 %v4203
    %v4357 = vunpack.c.l.b16 %v4204
    %v4358 = vunpack.c.h.b16 %v4204
    %v4359 = vunpack.c.l.b16 %v4205
    %v4360 = vunpack.c.h.b16 %v4205
    %v4361 = vunpack.c.l.b16 %v4206
    %v4362 = vunpack.c.h.b16 %v4206
    %v4363 = vunpack.c.l.b16 %v4207
    %v4364 = vunpack.c.h.b16 %v4207
    %v4365 = vunpack.c.l.b16 %v4208
    %v4366 = vunpack.c.h.b16 %v4208
    %v4367 = vunpack.c.l.b16 %v4209
    %v4368 = vunpack.c.h.b16 %v4209
    %v4369 = vunpack.c.l.b16 %v4210
    %v4370 = vunpack.c.h.b16 %v4210
    %v4371 = vunpack.c.l.b16 %v4211
    %v4372 = vunpack.c.h.b16 %v4211
    %v4373 = vunpack.c.l.b16 %v4212
    %v4374 = vunpack.c.h.b16 %v4212
    %v4375 = vunpack.c.l.b16 %v4213
    %v4376 = vunpack.c.h.b16 %v4213
    %v4377 = vunpack.c.l.b16 %v4214
    %v4378 = vunpack.c.h.b16 %v4214
    %v4379 = vunpack.c.l.b16 %v4215
    %v4380 = vunpack.c.h.b16 %v4215
    %v4381 = vunpack.c.l.b16 %v4216
    %v4382 = vunpack.c.h.b16 %v4216
    %v4383 = vunpack.c.l.b16 %v4217
    %v4384 = vunpack.c.h.b16 %v4217
    %v4385 = vunpack.c.l.b16 %v4218
    %v4386 = vunpack.c.h.b16 %v4218
    %v4387 = vunpack.c.l.b16 %v4219
    %v4388 = vunpack.c.h.b16 %v4219
    %v4389 = vunpack.c.l.b16 %v4220
    %v4390 = vunpack.c.h.b16 %v4220
    %v4391 = vunpack.c.l.b16 %v4221
    %v4392 = vunpack.c.h.b16 %v4221
    %v4393 = vunpack.c.l.b16 %v4222
    %v4394 = vunpack.c.h.b16 %v4222
    %v4395 = vunpack.c.l.b16 %v4223
    %v4396 = vunpack.c.h.b16 %v4223
    %v4397 = vunpack.c.l.b16 %v4224
    %v4398 = vunpack.c.h.b16 %v4224
    %v4399 = vunpack.c.l.b16 %v4225
    %v4400 = vunpack.c.h.b16 %v4225
    %v4401 = vunpack.c.l.b16 %v4226
    %v4402 = vunpack.c.h.b16 %v4226
    %v4403 = vunpack.c.l.b16 %v4227
    %v4404 = vunpack.c.h.b16 %v4227
    %v4405 = vunpack.c.l.b16 %v4228
    %v4406 = vunpack.c.h.b16 %v4228
    %v4407 = vunpack.c.l.b16 %v4229
    %v4408 = vunpack.c.h.b16 %v4229
    %v4409 = vunpack.c.l.b16 %v4230
    %v4410 = vunpack.c.h.b16 %v4230
    %v4411 = vunpack.c.l.b16 %v4231
    %v4412 = vunpack.c.h.b16 %v4231
    %v4413 = vunpack.c.l.b16 %v4232
    %v4414 = vunpack.c.h.b16 %v4232
    %v4415 = vunpack.c.l.b16 %v4233
    %v4416 = vunpack.c.h.b16 %v4233
    %v4417 = vunpack.c.l.b16 %v4234
    %v4418 = vunpack.c.h.b16 %v4234
    %v4419 = vunpack.c.l.b16 %v4235
    %v4420 = vunpack.c.h.b16 %v4235
    %v4421 = vunpack.c.l.b16 %v4236
    %v4422 = vunpack.c.h.b16 %v4236
    %v4423 = vunpack.c.l.b16 %v4237
    %v4424 = vunpack.c.h.b16 %v4237
    %v4425 = vunpack.c.l.b16 %v4238
    %v4426 = vunpack.c.h.b16 %v4238
    %v4427 = vunpack.c.l.b16 %v4239
    %v4428 = vunpack.c.h.b16 %v4239
    %v4429 = vunpack.c.l.b16 %v4240
    %v4430 = vunpack.c.h.b16 %v4240
    %v4431 = vunpack.c.l.b16 %v4241
    %v4432 = vunpack.c.h.b16 %v4241
    %v4433 = vunpack.c.l.b16 %v4242
    %v4434 = vunpack.c.h.b16 %v4242
    %v4435 = vunpack.c.l.b16 %v4243
    %v4436 = vunpack.c.h.b16 %v4243
    %v4437 = vunpack.c.l.b16 %v4244
    %v4438 = vunpack.c.h.b16 %v4244
    %v4439 = vunpack.c.l.b16 %v4245
    %v4440 = vunpack.c.h.b16 %v4245
    %v4441 = vunpack.c.l.b16 %v4246
    %v4442 = vunpack.c.h.b16 %v4246
    %v4443 = vunpack.c.l.b16 %v4247
    %v4444 = vunpack.c.h.b16 %v4247
    %v4445 = vunpack.c.l.b16 %v4248
    %v4446 = vunpack.c.h.b16 %v4248
    %v4447 = vunpack.c.l.b16 %v4249
    %v4448 = vunpack.c.h.b16 %v4249
    %v4449 = vunpack.c.l.b16 %v4250
    %v4450 = vunpack.c.h.b16 %v4250
    %v4451 = vunpack.c.l.b16 %v4251
    %v4452 = vunpack.c.h.b16 %v4251
    %v4453 = vunpack.c.l.b16 %v4252
    %v4454 = vunpack.c.h.b16 %v4252
    %v4455 = vunpack.c.l.b16 %v4253
    %v4456 = vunpack.c.h.b16 %v4253
    %v4457 = vunpack.c.l.b16 %v4254
    %v4458 = vunpack.c.h.b16 %v4254
    %v4459 = vunpack.c.l.b16 %v4255
    %v4460 = vunpack.c.h.b16 %v4255
    %v4461 = vunpack.c.l.b16 %v4256
    %v4462 = vunpack.c.h.b16 %v4256
    %v4463 = vunpack.c.l.b16 %v4257
    %v4464 = vunpack.c.h.b16 %v4257
    %v4465 = vunpack.c.l.b16 %v4258
    %v4466 = vunpack.c.h.b16 %v4258
    %v4467 = vunpack.c.l.b16 %v4259
    %v4468 = vunpack.c.h.b16 %v4259
    %v4469 = vunpack.c.l.b16 %v4260
    %v4470 = vunpack.c.h.b16 %v4260
    %v4471 = vunpack.c.l.b16 %v4261
    %v4472 = vunpack.c.h.b16 %v4261
    %v4473 = vunpack.c.l.b16 %v4262
    %v4474 = vunpack.c.h.b16 %v4262
    %v4475 = vunpack.c.l.b16 %v4263
    %v4476 = vunpack.c.h.b16 %v4263
    %v4477 = vunpack.c.l.b16 %v4264
    %v4478 = vunpack.c.h.b16 %v4264
    %v4479 = vpack.c.b16 %v4355, %v4351
    %v4480 = vpack.c.b16 %v4356, %v4352
    %v4481 = vpack.c.b16 %v4357, %v4353
    %v4482 = vpack.c.b16 %v4358, %v4354
    %v4483 = vpack.c.b16 %v4363, %v4359
    %v4484 = vpack.c.b16 %v4364, %v4360
    %v4485 = vpack.c.b16 %v4365, %v4361
    %v4486 = vpack.c.b16 %v4366, %v4362
    %v4487 = vpack.c.b16 %v4371, %v4367
    %v4488 = vpack.c.b16 %v4372, %v4368
    %v4489 = vpack.c.b16 %v4373, %v4369
    %v4490 = vpack.c.b16 %v4374, %v4370
    %v4491 = vpack.c.b16 %v4379, %v4375
    %v4492 = vpack.c.b16 %v4380, %v4376
    %v4493 = vpack.c.b16 %v4381, %v4377
    %v4494 = vpack.c.b16 %v4382, %v4378
    %v4495 = vpack.c.b16 %v4387, %v4383
    %v4496 = vpack.c.b16 %v4388, %v4384
    %v4497 = vpack.c.b16 %v4389, %v4385
    %v4498 = vpack.c.b16 %v4390, %v4386
    %v4499 = vpack.c.b16 %v4395, %v4391
    %v4500 = vpack.c.b16 %v4396, %v4392
    %v4501 = vpack.c.b16 %v4397, %v4393
    %v4502 = vpack.c.b16 %v4398, %v4394
    %v4503 = vpack.c.b16 %v4403, %v4399
    %v4504 = vpack.c.b16 %v4404, %v4400
    %v4505 = vpack.c.b16 %v4405, %v4401
    %v4506 = vpack.c.b16 %v4406, %v4402
    %v4507 = vpack.c.b16 %v4411, %v4407
    %v4508 = vpack.c.b16 %v4412, %v4408
    %v4509 = vpack.c.b16 %v4413, %v4409
    %v4510 = vpack.c.b16 %v4414, %v4410
    %v4511 = vpack.c.b16 %v4419, %v4415
    %v4512 = vpack.c.b16 %v4420, %v4416
    %v4513 = vpack.c.b16 %v4421, %v4417
    %v4514 = vpack.c.b16 %v4422, %v4418
    %v4515 = vpack.c.b16 %v4427, %v4423
    %v4516 = vpack.c.b16 %v4428, %v4424
    %v4517 = vpack.c.b16 %v4429, %v4425
    %v4518 = vpack.c.b16 %v4430, %v4426
    %v4519 = vpack.c.b16 %v4435, %v4431
    %v4520 = vpack.c.b16 %v4436, %v4432
    %v4521 = vpack.c.b16 %v4437, %v4433
    %v4522 = vpack.c.b16 %v4438, %v4434
    %v4523 = vpack.c.b16 %v4443, %v4439
    %v4524 = vpack.c.b16 %v4444, %v4440
    %v4525 = vpack.c.b16 %v4445, %v4441
    %v4526 = vpack.c.b16 %v4446, %v4442
    %v4527 = vpack.c.b16 %v4451, %v4447
    %v4528 = vpack.c.b16 %v4452, %v4448
    %v4529 = vpack.c.b16 %v4453, %v4449
    %v4530 = vpack.c.b16 %v4454, %v4450
    %v4531 = vpack.c.b16 %v4459, %v4455
    %v4532 = vpack.c.b16 %v4460, %v4456
    %v4533 = vpack.c.b16 %v4461, %v4457
    %v4534 = vpack.c.b16 %v4462, %v4458
    %v4535 = vpack.c.b16 %v4467, %v4463
    %v4536 = vpack.c.b16 %v4468, %v4464
    %v4537 = vpack.c.b16 %v4469, %v4465
    %v4538 = vpack.c.b16 %v4470, %v4466
    %v4539 = vpack.c.b16 %v4475, %v4471
    %v4540 = vpack.c.b16 %v4476, %v4472
    %v4541 = vpack.c.b16 %v4477, %v4473
    %v4542 = vpack.c.b16 %v4478, %v4474
    %4607 = vmatprep.subr.bf16.mxu0 %v4480
    %4608 = vmatpush1.bf16.msra.mxu0 %v4479
    %4609 = vmatprep.subr.bf16.mxu0 %v4484
    %4610 = vmatpush1.bf16.msra.mxu0 %v4483
    %4611 = vmatprep.subr.bf16.mxu0 %v4488
    %4612 = vmatpush1.bf16.msra.mxu0 %v4487
    %4613 = vmatprep.subr.bf16.mxu0 %v4492
    %4614 = vmatpush1.bf16.msra.mxu0 %v4491
    %4615 = vmatprep.subr.bf16.mxu0 %v4496
    %4616 = vmatpush1.bf16.msra.mxu0 %v4495
    %4617 = vmatprep.subr.bf16.mxu0 %v4500
    %4618 = vmatpush1.bf16.msra.mxu0 %v4499
    %4619 = vmatprep.subr.bf16.mxu0 %v4504
    %4620 = vmatpush1.bf16.msra.mxu0 %v4503
    %4621 = vmatprep.subr.bf16.mxu0 %v4508
    %4622 = vmatpush1.bf16.msra.mxu0 %v4507
    %4623 = vmatprep.subr.bf16.mxu0 %v4512
    %4624 = vmatpush1.bf16.msra.mxu0 %v4511
    %4625 = vmatprep.subr.bf16.mxu0 %v4516
    %4626 = vmatpush1.bf16.msra.mxu0 %v4515
    %4627 = vmatprep.subr.bf16.mxu0 %v4520
    %4628 = vmatpush1.bf16.msra.mxu0 %v4519
    %4629 = vmatprep.subr.bf16.mxu0 %v4524
    %4630 = vmatpush1.bf16.msra.mxu0 %v4523
    %4631 = vmatprep.subr.bf16.mxu0 %v4528
    %4632 = vmatpush1.bf16.msra.mxu0 %v4527
    %4633 = vmatprep.subr.bf16.mxu0 %v4532
    %4634 = vmatpush1.bf16.msra.mxu0 %v4531
    %4635 = vmatprep.subr.bf16.mxu0 %v4536
    %4636 = vmatpush1.bf16.msra.mxu0 %v4535
    %4637 = vmatprep.subr.bf16.mxu0 %v4540
    %4638 = vmatpush1.bf16.msra.mxu0 %v4539
    %4639 = vmatprep.mubr.bf16.mxu0 %v3942
    %4640 = vmatmul.mubr.bf16.gmra.mrb[0].mxu0 %v4200
    %v4641 = vpop.f32.mrb[0].mxu0
    %v4642 = vadd.f32 %v4270, %v4641
    %v4643 = vpop.f32.mrb[0].mxu0
    %v4644 = vadd.f32 %v4274, %v4643
    %v4645 = vpop.f32.mrb[0].mxu0
    %v4646 = vpop.f32.mrb[0].mxu0
    %4647 = vdwg.mxu0
    %4648 = vmatprep.subr.bf16.mxu0 %v4482
    %4649 = vmatpush1.bf16.msra.mxu0 %v4481
    %4650 = vmatprep.subr.bf16.mxu0 %v4486
    %4651 = vmatpush1.bf16.msra.mxu0 %v4485
    %4652 = vmatprep.subr.bf16.mxu0 %v4490
    %4653 = vmatpush1.bf16.msra.mxu0 %v4489
    %4654 = vmatprep.subr.bf16.mxu0 %v4494
    %4655 = vmatpush1.bf16.msra.mxu0 %v4493
    %4656 = vmatprep.subr.bf16.mxu0 %v4498
    %4657 = vmatpush1.bf16.msra.mxu0 %v4497
    %4658 = vmatprep.subr.bf16.mxu0 %v4502
    %4659 = vmatpush1.bf16.msra.mxu0 %v4501
    %4660 = vmatprep.subr.bf16.mxu0 %v4506
    %4661 = vmatpush1.bf16.msra.mxu0 %v4505
    %4662 = vmatprep.subr.bf16.mxu0 %v4510
    %4663 = vmatpush1.bf16.msra.mxu0 %v4509
    %4664 = vmatprep.subr.bf16.mxu0 %v4514
    %4665 = vmatpush1.bf16.msra.mxu0 %v4513
    %4666 = vmatprep.subr.bf16.mxu0 %v4518
    %4667 = vmatpush1.bf16.msra.mxu0 %v4517
    %4668 = vmatprep.subr.bf16.mxu0 %v4522
    %4669 = vmatpush1.bf16.msra.mxu0 %v4521
    %4670 = vmatprep.subr.bf16.mxu0 %v4526
    %4671 = vmatpush1.bf16.msra.mxu0 %v4525
    %4672 = vmatprep.subr.bf16.mxu0 %v4530
    %4673 = vmatpush1.bf16.msra.mxu0 %v4529
    %4674 = vmatprep.subr.bf16.mxu0 %v4534
    %4675 = vmatpush1.bf16.msra.mxu0 %v4533
    %4676 = vmatprep.subr.bf16.mxu0 %v4538
    %4677 = vmatpush1.bf16.msra.mxu0 %v4537
    %4678 = vmatprep.subr.bf16.mxu0 %v4542
    %4679 = vmatpush1.bf16.msra.mxu0 %v4541
    %4680 = vmatprep.mubr.bf16.mxu0 %v3942
    %4681 = vmatmul.mubr.bf16.gmra.mrb[0].mxu0 %v4200
    %v4682 = vpop.f32.mrb[0].mxu0
    %v4683 = vadd.f32 %v4278, %v4682
    %v4684 = vpop.f32.mrb[0].mxu0
    %v4685 = vadd.f32 %v4282, %v4684
    %v4686 = vpop.f32.mrb[0].mxu0
    %v4687 = vpop.f32.mrb[0].mxu0
    %4688 = vdwg.mxu0
    %v4689 = vxor.u32 %v4642, 2147483648
    %v4690 = vmul.f32 %v4689, 1.442695
    %v4691 = vpow.pop %v4690
    %v4692 = vadd.f32 %v4691, 1.0
    %v4693 = vrcp.pop %v4692
    %v4694 = vmul.f32 1.0, %v4693
    %v4695 = vxor.u32 %v4644, 2147483648
    %v4696 = vmul.f32 %v4695, 1.442695
    %v4697 = vpow.pop %v4696
    %v4698 = vadd.f32 %v4697, 1.0
    %v4699 = vrcp.pop %v4698
    %v4700 = vmul.f32 1.0, %v4699
    %v4701 = vtanh.pop %v4683
    %v4702 = vxor.u32 %v4685, 2147483648
    %v4703 = vmul.f32 %v4702, 1.442695
    %v4704 = vpow.pop %v4703
    %v4705 = vadd.f32 %v4704, 1.0
    %v4706 = vrcp.pop %v4705
    %v4707 = vmul.f32 1.0, %v4706
    %v4708 = vmul.f32 %v4700, %v3939
    %v4709 = vmul.f32 %v4694, %v4701
    %v4710 = vadd.f32 %v4708, %v4709
    %v4711 = vtanh.pop %v4710
    %v4712 = vmul.f32 %v4707, %v4711
    %v4713 = vpack.c.bf16 %v4712, %v4712
    %v4714 = vld [vmem:[%s7] sm:$0xf]
    %v4715 = vld [vmem:[%s7 + $0x4] sm:$0xf]
    %v4716 = vld [vmem:[%s7 + $0x8] sm:$0xf]
    %v4717 = vld [vmem:[%s7 + $0xc] sm:$0xf]
    %v4718 = vld [vmem:[%s7 + $0x10] sm:$0xf]
    %v4719 = vld [vmem:[%s7 + $0x14] sm:$0xf]
    %v4720 = vld [vmem:[%s7 + $0x18] sm:$0xf]
    %v4721 = vld [vmem:[%s7 + $0x1c] sm:$0xf]
    %v4722 = vld [vmem:[%s7 + $0x20] sm:$0xf]
    %v4723 = vld [vmem:[%s7 + $0x24] sm:$0xf]
    %v4724 = vld [vmem:[%s7 + $0x28] sm:$0xf]
    %v4725 = vld [vmem:[%s7 + $0x2c] sm:$0xf]
    %v4726 = vld [vmem:[%s7 + $0x30] sm:$0xf]
    %v4727 = vld [vmem:[%s7 + $0x34] sm:$0xf]
    %v4728 = vld [vmem:[%s7 + $0x38] sm:$0xf]
    %v4729 = vld [vmem:[%s7 + $0x3c] sm:$0xf]
    %v4730 = vld [vmem:[%s8] sm:$0x1]
    %v4732 = vlaneseq
    %v4733 = vshrl.u32 %v4732, 7
    %v4734 = vsub.s32 0, %v4733
    %v4735 = vrot.slane %v4730, %v4734
    %v4753 = vunpack.c.l.b16 %v4714
    %v4754 = vunpack.c.l.b16 %v4715
    %v4755 = vunpack.c.l.b16 %v4716
    %v4756 = vunpack.c.l.b16 %v4717
    %v4757 = vunpack.c.l.b16 %v4718
    %v4758 = vunpack.c.l.b16 %v4719
    %v4759 = vunpack.c.l.b16 %v4720
    %v4760 = vunpack.c.l.b16 %v4721
    %v4761 = vunpack.c.l.b16 %v4722
    %v4762 = vunpack.c.l.b16 %v4723
    %v4763 = vunpack.c.l.b16 %v4724
    %v4764 = vunpack.c.l.b16 %v4725
    %v4765 = vunpack.c.l.b16 %v4726
    %v4766 = vunpack.c.l.b16 %v4727
    %v4767 = vunpack.c.l.b16 %v4728
    %v4768 = vunpack.c.l.b16 %v4729
    %v4769 = vpack.c.b16 %v4754, %v4753
    %v4770 = vpack.c.b16 %v4756, %v4755
    %v4771 = vpack.c.b16 %v4758, %v4757
    %v4772 = vpack.c.b16 %v4760, %v4759
    %v4773 = vpack.c.b16 %v4762, %v4761
    %v4774 = vpack.c.b16 %v4764, %v4763
    %v4775 = vpack.c.b16 %v4766, %v4765
    %v4776 = vpack.c.b16 %v4768, %v4767
    %4785 = vmatprep.subr.bf16.mxu0 0
    %4786 = vmatpush1.bf16.msra.mxu0 %v4769
    %4787 = vmatprep.subr.bf16.mxu0 0
    %4788 = vmatpush1.bf16.msra.mxu0 %v4770
    %4789 = vmatprep.subr.bf16.mxu0 0
    %4790 = vmatpush1.bf16.msra.mxu0 %v4771
    %4791 = vmatprep.subr.bf16.mxu0 0
    %4792 = vmatpush1.bf16.msra.mxu0 %v4772
    %4793 = vmatprep.subr.bf16.mxu0 0
    %4794 = vmatpush1.bf16.msra.mxu0 %v4773
    %4795 = vmatprep.subr.bf16.mxu0 0
    %4796 = vmatpush1.bf16.msra.mxu0 %v4774
    %4797 = vmatprep.subr.bf16.mxu0 0
    %4798 = vmatpush1.bf16.msra.mxu0 %v4775
    %4799 = vmatprep.subr.bf16.mxu0 0
    %4800 = vmatpush1.bf16.msra.mxu0 %v4776
    %4801 = vmatprep.subr.bf16.mxu0 0
    %4802 = vmatpush1.bf16.msra.mxu0 0
    %4803 = vmatprep.subr.bf16.mxu0 0
    %4804 = vmatpush1.bf16.msra.mxu0 0
    %4805 = vmatprep.subr.bf16.mxu0 0
    %4806 = vmatpush1.bf16.msra.mxu0 0
    %4807 = vmatprep.subr.bf16.mxu0 0
    %4808 = vmatpush1.bf16.msra.mxu0 0
    %4809 = vmatprep.subr.bf16.mxu0 0
    %4810 = vmatpush1.bf16.msra.mxu0 0
    %4811 = vmatprep.subr.bf16.mxu0 0
    %4812 = vmatpush1.bf16.msra.mxu0 0
    %4813 = vmatprep.subr.bf16.mxu0 0
    %4814 = vmatpush1.bf16.msra.mxu0 0
    %4815 = vmatprep.subr.bf16.mxu0 0
    %4816 = vmatpush1.bf16.msra.mxu0 0
    %4817 = vmatprep.mubr.bf16.mxu0 0
    %4818 = vmatmul.mubr.bf16.gmra.mrb[0].mxu0 %v4713
    %v4819 = vpop.f32.mrb[0].mxu0
    %v4820 = vadd.f32 %v4735, %v4819
    %v4821 = vpop.f32.mrb[0].mxu0
    %v4822 = vpop.f32.mrb[0].mxu0
    %v4823 = vpop.f32.mrb[0].mxu0
    %4824 = vdwg.mxu0
    %s4825 = scalar_lea.vmem %s10, 32
    %4826 = vst [vmem:[%s4825] sm:$0xff] %v4820
    %s4827 = sld [smem:[#allocation4 + $0x5]]
    %p4828 = scmp.eq.s32.totalorder %s4827, 0
    // Predicated region
    $region74: #{seq2seq_forward.1} parent=1 // pred_check
      %p4829 = pneg %p4828
    $region75: #{seq2seq_forward.1} parent=1 // pred_check_branch
      %4831 = sbr.rel (%p4829) target = $region77
    $region76: #{seq2seq_forward.1} parent=1 // pred_region
      %4832 = vmax.xlane.f32.xlu0 %v4820
      %v4833 = vpop.xlane.xlu0 %4832
      %v4834 = vlaneseq
      %v4835 = vand.u32 %v4834, 127
      %vm4836 = vcmp.eq.f32.partialorder %v4820, %v4833
      %v4837 = vsel %vm4836, %v4835, 128
      %v4838 = vand.u32 %v4837, 65535
      %v4839 = vshra.s32 %v4837, 16
      %v4840 = vcvt.s32.f32 %v4838
      %v4841 = vcvt.s32.f32 %v4839
      %4842 = vmin.xlane.f32.xlu0 %v4841
      %v4843 = vpop.xlane.xlu0 %4842
      %vm4844 = vcmp.eq.f32.partialorder %v4841, %v4843
      %v4845 = vsel %vm4844, %v4840, inf
      %4846 = vmin.xlane.f32.xlu0 %v4845
      %v4847 = vpop.xlane.xlu0 %4846
      %v4848 = vcvt.f32.s32 %v4847
      %v4849 = vcvt.f32.s32 %v4843
      %v4850 = vshll.u32 %v4849, 16
      %v4851 = vadd.s32 %v4850, %v4848
      %vm4852 = vcmp.eq.s32.totalorder %v4835, %v4851
      %v4853 = vsel %vm4852, 1, 0
      %v4854 = vcvt.s32.f32 %v4853
      %v4855 = vpack.c.bf16 %v4854, %v4854
      %v4856 = vld [vmem:[%s9] sm:$0xf]
      %v4857 = vld [vmem:[%s9 + $0x4] sm:$0xf]
      %v4858 = vld [vmem:[%s9 + $0x8] sm:$0xf]
      %v4859 = vld [vmem:[%s9 + $0xc] sm:$0xf]
      %v4860 = vld [vmem:[%s9 + $0x10] sm:$0xf]
      %v4861 = vld [vmem:[%s9 + $0x14] sm:$0xf]
      %v4862 = vld [vmem:[%s9 + $0x18] sm:$0xf]
      %v4863 = vld [vmem:[%s9 + $0x1c] sm:$0xf]
      %v4864 = vld [vmem:[%s9 + $0x20] sm:$0xf]
      %v4865 = vld [vmem:[%s9 + $0x24] sm:$0xf]
      %v4866 = vld [vmem:[%s9 + $0x28] sm:$0xf]
      %v4867 = vld [vmem:[%s9 + $0x2c] sm:$0xf]
      %v4868 = vld [vmem:[%s9 + $0x30] sm:$0xf]
      %v4869 = vld [vmem:[%s9 + $0x34] sm:$0xf]
      %v4870 = vld [vmem:[%s9 + $0x38] sm:$0xf]
      %v4871 = vld [vmem:[%s9 + $0x3c] sm:$0xf]
      %v4888 = vunpack.c.l.b16 %v4856
      %v4889 = vunpack.c.l.b16 %v4857
      %v4890 = vunpack.c.l.b16 %v4858
      %v4891 = vunpack.c.l.b16 %v4859
      %v4892 = vunpack.c.l.b16 %v4860
      %v4893 = vunpack.c.l.b16 %v4861
      %v4894 = vunpack.c.l.b16 %v4862
      %v4895 = vunpack.c.l.b16 %v4863
      %v4896 = vunpack.c.l.b16 %v4864
      %v4897 = vunpack.c.l.b16 %v4865
      %v4898 = vunpack.c.l.b16 %v4866
      %v4899 = vunpack.c.l.b16 %v4867
      %v4900 = vunpack.c.l.b16 %v4868
      %v4901 = vunpack.c.l.b16 %v4869
      %v4902 = vunpack.c.l.b16 %v4870
      %v4903 = vunpack.c.l.b16 %v4871
      %v4904 = vpack.c.b16 %v4889, %v4888
      %v4905 = vpack.c.b16 %v4891, %v4890
      %v4906 = vpack.c.b16 %v4893, %v4892
      %v4907 = vpack.c.b16 %v4895, %v4894
      %v4908 = vpack.c.b16 %v4897, %v4896
      %v4909 = vpack.c.b16 %v4899, %v4898
      %v4910 = vpack.c.b16 %v4901, %v4900
      %v4911 = vpack.c.b16 %v4903, %v4902
      %4920 = vmatprep.subr.bf16.mxu0 0
      %4921 = vmatpush1.bf16.msra.mxu0 %v4904
      %4922 = vmatprep.subr.bf16.mxu0 0
      %4923 = vmatpush1.bf16.msra.mxu0 %v4905
      %4924 = vmatprep.subr.bf16.mxu0 0
      %4925 = vmatpush1.bf16.msra.mxu0 %v4906
      %4926 = vmatprep.subr.bf16.mxu0 0
      %4927 = vmatpush1.bf16.msra.mxu0 %v4907
      %4928 = vmatprep.subr.bf16.mxu0 0
      %4929 = vmatpush1.bf16.msra.mxu0 %v4908
      %4930 = vmatprep.subr.bf16.mxu0 0
      %4931 = vmatpush1.bf16.msra.mxu0 %v4909
      %4932 = vmatprep.subr.bf16.mxu0 0
      %4933 = vmatpush1.bf16.msra.mxu0 %v4910
      %4934 = vmatprep.subr.bf16.mxu0 0
      %4935 = vmatpush1.bf16.msra.mxu0 %v4911
      %4936 = vmatprep.subr.bf16.mxu0 0
      %4937 = vmatpush1.bf16.msra.mxu0 0
      %4938 = vmatprep.subr.bf16.mxu0 0
      %4939 = vmatpush1.bf16.msra.mxu0 0
      %4940 = vmatprep.subr.bf16.mxu0 0
      %4941 = vmatpush1.bf16.msra.mxu0 0
      %4942 = vmatprep.subr.bf16.mxu0 0
      %4943 = vmatpush1.bf16.msra.mxu0 0
      %4944 = vmatprep.subr.bf16.mxu0 0
      %4945 = vmatpush1.bf16.msra.mxu0 0
      %4946 = vmatprep.subr.bf16.mxu0 0
      %4947 = vmatpush1.bf16.msra.mxu0 0
      %4948 = vmatprep.subr.bf16.mxu0 0
      %4949 = vmatpush1.bf16.msra.mxu0 0
      %4950 = vmatprep.subr.bf16.mxu0 0
      %4951 = vmatpush1.bf16.msra.mxu0 0
      %4952 = vmatprep.mubr.bf16.mxu0 0
      %4953 = vmatmul.mubr.bf16.gmra.mrb[0].mxu0 %v4855
      %v4954 = vpop.f32.mrb[0].mxu0
      %v4955 = vadd.f32 0.0, %v4954
      %v4956 = vpop.f32.mrb[0].mxu0
      %v4957 = vpop.f32.mrb[0].mxu0
      %v4958 = vpop.f32.mrb[0].mxu0
      %4959 = vdwg.mxu0
      %4960 = vst [vmem:[#allocation2] sm:$0xff] %v4955
    $region77: #{seq2seq_forward.1} parent=1 // pred_fallthru
      _
    %s4961 = sld [smem:[#allocation4 + $0x5]]
    %p4962 = scmp.ne.s32.totalorder %s4961, 0
    // Predicated region
    $region78: #{seq2seq_forward.1} parent=1 // pred_check
      %p4963 = pneg %p4962
    $region79: #{seq2seq_forward.1} parent=1 // pred_check_branch
      %4965 = sbr.rel (%p4963) target = $region81
    $region80: #{seq2seq_forward.1} parent=1 // pred_region
      %s4966 = scalar_lea.vmem %s2, 20
      %v4967 = vld [vmem:[%s4966] sm:$0xf]
      %v4968 = vunpack.c.l.bf16 %v4967
      %4969 = vst [vmem:[#allocation2] sm:$0xff] %v4968
    $region81: #{seq2seq_forward.1} parent=1 // pred_fallthru
      _
    %v4970 = vld [vmem:[#allocation2] sm:$0xff]
    %v4971 = vpack.c.bf16 %v4970, %v4970
    %v4972 = vld [vmem:[#allocation5] sm:$0xff]
    %v4973 = vld [vmem:[#allocation5 + $0x8] sm:$0xff]
    %v4974 = vld [vmem:[#allocation5 + $0x10] sm:$0xff]
    %v4975 = vld [vmem:[#allocation5 + $0x18] sm:$0xff]
    %v4976 = vld [vmem:[#allocation5 + $0x20] sm:$0xff]
    %v4977 = vld [vmem:[#allocation5 + $0x28] sm:$0xff]
    %v4978 = vld [vmem:[#allocation5 + $0x30] sm:$0xff]
    %v4979 = vld [vmem:[#allocation5 + $0x38] sm:$0xff]
    %v4980 = vld [vmem:[#allocation5 + $0x40] sm:$0xff]
    %v4981 = vld [vmem:[#allocation5 + $0x48] sm:$0xff]
    %v4982 = vld [vmem:[#allocation5 + $0x50] sm:$0xff]
    %v4983 = vld [vmem:[#allocation5 + $0x58] sm:$0xff]
    %v4984 = vld [vmem:[#allocation5 + $0x60] sm:$0xff]
    %v4985 = vld [vmem:[#allocation5 + $0x68] sm:$0xff]
    %v4986 = vld [vmem:[#allocation5 + $0x70] sm:$0xff]
    %v4987 = vld [vmem:[#allocation5 + $0x78] sm:$0xff]
    %v4988 = vld [vmem:[#allocation5 + $0x80] sm:$0xff]
    %v4989 = vld [vmem:[#allocation5 + $0x88] sm:$0xff]
    %v4990 = vld [vmem:[#allocation5 + $0x90] sm:$0xff]
    %v4991 = vld [vmem:[#allocation5 + $0x98] sm:$0xff]
    %v4992 = vld [vmem:[#allocation5 + $0xa0] sm:$0xff]
    %v4993 = vld [vmem:[#allocation5 + $0xa8] sm:$0xff]
    %v4994 = vld [vmem:[#allocation5 + $0xb0] sm:$0xff]
    %v4995 = vld [vmem:[#allocation5 + $0xb8] sm:$0xff]
    %v4996 = vld [vmem:[#allocation5 + $0xc0] sm:$0xff]
    %v4997 = vld [vmem:[#allocation5 + $0xc8] sm:$0xff]
    %v4998 = vld [vmem:[#allocation5 + $0xd0] sm:$0xff]
    %v4999 = vld [vmem:[#allocation5 + $0xd8] sm:$0xff]
    %v5000 = vld [vmem:[#allocation5 + $0xe0] sm:$0xff]
    %v5001 = vld [vmem:[#allocation5 + $0xe8] sm:$0xff]
    %v5002 = vld [vmem:[#allocation5 + $0xf0] sm:$0xff]
    %v5003 = vld [vmem:[#allocation5 + $0xf8] sm:$0xff]
    %v5004 = vld [vmem:[#allocation5 + $0x100] sm:$0xff]
    %v5005 = vld [vmem:[#allocation5 + $0x108] sm:$0xff]
    %v5006 = vld [vmem:[#allocation5 + $0x110] sm:$0xff]
    %v5007 = vld [vmem:[#allocation5 + $0x118] sm:$0xff]
    %v5008 = vld [vmem:[#allocation5 + $0x120] sm:$0xff]
    %v5009 = vld [vmem:[#allocation5 + $0x128] sm:$0xff]
    %v5010 = vld [vmem:[#allocation5 + $0x130] sm:$0xff]
    %v5011 = vld [vmem:[#allocation5 + $0x138] sm:$0xff]
    %v5012 = vld [vmem:[#allocation5 + $0x140] sm:$0xff]
    %v5013 = vld [vmem:[#allocation5 + $0x148] sm:$0xff]
    %v5014 = vld [vmem:[#allocation5 + $0x150] sm:$0xff]
    %v5015 = vld [vmem:[#allocation5 + $0x158] sm:$0xff]
    %v5016 = vld [vmem:[#allocation5 + $0x160] sm:$0xff]
    %v5017 = vld [vmem:[#allocation5 + $0x168] sm:$0xff]
    %v5018 = vld [vmem:[#allocation5 + $0x170] sm:$0xff]
    %v5019 = vld [vmem:[#allocation5 + $0x178] sm:$0xff]
    %v5020 = vld [vmem:[#allocation5 + $0x180] sm:$0xff]
    %v5021 = vld [vmem:[#allocation5 + $0x188] sm:$0xff]
    %v5022 = vld [vmem:[#allocation5 + $0x190] sm:$0xff]
    %v5023 = vld [vmem:[#allocation5 + $0x198] sm:$0xff]
    %v5024 = vld [vmem:[#allocation5 + $0x1a0] sm:$0xff]
    %v5025 = vld [vmem:[#allocation5 + $0x1a8] sm:$0xff]
    %v5026 = vld [vmem:[#allocation5 + $0x1b0] sm:$0xff]
    %v5027 = vld [vmem:[#allocation5 + $0x1b8] sm:$0xff]
    %v5028 = vld [vmem:[#allocation5 + $0x1c0] sm:$0xff]
    %v5029 = vld [vmem:[#allocation5 + $0x1c8] sm:$0xff]
    %v5030 = vld [vmem:[#allocation5 + $0x1d0] sm:$0xff]
    %v5031 = vld [vmem:[#allocation5 + $0x1d8] sm:$0xff]
    %v5032 = vld [vmem:[#allocation5 + $0x1e0] sm:$0xff]
    %v5033 = vld [vmem:[#allocation5 + $0x1e8] sm:$0xff]
    %v5034 = vld [vmem:[#allocation5 + $0x1f0] sm:$0xff]
    %v5035 = vld [vmem:[#allocation5 + $0x1f8] sm:$0xff]
    %v5036 = vld [vmem:[%s6] sm:$0xf]
    %v5038 = vlaneseq
    %v5039 = vshrl.u32 %v5038, 7
    %v5040 = vsub.s32 0, %v5039
    %v5041 = vrot.slane %v5036, %v5040
    %v5042 = vlaneseq
    %v5043 = vshrl.u32 %v5042, 7
    %v5044 = vsub.s32 1, %v5043
    %v5045 = vrot.slane %v5036, %v5044
    %v5046 = vlaneseq
    %v5047 = vshrl.u32 %v5046, 7
    %v5048 = vsub.s32 2, %v5047
    %v5049 = vrot.slane %v5036, %v5048
    %v5050 = vlaneseq
    %v5051 = vshrl.u32 %v5050, 7
    %v5052 = vsub.s32 3, %v5051
    %v5053 = vrot.slane %v5036, %v5052
    %v5122 = vunpack.c.l.b16 %v4972
    %v5123 = vunpack.c.h.b16 %v4972
    %v5124 = vunpack.c.l.b16 %v4973
    %v5125 = vunpack.c.h.b16 %v4973
    %v5126 = vunpack.c.l.b16 %v4974
    %v5127 = vunpack.c.h.b16 %v4974
    %v5128 = vunpack.c.l.b16 %v4975
    %v5129 = vunpack.c.h.b16 %v4975
    %v5130 = vunpack.c.l.b16 %v4976
    %v5131 = vunpack.c.h.b16 %v4976
    %v5132 = vunpack.c.l.b16 %v4977
    %v5133 = vunpack.c.h.b16 %v4977
    %v5134 = vunpack.c.l.b16 %v4978
    %v5135 = vunpack.c.h.b16 %v4978
    %v5136 = vunpack.c.l.b16 %v4979
    %v5137 = vunpack.c.h.b16 %v4979
    %v5138 = vunpack.c.l.b16 %v4980
    %v5139 = vunpack.c.h.b16 %v4980
    %v5140 = vunpack.c.l.b16 %v4981
    %v5141 = vunpack.c.h.b16 %v4981
    %v5142 = vunpack.c.l.b16 %v4982
    %v5143 = vunpack.c.h.b16 %v4982
    %v5144 = vunpack.c.l.b16 %v4983
    %v5145 = vunpack.c.h.b16 %v4983
    %v5146 = vunpack.c.l.b16 %v4984
    %v5147 = vunpack.c.h.b16 %v4984
    %v5148 = vunpack.c.l.b16 %v4985
    %v5149 = vunpack.c.h.b16 %v4985
    %v5150 = vunpack.c.l.b16 %v4986
    %v5151 = vunpack.c.h.b16 %v4986
    %v5152 = vunpack.c.l.b16 %v4987
    %v5153 = vunpack.c.h.b16 %v4987
    %v5154 = vunpack.c.l.b16 %v4988
    %v5155 = vunpack.c.h.b16 %v4988
    %v5156 = vunpack.c.l.b16 %v4989
    %v5157 = vunpack.c.h.b16 %v4989
    %v5158 = vunpack.c.l.b16 %v4990
    %v5159 = vunpack.c.h.b16 %v4990
    %v5160 = vunpack.c.l.b16 %v4991
    %v5161 = vunpack.c.h.b16 %v4991
    %v5162 = vunpack.c.l.b16 %v4992
    %v5163 = vunpack.c.h.b16 %v4992
    %v5164 = vunpack.c.l.b16 %v4993
    %v5165 = vunpack.c.h.b16 %v4993
    %v5166 = vunpack.c.l.b16 %v4994
    %v5167 = vunpack.c.h.b16 %v4994
    %v5168 = vunpack.c.l.b16 %v4995
    %v5169 = vunpack.c.h.b16 %v4995
    %v5170 = vunpack.c.l.b16 %v4996
    %v5171 = vunpack.c.h.b16 %v4996
    %v5172 = vunpack.c.l.b16 %v4997
    %v5173 = vunpack.c.h.b16 %v4997
    %v5174 = vunpack.c.l.b16 %v4998
    %v5175 = vunpack.c.h.b16 %v4998
    %v5176 = vunpack.c.l.b16 %v4999
    %v5177 = vunpack.c.h.b16 %v4999
    %v5178 = vunpack.c.l.b16 %v5000
    %v5179 = vunpack.c.h.b16 %v5000
    %v5180 = vunpack.c.l.b16 %v5001
    %v5181 = vunpack.c.h.b16 %v5001
    %v5182 = vunpack.c.l.b16 %v5002
    %v5183 = vunpack.c.h.b16 %v5002
    %v5184 = vunpack.c.l.b16 %v5003
    %v5185 = vunpack.c.h.b16 %v5003
    %v5186 = vunpack.c.l.b16 %v5004
    %v5187 = vunpack.c.h.b16 %v5004
    %v5188 = vunpack.c.l.b16 %v5005
    %v5189 = vunpack.c.h.b16 %v5005
    %v5190 = vunpack.c.l.b16 %v5006
    %v5191 = vunpack.c.h.b16 %v5006
    %v5192 = vunpack.c.l.b16 %v5007
    %v5193 = vunpack.c.h.b16 %v5007
    %v5194 = vunpack.c.l.b16 %v5008
    %v5195 = vunpack.c.h.b16 %v5008
    %v5196 = vunpack.c.l.b16 %v5009
    %v5197 = vunpack.c.h.b16 %v5009
    %v5198 = vunpack.c.l.b16 %v5010
    %v5199 = vunpack.c.h.b16 %v5010
    %v5200 = vunpack.c.l.b16 %v5011
    %v5201 = vunpack.c.h.b16 %v5011
    %v5202 = vunpack.c.l.b16 %v5012
    %v5203 = vunpack.c.h.b16 %v5012
    %v5204 = vunpack.c.l.b16 %v5013
    %v5205 = vunpack.c.h.b16 %v5013
    %v5206 = vunpack.c.l.b16 %v5014
    %v5207 = vunpack.c.h.b16 %v5014
    %v5208 = vunpack.c.l.b16 %v5015
    %v5209 = vunpack.c.h.b16 %v5015
    %v5210 = vunpack.c.l.b16 %v5016
    %v5211 = vunpack.c.h.b16 %v5016
    %v5212 = vunpack.c.l.b16 %v5017
    %v5213 = vunpack.c.h.b16 %v5017
    %v5214 = vunpack.c.l.b16 %v5018
    %v5215 = vunpack.c.h.b16 %v5018
    %v5216 = vunpack.c.l.b16 %v5019
    %v5217 = vunpack.c.h.b16 %v5019
    %v5218 = vunpack.c.l.b16 %v5020
    %v5219 = vunpack.c.h.b16 %v5020
    %v5220 = vunpack.c.l.b16 %v5021
    %v5221 = vunpack.c.h.b16 %v5021
    %v5222 = vunpack.c.l.b16 %v5022
    %v5223 = vunpack.c.h.b16 %v5022
    %v5224 = vunpack.c.l.b16 %v5023
    %v5225 = vunpack.c.h.b16 %v5023
    %v5226 = vunpack.c.l.b16 %v5024
    %v5227 = vunpack.c.h.b16 %v5024
    %v5228 = vunpack.c.l.b16 %v5025
    %v5229 = vunpack.c.h.b16 %v5025
    %v5230 = vunpack.c.l.b16 %v5026
    %v5231 = vunpack.c.h.b16 %v5026
    %v5232 = vunpack.c.l.b16 %v5027
    %v5233 = vunpack.c.h.b16 %v5027
    %v5234 = vunpack.c.l.b16 %v5028
    %v5235 = vunpack.c.h.b16 %v5028
    %v5236 = vunpack.c.l.b16 %v5029
    %v5237 = vunpack.c.h.b16 %v5029
    %v5238 = vunpack.c.l.b16 %v5030
    %v5239 = vunpack.c.h.b16 %v5030
    %v5240 = vunpack.c.l.b16 %v5031
    %v5241 = vunpack.c.h.b16 %v5031
    %v5242 = vunpack.c.l.b16 %v5032
    %v5243 = vunpack.c.h.b16 %v5032
    %v5244 = vunpack.c.l.b16 %v5033
    %v5245 = vunpack.c.h.b16 %v5033
    %v5246 = vunpack.c.l.b16 %v5034
    %v5247 = vunpack.c.h.b16 %v5034
    %v5248 = vunpack.c.l.b16 %v5035
    %v5249 = vunpack.c.h.b16 %v5035
    %v5250 = vpack.c.b16 %v5126, %v5122
    %v5251 = vpack.c.b16 %v5127, %v5123
    %v5252 = vpack.c.b16 %v5128, %v5124
    %v5253 = vpack.c.b16 %v5129, %v5125
    %v5254 = vpack.c.b16 %v5134, %v5130
    %v5255 = vpack.c.b16 %v5135, %v5131
    %v5256 = vpack.c.b16 %v5136, %v5132
    %v5257 = vpack.c.b16 %v5137, %v5133
    %v5258 = vpack.c.b16 %v5142, %v5138
    %v5259 = vpack.c.b16 %v5143, %v5139
    %v5260 = vpack.c.b16 %v5144, %v5140
    %v5261 = vpack.c.b16 %v5145, %v5141
    %v5262 = vpack.c.b16 %v5150, %v5146
    %v5263 = vpack.c.b16 %v5151, %v5147
    %v5264 = vpack.c.b16 %v5152, %v5148
    %v5265 = vpack.c.b16 %v5153, %v5149
    %v5266 = vpack.c.b16 %v5158, %v5154
    %v5267 = vpack.c.b16 %v5159, %v5155
    %v5268 = vpack.c.b16 %v5160, %v5156
    %v5269 = vpack.c.b16 %v5161, %v5157
    %v5270 = vpack.c.b16 %v5166, %v5162
    %v5271 = vpack.c.b16 %v5167, %v5163
    %v5272 = vpack.c.b16 %v5168, %v5164
    %v5273 = vpack.c.b16 %v5169, %v5165
    %v5274 = vpack.c.b16 %v5174, %v5170
    %v5275 = vpack.c.b16 %v5175, %v5171
    %v5276 = vpack.c.b16 %v5176, %v5172
    %v5277 = vpack.c.b16 %v5177, %v5173
    %v5278 = vpack.c.b16 %v5182, %v5178
    %v5279 = vpack.c.b16 %v5183, %v5179
    %v5280 = vpack.c.b16 %v5184, %v5180
    %v5281 = vpack.c.b16 %v5185, %v5181
    %v5282 = vpack.c.b16 %v5190, %v5186
    %v5283 = vpack.c.b16 %v5191, %v5187
    %v5284 = vpack.c.b16 %v5192, %v5188
    %v5285 = vpack.c.b16 %v5193, %v5189
    %v5286 = vpack.c.b16 %v5198, %v5194
    %v5287 = vpack.c.b16 %v5199, %v5195
    %v5288 = vpack.c.b16 %v5200, %v5196
    %v5289 = vpack.c.b16 %v5201, %v5197
    %v5290 = vpack.c.b16 %v5206, %v5202
    %v5291 = vpack.c.b16 %v5207, %v5203
    %v5292 = vpack.c.b16 %v5208, %v5204
    %v5293 = vpack.c.b16 %v5209, %v5205
    %v5294 = vpack.c.b16 %v5214, %v5210
    %v5295 = vpack.c.b16 %v5215, %v5211
    %v5296 = vpack.c.b16 %v5216, %v5212
    %v5297 = vpack.c.b16 %v5217, %v5213
    %v5298 = vpack.c.b16 %v5222, %v5218
    %v5299 = vpack.c.b16 %v5223, %v5219
    %v5300 = vpack.c.b16 %v5224, %v5220
    %v5301 = vpack.c.b16 %v5225, %v5221
    %v5302 = vpack.c.b16 %v5230, %v5226
    %v5303 = vpack.c.b16 %v5231, %v5227
    %v5304 = vpack.c.b16 %v5232, %v5228
    %v5305 = vpack.c.b16 %v5233, %v5229
    %v5306 = vpack.c.b16 %v5238, %v5234
    %v5307 = vpack.c.b16 %v5239, %v5235
    %v5308 = vpack.c.b16 %v5240, %v5236
    %v5309 = vpack.c.b16 %v5241, %v5237
    %v5310 = vpack.c.b16 %v5246, %v5242
    %v5311 = vpack.c.b16 %v5247, %v5243
    %v5312 = vpack.c.b16 %v5248, %v5244
    %v5313 = vpack.c.b16 %v5249, %v5245
    %5378 = vmatprep.subr.bf16.mxu0 %v5251
    %5379 = vmatpush1.bf16.msra.mxu0 %v5250
    %5380 = vmatprep.subr.bf16.mxu0 %v5255
    %5381 = vmatpush1.bf16.msra.mxu0 %v5254
    %5382 = vmatprep.subr.bf16.mxu0 %v5259
    %5383 = vmatpush1.bf16.msra.mxu0 %v5258
    %5384 = vmatprep.subr.bf16.mxu0 %v5263
    %5385 = vmatpush1.bf16.msra.mxu0 %v5262
    %5386 = vmatprep.subr.bf16.mxu0 %v5267
    %5387 = vmatpush1.bf16.msra.mxu0 %v5266
    %5388 = vmatprep.subr.bf16.mxu0 %v5271
    %5389 = vmatpush1.bf16.msra.mxu0 %v5270
    %5390 = vmatprep.subr.bf16.mxu0 %v5275
    %5391 = vmatpush1.bf16.msra.mxu0 %v5274
    %5392 = vmatprep.subr.bf16.mxu0 %v5279
    %5393 = vmatpush1.bf16.msra.mxu0 %v5278
    %5394 = vmatprep.subr.bf16.mxu0 %v5283
    %5395 = vmatpush1.bf16.msra.mxu0 %v5282
    %5396 = vmatprep.subr.bf16.mxu0 %v5287
    %5397 = vmatpush1.bf16.msra.mxu0 %v5286
    %5398 = vmatprep.subr.bf16.mxu0 %v5291
    %5399 = vmatpush1.bf16.msra.mxu0 %v5290
    %5400 = vmatprep.subr.bf16.mxu0 %v5295
    %5401 = vmatpush1.bf16.msra.mxu0 %v5294
    %5402 = vmatprep.subr.bf16.mxu0 %v5299
    %5403 = vmatpush1.bf16.msra.mxu0 %v5298
    %5404 = vmatprep.subr.bf16.mxu0 %v5303
    %5405 = vmatpush1.bf16.msra.mxu0 %v5302
    %5406 = vmatprep.subr.bf16.mxu0 %v5307
    %5407 = vmatpush1.bf16.msra.mxu0 %v5306
    %5408 = vmatprep.subr.bf16.mxu0 %v5311
    %5409 = vmatpush1.bf16.msra.mxu0 %v5310
    %5410 = vmatprep.mubr.bf16.mxu0 %v4713
    %5411 = vmatmul.mubr.bf16.gmra.mrb[0].mxu0 %v4971
    %v5412 = vpop.f32.mrb[0].mxu0
    %v5413 = vadd.f32 %v5041, %v5412
    %v5414 = vpop.f32.mrb[0].mxu0
    %v5415 = vadd.f32 %v5045, %v5414
    %v5416 = vpop.f32.mrb[0].mxu0
    %v5417 = vpop.f32.mrb[0].mxu0
    %5418 = vdwg.mxu0
    %5419 = vmatprep.subr.bf16.mxu0 %v5253
    %5420 = vmatpush1.bf16.msra.mxu0 %v5252
    %5421 = vmatprep.subr.bf16.mxu0 %v5257
    %5422 = vmatpush1.bf16.msra.mxu0 %v5256
    %5423 = vmatprep.subr.bf16.mxu0 %v5261
    %5424 = vmatpush1.bf16.msra.mxu0 %v5260
    %5425 = vmatprep.subr.bf16.mxu0 %v5265
    %5426 = vmatpush1.bf16.msra.mxu0 %v5264
    %5427 = vmatprep.subr.bf16.mxu0 %v5269
    %5428 = vmatpush1.bf16.msra.mxu0 %v5268
    %5429 = vmatprep.subr.bf16.mxu0 %v5273
    %5430 = vmatpush1.bf16.msra.mxu0 %v5272
    %5431 = vmatprep.subr.bf16.mxu0 %v5277
    %5432 = vmatpush1.bf16.msra.mxu0 %v5276
    %5433 = vmatprep.subr.bf16.mxu0 %v5281
    %5434 = vmatpush1.bf16.msra.mxu0 %v5280
    %5435 = vmatprep.subr.bf16.mxu0 %v5285
    %5436 = vmatpush1.bf16.msra.mxu0 %v5284
    %5437 = vmatprep.subr.bf16.mxu0 %v5289
    %5438 = vmatpush1.bf16.msra.mxu0 %v5288
    %5439 = vmatprep.subr.bf16.mxu0 %v5293
    %5440 = vmatpush1.bf16.msra.mxu0 %v5292
    %5441 = vmatprep.subr.bf16.mxu0 %v5297
    %5442 = vmatpush1.bf16.msra.mxu0 %v5296
    %5443 = vmatprep.subr.bf16.mxu0 %v5301
    %5444 = vmatpush1.bf16.msra.mxu0 %v5300
    %5445 = vmatprep.subr.bf16.mxu0 %v5305
    %5446 = vmatpush1.bf16.msra.mxu0 %v5304
    %5447 = vmatprep.subr.bf16.mxu0 %v5309
    %5448 = vmatpush1.bf16.msra.mxu0 %v5308
    %5449 = vmatprep.subr.bf16.mxu0 %v5313
    %5450 = vmatpush1.bf16.msra.mxu0 %v5312
    %5451 = vmatprep.mubr.bf16.mxu0 %v4713
    %5452 = vmatmul.mubr.bf16.gmra.mrb[0].mxu0 %v4971
    %v5453 = vpop.f32.mrb[0].mxu0
    %v5454 = vadd.f32 %v5049, %v5453
    %v5455 = vpop.f32.mrb[0].mxu0
    %v5456 = vadd.f32 %v5053, %v5455
    %v5457 = vpop.f32.mrb[0].mxu0
    %v5458 = vpop.f32.mrb[0].mxu0
    %5459 = vdwg.mxu0
    %v5460 = vxor.u32 %v5413, 2147483648
    %v5461 = vmul.f32 %v5460, 1.442695
    %v5462 = vpow.pop %v5461
    %v5463 = vadd.f32 %v5462, 1.0
    %v5464 = vrcp.pop %v5463
    %v5465 = vmul.f32 1.0, %v5464
    %v5466 = vxor.u32 %v5415, 2147483648
    %v5467 = vmul.f32 %v5466, 1.442695
    %v5468 = vpow.pop %v5467
    %v5469 = vadd.f32 %v5468, 1.0
    %v5470 = vrcp.pop %v5469
    %v5471 = vmul.f32 1.0, %v5470
    %v5472 = vtanh.pop %v5454
    %v5473 = vxor.u32 %v5456, 2147483648
    %v5474 = vmul.f32 %v5473, 1.442695
    %v5475 = vpow.pop %v5474
    %v5476 = vadd.f32 %v5475, 1.0
    %v5477 = vrcp.pop %v5476
    %v5478 = vmul.f32 1.0, %v5477
    %v5479 = vmul.f32 %v5471, %v4710
    %v5480 = vmul.f32 %v5465, %v5472
    %v5481 = vadd.f32 %v5479, %v5480
    %v5482 = vtanh.pop %v5481
    %v5483 = vmul.f32 %v5478, %v5482
    %v5484 = vpack.c.bf16 %v5483, %v5483
    %v5485 = vld [vmem:[%s7] sm:$0xf]
    %v5486 = vld [vmem:[%s7 + $0x4] sm:$0xf]
    %v5487 = vld [vmem:[%s7 + $0x8] sm:$0xf]
    %v5488 = vld [vmem:[%s7 + $0xc] sm:$0xf]
    %v5489 = vld [vmem:[%s7 + $0x10] sm:$0xf]
    %v5490 = vld [vmem:[%s7 + $0x14] sm:$0xf]
    %v5491 = vld [vmem:[%s7 + $0x18] sm:$0xf]
    %v5492 = vld [vmem:[%s7 + $0x1c] sm:$0xf]
    %v5493 = vld [vmem:[%s7 + $0x20] sm:$0xf]
    %v5494 = vld [vmem:[%s7 + $0x24] sm:$0xf]
    %v5495 = vld [vmem:[%s7 + $0x28] sm:$0xf]
    %v5496 = vld [vmem:[%s7 + $0x2c] sm:$0xf]
    %v5497 = vld [vmem:[%s7 + $0x30] sm:$0xf]
    %v5498 = vld [vmem:[%s7 + $0x34] sm:$0xf]
    %v5499 = vld [vmem:[%s7 + $0x38] sm:$0xf]
    %v5500 = vld [vmem:[%s7 + $0x3c] sm:$0xf]
    %v5501 = vld [vmem:[%s8] sm:$0x1]
    %v5503 = vlaneseq
    %v5504 = vshrl.u32 %v5503, 7
    %v5505 = vsub.s32 0, %v5504
    %v5506 = vrot.slane %v5501, %v5505
    %v5524 = vunpack.c.l.b16 %v5485
    %v5525 = vunpack.c.l.b16 %v5486
    %v5526 = vunpack.c.l.b16 %v5487
    %v5527 = vunpack.c.l.b16 %v5488
    %v5528 = vunpack.c.l.b16 %v5489
    %v5529 = vunpack.c.l.b16 %v5490
    %v5530 = vunpack.c.l.b16 %v5491
    %v5531 = vunpack.c.l.b16 %v5492
    %v5532 = vunpack.c.l.b16 %v5493
    %v5533 = vunpack.c.l.b16 %v5494
    %v5534 = vunpack.c.l.b16 %v5495
    %v5535 = vunpack.c.l.b16 %v5496
    %v5536 = vunpack.c.l.b16 %v5497
    %v5537 = vunpack.c.l.b16 %v5498
    %v5538 = vunpack.c.l.b16 %v5499
    %v5539 = vunpack.c.l.b16 %v5500
    %v5540 = vpack.c.b16 %v5525, %v5524
    %v5541 = vpack.c.b16 %v5527, %v5526
    %v5542 = vpack.c.b16 %v5529, %v5528
    %v5543 = vpack.c.b16 %v5531, %v5530
    %v5544 = vpack.c.b16 %v5533, %v5532
    %v5545 = vpack.c.b16 %v5535, %v5534
    %v5546 = vpack.c.b16 %v5537, %v5536
    %v5547 = vpack.c.b16 %v5539, %v5538
    %5556 = vmatprep.subr.bf16.mxu0 0
    %5557 = vmatpush1.bf16.msra.mxu0 %v5540
    %5558 = vmatprep.subr.bf16.mxu0 0
    %5559 = vmatpush1.bf16.msra.mxu0 %v5541
    %5560 = vmatprep.subr.bf16.mxu0 0
    %5561 = vmatpush1.bf16.msra.mxu0 %v5542
    %5562 = vmatprep.subr.bf16.mxu0 0
    %5563 = vmatpush1.bf16.msra.mxu0 %v5543
    %5564 = vmatprep.subr.bf16.mxu0 0
    %5565 = vmatpush1.bf16.msra.mxu0 %v5544
    %5566 = vmatprep.subr.bf16.mxu0 0
    %5567 = vmatpush1.bf16.msra.mxu0 %v5545
    %5568 = vmatprep.subr.bf16.mxu0 0
    %5569 = vmatpush1.bf16.msra.mxu0 %v5546
    %5570 = vmatprep.subr.bf16.mxu0 0
    %5571 = vmatpush1.bf16.msra.mxu0 %v5547
    %5572 = vmatprep.subr.bf16.mxu0 0
    %5573 = vmatpush1.bf16.msra.mxu0 0
    %5574 = vmatprep.subr.bf16.mxu0 0
    %5575 = vmatpush1.bf16.msra.mxu0 0
    %5576 = vmatprep.subr.bf16.mxu0 0
    %5577 = vmatpush1.bf16.msra.mxu0 0
    %5578 = vmatprep.subr.bf16.mxu0 0
    %5579 = vmatpush1.bf16.msra.mxu0 0
    %5580 = vmatprep.subr.bf16.mxu0 0
    %5581 = vmatpush1.bf16.msra.mxu0 0
    %5582 = vmatprep.subr.bf16.mxu0 0
    %5583 = vmatpush1.bf16.msra.mxu0 0
    %5584 = vmatprep.subr.bf16.mxu0 0
    %5585 = vmatpush1.bf16.msra.mxu0 0
    %5586 = vmatprep.subr.bf16.mxu0 0
    %5587 = vmatpush1.bf16.msra.mxu0 0
    %5588 = vmatprep.mubr.bf16.mxu0 0
    %5589 = vmatmul.mubr.bf16.gmra.mrb[0].mxu0 %v5484
    %v5590 = vpop.f32.mrb[0].mxu0
    %v5591 = vadd.f32 %v5506, %v5590
    %v5592 = vpop.f32.mrb[0].mxu0
    %v5593 = vpop.f32.mrb[0].mxu0
    %v5594 = vpop.f32.mrb[0].mxu0
    %5595 = vdwg.mxu0
    %s5596 = scalar_lea.vmem %s10, 40
    %5597 = vst [vmem:[%s5596] sm:$0xff] %v5591
    %s5598 = sld [smem:[#allocation4 + $0x6]]
    %p5599 = scmp.eq.s32.totalorder %s5598, 0
    // Predicated region
    $region82: #{seq2seq_forward.1} parent=1 // pred_check
      %p5600 = pneg %p5599
    $region83: #{seq2seq_forward.1} parent=1 // pred_check_branch
      %5602 = sbr.rel (%p5600) target = $region85
    $region84: #{seq2seq_forward.1} parent=1 // pred_region
      %5603 = vmax.xlane.f32.xlu0 %v5591
      %v5604 = vpop.xlane.xlu0 %5603
      %v5605 = vlaneseq
      %v5606 = vand.u32 %v5605, 127
      %vm5607 = vcmp.eq.f32.partialorder %v5591, %v5604
      %v5608 = vsel %vm5607, %v5606, 128
      %v5609 = vand.u32 %v5608, 65535
      %v5610 = vshra.s32 %v5608, 16
      %v5611 = vcvt.s32.f32 %v5609
      %v5612 = vcvt.s32.f32 %v5610
      %5613 = vmin.xlane.f32.xlu0 %v5612
      %v5614 = vpop.xlane.xlu0 %5613
      %vm5615 = vcmp.eq.f32.partialorder %v5612, %v5614
      %v5616 = vsel %vm5615, %v5611, inf
      %5617 = vmin.xlane.f32.xlu0 %v5616
      %v5618 = vpop.xlane.xlu0 %5617
      %v5619 = vcvt.f32.s32 %v5618
      %v5620 = vcvt.f32.s32 %v5614
      %v5621 = vshll.u32 %v5620, 16
      %v5622 = vadd.s32 %v5621, %v5619
      %vm5623 = vcmp.eq.s32.totalorder %v5606, %v5622
      %v5624 = vsel %vm5623, 1, 0
      %v5625 = vcvt.s32.f32 %v5624
      %v5626 = vpack.c.bf16 %v5625, %v5625
      %v5627 = vld [vmem:[%s9] sm:$0xf]
      %v5628 = vld [vmem:[%s9 + $0x4] sm:$0xf]
      %v5629 = vld [vmem:[%s9 + $0x8] sm:$0xf]
      %v5630 = vld [vmem:[%s9 + $0xc] sm:$0xf]
      %v5631 = vld [vmem:[%s9 + $0x10] sm:$0xf]
      %v5632 = vld [vmem:[%s9 + $0x14] sm:$0xf]
      %v5633 = vld [vmem:[%s9 + $0x18] sm:$0xf]
      %v5634 = vld [vmem:[%s9 + $0x1c] sm:$0xf]
      %v5635 = vld [vmem:[%s9 + $0x20] sm:$0xf]
      %v5636 = vld [vmem:[%s9 + $0x24] sm:$0xf]
      %v5637 = vld [vmem:[%s9 + $0x28] sm:$0xf]
      %v5638 = vld [vmem:[%s9 + $0x2c] sm:$0xf]
      %v5639 = vld [vmem:[%s9 + $0x30] sm:$0xf]
      %v5640 = vld [vmem:[%s9 + $0x34] sm:$0xf]
      %v5641 = vld [vmem:[%s9 + $0x38] sm:$0xf]
      %v5642 = vld [vmem:[%s9 + $0x3c] sm:$0xf]
      %v5659 = vunpack.c.l.b16 %v5627
      %v5660 = vunpack.c.l.b16 %v5628
      %v5661 = vunpack.c.l.b16 %v5629
      %v5662 = vunpack.c.l.b16 %v5630
      %v5663 = vunpack.c.l.b16 %v5631
      %v5664 = vunpack.c.l.b16 %v5632
      %v5665 = vunpack.c.l.b16 %v5633
      %v5666 = vunpack.c.l.b16 %v5634
      %v5667 = vunpack.c.l.b16 %v5635
      %v5668 = vunpack.c.l.b16 %v5636
      %v5669 = vunpack.c.l.b16 %v5637
      %v5670 = vunpack.c.l.b16 %v5638
      %v5671 = vunpack.c.l.b16 %v5639
      %v5672 = vunpack.c.l.b16 %v5640
      %v5673 = vunpack.c.l.b16 %v5641
      %v5674 = vunpack.c.l.b16 %v5642
      %v5675 = vpack.c.b16 %v5660, %v5659
      %v5676 = vpack.c.b16 %v5662, %v5661
      %v5677 = vpack.c.b16 %v5664, %v5663
      %v5678 = vpack.c.b16 %v5666, %v5665
      %v5679 = vpack.c.b16 %v5668, %v5667
      %v5680 = vpack.c.b16 %v5670, %v5669
      %v5681 = vpack.c.b16 %v5672, %v5671
      %v5682 = vpack.c.b16 %v5674, %v5673
      %5691 = vmatprep.subr.bf16.mxu0 0
      %5692 = vmatpush1.bf16.msra.mxu0 %v5675
      %5693 = vmatprep.subr.bf16.mxu0 0
      %5694 = vmatpush1.bf16.msra.mxu0 %v5676
      %5695 = vmatprep.subr.bf16.mxu0 0
      %5696 = vmatpush1.bf16.msra.mxu0 %v5677
      %5697 = vmatprep.subr.bf16.mxu0 0
      %5698 = vmatpush1.bf16.msra.mxu0 %v5678
      %5699 = vmatprep.subr.bf16.mxu0 0
      %5700 = vmatpush1.bf16.msra.mxu0 %v5679
      %5701 = vmatprep.subr.bf16.mxu0 0
      %5702 = vmatpush1.bf16.msra.mxu0 %v5680
      %5703 = vmatprep.subr.bf16.mxu0 0
      %5704 = vmatpush1.bf16.msra.mxu0 %v5681
      %5705 = vmatprep.subr.bf16.mxu0 0
      %5706 = vmatpush1.bf16.msra.mxu0 %v5682
      %5707 = vmatprep.subr.bf16.mxu0 0
      %5708 = vmatpush1.bf16.msra.mxu0 0
      %5709 = vmatprep.subr.bf16.mxu0 0
      %5710 = vmatpush1.bf16.msra.mxu0 0
      %5711 = vmatprep.subr.bf16.mxu0 0
      %5712 = vmatpush1.bf16.msra.mxu0 0
      %5713 = vmatprep.subr.bf16.mxu0 0
      %5714 = vmatpush1.bf16.msra.mxu0 0
      %5715 = vmatprep.subr.bf16.mxu0 0
      %5716 = vmatpush1.bf16.msra.mxu0 0
      %5717 = vmatprep.subr.bf16.mxu0 0
      %5718 = vmatpush1.bf16.msra.mxu0 0
      %5719 = vmatprep.subr.bf16.mxu0 0
      %5720 = vmatpush1.bf16.msra.mxu0 0
      %5721 = vmatprep.subr.bf16.mxu0 0
      %5722 = vmatpush1.bf16.msra.mxu0 0
      %5723 = vmatprep.mubr.bf16.mxu0 0
      %5724 = vmatmul.mubr.bf16.gmra.mrb[0].mxu0 %v5626
      %v5725 = vpop.f32.mrb[0].mxu0
      %v5726 = vadd.f32 0.0, %v5725
      %v5727 = vpop.f32.mrb[0].mxu0
      %v5728 = vpop.f32.mrb[0].mxu0
      %v5729 = vpop.f32.mrb[0].mxu0
      %5730 = vdwg.mxu0
      %5731 = vst [vmem:[#allocation2] sm:$0xff] %v5726
    $region85: #{seq2seq_forward.1} parent=1 // pred_fallthru
      _
    %s5732 = sld [smem:[#allocation4 + $0x6]]
    %p5733 = scmp.ne.s32.totalorder %s5732, 0
    // Predicated region
    $region86: #{seq2seq_forward.1} parent=1 // pred_check
      %p5734 = pneg %p5733
    $region87: #{seq2seq_forward.1} parent=1 // pred_check_branch
      %5736 = sbr.rel (%p5734) target = $region89
    $region88: #{seq2seq_forward.1} parent=1 // pred_region
      %s5737 = scalar_lea.vmem %s2, 24
      %v5738 = vld [vmem:[%s5737] sm:$0xf]
      %v5739 = vunpack.c.l.bf16 %v5738
      %5740 = vst [vmem:[#allocation2] sm:$0xff] %v5739
    $region89: #{seq2seq_forward.1} parent=1 // pred_fallthru
      _
    %v5741 = vld [vmem:[#allocation2] sm:$0xff]
    %v5742 = vpack.c.bf16 %v5741, %v5741
    %v5743 = vld [vmem:[#allocation5] sm:$0xff]
    %v5744 = vld [vmem:[#allocation5 + $0x8] sm:$0xff]
    %v5745 = vld [vmem:[#allocation5 + $0x10] sm:$0xff]
    %v5746 = vld [vmem:[#allocation5 + $0x18] sm:$0xff]
    %v5747 = vld [vmem:[#allocation5 + $0x20] sm:$0xff]
    %v5748 = vld [vmem:[#allocation5 + $0x28] sm:$0xff]
    %v5749 = vld [vmem:[#allocation5 + $0x30] sm:$0xff]
    %v5750 = vld [vmem:[#allocation5 + $0x38] sm:$0xff]
    %v5751 = vld [vmem:[#allocation5 + $0x40] sm:$0xff]
    %v5752 = vld [vmem:[#allocation5 + $0x48] sm:$0xff]
    %v5753 = vld [vmem:[#allocation5 + $0x50] sm:$0xff]
    %v5754 = vld [vmem:[#allocation5 + $0x58] sm:$0xff]
    %v5755 = vld [vmem:[#allocation5 + $0x60] sm:$0xff]
    %v5756 = vld [vmem:[#allocation5 + $0x68] sm:$0xff]
    %v5757 = vld [vmem:[#allocation5 + $0x70] sm:$0xff]
    %v5758 = vld [vmem:[#allocation5 + $0x78] sm:$0xff]
    %v5759 = vld [vmem:[#allocation5 + $0x80] sm:$0xff]
    %v5760 = vld [vmem:[#allocation5 + $0x88] sm:$0xff]
    %v5761 = vld [vmem:[#allocation5 + $0x90] sm:$0xff]
    %v5762 = vld [vmem:[#allocation5 + $0x98] sm:$0xff]
    %v5763 = vld [vmem:[#allocation5 + $0xa0] sm:$0xff]
    %v5764 = vld [vmem:[#allocation5 + $0xa8] sm:$0xff]
    %v5765 = vld [vmem:[#allocation5 + $0xb0] sm:$0xff]
    %v5766 = vld [vmem:[#allocation5 + $0xb8] sm:$0xff]
    %v5767 = vld [vmem:[#allocation5 + $0xc0] sm:$0xff]
    %v5768 = vld [vmem:[#allocation5 + $0xc8] sm:$0xff]
    %v5769 = vld [vmem:[#allocation5 + $0xd0] sm:$0xff]
    %v5770 = vld [vmem:[#allocation5 + $0xd8] sm:$0xff]
    %v5771 = vld [vmem:[#allocation5 + $0xe0] sm:$0xff]
    %v5772 = vld [vmem:[#allocation5 + $0xe8] sm:$0xff]
    %v5773 = vld [vmem:[#allocation5 + $0xf0] sm:$0xff]
    %v5774 = vld [vmem:[#allocation5 + $0xf8] sm:$0xff]
    %v5775 = vld [vmem:[#allocation5 + $0x100] sm:$0xff]
    %v5776 = vld [vmem:[#allocation5 + $0x108] sm:$0xff]
    %v5777 = vld [vmem:[#allocation5 + $0x110] sm:$0xff]
    %v5778 = vld [vmem:[#allocation5 + $0x118] sm:$0xff]
    %v5779 = vld [vmem:[#allocation5 + $0x120] sm:$0xff]
    %v5780 = vld [vmem:[#allocation5 + $0x128] sm:$0xff]
    %v5781 = vld [vmem:[#allocation5 + $0x130] sm:$0xff]
    %v5782 = vld [vmem:[#allocation5 + $0x138] sm:$0xff]
    %v5783 = vld [vmem:[#allocation5 + $0x140] sm:$0xff]
    %v5784 = vld [vmem:[#allocation5 + $0x148] sm:$0xff]
    %v5785 = vld [vmem:[#allocation5 + $0x150] sm:$0xff]
    %v5786 = vld [vmem:[#allocation5 + $0x158] sm:$0xff]
    %v5787 = vld [vmem:[#allocation5 + $0x160] sm:$0xff]
    %v5788 = vld [vmem:[#allocation5 + $0x168] sm:$0xff]
    %v5789 = vld [vmem:[#allocation5 + $0x170] sm:$0xff]
    %v5790 = vld [vmem:[#allocation5 + $0x178] sm:$0xff]
    %v5791 = vld [vmem:[#allocation5 + $0x180] sm:$0xff]
    %v5792 = vld [vmem:[#allocation5 + $0x188] sm:$0xff]
    %v5793 = vld [vmem:[#allocation5 + $0x190] sm:$0xff]
    %v5794 = vld [vmem:[#allocation5 + $0x198] sm:$0xff]
    %v5795 = vld [vmem:[#allocation5 + $0x1a0] sm:$0xff]
    %v5796 = vld [vmem:[#allocation5 + $0x1a8] sm:$0xff]
    %v5797 = vld [vmem:[#allocation5 + $0x1b0] sm:$0xff]
    %v5798 = vld [vmem:[#allocation5 + $0x1b8] sm:$0xff]
    %v5799 = vld [vmem:[#allocation5 + $0x1c0] sm:$0xff]
    %v5800 = vld [vmem:[#allocation5 + $0x1c8] sm:$0xff]
    %v5801 = vld [vmem:[#allocation5 + $0x1d0] sm:$0xff]
    %v5802 = vld [vmem:[#allocation5 + $0x1d8] sm:$0xff]
    %v5803 = vld [vmem:[#allocation5 + $0x1e0] sm:$0xff]
    %v5804 = vld [vmem:[#allocation5 + $0x1e8] sm:$0xff]
    %v5805 = vld [vmem:[#allocation5 + $0x1f0] sm:$0xff]
    %v5806 = vld [vmem:[#allocation5 + $0x1f8] sm:$0xff]
    %v5807 = vld [vmem:[%s6] sm:$0xf]
    %v5809 = vlaneseq
    %v5810 = vshrl.u32 %v5809, 7
    %v5811 = vsub.s32 0, %v5810
    %v5812 = vrot.slane %v5807, %v5811
    %v5813 = vlaneseq
    %v5814 = vshrl.u32 %v5813, 7
    %v5815 = vsub.s32 1, %v5814
    %v5816 = vrot.slane %v5807, %v5815
    %v5817 = vlaneseq
    %v5818 = vshrl.u32 %v5817, 7
    %v5819 = vsub.s32 2, %v5818
    %v5820 = vrot.slane %v5807, %v5819
    %v5821 = vlaneseq
    %v5822 = vshrl.u32 %v5821, 7
    %v5823 = vsub.s32 3, %v5822
    %v5824 = vrot.slane %v5807, %v5823
    %v5893 = vunpack.c.l.b16 %v5743
    %v5894 = vunpack.c.h.b16 %v5743
    %v5895 = vunpack.c.l.b16 %v5744
    %v5896 = vunpack.c.h.b16 %v5744
    %v5897 = vunpack.c.l.b16 %v5745
    %v5898 = vunpack.c.h.b16 %v5745
    %v5899 = vunpack.c.l.b16 %v5746
    %v5900 = vunpack.c.h.b16 %v5746
    %v5901 = vunpack.c.l.b16 %v5747
    %v5902 = vunpack.c.h.b16 %v5747
    %v5903 = vunpack.c.l.b16 %v5748
    %v5904 = vunpack.c.h.b16 %v5748
    %v5905 = vunpack.c.l.b16 %v5749
    %v5906 = vunpack.c.h.b16 %v5749
    %v5907 = vunpack.c.l.b16 %v5750
    %v5908 = vunpack.c.h.b16 %v5750
    %v5909 = vunpack.c.l.b16 %v5751
    %v5910 = vunpack.c.h.b16 %v5751
    %v5911 = vunpack.c.l.b16 %v5752
    %v5912 = vunpack.c.h.b16 %v5752
    %v5913 = vunpack.c.l.b16 %v5753
    %v5914 = vunpack.c.h.b16 %v5753
    %v5915 = vunpack.c.l.b16 %v5754
    %v5916 = vunpack.c.h.b16 %v5754
    %v5917 = vunpack.c.l.b16 %v5755
    %v5918 = vunpack.c.h.b16 %v5755
    %v5919 = vunpack.c.l.b16 %v5756
    %v5920 = vunpack.c.h.b16 %v5756
    %v5921 = vunpack.c.l.b16 %v5757
    %v5922 = vunpack.c.h.b16 %v5757
    %v5923 = vunpack.c.l.b16 %v5758
    %v5924 = vunpack.c.h.b16 %v5758
    %v5925 = vunpack.c.l.b16 %v5759
    %v5926 = vunpack.c.h.b16 %v5759
    %v5927 = vunpack.c.l.b16 %v5760
    %v5928 = vunpack.c.h.b16 %v5760
    %v5929 = vunpack.c.l.b16 %v5761
    %v5930 = vunpack.c.h.b16 %v5761
    %v5931 = vunpack.c.l.b16 %v5762
    %v5932 = vunpack.c.h.b16 %v5762
    %v5933 = vunpack.c.l.b16 %v5763
    %v5934 = vunpack.c.h.b16 %v5763
    %v5935 = vunpack.c.l.b16 %v5764
    %v5936 = vunpack.c.h.b16 %v5764
    %v5937 = vunpack.c.l.b16 %v5765
    %v5938 = vunpack.c.h.b16 %v5765
    %v5939 = vunpack.c.l.b16 %v5766
    %v5940 = vunpack.c.h.b16 %v5766
    %v5941 = vunpack.c.l.b16 %v5767
    %v5942 = vunpack.c.h.b16 %v5767
    %v5943 = vunpack.c.l.b16 %v5768
    %v5944 = vunpack.c.h.b16 %v5768
    %v5945 = vunpack.c.l.b16 %v5769
    %v5946 = vunpack.c.h.b16 %v5769
    %v5947 = vunpack.c.l.b16 %v5770
    %v5948 = vunpack.c.h.b16 %v5770
    %v5949 = vunpack.c.l.b16 %v5771
    %v5950 = vunpack.c.h.b16 %v5771
    %v5951 = vunpack.c.l.b16 %v5772
    %v5952 = vunpack.c.h.b16 %v5772
    %v5953 = vunpack.c.l.b16 %v5773
    %v5954 = vunpack.c.h.b16 %v5773
    %v5955 = vunpack.c.l.b16 %v5774
    %v5956 = vunpack.c.h.b16 %v5774
    %v5957 = vunpack.c.l.b16 %v5775
    %v5958 = vunpack.c.h.b16 %v5775
    %v5959 = vunpack.c.l.b16 %v5776
    %v5960 = vunpack.c.h.b16 %v5776
    %v5961 = vunpack.c.l.b16 %v5777
    %v5962 = vunpack.c.h.b16 %v5777
    %v5963 = vunpack.c.l.b16 %v5778
    %v5964 = vunpack.c.h.b16 %v5778
    %v5965 = vunpack.c.l.b16 %v5779
    %v5966 = vunpack.c.h.b16 %v5779
    %v5967 = vunpack.c.l.b16 %v5780
    %v5968 = vunpack.c.h.b16 %v5780
    %v5969 = vunpack.c.l.b16 %v5781
    %v5970 = vunpack.c.h.b16 %v5781
    %v5971 = vunpack.c.l.b16 %v5782
    %v5972 = vunpack.c.h.b16 %v5782
    %v5973 = vunpack.c.l.b16 %v5783
    %v5974 = vunpack.c.h.b16 %v5783
    %v5975 = vunpack.c.l.b16 %v5784
    %v5976 = vunpack.c.h.b16 %v5784
    %v5977 = vunpack.c.l.b16 %v5785
    %v5978 = vunpack.c.h.b16 %v5785
    %v5979 = vunpack.c.l.b16 %v5786
    %v5980 = vunpack.c.h.b16 %v5786
    %v5981 = vunpack.c.l.b16 %v5787
    %v5982 = vunpack.c.h.b16 %v5787
    %v5983 = vunpack.c.l.b16 %v5788
    %v5984 = vunpack.c.h.b16 %v5788
    %v5985 = vunpack.c.l.b16 %v5789
    %v5986 = vunpack.c.h.b16 %v5789
    %v5987 = vunpack.c.l.b16 %v5790
    %v5988 = vunpack.c.h.b16 %v5790
    %v5989 = vunpack.c.l.b16 %v5791
    %v5990 = vunpack.c.h.b16 %v5791
    %v5991 = vunpack.c.l.b16 %v5792
    %v5992 = vunpack.c.h.b16 %v5792
    %v5993 = vunpack.c.l.b16 %v5793
    %v5994 = vunpack.c.h.b16 %v5793
    %v5995 = vunpack.c.l.b16 %v5794
    %v5996 = vunpack.c.h.b16 %v5794
    %v5997 = vunpack.c.l.b16 %v5795
    %v5998 = vunpack.c.h.b16 %v5795
    %v5999 = vunpack.c.l.b16 %v5796
    %v6000 = vunpack.c.h.b16 %v5796
    %v6001 = vunpack.c.l.b16 %v5797
    %v6002 = vunpack.c.h.b16 %v5797
    %v6003 = vunpack.c.l.b16 %v5798
    %v6004 = vunpack.c.h.b16 %v5798
    %v6005 = vunpack.c.l.b16 %v5799
    %v6006 = vunpack.c.h.b16 %v5799
    %v6007 = vunpack.c.l.b16 %v5800
    %v6008 = vunpack.c.h.b16 %v5800
    %v6009 = vunpack.c.l.b16 %v5801
    %v6010 = vunpack.c.h.b16 %v5801
    %v6011 = vunpack.c.l.b16 %v5802
    %v6012 = vunpack.c.h.b16 %v5802
    %v6013 = vunpack.c.l.b16 %v5803
    %v6014 = vunpack.c.h.b16 %v5803
    %v6015 = vunpack.c.l.b16 %v5804
    %v6016 = vunpack.c.h.b16 %v5804
    %v6017 = vunpack.c.l.b16 %v5805
    %v6018 = vunpack.c.h.b16 %v5805
    %v6019 = vunpack.c.l.b16 %v5806
    %v6020 = vunpack.c.h.b16 %v5806
    %v6021 = vpack.c.b16 %v5897, %v5893
    %v6022 = vpack.c.b16 %v5898, %v5894
    %v6023 = vpack.c.b16 %v5899, %v5895
    %v6024 = vpack.c.b16 %v5900, %v5896
    %v6025 = vpack.c.b16 %v5905, %v5901
    %v6026 = vpack.c.b16 %v5906, %v5902
    %v6027 = vpack.c.b16 %v5907, %v5903
    %v6028 = vpack.c.b16 %v5908, %v5904
    %v6029 = vpack.c.b16 %v5913, %v5909
    %v6030 = vpack.c.b16 %v5914, %v5910
    %v6031 = vpack.c.b16 %v5915, %v5911
    %v6032 = vpack.c.b16 %v5916, %v5912
    %v6033 = vpack.c.b16 %v5921, %v5917
    %v6034 = vpack.c.b16 %v5922, %v5918
    %v6035 = vpack.c.b16 %v5923, %v5919
    %v6036 = vpack.c.b16 %v5924, %v5920
    %v6037 = vpack.c.b16 %v5929, %v5925
    %v6038 = vpack.c.b16 %v5930, %v5926
    %v6039 = vpack.c.b16 %v5931, %v5927
    %v6040 = vpack.c.b16 %v5932, %v5928
    %v6041 = vpack.c.b16 %v5937, %v5933
    %v6042 = vpack.c.b16 %v5938, %v5934
    %v6043 = vpack.c.b16 %v5939, %v5935
    %v6044 = vpack.c.b16 %v5940, %v5936
    %v6045 = vpack.c.b16 %v5945, %v5941
    %v6046 = vpack.c.b16 %v5946, %v5942
    %v6047 = vpack.c.b16 %v5947, %v5943
    %v6048 = vpack.c.b16 %v5948, %v5944
    %v6049 = vpack.c.b16 %v5953, %v5949
    %v6050 = vpack.c.b16 %v5954, %v5950
    %v6051 = vpack.c.b16 %v5955, %v5951
    %v6052 = vpack.c.b16 %v5956, %v5952
    %v6053 = vpack.c.b16 %v5961, %v5957
    %v6054 = vpack.c.b16 %v5962, %v5958
    %v6055 = vpack.c.b16 %v5963, %v5959
    %v6056 = vpack.c.b16 %v5964, %v5960
    %v6057 = vpack.c.b16 %v5969, %v5965
    %v6058 = vpack.c.b16 %v5970, %v5966
    %v6059 = vpack.c.b16 %v5971, %v5967
    %v6060 = vpack.c.b16 %v5972, %v5968
    %v6061 = vpack.c.b16 %v5977, %v5973
    %v6062 = vpack.c.b16 %v5978, %v5974
    %v6063 = vpack.c.b16 %v5979, %v5975
    %v6064 = vpack.c.b16 %v5980, %v5976
    %v6065 = vpack.c.b16 %v5985, %v5981
    %v6066 = vpack.c.b16 %v5986, %v5982
    %v6067 = vpack.c.b16 %v5987, %v5983
    %v6068 = vpack.c.b16 %v5988, %v5984
    %v6069 = vpack.c.b16 %v5993, %v5989
    %v6070 = vpack.c.b16 %v5994, %v5990
    %v6071 = vpack.c.b16 %v5995, %v5991
    %v6072 = vpack.c.b16 %v5996, %v5992
    %v6073 = vpack.c.b16 %v6001, %v5997
    %v6074 = vpack.c.b16 %v6002, %v5998
    %v6075 = vpack.c.b16 %v6003, %v5999
    %v6076 = vpack.c.b16 %v6004, %v6000
    %v6077 = vpack.c.b16 %v6009, %v6005
    %v6078 = vpack.c.b16 %v6010, %v6006
    %v6079 = vpack.c.b16 %v6011, %v6007
    %v6080 = vpack.c.b16 %v6012, %v6008
    %v6081 = vpack.c.b16 %v6017, %v6013
    %v6082 = vpack.c.b16 %v6018, %v6014
    %v6083 = vpack.c.b16 %v6019, %v6015
    %v6084 = vpack.c.b16 %v6020, %v6016
    %6149 = vmatprep.subr.bf16.mxu0 %v6022
    %6150 = vmatpush1.bf16.msra.mxu0 %v6021
    %6151 = vmatprep.subr.bf16.mxu0 %v6026
    %6152 = vmatpush1.bf16.msra.mxu0 %v6025
    %6153 = vmatprep.subr.bf16.mxu0 %v6030
    %6154 = vmatpush1.bf16.msra.mxu0 %v6029
    %6155 = vmatprep.subr.bf16.mxu0 %v6034
    %6156 = vmatpush1.bf16.msra.mxu0 %v6033
    %6157 = vmatprep.subr.bf16.mxu0 %v6038
    %6158 = vmatpush1.bf16.msra.mxu0 %v6037
    %6159 = vmatprep.subr.bf16.mxu0 %v6042
    %6160 = vmatpush1.bf16.msra.mxu0 %v6041
    %6161 = vmatprep.subr.bf16.mxu0 %v6046
    %6162 = vmatpush1.bf16.msra.mxu0 %v6045
    %6163 = vmatprep.subr.bf16.mxu0 %v6050
    %6164 = vmatpush1.bf16.msra.mxu0 %v6049
    %6165 = vmatprep.subr.bf16.mxu0 %v6054
    %6166 = vmatpush1.bf16.msra.mxu0 %v6053
    %6167 = vmatprep.subr.bf16.mxu0 %v6058
    %6168 = vmatpush1.bf16.msra.mxu0 %v6057
    %6169 = vmatprep.subr.bf16.mxu0 %v6062
    %6170 = vmatpush1.bf16.msra.mxu0 %v6061
    %6171 = vmatprep.subr.bf16.mxu0 %v6066
    %6172 = vmatpush1.bf16.msra.mxu0 %v6065
    %6173 = vmatprep.subr.bf16.mxu0 %v6070
    %6174 = vmatpush1.bf16.msra.mxu0 %v6069
    %6175 = vmatprep.subr.bf16.mxu0 %v6074
    %6176 = vmatpush1.bf16.msra.mxu0 %v6073
    %6177 = vmatprep.subr.bf16.mxu0 %v6078
    %6178 = vmatpush1.bf16.msra.mxu0 %v6077
    %6179 = vmatprep.subr.bf16.mxu0 %v6082
    %6180 = vmatpush1.bf16.msra.mxu0 %v6081
    %6181 = vmatprep.mubr.bf16.mxu0 %v5484
    %6182 = vmatmul.mubr.bf16.gmra.mrb[0].mxu0 %v5742
    %v6183 = vpop.f32.mrb[0].mxu0
    %v6184 = vadd.f32 %v5812, %v6183
    %v6185 = vpop.f32.mrb[0].mxu0
    %v6186 = vadd.f32 %v5816, %v6185
    %v6187 = vpop.f32.mrb[0].mxu0
    %v6188 = vpop.f32.mrb[0].mxu0
    %6189 = vdwg.mxu0
    %6190 = vmatprep.subr.bf16.mxu0 %v6024
    %6191 = vmatpush1.bf16.msra.mxu0 %v6023
    %6192 = vmatprep.subr.bf16.mxu0 %v6028
    %6193 = vmatpush1.bf16.msra.mxu0 %v6027
    %6194 = vmatprep.subr.bf16.mxu0 %v6032
    %6195 = vmatpush1.bf16.msra.mxu0 %v6031
    %6196 = vmatprep.subr.bf16.mxu0 %v6036
    %6197 = vmatpush1.bf16.msra.mxu0 %v6035
    %6198 = vmatprep.subr.bf16.mxu0 %v6040
    %6199 = vmatpush1.bf16.msra.mxu0 %v6039
    %6200 = vmatprep.subr.bf16.mxu0 %v6044
    %6201 = vmatpush1.bf16.msra.mxu0 %v6043
    %6202 = vmatprep.subr.bf16.mxu0 %v6048
    %6203 = vmatpush1.bf16.msra.mxu0 %v6047
    %6204 = vmatprep.subr.bf16.mxu0 %v6052
    %6205 = vmatpush1.bf16.msra.mxu0 %v6051
    %6206 = vmatprep.subr.bf16.mxu0 %v6056
    %6207 = vmatpush1.bf16.msra.mxu0 %v6055
    %6208 = vmatprep.subr.bf16.mxu0 %v6060
    %6209 = vmatpush1.bf16.msra.mxu0 %v6059
    %6210 = vmatprep.subr.bf16.mxu0 %v6064
    %6211 = vmatpush1.bf16.msra.mxu0 %v6063
    %6212 = vmatprep.subr.bf16.mxu0 %v6068
    %6213 = vmatpush1.bf16.msra.mxu0 %v6067
    %6214 = vmatprep.subr.bf16.mxu0 %v6072
    %6215 = vmatpush1.bf16.msra.mxu0 %v6071
    %6216 = vmatprep.subr.bf16.mxu0 %v6076
    %6217 = vmatpush1.bf16.msra.mxu0 %v6075
    %6218 = vmatprep.subr.bf16.mxu0 %v6080
    %6219 = vmatpush1.bf16.msra.mxu0 %v6079
    %6220 = vmatprep.subr.bf16.mxu0 %v6084
    %6221 = vmatpush1.bf16.msra.mxu0 %v6083
    %6222 = vmatprep.mubr.bf16.mxu0 %v5484
    %6223 = vmatmul.mubr.bf16.gmra.mrb[0].mxu0 %v5742
    %v6224 = vpop.f32.mrb[0].mxu0
    %v6225 = vadd.f32 %v5820, %v6224
    %v6226 = vpop.f32.mrb[0].mxu0
    %v6227 = vadd.f32 %v5824, %v6226
    %v6228 = vpop.f32.mrb[0].mxu0
    %v6229 = vpop.f32.mrb[0].mxu0
    %6230 = vdwg.mxu0
    %v6231 = vxor.u32 %v6184, 2147483648
    %v6232 = vmul.f32 %v6231, 1.442695
    %v6233 = vpow.pop %v6232
    %v6234 = vadd.f32 %v6233, 1.0
    %v6235 = vrcp.pop %v6234
    %v6236 = vmul.f32 1.0, %v6235
    %v6237 = vxor.u32 %v6186, 2147483648
    %v6238 = vmul.f32 %v6237, 1.442695
    %v6239 = vpow.pop %v6238
    %v6240 = vadd.f32 %v6239, 1.0
    %v6241 = vrcp.pop %v6240
    %v6242 = vmul.f32 1.0, %v6241
    %v6243 = vtanh.pop %v6225
    %v6244 = vxor.u32 %v6227, 2147483648
    %v6245 = vmul.f32 %v6244, 1.442695
    %v6246 = vpow.pop %v6245
    %v6247 = vadd.f32 %v6246, 1.0
    %v6248 = vrcp.pop %v6247
    %v6249 = vmul.f32 1.0, %v6248
    %v6250 = vmul.f32 %v6242, %v5481
    %v6251 = vmul.f32 %v6236, %v6243
    %v6252 = vadd.f32 %v6250, %v6251
    %v6253 = vtanh.pop %v6252
    %v6254 = vmul.f32 %v6249, %v6253
    %v6255 = vpack.c.bf16 %v6254, %v6254
    %v6256 = vld [vmem:[%s7] sm:$0xf]
    %v6257 = vld [vmem:[%s7 + $0x4] sm:$0xf]
    %v6258 = vld [vmem:[%s7 + $0x8] sm:$0xf]
    %v6259 = vld [vmem:[%s7 + $0xc] sm:$0xf]
    %v6260 = vld [vmem:[%s7 + $0x10] sm:$0xf]
    %v6261 = vld [vmem:[%s7 + $0x14] sm:$0xf]
    %v6262 = vld [vmem:[%s7 + $0x18] sm:$0xf]
    %v6263 = vld [vmem:[%s7 + $0x1c] sm:$0xf]
    %v6264 = vld [vmem:[%s7 + $0x20] sm:$0xf]
    %v6265 = vld [vmem:[%s7 + $0x24] sm:$0xf]
    %v6266 = vld [vmem:[%s7 + $0x28] sm:$0xf]
    %v6267 = vld [vmem:[%s7 + $0x2c] sm:$0xf]
    %v6268 = vld [vmem:[%s7 + $0x30] sm:$0xf]
    %v6269 = vld [vmem:[%s7 + $0x34] sm:$0xf]
    %v6270 = vld [vmem:[%s7 + $0x38] sm:$0xf]
    %v6271 = vld [vmem:[%s7 + $0x3c] sm:$0xf]
    %v6272 = vld [vmem:[%s8] sm:$0x1]
    %v6274 = vlaneseq
    %v6275 = vshrl.u32 %v6274, 7
    %v6276 = vsub.s32 0, %v6275
    %v6277 = vrot.slane %v6272, %v6276
    %v6295 = vunpack.c.l.b16 %v6256
    %v6296 = vunpack.c.l.b16 %v6257
    %v6297 = vunpack.c.l.b16 %v6258
    %v6298 = vunpack.c.l.b16 %v6259
    %v6299 = vunpack.c.l.b16 %v6260
    %v6300 = vunpack.c.l.b16 %v6261
    %v6301 = vunpack.c.l.b16 %v6262
    %v6302 = vunpack.c.l.b16 %v6263
    %v6303 = vunpack.c.l.b16 %v6264
    %v6304 = vunpack.c.l.b16 %v6265
    %v6305 = vunpack.c.l.b16 %v6266
    %v6306 = vunpack.c.l.b16 %v6267
    %v6307 = vunpack.c.l.b16 %v6268
    %v6308 = vunpack.c.l.b16 %v6269
    %v6309 = vunpack.c.l.b16 %v6270
    %v6310 = vunpack.c.l.b16 %v6271
    %v6311 = vpack.c.b16 %v6296, %v6295
    %v6312 = vpack.c.b16 %v6298, %v6297
    %v6313 = vpack.c.b16 %v6300, %v6299
    %v6314 = vpack.c.b16 %v6302, %v6301
    %v6315 = vpack.c.b16 %v6304, %v6303
    %v6316 = vpack.c.b16 %v6306, %v6305
    %v6317 = vpack.c.b16 %v6308, %v6307
    %v6318 = vpack.c.b16 %v6310, %v6309
    %6327 = vmatprep.subr.bf16.mxu0 0
    %6328 = vmatpush1.bf16.msra.mxu0 %v6311
    %6329 = vmatprep.subr.bf16.mxu0 0
    %6330 = vmatpush1.bf16.msra.mxu0 %v6312
    %6331 = vmatprep.subr.bf16.mxu0 0
    %6332 = vmatpush1.bf16.msra.mxu0 %v6313
    %6333 = vmatprep.subr.bf16.mxu0 0
    %6334 = vmatpush1.bf16.msra.mxu0 %v6314
    %6335 = vmatprep.subr.bf16.mxu0 0
    %6336 = vmatpush1.bf16.msra.mxu0 %v6315
    %6337 = vmatprep.subr.bf16.mxu0 0
    %6338 = vmatpush1.bf16.msra.mxu0 %v6316
    %6339 = vmatprep.subr.bf16.mxu0 0
    %6340 = vmatpush1.bf16.msra.mxu0 %v6317
    %6341 = vmatprep.subr.bf16.mxu0 0
    %6342 = vmatpush1.bf16.msra.mxu0 %v6318
    %6343 = vmatprep.subr.bf16.mxu0 0
    %6344 = vmatpush1.bf16.msra.mxu0 0
    %6345 = vmatprep.subr.bf16.mxu0 0
    %6346 = vmatpush1.bf16.msra.mxu0 0
    %6347 = vmatprep.subr.bf16.mxu0 0
    %6348 = vmatpush1.bf16.msra.mxu0 0
    %6349 = vmatprep.subr.bf16.mxu0 0
    %6350 = vmatpush1.bf16.msra.mxu0 0
    %6351 = vmatprep.subr.bf16.mxu0 0
    %6352 = vmatpush1.bf16.msra.mxu0 0
    %6353 = vmatprep.subr.bf16.mxu0 0
    %6354 = vmatpush1.bf16.msra.mxu0 0
    %6355 = vmatprep.subr.bf16.mxu0 0
    %6356 = vmatpush1.bf16.msra.mxu0 0
    %6357 = vmatprep.subr.bf16.mxu0 0
    %6358 = vmatpush1.bf16.msra.mxu0 0
    %6359 = vmatprep.mubr.bf16.mxu0 0
    %6360 = vmatmul.mubr.bf16.gmra.mrb[0].mxu0 %v6255
    %v6361 = vpop.f32.mrb[0].mxu0
    %v6362 = vadd.f32 %v6277, %v6361
    %v6363 = vpop.f32.mrb[0].mxu0
    %v6364 = vpop.f32.mrb[0].mxu0
    %v6365 = vpop.f32.mrb[0].mxu0
    %6366 = vdwg.mxu0
    %s6367 = scalar_lea.vmem %s10, 48
    %6368 = vst [vmem:[%s6367] sm:$0xff] %v6362
    // Predicated region
    $region90: #{seq2seq_forward.1} parent=1 // pred_check
      _
    $region91: #{seq2seq_forward.1} parent=1 // pred_check_branch
      %6370 = sbr.rel (0) target = $region93
    $region92: #{seq2seq_forward.1} parent=1 // pred_region
      _
    $region93: #{seq2seq_forward.1} parent=1 // pred_fallthru
      _
    // Predicated region
    $region94: #{seq2seq_forward.1} parent=1 // pred_check
      _
    $region95: #{seq2seq_forward.1} parent=1 // pred_check_branch
      %6372 = sbr.rel (0) target = $region97
    $region96: #{seq2seq_forward.1} parent=1 // pred_region
      _
    $region97: #{seq2seq_forward.1} parent=1 // pred_fallthru
      _
    %6373 = vsyncpa [#allocation6], 1

</llo_original>
